<compile_context>
chip_gen: v5e
topology: v5e:2x2
jax: 0.10.0
libtpu: 0.0.40
codegen_flags: <defaults>
</compile_context>

<pallas_src>
import jax
import jax.numpy as jnp
from jax.experimental import pallas as pl
from jax.experimental.pallas import tpu as pltpu

IN_DIM = 28 * 28      # 784 (kept un-padded; full-dim block, Mosaic pads K in VMEM)
HID = 1000
OUT_DIM = 10

HID_PAD = 1024        # 1000 -> 8 * 128 (lane-aligned hidden width)
OUT_PAD = 128         # 10 -> 128 (lane-dense output; sliced back in the wrapper)

MAX_BATCH_TILE = 512  # rows per grid step; ~12-14 MiB VMEM footprint, fits v7x's 64 MiB


def _round_up(n, m):
    return ((n + m - 1) // m) * m


def _mlp_kernel(x_ref, w1_ref, b1_ref, w2_ref, b2_ref, w3_ref, b3_ref, o_ref):
    # One batch tile of the fused 3-layer MLP. x arrives as f32 and is cast to bf16
    # in VMEM (no padded-x HBM copy); weights are bf16; all matmuls accumulate in f32
    # on the MXU; ReLU runs on the f32 accumulator before the bf16 downcast.
    x = x_ref[...].astype(jnp.bfloat16)                                   # (TM, 784)
    h1 = jnp.dot(x, w1_ref[...], preferred_element_type=jnp.float32) + b1_ref[...]
    h1 = jnp.maximum(h1, 0.0).astype(jnp.bfloat16)                        # (TM, 1024)
    h2 = jnp.dot(h1, w2_ref[...], preferred_element_type=jnp.float32) + b2_ref[...]
    h2 = jnp.maximum(h2, 0.0).astype(jnp.bfloat16)                        # (TM, 1024)
    o_ref[...] = (
        jnp.dot(h2, w3_ref[...], preferred_element_type=jnp.float32) + b3_ref[...]
    )                                                                     # (TM, 128) f32


def _pad2(a, rows, cols, dtype):
    out = jnp.zeros((rows, cols), dtype)
    return out.at[: a.shape[0], : a.shape[1]].set(a.astype(dtype))


def prepare_params(params):
    """Zero-pad to tile-aligned shapes and cast weights to bf16 (biases stay f32)."""
    w1, b1, w2, b2, w3, b3 = params
    w1p = _pad2(w1, IN_DIM, HID_PAD, jnp.bfloat16)      # (784, 1024)
    w2p = _pad2(w2, HID_PAD, HID_PAD, jnp.bfloat16)     # (1024, 1024)
    w3p = _pad2(w3, HID_PAD, OUT_PAD, jnp.bfloat16)     # (1024, 128)
    b1p = _pad2(b1.reshape(1, -1), 1, HID_PAD, jnp.float32)
    b2p = _pad2(b2.reshape(1, -1), 1, HID_PAD, jnp.float32)
    b3p = _pad2(b3.reshape(1, -1), 1, OUT_PAD, jnp.float32)
    return (w1p, b1p, w2p, b2p, w3p, b3p)


def fashion_mnist_forward(x, padded_params):
    """x: (B, 1, 28, 28) or (B, 784). Returns f32 logits (B, 10)."""
    w1p, b1p, w2p, b2p, w3p, b3p = padded_params
    B = x.shape[0]
    x_flat = x.reshape(B, -1).astype(jnp.float32)
    assert x_flat.shape[1] == IN_DIM

    # Batch tile: multiple of 16 (bf16 sublane packing after the in-kernel cast),
    # capped at MAX_BATCH_TILE.
    tm = min(MAX_BATCH_TILE, _round_up(B, 16))
    bp = _round_up(B, tm)
    num_tiles = bp // tm
    grid = (num_tiles,)

    # Pad only the batch rows (fusable jnp.pad); no padded/bf16 copy of x in HBM.
    if bp != B:
        x_flat = jnp.pad(x_flat, ((0, bp - B), (0, 0)))

    # Weights/biases: full-array blocks with a constant index_map -> DMA'd once and
    # VMEM-resident across all batch tiles. Single-buffered (they never change).
    def resident(shape):
        return pl.BlockSpec(shape, lambda i: (0, 0),
                            pipeline_mode=pl.Buffered(buffer_count=1))

    # Only shard batch tiles across TensorCores when there is enough work to amortize
    # the duplicated weight DMA (weight-DMA-bound at tiny batch).
    batch_semantics = "parallel" if num_tiles >= 4 else "arbitrary"

    out_padded = pl.pallas_call(
        _mlp_kernel,
        out_shape=jax.ShapeDtypeStruct((bp, OUT_PAD), jnp.float32),
        grid=grid,
        in_specs=[
            pl.BlockSpec((tm, IN_DIM), lambda i: (i, 0)),   # x: one batch tile per step
            resident((IN_DIM, HID_PAD)),                    # w1
            resident((1, HID_PAD)),                         # b1
            resident((HID_PAD, HID_PAD)),                   # w2
            resident((1, HID_PAD)),                         # b2
            resident((HID_PAD, OUT_PAD)),                   # w3
            resident((1, OUT_PAD)),                         # b3
        ],
        out_specs=pl.BlockSpec((tm, OUT_PAD), lambda i: (i, 0)),
        compiler_params=pltpu.CompilerParams(
            dimension_semantics=(batch_semantics,),
            vmem_limit_bytes=32 << 20,
        ),
    )(x_flat, w1p, b1p, w2p, b2p, w3p, b3p)

    # Drop batch padding and the padded logit columns (padded logits are exactly b=0).
    return out_padded[:B, :OUT_DIM]


def init_params(key):
    """Deterministic init mimicking nn.Linear's U(-1/sqrt(fan_in), 1/sqrt(fan_in))."""
    ks = jax.random.split(key, 6)

    def linear(kw, kb, fan_in, fan_out):
        bound = 1.0 / jnp.sqrt(jnp.float32(fan_in))
        w = jax.random.uniform(kw, (fan_in, fan_out), jnp.float32, -bound, bound)
        b = jax.random.uniform(kb, (1, fan_out), jnp.float32, -bound, bound)
        return w, b

    w1, b1 = linear(ks[0], ks[1], IN_DIM, HID)
    w2, b2 = linear(ks[2], ks[3], HID, HID)
    w3, b3 = linear(ks[4], ks[5], HID, OUT_DIM)
    return (w1, b1, w2, b2, w3, b3)


def _reference(x, params):
    w1, b1, w2, b2, w3, b3 = params
    h = x.reshape(x.shape[0], -1).astype(jnp.float32)
    h = jnp.maximum(h @ w1 + b1, 0.0)
    h = jnp.maximum(h @ w2 + b2, 0.0)
    return h @ w3 + b3


if __name__ == "__main__":
    key = jax.random.PRNGKey(0)
    k_param, k_x = jax.random.split(key)
    params = init_params(k_param)
    padded_params = prepare_params(params)

    # Small batch; spatial dims are dictated by the module (28x28 Fashion-MNIST, 1 channel).
    x = jax.random.normal(k_x, (2, 1, 28, 28), dtype=jnp.float32)

    out = fashion_mnist_forward(x, padded_params)
    out = jax.block_until_ready(out)

    ref = _reference(x, params)
    assert out.shape == (2, OUT_DIM)
    # bf16 weights/activations -> loosened tolerance vs. the pure-f32 reference.
    assert jnp.allclose(out, ref, atol=2e-2, rtol=2e-2), "mismatch vs pure-JAX reference"

    print("KERNEL_OK")
</pallas_src>

<mosaic_0001>
module attributes {stable_mosaic.version = 11 : i64} {
  func.func @_mlp_kernel(%arg0: i32, %arg1: memref<16x784xf32, #tpu.memory_space<vmem>>, %arg2: memref<784x1024xbf16, #tpu.memory_space<vmem>>, %arg3: memref<1x1024xf32, #tpu.memory_space<vmem>>, %arg4: memref<1024x1024xbf16, #tpu.memory_space<vmem>>, %arg5: memref<1x1024xf32, #tpu.memory_space<vmem>>, %arg6: memref<1024x128xbf16, #tpu.memory_space<vmem>>, %arg7: memref<1x128xf32, #tpu.memory_space<vmem>>, %arg8: memref<16x128xf32, #tpu.memory_space<vmem>>) attributes {dimension_semantics = [#tpu.dimension_semantics<arbitrary>], iteration_bounds = array<i64: 1>, scalar_prefetch = 0 : i64, scratch_operands = 0 : i64, tpu.core_type = #tpu.core_type<tc>, window_params = [{transform_indices = @transform_0, window_bounds = array<i64: 16, 784>}, {pipeline_mode = #tpu.pipeline_mode<synchronous>, transform_indices = @transform_1, window_bounds = array<i64: 784, 1024>}, {pipeline_mode = #tpu.pipeline_mode<synchronous>, transform_indices = @transform_2, window_bounds = array<i64: 1, 1024>}, {pipeline_mode = #tpu.pipeline_mode<synchronous>, transform_indices = @transform_3, window_bounds = array<i64: 1024, 1024>}, {pipeline_mode = #tpu.pipeline_mode<synchronous>, transform_indices = @transform_4, window_bounds = array<i64: 1, 1024>}, {pipeline_mode = #tpu.pipeline_mode<synchronous>, transform_indices = @transform_5, window_bounds = array<i64: 1024, 128>}, {pipeline_mode = #tpu.pipeline_mode<synchronous>, transform_indices = @transform_6, window_bounds = array<i64: 1, 128>}, {transform_indices = @transform_7, window_bounds = array<i64: 16, 128>}]} {
    %c0 = arith.constant 0 : index
    %c0_0 = arith.constant 0 : index
    %0 = vector.load %arg1[%c0, %c0_0] : memref<16x784xf32, #tpu.memory_space<vmem>>, vector<16x784xf32>
    %1 = arith.truncf %0 : vector<16x784xf32> to vector<16x784xbf16>
    %c0_1 = arith.constant 0 : index
    %c0_2 = arith.constant 0 : index
    %2 = vector.load %arg2[%c0_1, %c0_2] : memref<784x1024xbf16, #tpu.memory_space<vmem>>, vector<784x1024xbf16>
    %cst = arith.constant dense<0.000000e+00> : vector<16x1024xf32>
    %3 = tpu.matmul %1, %2, %cst {dimension_numbers = #tpu.dot_dimension_numbers<[1], [0], [0], [1], [0, 0, 1, 1], [], []>} : vector<16x784xbf16>, vector<784x1024xbf16>, vector<16x1024xf32> -> vector<16x1024xf32>
    %c0_3 = arith.constant 0 : index
    %c0_4 = arith.constant 0 : index
    %4 = vector.load %arg3[%c0_3, %c0_4] : memref<1x1024xf32, #tpu.memory_space<vmem>>, vector<1x1024xf32>
    %5 = vector.broadcast %4 : vector<1x1024xf32> to vector<16x1024xf32>
    %6 = arith.addf %3, %5 : vector<16x1024xf32>
    %cst_5 = arith.constant 0.000000e+00 : f32
    %7 = vector.broadcast %cst_5 : f32 to vector<16x1024xf32>
    %8 = arith.maximumf %6, %7 : vector<16x1024xf32>
    %9 = arith.truncf %8 : vector<16x1024xf32> to vector<16x1024xbf16>
    %c0_6 = arith.constant 0 : index
    %c0_7 = arith.constant 0 : index
    %10 = vector.load %arg4[%c0_6, %c0_7] : memref<1024x1024xbf16, #tpu.memory_space<vmem>>, vector<1024x1024xbf16>
    %cst_8 = arith.constant dense<0.000000e+00> : vector<16x1024xf32>
    %11 = tpu.matmul %9, %10, %cst_8 {dimension_numbers = #tpu.dot_dimension_numbers<[1], [0], [0], [1], [0, 0, 1, 1], [], []>} : vector<16x1024xbf16>, vector<1024x1024xbf16>, vector<16x1024xf32> -> vector<16x1024xf32>
    %c0_9 = arith.constant 0 : index
    %c0_10 = arith.constant 0 : index
    %12 = vector.load %arg5[%c0_9, %c0_10] : memref<1x1024xf32, #tpu.memory_space<vmem>>, vector<1x1024xf32>
    %13 = vector.broadcast %12 : vector<1x1024xf32> to vector<16x1024xf32>
    %14 = arith.addf %11, %13 : vector<16x1024xf32>
    %cst_11 = arith.constant 0.000000e+00 : f32
    %15 = vector.broadcast %cst_11 : f32 to vector<16x1024xf32>
    %16 = arith.maximumf %14, %15 : vector<16x1024xf32>
    %17 = arith.truncf %16 : vector<16x1024xf32> to vector<16x1024xbf16>
    %c0_12 = arith.constant 0 : index
    %c0_13 = arith.constant 0 : index
    %18 = vector.load %arg6[%c0_12, %c0_13] : memref<1024x128xbf16, #tpu.memory_space<vmem>>, vector<1024x128xbf16>
    %cst_14 = arith.constant dense<0.000000e+00> : vector<16x128xf32>
    %19 = tpu.matmul %17, %18, %cst_14 {dimension_numbers = #tpu.dot_dimension_numbers<[1], [0], [0], [1], [0, 0, 1, 1], [], []>} : vector<16x1024xbf16>, vector<1024x128xbf16>, vector<16x128xf32> -> vector<16x128xf32>
    %c0_15 = arith.constant 0 : index
    %c0_16 = arith.constant 0 : index
    %20 = vector.load %arg7[%c0_15, %c0_16] : memref<1x128xf32, #tpu.memory_space<vmem>>, vector<1x128xf32>
    %21 = vector.broadcast %20 : vector<1x128xf32> to vector<16x128xf32>
    %22 = arith.addf %19, %21 : vector<16x128xf32>
    %c0_17 = arith.constant 0 : index
    %c0_18 = arith.constant 0 : index
    %23 = vector.load %arg8[%c0_17, %c0_18] : memref<16x128xf32, #tpu.memory_space<vmem>>, vector<16x128xf32>
    tpu.vector_store %arg8[%c0_17, %c0_18], %22 {strides = array<i32>} : memref<16x128xf32, #tpu.memory_space<vmem>>, vector<16x128xf32>,
    return
  }
  func.func @transform_0(%arg0: i32) -> (i32, i32) {
    %c0_i32 = arith.constant 0 : i32
    %c0_i32_0 = arith.constant 0 : i32
    return %arg0, %c0_i32 : i32, i32
  }
  func.func @transform_1(%arg0: i32) -> (i32, i32) {
    %c0_i32 = arith.constant 0 : i32
    %c0_i32_0 = arith.constant 0 : i32
    %c0_i32_1 = arith.constant 0 : i32
    return %c0_i32, %c0_i32_0 : i32, i32
  }
  func.func @transform_2(%arg0: i32) -> (i32, i32) {
    %c0_i32 = arith.constant 0 : i32
    %c0_i32_0 = arith.constant 0 : i32
    %c0_i32_1 = arith.constant 0 : i32
    return %c0_i32, %c0_i32_0 : i32, i32
  }
  func.func @transform_3(%arg0: i32) -> (i32, i32) {
    %c0_i32 = arith.constant 0 : i32
    %c0_i32_0 = arith.constant 0 : i32
    %c0_i32_1 = arith.constant 0 : i32
    return %c0_i32, %c0_i32_0 : i32, i32
  }
  func.func @transform_4(%arg0: i32) -> (i32, i32) {
    %c0_i32 = arith.constant 0 : i32
    %c0_i32_0 = arith.constant 0 : i32
    %c0_i32_1 = arith.constant 0 : i32
    return %c0_i32, %c0_i32_0 : i32, i32
  }
  func.func @transform_5(%arg0: i32) -> (i32, i32) {
    %c0_i32 = arith.constant 0 : i32
    %c0_i32_0 = arith.constant 0 : i32
    %c0_i32_1 = arith.constant 0 : i32
    return %c0_i32, %c0_i32_0 : i32, i32
  }
  func.func @transform_6(%arg0: i32) -> (i32, i32) {
    %c0_i32 = arith.constant 0 : i32
    %c0_i32_0 = arith.constant 0 : i32
    %c0_i32_1 = arith.constant 0 : i32
    return %c0_i32, %c0_i32_0 : i32, i32
  }
  func.func @transform_7(%arg0: i32) -> (i32, i32) {
    %c0_i32 = arith.constant 0 : i32
    %c0_i32_0 = arith.constant 0 : i32
    return %arg0, %c0_i32 : i32, i32
  }
}

</mosaic_0001>

<llo_original>
// kernel: tpu_custom_call.1
$region0: #{tpu_custom_call.1}
  #allocation0 [shape = 'u32[]', space=smem, size = 0x4, offset = 0x4, fixed_abs, tag = 'smem constant byte address 0x4 - core index']
  #allocation1 [shape = 'u32[72,128]{1,0:T(1,128)}', space=vmem, size = 0x9000, scoped, tag = 'internal scratch']
  %s0 = inlined_call_operand.hbm [shape: f32[16,784], index: 0, kind: input, shape index: {}]
  %s1 = inlined_call_operand.hbm [shape: bf16[784,1024], index: 1, kind: input, shape index: {}]
  %s2 = inlined_call_operand.hbm [shape: f32[1,1024], index: 2, kind: input, shape index: {}]
  %s3 = inlined_call_operand.hbm [shape: bf16[1024,1024], index: 3, kind: input, shape index: {}]
  %s4 = inlined_call_operand.hbm [shape: f32[1,1024], index: 4, kind: input, shape index: {}]
  %s5 = inlined_call_operand.hbm [shape: bf16[1024,128], index: 5, kind: input, shape index: {}]
  %s6 = inlined_call_operand.hbm [shape: f32[1,128], index: 6, kind: input, shape index: {}]
  %s7 = inlined_call_operand.hbm [shape: f32[16,128], index: 7, kind: output, shape index: {}]
  %s8 = sld [smem:[#allocation0]]
  $region66: #{tpu_custom_call.1} parent=0
    _
  %s10 = ssub.s32 1, %s8
  %s11 = scalar_select 0, %s10, %s8
  $region1: #{tpu_custom_call.1} parent=0
    #allocation2 [shape = 'u8[57344]{0}', space=vmem, size = 0xe000, scoped, tag = 'input window, operand 0, single buffered']
    #allocation3 [shape = 's32[1]{0}', space=sflag, size = 0x4, scoped, tag = 'scoped memory for tpu_custom_call.1']
    #allocation4 [shape = 's32[1]{0}', space=sflag, size = 0x4, scoped, tag = 'scoped memory for tpu_custom_call.1']
    #allocation5 [shape = 'u8[1605632]{0}', space=vmem, size = 0x188000, scoped, tag = 'input window, operand 1, single buffered']
    #allocation6 [shape = 's32[1]{0}', space=sflag, size = 0x4, scoped, tag = 'scoped memory for tpu_custom_call.1']
    #allocation7 [shape = 'u8[4096]{0}', space=vmem, size = 0x1000, scoped, tag = 'input window, operand 2, single buffered']
    #allocation8 [shape = 'u8[2097152]{0}', space=vmem, size = 0x200000, scoped, tag = 'input window, operand 3, single buffered']
    #allocation9 [shape = 's32[1]{0}', space=sflag, size = 0x4, scoped, tag = 'scoped memory for tpu_custom_call.1']
    #allocation10 [shape = 'u8[4096]{0}', space=vmem, size = 0x1000, scoped, tag = 'input window, operand 4, single buffered']
    #allocation11 [shape = 'u8[262144]{0}', space=vmem, size = 0x40000, scoped, tag = 'input window, operand 5, single buffered']
    #allocation12 [shape = 's32[1]{0}', space=sflag, size = 0x4, scoped, tag = 'scoped memory for tpu_custom_call.1']
    #allocation13 [shape = 'u8[512]{0}', space=vmem, size = 0x400, scoped, tag = 'input window, operand 6, single buffered']
    #allocation14 [shape = 'u8[8192]{0}', space=vmem, size = 0x2000, scoped, tag = 'output window, operand 0, single buffered']
    %12 = vsyncpa [#allocation3], 0
    %13 = vsyncpa [#allocation6], 0
    %14 = vsyncpa [#allocation9], 0
    %15 = vsyncpa [#allocation12], 0
    %16 = vsyncpa [#allocation4], 0
    // Predicated region
    $region2: #{tpu_custom_call.1} parent=1 // pred_check
      _
    $region3: #{tpu_custom_call.1} parent=1 // pred_check_branch
      %18 = sbr.rel (0) target = $region5
    $region4: #{tpu_custom_call.1} parent=1 // pred_region
      %20 = vsyncadd [#allocation3], 0
      %s21 = sshll.u32 %s0, 4
      %s22 = int_to_ptr.hbm [resolvable:$true] %s21
      %s23 = sshll.u32 [#allocation2], 4
      %s24 = int_to_ptr.vmem [resolvable:$true] %s23
      %29 = dma.hbm_to_vmem [thread:$0]  %s22, 1792, %s24, [#allocation3], 896, 896, 56
    $region5: #{tpu_custom_call.1} parent=1 // pred_fallthru
      _
    // Predicated region
    $region6: #{tpu_custom_call.1} parent=1 // pred_check
      _
    $region7: #{tpu_custom_call.1} parent=1 // pred_check_branch
      %31 = sbr.rel (0) target = $region9
    $region8: #{tpu_custom_call.1} parent=1 // pred_region
      %33 = vsyncadd [#allocation6], 0
      %s34 = sshll.u32 %s1, 4
      %s35 = int_to_ptr.hbm [resolvable:$true] %s34
      %s36 = sshll.u32 [#allocation5], 4
      %s37 = int_to_ptr.vmem [resolvable:$true] %s36
      %42 = dma.hbm_to_vmem [thread:$0]  %s35, 50176, %s37, [#allocation6], 512, 512, 32
    $region9: #{tpu_custom_call.1} parent=1 // pred_fallthru
      _
    // Predicated region
    $region10: #{tpu_custom_call.1} parent=1 // pred_check
      _
    $region11: #{tpu_custom_call.1} parent=1 // pred_check_branch
      %44 = sbr.rel (0) target = $region13
    $region12: #{tpu_custom_call.1} parent=1 // pred_region
      %46 = vsyncadd [#allocation6], 0
      %s48 = sshll.u32 %s2, 4
      %s49 = int_to_ptr.hbm [resolvable:$true] %s48
      %s50 = sshll.u32 [#allocation7], 4
      %s51 = int_to_ptr.vmem [resolvable:$true] %s50
      %53 = dma.hbm_to_vmem [thread:$0]  %s49, 128, %s51, [#allocation6]
    $region13: #{tpu_custom_call.1} parent=1 // pred_fallthru
      _
    // Predicated region
    $region14: #{tpu_custom_call.1} parent=1 // pred_check
      _
    $region15: #{tpu_custom_call.1} parent=1 // pred_check_branch
      %55 = sbr.rel (0) target = $region17
    $region16: #{tpu_custom_call.1} parent=1 // pred_region
      %57 = vsyncadd [#allocation9], 0
      %s58 = sshll.u32 %s3, 4
      %s59 = int_to_ptr.hbm [resolvable:$true] %s58
      %s60 = sshll.u32 [#allocation8], 4
      %s61 = int_to_ptr.vmem [resolvable:$true] %s60
      %66 = dma.hbm_to_vmem [thread:$0]  %s59, 65536, %s61, [#allocation9], 512, 512, 32
    $region17: #{tpu_custom_call.1} parent=1 // pred_fallthru
      _
    // Predicated region
    $region18: #{tpu_custom_call.1} parent=1 // pred_check
      _
    $region19: #{tpu_custom_call.1} parent=1 // pred_check_branch
      %68 = sbr.rel (0) target = $region21
    $region20: #{tpu_custom_call.1} parent=1 // pred_region
      %70 = vsyncadd [#allocation9], 0
      %s72 = sshll.u32 %s4, 4
      %s73 = int_to_ptr.hbm [resolvable:$true] %s72
      %s74 = sshll.u32 [#allocation10], 4
      %s75 = int_to_ptr.vmem [resolvable:$true] %s74
      %77 = dma.hbm_to_vmem [thread:$0]  %s73, 128, %s75, [#allocation9]
    $region21: #{tpu_custom_call.1} parent=1 // pred_fallthru
      _
    // Predicated region
    $region22: #{tpu_custom_call.1} parent=1 // pred_check
      _
    $region23: #{tpu_custom_call.1} parent=1 // pred_check_branch
      %79 = sbr.rel (0) target = $region25
    $region24: #{tpu_custom_call.1} parent=1 // pred_region
      %81 = vsyncadd [#allocation12], 0
      %s82 = sshll.u32 %s5, 4
      %s83 = int_to_ptr.hbm [resolvable:$true] %s82
      %s84 = sshll.u32 [#allocation11], 4
      %s85 = int_to_ptr.vmem [resolvable:$true] %s84
      %90 = dma.hbm_to_vmem [thread:$0]  %s83, 8192, %s85, [#allocation12], 64, 64, 4
    $region25: #{tpu_custom_call.1} parent=1 // pred_fallthru
      _
    // Predicated region
    $region26: #{tpu_custom_call.1} parent=1 // pred_check
      _
    $region27: #{tpu_custom_call.1} parent=1 // pred_check_branch
      %92 = sbr.rel (0) target = $region29
    $region28: #{tpu_custom_call.1} parent=1 // pred_region
      %94 = vsyncadd [#allocation12], 0
      %s96 = sshll.u32 %s6, 4
      %s97 = int_to_ptr.hbm [resolvable:$true] %s96
      %s98 = sshll.u32 [#allocation13], 4
      %s99 = int_to_ptr.vmem [resolvable:$true] %s98
      %101 = dma.hbm_to_vmem [thread:$0]  %s97, 16, %s99, [#allocation12]
    $region29: #{tpu_custom_call.1} parent=1 // pred_fallthru
      _
    // Predicated region
    $region30: #{tpu_custom_call.1} parent=1 // pred_check
      _
    $region31: #{tpu_custom_call.1} parent=1 // pred_check_branch
      %103 = sbr.rel (0) target = $region33
    $region32: #{tpu_custom_call.1} parent=1 // pred_region
      %105 = dma.done [#allocation3], 1792
    $region33: #{tpu_custom_call.1} parent=1 // pred_fallthru
      _
    // Predicated region
    $region34: #{tpu_custom_call.1} parent=1 // pred_check
      _
    $region35: #{tpu_custom_call.1} parent=1 // pred_check_branch
      %107 = sbr.rel (0) target = $region37
    $region36: #{tpu_custom_call.1} parent=1 // pred_region
      %109 = dma.done [#allocation6], 50176
    $region37: #{tpu_custom_call.1} parent=1 // pred_fallthru
      _
    // Predicated region
    $region38: #{tpu_custom_call.1} parent=1 // pred_check
      _
    $region39: #{tpu_custom_call.1} parent=1 // pred_check_branch
      %111 = sbr.rel (0) target = $region41
    $region40: #{tpu_custom_call.1} parent=1 // pred_region
      %113 = dma.done [#allocation6], 128
    $region41: #{tpu_custom_call.1} parent=1 // pred_fallthru
      _
    // Predicated region
    $region42: #{tpu_custom_call.1} parent=1 // pred_check
      _
    $region43: #{tpu_custom_call.1} parent=1 // pred_check_branch
      %115 = sbr.rel (0) target = $region45
    $region44: #{tpu_custom_call.1} parent=1 // pred_region
      %117 = dma.done [#allocation9], 65536
    $region45: #{tpu_custom_call.1} parent=1 // pred_fallthru
      _
    // Predicated region
    $region46: #{tpu_custom_call.1} parent=1 // pred_check
      _
    $region47: #{tpu_custom_call.1} parent=1 // pred_check_branch
      %119 = sbr.rel (0) target = $region49
    $region48: #{tpu_custom_call.1} parent=1 // pred_region
      %121 = dma.done [#allocation9], 128
    $region49: #{tpu_custom_call.1} parent=1 // pred_fallthru
      _
    // Predicated region
    $region50: #{tpu_custom_call.1} parent=1 // pred_check
      _
    $region51: #{tpu_custom_call.1} parent=1 // pred_check_branch
      %123 = sbr.rel (0) target = $region53
    $region52: #{tpu_custom_call.1} parent=1 // pred_region
      %125 = dma.done [#allocation12], 8192
    $region53: #{tpu_custom_call.1} parent=1 // pred_fallthru
      _
    // Predicated region
    $region54: #{tpu_custom_call.1} parent=1 // pred_check
      _
    $region55: #{tpu_custom_call.1} parent=1 // pred_check_branch
      %127 = sbr.rel (0) target = $region57
    $region56: #{tpu_custom_call.1} parent=1 // pred_region
      %129 = dma.done [#allocation12], 16
    $region57: #{tpu_custom_call.1} parent=1 // pred_fallthru
      _
    %v131 = vld [vmem:[#allocation2] sm:$0xff]
    %v132 = vld [vmem:[#allocation2 + $0x8] sm:$0xff]
    %v133 = vld [vmem:[#allocation2 + $0x10] sm:$0xff]
    %v134 = vld [vmem:[#allocation2 + $0x18] sm:$0xff]
    %v135 = vld [vmem:[#allocation2 + $0x20] sm:$0xff]
    %v136 = vld [vmem:[#allocation2 + $0x28] sm:$0xff]
    %v137 = vld [vmem:[#allocation2 + $0x30] sm:$0xff]
    %v138 = vld [vmem:[#allocation2 + $0x38] sm:$0xff]
    %v139 = vld [vmem:[#allocation2 + $0x40] sm:$0xff]
    %v140 = vld [vmem:[#allocation2 + $0x48] sm:$0xff]
    %v141 = vld [vmem:[#allocation2 + $0x50] sm:$0xff]
    %v142 = vld [vmem:[#allocation2 + $0x58] sm:$0xff]
    %v143 = vld [vmem:[#allocation2 + $0x60] sm:$0xff]
    %v144 = vld [vmem:[#allocation2 + $0x68] sm:$0xff]
    %v145 = vpack.c.bf16 %v138, %v131
    %v146 = vpack.c.bf16 %v139, %v132
    %v147 = vpack.c.bf16 %v140, %v133
    %v148 = vpack.c.bf16 %v141, %v134
    %v149 = vpack.c.bf16 %v142, %v135
    %v150 = vpack.c.bf16 %v143, %v136
    %v151 = vpack.c.bf16 %v144, %v137
    %v152 = vld [vmem:[#allocation5] sm:$0xff]
    %v153 = vld [vmem:[#allocation5 + $0x8] sm:$0xff]
    %v154 = vld [vmem:[#allocation5 + $0x10] sm:$0xff]
    %v155 = vld [vmem:[#allocation5 + $0x18] sm:$0xff]
    %v156 = vld [vmem:[#allocation5 + $0x20] sm:$0xff]
    %v157 = vld [vmem:[#allocation5 + $0x28] sm:$0xff]
    %v158 = vld [vmem:[#allocation5 + $0x30] sm:$0xff]
    %v159 = vld [vmem:[#allocation5 + $0x38] sm:$0xff]
    %v160 = vld [vmem:[#allocation5 + $0x40] sm:$0xff]
    %v161 = vld [vmem:[#allocation5 + $0x48] sm:$0xff]
    %v162 = vld [vmem:[#allocation5 + $0x50] sm:$0xff]
    %v163 = vld [vmem:[#allocation5 + $0x58] sm:$0xff]
    %v164 = vld [vmem:[#allocation5 + $0x60] sm:$0xff]
    %v165 = vld [vmem:[#allocation5 + $0x68] sm:$0xff]
    %v166 = vld [vmem:[#allocation5 + $0x70] sm:$0xff]
    %v167 = vld [vmem:[#allocation5 + $0x78] sm:$0xff]
    %v168 = vld [vmem:[#allocation5 + $0x80] sm:$0xff]
    %v169 = vld [vmem:[#allocation5 + $0x88] sm:$0xff]
    %v170 = vld [vmem:[#allocation5 + $0x90] sm:$0xff]
    %v171 = vld [vmem:[#allocation5 + $0x98] sm:$0xff]
    %v172 = vld [vmem:[#allocation5 + $0xa0] sm:$0xff]
    %v173 = vld [vmem:[#allocation5 + $0xa8] sm:$0xff]
    %v174 = vld [vmem:[#allocation5 + $0xb0] sm:$0xff]
    %v175 = vld [vmem:[#allocation5 + $0xb8] sm:$0xff]
    %v176 = vld [vmem:[#allocation5 + $0xc0] sm:$0xff]
    %v177 = vld [vmem:[#allocation5 + $0xc8] sm:$0xff]
    %v178 = vld [vmem:[#allocation5 + $0xd0] sm:$0xff]
    %v179 = vld [vmem:[#allocation5 + $0xd8] sm:$0xff]
    %v180 = vld [vmem:[#allocation5 + $0xe0] sm:$0xff]
    %v181 = vld [vmem:[#allocation5 + $0xe8] sm:$0xff]
    %v182 = vld [vmem:[#allocation5 + $0xf0] sm:$0xff]
    %v183 = vld [vmem:[#allocation5 + $0xf8] sm:$0xff]
    %v184 = vld [vmem:[#allocation5 + $0x100] sm:$0xff]
    %v185 = vld [vmem:[#allocation5 + $0x108] sm:$0xff]
    %v186 = vld [vmem:[#allocation5 + $0x110] sm:$0xff]
    %v187 = vld [vmem:[#allocation5 + $0x118] sm:$0xff]
    %v188 = vld [vmem:[#allocation5 + $0x120] sm:$0xff]
    %v189 = vld [vmem:[#allocation5 + $0x128] sm:$0xff]
    %v190 = vld [vmem:[#allocation5 + $0x130] sm:$0xff]
    %v191 = vld [vmem:[#allocation5 + $0x138] sm:$0xff]
    %v192 = vld [vmem:[#allocation5 + $0x140] sm:$0xff]
    %v193 = vld [vmem:[#allocation5 + $0x148] sm:$0xff]
    %v194 = vld [vmem:[#allocation5 + $0x150] sm:$0xff]
    %v195 = vld [vmem:[#allocation5 + $0x158] sm:$0xff]
    %v196 = vld [vmem:[#allocation5 + $0x160] sm:$0xff]
    %v197 = vld [vmem:[#allocation5 + $0x168] sm:$0xff]
    %v198 = vld [vmem:[#allocation5 + $0x170] sm:$0xff]
    %v199 = vld [vmem:[#allocation5 + $0x178] sm:$0xff]
    %v200 = vld [vmem:[#allocation5 + $0x180] sm:$0xff]
    %v201 = vld [vmem:[#allocation5 + $0x188] sm:$0xff]
    %v202 = vld [vmem:[#allocation5 + $0x190] sm:$0xff]
    %v203 = vld [vmem:[#allocation5 + $0x198] sm:$0xff]
    %v204 = vld [vmem:[#allocation5 + $0x1a0] sm:$0xff]
    %v205 = vld [vmem:[#allocation5 + $0x1a8] sm:$0xff]
    %v206 = vld [vmem:[#allocation5 + $0x1b0] sm:$0xff]
    %v207 = vld [vmem:[#allocation5 + $0x1b8] sm:$0xff]
    %v208 = vld [vmem:[#allocation5 + $0x1c0] sm:$0xff]
    %v209 = vld [vmem:[#allocation5 + $0x1c8] sm:$0xff]
    %v210 = vld [vmem:[#allocation5 + $0x1d0] sm:$0xff]
    %v211 = vld [vmem:[#allocation5 + $0x1d8] sm:$0xff]
    %v212 = vld [vmem:[#allocation5 + $0x1e0] sm:$0xff]
    %v213 = vld [vmem:[#allocation5 + $0x1e8] sm:$0xff]
    %v214 = vld [vmem:[#allocation5 + $0x1f0] sm:$0xff]
    %v215 = vld [vmem:[#allocation5 + $0x1f8] sm:$0xff]
    %v216 = vld [vmem:[#allocation5 + $0x200] sm:$0xff]
    %v217 = vld [vmem:[#allocation5 + $0x208] sm:$0xff]
    %v218 = vld [vmem:[#allocation5 + $0x210] sm:$0xff]
    %v219 = vld [vmem:[#allocation5 + $0x218] sm:$0xff]
    %v220 = vld [vmem:[#allocation5 + $0x220] sm:$0xff]
    %v221 = vld [vmem:[#allocation5 + $0x228] sm:$0xff]
    %v222 = vld [vmem:[#allocation5 + $0x230] sm:$0xff]
    %v223 = vld [vmem:[#allocation5 + $0x238] sm:$0xff]
    %v224 = vld [vmem:[#allocation5 + $0x240] sm:$0xff]
    %v225 = vld [vmem:[#allocation5 + $0x248] sm:$0xff]
    %v226 = vld [vmem:[#allocation5 + $0x250] sm:$0xff]
    %v227 = vld [vmem:[#allocation5 + $0x258] sm:$0xff]
    %v228 = vld [vmem:[#allocation5 + $0x260] sm:$0xff]
    %v229 = vld [vmem:[#allocation5 + $0x268] sm:$0xff]
    %v230 = vld [vmem:[#allocation5 + $0x270] sm:$0xff]
    %v231 = vld [vmem:[#allocation5 + $0x278] sm:$0xff]
    %v232 = vld [vmem:[#allocation5 + $0x280] sm:$0xff]
    %v233 = vld [vmem:[#allocation5 + $0x288] sm:$0xff]
    %v234 = vld [vmem:[#allocation5 + $0x290] sm:$0xff]
    %v235 = vld [vmem:[#allocation5 + $0x298] sm:$0xff]
    %v236 = vld [vmem:[#allocation5 + $0x2a0] sm:$0xff]
    %v237 = vld [vmem:[#allocation5 + $0x2a8] sm:$0xff]
    %v238 = vld [vmem:[#allocation5 + $0x2b0] sm:$0xff]
    %v239 = vld [vmem:[#allocation5 + $0x2b8] sm:$0xff]
    %v240 = vld [vmem:[#allocation5 + $0x2c0] sm:$0xff]
    %v241 = vld [vmem:[#allocation5 + $0x2c8] sm:$0xff]
    %v242 = vld [vmem:[#allocation5 + $0x2d0] sm:$0xff]
    %v243 = vld [vmem:[#allocation5 + $0x2d8] sm:$0xff]
    %v244 = vld [vmem:[#allocation5 + $0x2e0] sm:$0xff]
    %v245 = vld [vmem:[#allocation5 + $0x2e8] sm:$0xff]
    %v246 = vld [vmem:[#allocation5 + $0x2f0] sm:$0xff]
    %v247 = vld [vmem:[#allocation5 + $0x2f8] sm:$0xff]
    %v248 = vld [vmem:[#allocation5 + $0x300] sm:$0xff]
    %v249 = vld [vmem:[#allocation5 + $0x308] sm:$0xff]
    %v250 = vld [vmem:[#allocation5 + $0x310] sm:$0xff]
    %v251 = vld [vmem:[#allocation5 + $0x318] sm:$0xff]
    %v252 = vld [vmem:[#allocation5 + $0x320] sm:$0xff]
    %v253 = vld [vmem:[#allocation5 + $0x328] sm:$0xff]
    %v254 = vld [vmem:[#allocation5 + $0x330] sm:$0xff]
    %v255 = vld [vmem:[#allocation5 + $0x338] sm:$0xff]
    %v256 = vld [vmem:[#allocation5 + $0x340] sm:$0xff]
    %v257 = vld [vmem:[#allocation5 + $0x348] sm:$0xff]
    %v258 = vld [vmem:[#allocation5 + $0x350] sm:$0xff]
    %v259 = vld [vmem:[#allocation5 + $0x358] sm:$0xff]
    %v260 = vld [vmem:[#allocation5 + $0x360] sm:$0xff]
    %v261 = vld [vmem:[#allocation5 + $0x368] sm:$0xff]
    %v262 = vld [vmem:[#allocation5 + $0x370] sm:$0xff]
    %v263 = vld [vmem:[#allocation5 + $0x378] sm:$0xff]
    %v264 = vld [vmem:[#allocation5 + $0x380] sm:$0xff]
    %v265 = vld [vmem:[#allocation5 + $0x388] sm:$0xff]
    %v266 = vld [vmem:[#allocation5 + $0x390] sm:$0xff]
    %v267 = vld [vmem:[#allocation5 + $0x398] sm:$0xff]
    %v268 = vld [vmem:[#allocation5 + $0x3a0] sm:$0xff]
    %v269 = vld [vmem:[#allocation5 + $0x3a8] sm:$0xff]
    %v270 = vld [vmem:[#allocation5 + $0x3b0] sm:$0xff]
    %v271 = vld [vmem:[#allocation5 + $0x3b8] sm:$0xff]
    %v272 = vld [vmem:[#allocation5 + $0x3c0] sm:$0xff]
    %v273 = vld [vmem:[#allocation5 + $0x3c8] sm:$0xff]
    %v274 = vld [vmem:[#allocation5 + $0x3d0] sm:$0xff]
    %v275 = vld [vmem:[#allocation5 + $0x3d8] sm:$0xff]
    %v276 = vld [vmem:[#allocation5 + $0x3e0] sm:$0xff]
    %v277 = vld [vmem:[#allocation5 + $0x3e8] sm:$0xff]
    %v278 = vld [vmem:[#allocation5 + $0x3f0] sm:$0xff]
    %v279 = vld [vmem:[#allocation5 + $0x3f8] sm:$0xff]
    %v280 = vld [vmem:[#allocation5 + $0x400] sm:$0xff]
    %v281 = vld [vmem:[#allocation5 + $0x408] sm:$0xff]
    %v282 = vld [vmem:[#allocation5 + $0x410] sm:$0xff]
    %v283 = vld [vmem:[#allocation5 + $0x418] sm:$0xff]
    %v284 = vld [vmem:[#allocation5 + $0x420] sm:$0xff]
    %v285 = vld [vmem:[#allocation5 + $0x428] sm:$0xff]
    %v286 = vld [vmem:[#allocation5 + $0x430] sm:$0xff]
    %v287 = vld [vmem:[#allocation5 + $0x438] sm:$0xff]
    %v288 = vld [vmem:[#allocation5 + $0x440] sm:$0xff]
    %v289 = vld [vmem:[#allocation5 + $0x448] sm:$0xff]
    %v290 = vld [vmem:[#allocation5 + $0x450] sm:$0xff]
    %v291 = vld [vmem:[#allocation5 + $0x458] sm:$0xff]
    %v292 = vld [vmem:[#allocation5 + $0x460] sm:$0xff]
    %v293 = vld [vmem:[#allocation5 + $0x468] sm:$0xff]
    %v294 = vld [vmem:[#allocation5 + $0x470] sm:$0xff]
    %v295 = vld [vmem:[#allocation5 + $0x478] sm:$0xff]
    %v296 = vld [vmem:[#allocation5 + $0x480] sm:$0xff]
    %v297 = vld [vmem:[#allocation5 + $0x488] sm:$0xff]
    %v298 = vld [vmem:[#allocation5 + $0x490] sm:$0xff]
    %v299 = vld [vmem:[#allocation5 + $0x498] sm:$0xff]
    %v300 = vld [vmem:[#allocation5 + $0x4a0] sm:$0xff]
    %v301 = vld [vmem:[#allocation5 + $0x4a8] sm:$0xff]
    %v302 = vld [vmem:[#allocation5 + $0x4b0] sm:$0xff]
    %v303 = vld [vmem:[#allocation5 + $0x4b8] sm:$0xff]
    %v304 = vld [vmem:[#allocation5 + $0x4c0] sm:$0xff]
    %v305 = vld [vmem:[#allocation5 + $0x4c8] sm:$0xff]
    %v306 = vld [vmem:[#allocation5 + $0x4d0] sm:$0xff]
    %v307 = vld [vmem:[#allocation5 + $0x4d8] sm:$0xff]
    %v308 = vld [vmem:[#allocation5 + $0x4e0] sm:$0xff]
    %v309 = vld [vmem:[#allocation5 + $0x4e8] sm:$0xff]
    %v310 = vld [vmem:[#allocation5 + $0x4f0] sm:$0xff]
    %v311 = vld [vmem:[#allocation5 + $0x4f8] sm:$0xff]
    %v312 = vld [vmem:[#allocation5 + $0x500] sm:$0xff]
    %v313 = vld [vmem:[#allocation5 + $0x508] sm:$0xff]
    %v314 = vld [vmem:[#allocation5 + $0x510] sm:$0xff]
    %v315 = vld [vmem:[#allocation5 + $0x518] sm:$0xff]
    %v316 = vld [vmem:[#allocation5 + $0x520] sm:$0xff]
    %v317 = vld [vmem:[#allocation5 + $0x528] sm:$0xff]
    %v318 = vld [vmem:[#allocation5 + $0x530] sm:$0xff]
    %v319 = vld [vmem:[#allocation5 + $0x538] sm:$0xff]
    %v320 = vld [vmem:[#allocation5 + $0x540] sm:$0xff]
    %v321 = vld [vmem:[#allocation5 + $0x548] sm:$0xff]
    %v322 = vld [vmem:[#allocation5 + $0x550] sm:$0xff]
    %v323 = vld [vmem:[#allocation5 + $0x558] sm:$0xff]
    %v324 = vld [vmem:[#allocation5 + $0x560] sm:$0xff]
    %v325 = vld [vmem:[#allocation5 + $0x568] sm:$0xff]
    %v326 = vld [vmem:[#allocation5 + $0x570] sm:$0xff]
    %v327 = vld [vmem:[#allocation5 + $0x578] sm:$0xff]
    %v328 = vld [vmem:[#allocation5 + $0x580] sm:$0xff]
    %v329 = vld [vmem:[#allocation5 + $0x588] sm:$0xff]
    %v330 = vld [vmem:[#allocation5 + $0x590] sm:$0xff]
    %v331 = vld [vmem:[#allocation5 + $0x598] sm:$0xff]
    %v332 = vld [vmem:[#allocation5 + $0x5a0] sm:$0xff]
    %v333 = vld [vmem:[#allocation5 + $0x5a8] sm:$0xff]
    %v334 = vld [vmem:[#allocation5 + $0x5b0] sm:$0xff]
    %v335 = vld [vmem:[#allocation5 + $0x5b8] sm:$0xff]
    %v336 = vld [vmem:[#allocation5 + $0x5c0] sm:$0xff]
    %v337 = vld [vmem:[#allocation5 + $0x5c8] sm:$0xff]
    %v338 = vld [vmem:[#allocation5 + $0x5d0] sm:$0xff]
    %v339 = vld [vmem:[#allocation5 + $0x5d8] sm:$0xff]
    %v340 = vld [vmem:[#allocation5 + $0x5e0] sm:$0xff]
    %v341 = vld [vmem:[#allocation5 + $0x5e8] sm:$0xff]
    %v342 = vld [vmem:[#allocation5 + $0x5f0] sm:$0xff]
    %v343 = vld [vmem:[#allocation5 + $0x5f8] sm:$0xff]
    %v344 = vld [vmem:[#allocation5 + $0x600] sm:$0xff]
    %v345 = vld [vmem:[#allocation5 + $0x608] sm:$0xff]
    %v346 = vld [vmem:[#allocation5 + $0x610] sm:$0xff]
    %v347 = vld [vmem:[#allocation5 + $0x618] sm:$0xff]
    %v348 = vld [vmem:[#allocation5 + $0x620] sm:$0xff]
    %v349 = vld [vmem:[#allocation5 + $0x628] sm:$0xff]
    %v350 = vld [vmem:[#allocation5 + $0x630] sm:$0xff]
    %v351 = vld [vmem:[#allocation5 + $0x638] sm:$0xff]
    %v352 = vld [vmem:[#allocation5 + $0x640] sm:$0xff]
    %v353 = vld [vmem:[#allocation5 + $0x648] sm:$0xff]
    %v354 = vld [vmem:[#allocation5 + $0x650] sm:$0xff]
    %v355 = vld [vmem:[#allocation5 + $0x658] sm:$0xff]
    %v356 = vld [vmem:[#allocation5 + $0x660] sm:$0xff]
    %v357 = vld [vmem:[#allocation5 + $0x668] sm:$0xff]
    %v358 = vld [vmem:[#allocation5 + $0x670] sm:$0xff]
    %v359 = vld [vmem:[#allocation5 + $0x678] sm:$0xff]
    %v360 = vld [vmem:[#allocation5 + $0x680] sm:$0xff]
    %v361 = vld [vmem:[#allocation5 + $0x688] sm:$0xff]
    %v362 = vld [vmem:[#allocation5 + $0x690] sm:$0xff]
    %v363 = vld [vmem:[#allocation5 + $0x698] sm:$0xff]
    %v364 = vld [vmem:[#allocation5 + $0x6a0] sm:$0xff]
    %v365 = vld [vmem:[#allocation5 + $0x6a8] sm:$0xff]
    %v366 = vld [vmem:[#allocation5 + $0x6b0] sm:$0xff]
    %v367 = vld [vmem:[#allocation5 + $0x6b8] sm:$0xff]
    %v368 = vld [vmem:[#allocation5 + $0x6c0] sm:$0xff]
    %v369 = vld [vmem:[#allocation5 + $0x6c8] sm:$0xff]
    %v370 = vld [vmem:[#allocation5 + $0x6d0] sm:$0xff]
    %v371 = vld [vmem:[#allocation5 + $0x6d8] sm:$0xff]
    %v372 = vld [vmem:[#allocation5 + $0x6e0] sm:$0xff]
    %v373 = vld [vmem:[#allocation5 + $0x6e8] sm:$0xff]
    %v374 = vld [vmem:[#allocation5 + $0x6f0] sm:$0xff]
    %v375 = vld [vmem:[#allocation5 + $0x6f8] sm:$0xff]
    %v376 = vld [vmem:[#allocation5 + $0x700] sm:$0xff]
    %v377 = vld [vmem:[#allocation5 + $0x708] sm:$0xff]
    %v378 = vld [vmem:[#allocation5 + $0x710] sm:$0xff]
    %v379 = vld [vmem:[#allocation5 + $0x718] sm:$0xff]
    %v380 = vld [vmem:[#allocation5 + $0x720] sm:$0xff]
    %v381 = vld [vmem:[#allocation5 + $0x728] sm:$0xff]
    %v382 = vld [vmem:[#allocation5 + $0x730] sm:$0xff]
    %v383 = vld [vmem:[#allocation5 + $0x738] sm:$0xff]
    %v384 = vld [vmem:[#allocation5 + $0x740] sm:$0xff]
    %v385 = vld [vmem:[#allocation5 + $0x748] sm:$0xff]
    %v386 = vld [vmem:[#allocation5 + $0x750] sm:$0xff]
    %v387 = vld [vmem:[#allocation5 + $0x758] sm:$0xff]
    %v388 = vld [vmem:[#allocation5 + $0x760] sm:$0xff]
    %v389 = vld [vmem:[#allocation5 + $0x768] sm:$0xff]
    %v390 = vld [vmem:[#allocation5 + $0x770] sm:$0xff]
    %v391 = vld [vmem:[#allocation5 + $0x778] sm:$0xff]
    %v392 = vld [vmem:[#allocation5 + $0x780] sm:$0xff]
    %v393 = vld [vmem:[#allocation5 + $0x788] sm:$0xff]
    %v394 = vld [vmem:[#allocation5 + $0x790] sm:$0xff]
    %v395 = vld [vmem:[#allocation5 + $0x798] sm:$0xff]
    %v396 = vld [vmem:[#allocation5 + $0x7a0] sm:$0xff]
    %v397 = vld [vmem:[#allocation5 + $0x7a8] sm:$0xff]
    %v398 = vld [vmem:[#allocation5 + $0x7b0] sm:$0xff]
    %v399 = vld [vmem:[#allocation5 + $0x7b8] sm:$0xff]
    %v400 = vld [vmem:[#allocation5 + $0x7c0] sm:$0xff]
    %v401 = vld [vmem:[#allocation5 + $0x7c8] sm:$0xff]
    %v402 = vld [vmem:[#allocation5 + $0x7d0] sm:$0xff]
    %v403 = vld [vmem:[#allocation5 + $0x7d8] sm:$0xff]
    %v404 = vld [vmem:[#allocation5 + $0x7e0] sm:$0xff]
    %v405 = vld [vmem:[#allocation5 + $0x7e8] sm:$0xff]
    %v406 = vld [vmem:[#allocation5 + $0x7f0] sm:$0xff]
    %v407 = vld [vmem:[#allocation5 + $0x7f8] sm:$0xff]
    %v408 = vld [vmem:[#allocation5 + $0x800] sm:$0xff]
    %v409 = vld [vmem:[#allocation5 + $0x808] sm:$0xff]
    %v410 = vld [vmem:[#allocation5 + $0x810] sm:$0xff]
    %v411 = vld [vmem:[#allocation5 + $0x818] sm:$0xff]
    %v412 = vld [vmem:[#allocation5 + $0x820] sm:$0xff]
    %v413 = vld [vmem:[#allocation5 + $0x828] sm:$0xff]
    %v414 = vld [vmem:[#allocation5 + $0x830] sm:$0xff]
    %v415 = vld [vmem:[#allocation5 + $0x838] sm:$0xff]
    %v416 = vld [vmem:[#allocation5 + $0x840] sm:$0xff]
    %v417 = vld [vmem:[#allocation5 + $0x848] sm:$0xff]
    %v418 = vld [vmem:[#allocation5 + $0x850] sm:$0xff]
    %v419 = vld [vmem:[#allocation5 + $0x858] sm:$0xff]
    %v420 = vld [vmem:[#allocation5 + $0x860] sm:$0xff]
    %v421 = vld [vmem:[#allocation5 + $0x868] sm:$0xff]
    %v422 = vld [vmem:[#allocation5 + $0x870] sm:$0xff]
    %v423 = vld [vmem:[#allocation5 + $0x878] sm:$0xff]
    %v424 = vld [vmem:[#allocation5 + $0x880] sm:$0xff]
    %v425 = vld [vmem:[#allocation5 + $0x888] sm:$0xff]
    %v426 = vld [vmem:[#allocation5 + $0x890] sm:$0xff]
    %v427 = vld [vmem:[#allocation5 + $0x898] sm:$0xff]
    %v428 = vld [vmem:[#allocation5 + $0x8a0] sm:$0xff]
    %v429 = vld [vmem:[#allocation5 + $0x8a8] sm:$0xff]
    %v430 = vld [vmem:[#allocation5 + $0x8b0] sm:$0xff]
    %v431 = vld [vmem:[#allocation5 + $0x8b8] sm:$0xff]
    %v432 = vld [vmem:[#allocation5 + $0x8c0] sm:$0xff]
    %v433 = vld [vmem:[#allocation5 + $0x8c8] sm:$0xff]
    %v434 = vld [vmem:[#allocation5 + $0x8d0] sm:$0xff]
    %v435 = vld [vmem:[#allocation5 + $0x8d8] sm:$0xff]
    %v436 = vld [vmem:[#allocation5 + $0x8e0] sm:$0xff]
    %v437 = vld [vmem:[#allocation5 + $0x8e8] sm:$0xff]
    %v438 = vld [vmem:[#allocation5 + $0x8f0] sm:$0xff]
    %v439 = vld [vmem:[#allocation5 + $0x8f8] sm:$0xff]
    %v440 = vld [vmem:[#allocation5 + $0x900] sm:$0xff]
    %v441 = vld [vmem:[#allocation5 + $0x908] sm:$0xff]
    %v442 = vld [vmem:[#allocation5 + $0x910] sm:$0xff]
    %v443 = vld [vmem:[#allocation5 + $0x918] sm:$0xff]
    %v444 = vld [vmem:[#allocation5 + $0x920] sm:$0xff]
    %v445 = vld [vmem:[#allocation5 + $0x928] sm:$0xff]
    %v446 = vld [vmem:[#allocation5 + $0x930] sm:$0xff]
    %v447 = vld [vmem:[#allocation5 + $0x938] sm:$0xff]
    %v448 = vld [vmem:[#allocation5 + $0x940] sm:$0xff]
    %v449 = vld [vmem:[#allocation5 + $0x948] sm:$0xff]
    %v450 = vld [vmem:[#allocation5 + $0x950] sm:$0xff]
    %v451 = vld [vmem:[#allocation5 + $0x958] sm:$0xff]
    %v452 = vld [vmem:[#allocation5 + $0x960] sm:$0xff]
    %v453 = vld [vmem:[#allocation5 + $0x968] sm:$0xff]
    %v454 = vld [vmem:[#allocation5 + $0x970] sm:$0xff]
    %v455 = vld [vmem:[#allocation5 + $0x978] sm:$0xff]
    %v456 = vld [vmem:[#allocation5 + $0x980] sm:$0xff]
    %v457 = vld [vmem:[#allocation5 + $0x988] sm:$0xff]
    %v458 = vld [vmem:[#allocation5 + $0x990] sm:$0xff]
    %v459 = vld [vmem:[#allocation5 + $0x998] sm:$0xff]
    %v460 = vld [vmem:[#allocation5 + $0x9a0] sm:$0xff]
    %v461 = vld [vmem:[#allocation5 + $0x9a8] sm:$0xff]
    %v462 = vld [vmem:[#allocation5 + $0x9b0] sm:$0xff]
    %v463 = vld [vmem:[#allocation5 + $0x9b8] sm:$0xff]
    %v464 = vld [vmem:[#allocation5 + $0x9c0] sm:$0xff]
    %v465 = vld [vmem:[#allocation5 + $0x9c8] sm:$0xff]
    %v466 = vld [vmem:[#allocation5 + $0x9d0] sm:$0xff]
    %v467 = vld [vmem:[#allocation5 + $0x9d8] sm:$0xff]
    %v468 = vld [vmem:[#allocation5 + $0x9e0] sm:$0xff]
    %v469 = vld [vmem:[#allocation5 + $0x9e8] sm:$0xff]
    %v470 = vld [vmem:[#allocation5 + $0x9f0] sm:$0xff]
    %v471 = vld [vmem:[#allocation5 + $0x9f8] sm:$0xff]
    %v472 = vld [vmem:[#allocation5 + $0xa00] sm:$0xff]
    %v473 = vld [vmem:[#allocation5 + $0xa08] sm:$0xff]
    %v474 = vld [vmem:[#allocation5 + $0xa10] sm:$0xff]
    %v475 = vld [vmem:[#allocation5 + $0xa18] sm:$0xff]
    %v476 = vld [vmem:[#allocation5 + $0xa20] sm:$0xff]
    %v477 = vld [vmem:[#allocation5 + $0xa28] sm:$0xff]
    %v478 = vld [vmem:[#allocation5 + $0xa30] sm:$0xff]
    %v479 = vld [vmem:[#allocation5 + $0xa38] sm:$0xff]
    %v480 = vld [vmem:[#allocation5 + $0xa40] sm:$0xff]
    %v481 = vld [vmem:[#allocation5 + $0xa48] sm:$0xff]
    %v482 = vld [vmem:[#allocation5 + $0xa50] sm:$0xff]
    %v483 = vld [vmem:[#allocation5 + $0xa58] sm:$0xff]
    %v484 = vld [vmem:[#allocation5 + $0xa60] sm:$0xff]
    %v485 = vld [vmem:[#allocation5 + $0xa68] sm:$0xff]
    %v486 = vld [vmem:[#allocation5 + $0xa70] sm:$0xff]
    %v487 = vld [vmem:[#allocation5 + $0xa78] sm:$0xff]
    %v488 = vld [vmem:[#allocation5 + $0xa80] sm:$0xff]
    %v489 = vld [vmem:[#allocation5 + $0xa88] sm:$0xff]
    %v490 = vld [vmem:[#allocation5 + $0xa90] sm:$0xff]
    %v491 = vld [vmem:[#allocation5 + $0xa98] sm:$0xff]
    %v492 = vld [vmem:[#allocation5 + $0xaa0] sm:$0xff]
    %v493 = vld [vmem:[#allocation5 + $0xaa8] sm:$0xff]
    %v494 = vld [vmem:[#allocation5 + $0xab0] sm:$0xff]
    %v495 = vld [vmem:[#allocation5 + $0xab8] sm:$0xff]
    %v496 = vld [vmem:[#allocation5 + $0xac0] sm:$0xff]
    %v497 = vld [vmem:[#allocation5 + $0xac8] sm:$0xff]
    %v498 = vld [vmem:[#allocation5 + $0xad0] sm:$0xff]
    %v499 = vld [vmem:[#allocation5 + $0xad8] sm:$0xff]
    %v500 = vld [vmem:[#allocation5 + $0xae0] sm:$0xff]
    %v501 = vld [vmem:[#allocation5 + $0xae8] sm:$0xff]
    %v502 = vld [vmem:[#allocation5 + $0xaf0] sm:$0xff]
    %v503 = vld [vmem:[#allocation5 + $0xaf8] sm:$0xff]
    %v504 = vld [vmem:[#allocation5 + $0xb00] sm:$0xff]
    %v505 = vld [vmem:[#allocation5 + $0xb08] sm:$0xff]
    %v506 = vld [vmem:[#allocation5 + $0xb10] sm:$0xff]
    %v507 = vld [vmem:[#allocation5 + $0xb18] sm:$0xff]
    %v508 = vld [vmem:[#allocation5 + $0xb20] sm:$0xff]
    %v509 = vld [vmem:[#allocation5 + $0xb28] sm:$0xff]
    %v510 = vld [vmem:[#allocation5 + $0xb30] sm:$0xff]
    %v511 = vld [vmem:[#allocation5 + $0xb38] sm:$0xff]
    %v512 = vld [vmem:[#allocation5 + $0xb40] sm:$0xff]
    %v513 = vld [vmem:[#allocation5 + $0xb48] sm:$0xff]
    %v514 = vld [vmem:[#allocation5 + $0xb50] sm:$0xff]
    %v515 = vld [vmem:[#allocation5 + $0xb58] sm:$0xff]
    %v516 = vld [vmem:[#allocation5 + $0xb60] sm:$0xff]
    %v517 = vld [vmem:[#allocation5 + $0xb68] sm:$0xff]
    %v518 = vld [vmem:[#allocation5 + $0xb70] sm:$0xff]
    %v519 = vld [vmem:[#allocation5 + $0xb78] sm:$0xff]
    %v520 = vld [vmem:[#allocation5 + $0xb80] sm:$0xff]
    %v521 = vld [vmem:[#allocation5 + $0xb88] sm:$0xff]
    %v522 = vld [vmem:[#allocation5 + $0xb90] sm:$0xff]
    %v523 = vld [vmem:[#allocation5 + $0xb98] sm:$0xff]
    %v524 = vld [vmem:[#allocation5 + $0xba0] sm:$0xff]
    %v525 = vld [vmem:[#allocation5 + $0xba8] sm:$0xff]
    %v526 = vld [vmem:[#allocation5 + $0xbb0] sm:$0xff]
    %v527 = vld [vmem:[#allocation5 + $0xbb8] sm:$0xff]
    %v528 = vld [vmem:[#allocation5 + $0xbc0] sm:$0xff]
    %v529 = vld [vmem:[#allocation5 + $0xbc8] sm:$0xff]
    %v530 = vld [vmem:[#allocation5 + $0xbd0] sm:$0xff]
    %v531 = vld [vmem:[#allocation5 + $0xbd8] sm:$0xff]
    %v532 = vld [vmem:[#allocation5 + $0xbe0] sm:$0xff]
    %v533 = vld [vmem:[#allocation5 + $0xbe8] sm:$0xff]
    %v534 = vld [vmem:[#allocation5 + $0xbf0] sm:$0xff]
    %v535 = vld [vmem:[#allocation5 + $0xbf8] sm:$0xff]
    %v536 = vld [vmem:[#allocation5 + $0xc00] sm:$0xff]
    %v537 = vld [vmem:[#allocation5 + $0xc08] sm:$0xff]
    %v538 = vld [vmem:[#allocation5 + $0xc10] sm:$0xff]
    %v539 = vld [vmem:[#allocation5 + $0xc18] sm:$0xff]
    %v540 = vld [vmem:[#allocation5 + $0xc20] sm:$0xff]
    %v541 = vld [vmem:[#allocation5 + $0xc28] sm:$0xff]
    %v542 = vld [vmem:[#allocation5 + $0xc30] sm:$0xff]
    %v543 = vld [vmem:[#allocation5 + $0xc38] sm:$0xff]
    %v544 = vld [vmem:[#allocation7] sm:$0xff]
    %v546 = vperm.slane %v544, 0
    %v547 = vperm.slane %v544, 1
    %v548 = vperm.slane %v544, 2
    %v549 = vperm.slane %v544, 3
    %v550 = vperm.slane %v544, 4
    %v551 = vperm.slane %v544, 5
    %v552 = vperm.slane %v544, 6
    %v553 = vperm.slane %v544, 7
    %v954 = vunpack.c.l.b16 %v152
    %v955 = vunpack.c.h.b16 %v152
    %v956 = vunpack.c.l.b16 %v153
    %v957 = vunpack.c.h.b16 %v153
    %v958 = vunpack.c.l.b16 %v154
    %v959 = vunpack.c.h.b16 %v154
    %v960 = vunpack.c.l.b16 %v155
    %v961 = vunpack.c.h.b16 %v155
    %v962 = vunpack.c.l.b16 %v156
    %v963 = vunpack.c.h.b16 %v156
    %v964 = vunpack.c.l.b16 %v157
    %v965 = vunpack.c.h.b16 %v157
    %v966 = vunpack.c.l.b16 %v158
    %v967 = vunpack.c.h.b16 %v158
    %v968 = vunpack.c.l.b16 %v159
    %v969 = vunpack.c.h.b16 %v159
    %v970 = vunpack.c.l.b16 %v160
    %v971 = vunpack.c.h.b16 %v160
    %v972 = vunpack.c.l.b16 %v161
    %v973 = vunpack.c.h.b16 %v161
    %v974 = vunpack.c.l.b16 %v162
    %v975 = vunpack.c.h.b16 %v162
    %v976 = vunpack.c.l.b16 %v163
    %v977 = vunpack.c.h.b16 %v163
    %v978 = vunpack.c.l.b16 %v164
    %v979 = vunpack.c.h.b16 %v164
    %v980 = vunpack.c.l.b16 %v165
    %v981 = vunpack.c.h.b16 %v165
    %v982 = vunpack.c.l.b16 %v166
    %v983 = vunpack.c.h.b16 %v166
    %v984 = vunpack.c.l.b16 %v167
    %v985 = vunpack.c.h.b16 %v167
    %v986 = vunpack.c.l.b16 %v168
    %v987 = vunpack.c.h.b16 %v168
    %v988 = vunpack.c.l.b16 %v169
    %v989 = vunpack.c.h.b16 %v169
    %v990 = vunpack.c.l.b16 %v170
    %v991 = vunpack.c.h.b16 %v170
    %v992 = vunpack.c.l.b16 %v171
    %v993 = vunpack.c.h.b16 %v171
    %v994 = vunpack.c.l.b16 %v172
    %v995 = vunpack.c.h.b16 %v172
    %v996 = vunpack.c.l.b16 %v173
    %v997 = vunpack.c.h.b16 %v173
    %v998 = vunpack.c.l.b16 %v174
    %v999 = vunpack.c.h.b16 %v174
    %v1000 = vunpack.c.l.b16 %v175
    %v1001 = vunpack.c.h.b16 %v175
    %v1002 = vunpack.c.l.b16 %v176
    %v1003 = vunpack.c.h.b16 %v176
    %v1004 = vunpack.c.l.b16 %v177
    %v1005 = vunpack.c.h.b16 %v177
    %v1006 = vunpack.c.l.b16 %v178
    %v1007 = vunpack.c.h.b16 %v178
    %v1008 = vunpack.c.l.b16 %v179
    %v1009 = vunpack.c.h.b16 %v179
    %v1010 = vunpack.c.l.b16 %v180
    %v1011 = vunpack.c.h.b16 %v180
    %v1012 = vunpack.c.l.b16 %v181
    %v1013 = vunpack.c.h.b16 %v181
    %v1014 = vunpack.c.l.b16 %v182
    %v1015 = vunpack.c.h.b16 %v182
    %v1016 = vunpack.c.l.b16 %v183
    %v1017 = vunpack.c.h.b16 %v183
    %v1018 = vunpack.c.l.b16 %v184
    %v1019 = vunpack.c.h.b16 %v184
    %v1020 = vunpack.c.l.b16 %v185
    %v1021 = vunpack.c.h.b16 %v185
    %v1022 = vunpack.c.l.b16 %v186
    %v1023 = vunpack.c.h.b16 %v186
    %v1024 = vunpack.c.l.b16 %v187
    %v1025 = vunpack.c.h.b16 %v187
    %v1026 = vunpack.c.l.b16 %v188
    %v1027 = vunpack.c.h.b16 %v188
    %v1028 = vunpack.c.l.b16 %v189
    %v1029 = vunpack.c.h.b16 %v189
    %v1030 = vunpack.c.l.b16 %v190
    %v1031 = vunpack.c.h.b16 %v190
    %v1032 = vunpack.c.l.b16 %v191
    %v1033 = vunpack.c.h.b16 %v191
    %v1034 = vunpack.c.l.b16 %v192
    %v1035 = vunpack.c.h.b16 %v192
    %v1036 = vunpack.c.l.b16 %v193
    %v1037 = vunpack.c.h.b16 %v193
    %v1038 = vunpack.c.l.b16 %v194
    %v1039 = vunpack.c.h.b16 %v194
    %v1040 = vunpack.c.l.b16 %v195
    %v1041 = vunpack.c.h.b16 %v195
    %v1042 = vunpack.c.l.b16 %v196
    %v1043 = vunpack.c.h.b16 %v196
    %v1044 = vunpack.c.l.b16 %v197
    %v1045 = vunpack.c.h.b16 %v197
    %v1046 = vunpack.c.l.b16 %v198
    %v1047 = vunpack.c.h.b16 %v198
    %v1048 = vunpack.c.l.b16 %v199
    %v1049 = vunpack.c.h.b16 %v199
    %v1050 = vunpack.c.l.b16 %v200
    %v1051 = vunpack.c.h.b16 %v200
    %v1052 = vunpack.c.l.b16 %v201
    %v1053 = vunpack.c.h.b16 %v201
    %v1054 = vunpack.c.l.b16 %v202
    %v1055 = vunpack.c.h.b16 %v202
    %v1056 = vunpack.c.l.b16 %v203
    %v1057 = vunpack.c.h.b16 %v203
    %v1058 = vunpack.c.l.b16 %v204
    %v1059 = vunpack.c.h.b16 %v204
    %v1060 = vunpack.c.l.b16 %v205
    %v1061 = vunpack.c.h.b16 %v205
    %v1062 = vunpack.c.l.b16 %v206
    %v1063 = vunpack.c.h.b16 %v206
    %v1064 = vunpack.c.l.b16 %v207
    %v1065 = vunpack.c.h.b16 %v207
    %v1066 = vunpack.c.l.b16 %v208
    %v1067 = vunpack.c.h.b16 %v208
    %v1068 = vunpack.c.l.b16 %v209
    %v1069 = vunpack.c.h.b16 %v209
    %v1070 = vunpack.c.l.b16 %v210
    %v1071 = vunpack.c.h.b16 %v210
    %v1072 = vunpack.c.l.b16 %v211
    %v1073 = vunpack.c.h.b16 %v211
    %v1074 = vunpack.c.l.b16 %v212
    %v1075 = vunpack.c.h.b16 %v212
    %v1076 = vunpack.c.l.b16 %v213
    %v1077 = vunpack.c.h.b16 %v213
    %v1078 = vunpack.c.l.b16 %v214
    %v1079 = vunpack.c.h.b16 %v214
    %v1080 = vunpack.c.l.b16 %v215
    %v1081 = vunpack.c.h.b16 %v215
    %v1082 = vunpack.c.l.b16 %v216
    %v1083 = vunpack.c.h.b16 %v216
    %v1084 = vunpack.c.l.b16 %v217
    %v1085 = vunpack.c.h.b16 %v217
    %v1086 = vunpack.c.l.b16 %v218
    %v1087 = vunpack.c.h.b16 %v218
    %v1088 = vunpack.c.l.b16 %v219
    %v1089 = vunpack.c.h.b16 %v219
    %v1090 = vunpack.c.l.b16 %v220
    %v1091 = vunpack.c.h.b16 %v220
    %v1092 = vunpack.c.l.b16 %v221
    %v1093 = vunpack.c.h.b16 %v221
    %v1094 = vunpack.c.l.b16 %v222
    %v1095 = vunpack.c.h.b16 %v222
    %v1096 = vunpack.c.l.b16 %v223
    %v1097 = vunpack.c.h.b16 %v223
    %v1098 = vunpack.c.l.b16 %v224
    %v1099 = vunpack.c.h.b16 %v224
    %v1100 = vunpack.c.l.b16 %v225
    %v1101 = vunpack.c.h.b16 %v225
    %v1102 = vunpack.c.l.b16 %v226
    %v1103 = vunpack.c.h.b16 %v226
    %v1104 = vunpack.c.l.b16 %v227
    %v1105 = vunpack.c.h.b16 %v227
    %v1106 = vunpack.c.l.b16 %v228
    %v1107 = vunpack.c.h.b16 %v228
    %v1108 = vunpack.c.l.b16 %v229
    %v1109 = vunpack.c.h.b16 %v229
    %v1110 = vunpack.c.l.b16 %v230
    %v1111 = vunpack.c.h.b16 %v230
    %v1112 = vunpack.c.l.b16 %v231
    %v1113 = vunpack.c.h.b16 %v231
    %v1114 = vunpack.c.l.b16 %v232
    %v1115 = vunpack.c.h.b16 %v232
    %v1116 = vunpack.c.l.b16 %v233
    %v1117 = vunpack.c.h.b16 %v233
    %v1118 = vunpack.c.l.b16 %v234
    %v1119 = vunpack.c.h.b16 %v234
    %v1120 = vunpack.c.l.b16 %v235
    %v1121 = vunpack.c.h.b16 %v235
    %v1122 = vunpack.c.l.b16 %v236
    %v1123 = vunpack.c.h.b16 %v236
    %v1124 = vunpack.c.l.b16 %v237
    %v1125 = vunpack.c.h.b16 %v237
    %v1126 = vunpack.c.l.b16 %v238
    %v1127 = vunpack.c.h.b16 %v238
    %v1128 = vunpack.c.l.b16 %v239
    %v1129 = vunpack.c.h.b16 %v239
    %v1130 = vunpack.c.l.b16 %v240
    %v1131 = vunpack.c.h.b16 %v240
    %v1132 = vunpack.c.l.b16 %v241
    %v1133 = vunpack.c.h.b16 %v241
    %v1134 = vunpack.c.l.b16 %v242
    %v1135 = vunpack.c.h.b16 %v242
    %v1136 = vunpack.c.l.b16 %v243
    %v1137 = vunpack.c.h.b16 %v243
    %v1138 = vunpack.c.l.b16 %v244
    %v1139 = vunpack.c.h.b16 %v244
    %v1140 = vunpack.c.l.b16 %v245
    %v1141 = vunpack.c.h.b16 %v245
    %v1142 = vunpack.c.l.b16 %v246
    %v1143 = vunpack.c.h.b16 %v246
    %v1144 = vunpack.c.l.b16 %v247
    %v1145 = vunpack.c.h.b16 %v247
    %v1146 = vunpack.c.l.b16 %v248
    %v1147 = vunpack.c.h.b16 %v248
    %v1148 = vunpack.c.l.b16 %v249
    %v1149 = vunpack.c.h.b16 %v249
    %v1150 = vunpack.c.l.b16 %v250
    %v1151 = vunpack.c.h.b16 %v250
    %v1152 = vunpack.c.l.b16 %v251
    %v1153 = vunpack.c.h.b16 %v251
    %v1154 = vunpack.c.l.b16 %v252
    %v1155 = vunpack.c.h.b16 %v252
    %v1156 = vunpack.c.l.b16 %v253
    %v1157 = vunpack.c.h.b16 %v253
    %v1158 = vunpack.c.l.b16 %v254
    %v1159 = vunpack.c.h.b16 %v254
    %v1160 = vunpack.c.l.b16 %v255
    %v1161 = vunpack.c.h.b16 %v255
    %v1162 = vunpack.c.l.b16 %v256
    %v1163 = vunpack.c.h.b16 %v256
    %v1164 = vunpack.c.l.b16 %v257
    %v1165 = vunpack.c.h.b16 %v257
    %v1166 = vunpack.c.l.b16 %v258
    %v1167 = vunpack.c.h.b16 %v258
    %v1168 = vunpack.c.l.b16 %v259
    %v1169 = vunpack.c.h.b16 %v259
    %v1170 = vunpack.c.l.b16 %v260
    %v1171 = vunpack.c.h.b16 %v260
    %v1172 = vunpack.c.l.b16 %v261
    %v1173 = vunpack.c.h.b16 %v261
    %v1174 = vunpack.c.l.b16 %v262
    %v1175 = vunpack.c.h.b16 %v262
    %v1176 = vunpack.c.l.b16 %v263
    %v1177 = vunpack.c.h.b16 %v263
    %v1178 = vunpack.c.l.b16 %v264
    %v1179 = vunpack.c.h.b16 %v264
    %v1180 = vunpack.c.l.b16 %v265
    %v1181 = vunpack.c.h.b16 %v265
    %v1182 = vunpack.c.l.b16 %v266
    %v1183 = vunpack.c.h.b16 %v266
    %v1184 = vunpack.c.l.b16 %v267
    %v1185 = vunpack.c.h.b16 %v267
    %v1186 = vunpack.c.l.b16 %v268
    %v1187 = vunpack.c.h.b16 %v268
    %v1188 = vunpack.c.l.b16 %v269
    %v1189 = vunpack.c.h.b16 %v269
    %v1190 = vunpack.c.l.b16 %v270
    %v1191 = vunpack.c.h.b16 %v270
    %v1192 = vunpack.c.l.b16 %v271
    %v1193 = vunpack.c.h.b16 %v271
    %v1194 = vunpack.c.l.b16 %v272
    %v1195 = vunpack.c.h.b16 %v272
    %v1196 = vunpack.c.l.b16 %v273
    %v1197 = vunpack.c.h.b16 %v273
    %v1198 = vunpack.c.l.b16 %v274
    %v1199 = vunpack.c.h.b16 %v274
    %v1200 = vunpack.c.l.b16 %v275
    %v1201 = vunpack.c.h.b16 %v275
    %v1202 = vunpack.c.l.b16 %v276
    %v1203 = vunpack.c.h.b16 %v276
    %v1204 = vunpack.c.l.b16 %v277
    %v1205 = vunpack.c.h.b16 %v277
    %v1206 = vunpack.c.l.b16 %v278
    %v1207 = vunpack.c.h.b16 %v278
    %v1208 = vunpack.c.l.b16 %v279
    %v1209 = vunpack.c.h.b16 %v279
    %v1210 = vunpack.c.l.b16 %v280
    %v1211 = vunpack.c.h.b16 %v280
    %v1212 = vunpack.c.l.b16 %v281
    %v1213 = vunpack.c.h.b16 %v281
    %v1214 = vunpack.c.l.b16 %v282
    %v1215 = vunpack.c.h.b16 %v282
    %v1216 = vunpack.c.l.b16 %v283
    %v1217 = vunpack.c.h.b16 %v283
    %v1218 = vunpack.c.l.b16 %v284
    %v1219 = vunpack.c.h.b16 %v284
    %v1220 = vunpack.c.l.b16 %v285
    %v1221 = vunpack.c.h.b16 %v285
    %v1222 = vunpack.c.l.b16 %v286
    %v1223 = vunpack.c.h.b16 %v286
    %v1224 = vunpack.c.l.b16 %v287
    %v1225 = vunpack.c.h.b16 %v287
    %v1226 = vunpack.c.l.b16 %v288
    %v1227 = vunpack.c.h.b16 %v288
    %v1228 = vunpack.c.l.b16 %v289
    %v1229 = vunpack.c.h.b16 %v289
    %v1230 = vunpack.c.l.b16 %v290
    %v1231 = vunpack.c.h.b16 %v290
    %v1232 = vunpack.c.l.b16 %v291
    %v1233 = vunpack.c.h.b16 %v291
    %v1234 = vunpack.c.l.b16 %v292
    %v1235 = vunpack.c.h.b16 %v292
    %v1236 = vunpack.c.l.b16 %v293
    %v1237 = vunpack.c.h.b16 %v293
    %v1238 = vunpack.c.l.b16 %v294
    %v1239 = vunpack.c.h.b16 %v294
    %v1240 = vunpack.c.l.b16 %v295
    %v1241 = vunpack.c.h.b16 %v295
    %v1242 = vunpack.c.l.b16 %v296
    %v1243 = vunpack.c.h.b16 %v296
    %v1244 = vunpack.c.l.b16 %v297
    %v1245 = vunpack.c.h.b16 %v297
    %v1246 = vunpack.c.l.b16 %v298
    %v1247 = vunpack.c.h.b16 %v298
    %v1248 = vunpack.c.l.b16 %v299
    %v1249 = vunpack.c.h.b16 %v299
    %v1250 = vunpack.c.l.b16 %v300
    %v1251 = vunpack.c.h.b16 %v300
    %v1252 = vunpack.c.l.b16 %v301
    %v1253 = vunpack.c.h.b16 %v301
    %v1254 = vunpack.c.l.b16 %v302
    %v1255 = vunpack.c.h.b16 %v302
    %v1256 = vunpack.c.l.b16 %v303
    %v1257 = vunpack.c.h.b16 %v303
    %v1258 = vunpack.c.l.b16 %v304
    %v1259 = vunpack.c.h.b16 %v304
    %v1260 = vunpack.c.l.b16 %v305
    %v1261 = vunpack.c.h.b16 %v305
    %v1262 = vunpack.c.l.b16 %v306
    %v1263 = vunpack.c.h.b16 %v306
    %v1264 = vunpack.c.l.b16 %v307
    %v1265 = vunpack.c.h.b16 %v307
    %v1266 = vunpack.c.l.b16 %v308
    %v1267 = vunpack.c.h.b16 %v308
    %v1268 = vunpack.c.l.b16 %v309
    %v1269 = vunpack.c.h.b16 %v309
    %v1270 = vunpack.c.l.b16 %v310
    %v1271 = vunpack.c.h.b16 %v310
    %v1272 = vunpack.c.l.b16 %v311
    %v1273 = vunpack.c.h.b16 %v311
    %v1274 = vunpack.c.l.b16 %v312
    %v1275 = vunpack.c.h.b16 %v312
    %v1276 = vunpack.c.l.b16 %v313
    %v1277 = vunpack.c.h.b16 %v313
    %v1278 = vunpack.c.l.b16 %v314
    %v1279 = vunpack.c.h.b16 %v314
    %v1280 = vunpack.c.l.b16 %v315
    %v1281 = vunpack.c.h.b16 %v315
    %v1282 = vunpack.c.l.b16 %v316
    %v1283 = vunpack.c.h.b16 %v316
    %v1284 = vunpack.c.l.b16 %v317
    %v1285 = vunpack.c.h.b16 %v317
    %v1286 = vunpack.c.l.b16 %v318
    %v1287 = vunpack.c.h.b16 %v318
    %v1288 = vunpack.c.l.b16 %v319
    %v1289 = vunpack.c.h.b16 %v319
    %v1290 = vunpack.c.l.b16 %v320
    %v1291 = vunpack.c.h.b16 %v320
    %v1292 = vunpack.c.l.b16 %v321
    %v1293 = vunpack.c.h.b16 %v321
    %v1294 = vunpack.c.l.b16 %v322
    %v1295 = vunpack.c.h.b16 %v322
    %v1296 = vunpack.c.l.b16 %v323
    %v1297 = vunpack.c.h.b16 %v323
    %v1298 = vunpack.c.l.b16 %v324
    %v1299 = vunpack.c.h.b16 %v324
    %v1300 = vunpack.c.l.b16 %v325
    %v1301 = vunpack.c.h.b16 %v325
    %v1302 = vunpack.c.l.b16 %v326
    %v1303 = vunpack.c.h.b16 %v326
    %v1304 = vunpack.c.l.b16 %v327
    %v1305 = vunpack.c.h.b16 %v327
    %v1306 = vunpack.c.l.b16 %v328
    %v1307 = vunpack.c.h.b16 %v328
    %v1308 = vunpack.c.l.b16 %v329
    %v1309 = vunpack.c.h.b16 %v329
    %v1310 = vunpack.c.l.b16 %v330
    %v1311 = vunpack.c.h.b16 %v330
    %v1312 = vunpack.c.l.b16 %v331
    %v1313 = vunpack.c.h.b16 %v331
    %v1314 = vunpack.c.l.b16 %v332
    %v1315 = vunpack.c.h.b16 %v332
    %v1316 = vunpack.c.l.b16 %v333
    %v1317 = vunpack.c.h.b16 %v333
    %v1318 = vunpack.c.l.b16 %v334
    %v1319 = vunpack.c.h.b16 %v334
    %v1320 = vunpack.c.l.b16 %v335
    %v1321 = vunpack.c.h.b16 %v335
    %v1322 = vunpack.c.l.b16 %v336
    %v1323 = vunpack.c.h.b16 %v336
    %v1324 = vunpack.c.l.b16 %v337
    %v1325 = vunpack.c.h.b16 %v337
    %v1326 = vunpack.c.l.b16 %v338
    %v1327 = vunpack.c.h.b16 %v338
    %v1328 = vunpack.c.l.b16 %v339
    %v1329 = vunpack.c.h.b16 %v339
    %v1330 = vunpack.c.l.b16 %v340
    %v1331 = vunpack.c.h.b16 %v340
    %v1332 = vunpack.c.l.b16 %v341
    %v1333 = vunpack.c.h.b16 %v341
    %v1334 = vunpack.c.l.b16 %v342
    %v1335 = vunpack.c.h.b16 %v342
    %v1336 = vunpack.c.l.b16 %v343
    %v1337 = vunpack.c.h.b16 %v343
    %v1338 = vunpack.c.l.b16 %v344
    %v1339 = vunpack.c.h.b16 %v344
    %v1340 = vunpack.c.l.b16 %v345
    %v1341 = vunpack.c.h.b16 %v345
    %v1342 = vunpack.c.l.b16 %v346
    %v1343 = vunpack.c.h.b16 %v346
    %v1344 = vunpack.c.l.b16 %v347
    %v1345 = vunpack.c.h.b16 %v347
    %v1346 = vunpack.c.l.b16 %v348
    %v1347 = vunpack.c.h.b16 %v348
    %v1348 = vunpack.c.l.b16 %v349
    %v1349 = vunpack.c.h.b16 %v349
    %v1350 = vunpack.c.l.b16 %v350
    %v1351 = vunpack.c.h.b16 %v350
    %v1352 = vunpack.c.l.b16 %v351
    %v1353 = vunpack.c.h.b16 %v351
    %v1354 = vunpack.c.l.b16 %v352
    %v1355 = vunpack.c.h.b16 %v352
    %v1356 = vunpack.c.l.b16 %v353
    %v1357 = vunpack.c.h.b16 %v353
    %v1358 = vunpack.c.l.b16 %v354
    %v1359 = vunpack.c.h.b16 %v354
    %v1360 = vunpack.c.l.b16 %v355
    %v1361 = vunpack.c.h.b16 %v355
    %v1362 = vunpack.c.l.b16 %v356
    %v1363 = vunpack.c.h.b16 %v356
    %v1364 = vunpack.c.l.b16 %v357
    %v1365 = vunpack.c.h.b16 %v357
    %v1366 = vunpack.c.l.b16 %v358
    %v1367 = vunpack.c.h.b16 %v358
    %v1368 = vunpack.c.l.b16 %v359
    %v1369 = vunpack.c.h.b16 %v359
    %v1370 = vunpack.c.l.b16 %v360
    %v1371 = vunpack.c.h.b16 %v360
    %v1372 = vunpack.c.l.b16 %v361
    %v1373 = vunpack.c.h.b16 %v361
    %v1374 = vunpack.c.l.b16 %v362
    %v1375 = vunpack.c.h.b16 %v362
    %v1376 = vunpack.c.l.b16 %v363
    %v1377 = vunpack.c.h.b16 %v363
    %v1378 = vunpack.c.l.b16 %v364
    %v1379 = vunpack.c.h.b16 %v364
    %v1380 = vunpack.c.l.b16 %v365
    %v1381 = vunpack.c.h.b16 %v365
    %v1382 = vunpack.c.l.b16 %v366
    %v1383 = vunpack.c.h.b16 %v366
    %v1384 = vunpack.c.l.b16 %v367
    %v1385 = vunpack.c.h.b16 %v367
    %v1386 = vunpack.c.l.b16 %v368
    %v1387 = vunpack.c.h.b16 %v368
    %v1388 = vunpack.c.l.b16 %v369
    %v1389 = vunpack.c.h.b16 %v369
    %v1390 = vunpack.c.l.b16 %v370
    %v1391 = vunpack.c.h.b16 %v370
    %v1392 = vunpack.c.l.b16 %v371
    %v1393 = vunpack.c.h.b16 %v371
    %v1394 = vunpack.c.l.b16 %v372
    %v1395 = vunpack.c.h.b16 %v372
    %v1396 = vunpack.c.l.b16 %v373
    %v1397 = vunpack.c.h.b16 %v373
    %v1398 = vunpack.c.l.b16 %v374
    %v1399 = vunpack.c.h.b16 %v374
    %v1400 = vunpack.c.l.b16 %v375
    %v1401 = vunpack.c.h.b16 %v375
    %v1402 = vunpack.c.l.b16 %v376
    %v1403 = vunpack.c.h.b16 %v376
    %v1404 = vunpack.c.l.b16 %v377
    %v1405 = vunpack.c.h.b16 %v377
    %v1406 = vunpack.c.l.b16 %v378
    %v1407 = vunpack.c.h.b16 %v378
    %v1408 = vunpack.c.l.b16 %v379
    %v1409 = vunpack.c.h.b16 %v379
    %v1410 = vunpack.c.l.b16 %v380
    %v1411 = vunpack.c.h.b16 %v380
    %v1412 = vunpack.c.l.b16 %v381
    %v1413 = vunpack.c.h.b16 %v381
    %v1414 = vunpack.c.l.b16 %v382
    %v1415 = vunpack.c.h.b16 %v382
    %v1416 = vunpack.c.l.b16 %v383
    %v1417 = vunpack.c.h.b16 %v383
    %v1418 = vunpack.c.l.b16 %v384
    %v1419 = vunpack.c.h.b16 %v384
    %v1420 = vunpack.c.l.b16 %v385
    %v1421 = vunpack.c.h.b16 %v385
    %v1422 = vunpack.c.l.b16 %v386
    %v1423 = vunpack.c.h.b16 %v386
    %v1424 = vunpack.c.l.b16 %v387
    %v1425 = vunpack.c.h.b16 %v387
    %v1426 = vunpack.c.l.b16 %v388
    %v1427 = vunpack.c.h.b16 %v388
    %v1428 = vunpack.c.l.b16 %v389
    %v1429 = vunpack.c.h.b16 %v389
    %v1430 = vunpack.c.l.b16 %v390
    %v1431 = vunpack.c.h.b16 %v390
    %v1432 = vunpack.c.l.b16 %v391
    %v1433 = vunpack.c.h.b16 %v391
    %v1434 = vunpack.c.l.b16 %v392
    %v1435 = vunpack.c.h.b16 %v392
    %v1436 = vunpack.c.l.b16 %v393
    %v1437 = vunpack.c.h.b16 %v393
    %v1438 = vunpack.c.l.b16 %v394
    %v1439 = vunpack.c.h.b16 %v394
    %v1440 = vunpack.c.l.b16 %v395
    %v1441 = vunpack.c.h.b16 %v395
    %v1442 = vunpack.c.l.b16 %v396
    %v1443 = vunpack.c.h.b16 %v396
    %v1444 = vunpack.c.l.b16 %v397
    %v1445 = vunpack.c.h.b16 %v397
    %v1446 = vunpack.c.l.b16 %v398
    %v1447 = vunpack.c.h.b16 %v398
    %v1448 = vunpack.c.l.b16 %v399
    %v1449 = vunpack.c.h.b16 %v399
    %v1450 = vunpack.c.l.b16 %v400
    %v1451 = vunpack.c.h.b16 %v400
    %v1452 = vunpack.c.l.b16 %v401
    %v1453 = vunpack.c.h.b16 %v401
    %v1454 = vunpack.c.l.b16 %v402
    %v1455 = vunpack.c.h.b16 %v402
    %v1456 = vunpack.c.l.b16 %v403
    %v1457 = vunpack.c.h.b16 %v403
    %v1458 = vunpack.c.l.b16 %v404
    %v1459 = vunpack.c.h.b16 %v404
    %v1460 = vunpack.c.l.b16 %v405
    %v1461 = vunpack.c.h.b16 %v405
    %v1462 = vunpack.c.l.b16 %v406
    %v1463 = vunpack.c.h.b16 %v406
    %v1464 = vunpack.c.l.b16 %v407
    %v1465 = vunpack.c.h.b16 %v407
    %v1466 = vunpack.c.l.b16 %v408
    %v1467 = vunpack.c.h.b16 %v408
    %v1468 = vunpack.c.l.b16 %v409
    %v1469 = vunpack.c.h.b16 %v409
    %v1470 = vunpack.c.l.b16 %v410
    %v1471 = vunpack.c.h.b16 %v410
    %v1472 = vunpack.c.l.b16 %v411
    %v1473 = vunpack.c.h.b16 %v411
    %v1474 = vunpack.c.l.b16 %v412
    %v1475 = vunpack.c.h.b16 %v412
    %v1476 = vunpack.c.l.b16 %v413
    %v1477 = vunpack.c.h.b16 %v413
    %v1478 = vunpack.c.l.b16 %v414
    %v1479 = vunpack.c.h.b16 %v414
    %v1480 = vunpack.c.l.b16 %v415
    %v1481 = vunpack.c.h.b16 %v415
    %v1482 = vunpack.c.l.b16 %v416
    %v1483 = vunpack.c.h.b16 %v416
    %v1484 = vunpack.c.l.b16 %v417
    %v1485 = vunpack.c.h.b16 %v417
    %v1486 = vunpack.c.l.b16 %v418
    %v1487 = vunpack.c.h.b16 %v418
    %v1488 = vunpack.c.l.b16 %v419
    %v1489 = vunpack.c.h.b16 %v419
    %v1490 = vunpack.c.l.b16 %v420
    %v1491 = vunpack.c.h.b16 %v420
    %v1492 = vunpack.c.l.b16 %v421
    %v1493 = vunpack.c.h.b16 %v421
    %v1494 = vunpack.c.l.b16 %v422
    %v1495 = vunpack.c.h.b16 %v422
    %v1496 = vunpack.c.l.b16 %v423
    %v1497 = vunpack.c.h.b16 %v423
    %v1498 = vunpack.c.l.b16 %v424
    %v1499 = vunpack.c.h.b16 %v424
    %v1500 = vunpack.c.l.b16 %v425
    %v1501 = vunpack.c.h.b16 %v425
    %v1502 = vunpack.c.l.b16 %v426
    %v1503 = vunpack.c.h.b16 %v426
    %v1504 = vunpack.c.l.b16 %v427
    %v1505 = vunpack.c.h.b16 %v427
    %v1506 = vunpack.c.l.b16 %v428
    %v1507 = vunpack.c.h.b16 %v428
    %v1508 = vunpack.c.l.b16 %v429
    %v1509 = vunpack.c.h.b16 %v429
    %v1510 = vunpack.c.l.b16 %v430
    %v1511 = vunpack.c.h.b16 %v430
    %v1512 = vunpack.c.l.b16 %v431
    %v1513 = vunpack.c.h.b16 %v431
    %v1514 = vunpack.c.l.b16 %v432
    %v1515 = vunpack.c.h.b16 %v432
    %v1516 = vunpack.c.l.b16 %v433
    %v1517 = vunpack.c.h.b16 %v433
    %v1518 = vunpack.c.l.b16 %v434
    %v1519 = vunpack.c.h.b16 %v434
    %v1520 = vunpack.c.l.b16 %v435
    %v1521 = vunpack.c.h.b16 %v435
    %v1522 = vunpack.c.l.b16 %v436
    %v1523 = vunpack.c.h.b16 %v436
    %v1524 = vunpack.c.l.b16 %v437
    %v1525 = vunpack.c.h.b16 %v437
    %v1526 = vunpack.c.l.b16 %v438
    %v1527 = vunpack.c.h.b16 %v438
    %v1528 = vunpack.c.l.b16 %v439
    %v1529 = vunpack.c.h.b16 %v439
    %v1530 = vunpack.c.l.b16 %v440
    %v1531 = vunpack.c.h.b16 %v440
    %v1532 = vunpack.c.l.b16 %v441
    %v1533 = vunpack.c.h.b16 %v441
    %v1534 = vunpack.c.l.b16 %v442
    %v1535 = vunpack.c.h.b16 %v442
    %v1536 = vunpack.c.l.b16 %v443
    %v1537 = vunpack.c.h.b16 %v443
    %v1538 = vunpack.c.l.b16 %v444
    %v1539 = vunpack.c.h.b16 %v444
    %v1540 = vunpack.c.l.b16 %v445
    %v1541 = vunpack.c.h.b16 %v445
    %v1542 = vunpack.c.l.b16 %v446
    %v1543 = vunpack.c.h.b16 %v446
    %v1544 = vunpack.c.l.b16 %v447
    %v1545 = vunpack.c.h.b16 %v447
    %v1546 = vunpack.c.l.b16 %v448
    %v1547 = vunpack.c.h.b16 %v448
    %v1548 = vunpack.c.l.b16 %v449
    %v1549 = vunpack.c.h.b16 %v449
    %v1550 = vunpack.c.l.b16 %v450
    %v1551 = vunpack.c.h.b16 %v450
    %v1552 = vunpack.c.l.b16 %v451
    %v1553 = vunpack.c.h.b16 %v451
    %v1554 = vunpack.c.l.b16 %v452
    %v1555 = vunpack.c.h.b16 %v452
    %v1556 = vunpack.c.l.b16 %v453
    %v1557 = vunpack.c.h.b16 %v453
    %v1558 = vunpack.c.l.b16 %v454
    %v1559 = vunpack.c.h.b16 %v454
    %v1560 = vunpack.c.l.b16 %v455
    %v1561 = vunpack.c.h.b16 %v455
    %v1562 = vunpack.c.l.b16 %v456
    %v1563 = vunpack.c.h.b16 %v456
    %v1564 = vunpack.c.l.b16 %v457
    %v1565 = vunpack.c.h.b16 %v457
    %v1566 = vunpack.c.l.b16 %v458
    %v1567 = vunpack.c.h.b16 %v458
    %v1568 = vunpack.c.l.b16 %v459
    %v1569 = vunpack.c.h.b16 %v459
    %v1570 = vunpack.c.l.b16 %v460
    %v1571 = vunpack.c.h.b16 %v460
    %v1572 = vunpack.c.l.b16 %v461
    %v1573 = vunpack.c.h.b16 %v461
    %v1574 = vunpack.c.l.b16 %v462
    %v1575 = vunpack.c.h.b16 %v462
    %v1576 = vunpack.c.l.b16 %v463
    %v1577 = vunpack.c.h.b16 %v463
    %v1578 = vunpack.c.l.b16 %v464
    %v1579 = vunpack.c.h.b16 %v464
    %v1580 = vunpack.c.l.b16 %v465
    %v1581 = vunpack.c.h.b16 %v465
    %v1582 = vunpack.c.l.b16 %v466
    %v1583 = vunpack.c.h.b16 %v466
    %v1584 = vunpack.c.l.b16 %v467
    %v1585 = vunpack.c.h.b16 %v467
    %v1586 = vunpack.c.l.b16 %v468
    %v1587 = vunpack.c.h.b16 %v468
    %v1588 = vunpack.c.l.b16 %v469
    %v1589 = vunpack.c.h.b16 %v469
    %v1590 = vunpack.c.l.b16 %v470
    %v1591 = vunpack.c.h.b16 %v470
    %v1592 = vunpack.c.l.b16 %v471
    %v1593 = vunpack.c.h.b16 %v471
    %v1594 = vunpack.c.l.b16 %v472
    %v1595 = vunpack.c.h.b16 %v472
    %v1596 = vunpack.c.l.b16 %v473
    %v1597 = vunpack.c.h.b16 %v473
    %v1598 = vunpack.c.l.b16 %v474
    %v1599 = vunpack.c.h.b16 %v474
    %v1600 = vunpack.c.l.b16 %v475
    %v1601 = vunpack.c.h.b16 %v475
    %v1602 = vunpack.c.l.b16 %v476
    %v1603 = vunpack.c.h.b16 %v476
    %v1604 = vunpack.c.l.b16 %v477
    %v1605 = vunpack.c.h.b16 %v477
    %v1606 = vunpack.c.l.b16 %v478
    %v1607 = vunpack.c.h.b16 %v478
    %v1608 = vunpack.c.l.b16 %v479
    %v1609 = vunpack.c.h.b16 %v479
    %v1610 = vunpack.c.l.b16 %v480
    %v1611 = vunpack.c.h.b16 %v480
    %v1612 = vunpack.c.l.b16 %v481
    %v1613 = vunpack.c.h.b16 %v481
    %v1614 = vunpack.c.l.b16 %v482
    %v1615 = vunpack.c.h.b16 %v482
    %v1616 = vunpack.c.l.b16 %v483
    %v1617 = vunpack.c.h.b16 %v483
    %v1618 = vunpack.c.l.b16 %v484
    %v1619 = vunpack.c.h.b16 %v484
    %v1620 = vunpack.c.l.b16 %v485
    %v1621 = vunpack.c.h.b16 %v485
    %v1622 = vunpack.c.l.b16 %v486
    %v1623 = vunpack.c.h.b16 %v486
    %v1624 = vunpack.c.l.b16 %v487
    %v1625 = vunpack.c.h.b16 %v487
    %v1626 = vunpack.c.l.b16 %v488
    %v1627 = vunpack.c.h.b16 %v488
    %v1628 = vunpack.c.l.b16 %v489
    %v1629 = vunpack.c.h.b16 %v489
    %v1630 = vunpack.c.l.b16 %v490
    %v1631 = vunpack.c.h.b16 %v490
    %v1632 = vunpack.c.l.b16 %v491
    %v1633 = vunpack.c.h.b16 %v491
    %v1634 = vunpack.c.l.b16 %v492
    %v1635 = vunpack.c.h.b16 %v492
    %v1636 = vunpack.c.l.b16 %v493
    %v1637 = vunpack.c.h.b16 %v493
    %v1638 = vunpack.c.l.b16 %v494
    %v1639 = vunpack.c.h.b16 %v494
    %v1640 = vunpack.c.l.b16 %v495
    %v1641 = vunpack.c.h.b16 %v495
    %v1642 = vunpack.c.l.b16 %v496
    %v1643 = vunpack.c.h.b16 %v496
    %v1644 = vunpack.c.l.b16 %v497
    %v1645 = vunpack.c.h.b16 %v497
    %v1646 = vunpack.c.l.b16 %v498
    %v1647 = vunpack.c.h.b16 %v498
    %v1648 = vunpack.c.l.b16 %v499
    %v1649 = vunpack.c.h.b16 %v499
    %v1650 = vunpack.c.l.b16 %v500
    %v1651 = vunpack.c.h.b16 %v500
    %v1652 = vunpack.c.l.b16 %v501
    %v1653 = vunpack.c.h.b16 %v501
    %v1654 = vunpack.c.l.b16 %v502
    %v1655 = vunpack.c.h.b16 %v502
    %v1656 = vunpack.c.l.b16 %v503
    %v1657 = vunpack.c.h.b16 %v503
    %v1658 = vunpack.c.l.b16 %v504
    %v1659 = vunpack.c.h.b16 %v504
    %v1660 = vunpack.c.l.b16 %v505
    %v1661 = vunpack.c.h.b16 %v505
    %v1662 = vunpack.c.l.b16 %v506
    %v1663 = vunpack.c.h.b16 %v506
    %v1664 = vunpack.c.l.b16 %v507
    %v1665 = vunpack.c.h.b16 %v507
    %v1666 = vunpack.c.l.b16 %v508
    %v1667 = vunpack.c.h.b16 %v508
    %v1668 = vunpack.c.l.b16 %v509
    %v1669 = vunpack.c.h.b16 %v509
    %v1670 = vunpack.c.l.b16 %v510
    %v1671 = vunpack.c.h.b16 %v510
    %v1672 = vunpack.c.l.b16 %v511
    %v1673 = vunpack.c.h.b16 %v511
    %v1674 = vunpack.c.l.b16 %v512
    %v1675 = vunpack.c.h.b16 %v512
    %v1676 = vunpack.c.l.b16 %v513
    %v1677 = vunpack.c.h.b16 %v513
    %v1678 = vunpack.c.l.b16 %v514
    %v1679 = vunpack.c.h.b16 %v514
    %v1680 = vunpack.c.l.b16 %v515
    %v1681 = vunpack.c.h.b16 %v515
    %v1682 = vunpack.c.l.b16 %v516
    %v1683 = vunpack.c.h.b16 %v516
    %v1684 = vunpack.c.l.b16 %v517
    %v1685 = vunpack.c.h.b16 %v517
    %v1686 = vunpack.c.l.b16 %v518
    %v1687 = vunpack.c.h.b16 %v518
    %v1688 = vunpack.c.l.b16 %v519
    %v1689 = vunpack.c.h.b16 %v519
    %v1690 = vunpack.c.l.b16 %v520
    %v1691 = vunpack.c.h.b16 %v520
    %v1692 = vunpack.c.l.b16 %v521
    %v1693 = vunpack.c.h.b16 %v521
    %v1694 = vunpack.c.l.b16 %v522
    %v1695 = vunpack.c.h.b16 %v522
    %v1696 = vunpack.c.l.b16 %v523
    %v1697 = vunpack.c.h.b16 %v523
    %v1698 = vunpack.c.l.b16 %v524
    %v1699 = vunpack.c.h.b16 %v524
    %v1700 = vunpack.c.l.b16 %v525
    %v1701 = vunpack.c.h.b16 %v525
    %v1702 = vunpack.c.l.b16 %v526
    %v1703 = vunpack.c.h.b16 %v526
    %v1704 = vunpack.c.l.b16 %v527
    %v1705 = vunpack.c.h.b16 %v527
    %v1706 = vunpack.c.l.b16 %v528
    %v1707 = vunpack.c.h.b16 %v528
    %v1708 = vunpack.c.l.b16 %v529
    %v1709 = vunpack.c.h.b16 %v529
    %v1710 = vunpack.c.l.b16 %v530
    %v1711 = vunpack.c.h.b16 %v530
    %v1712 = vunpack.c.l.b16 %v531
    %v1713 = vunpack.c.h.b16 %v531
    %v1714 = vunpack.c.l.b16 %v532
    %v1715 = vunpack.c.h.b16 %v532
    %v1716 = vunpack.c.l.b16 %v533
    %v1717 = vunpack.c.h.b16 %v533
    %v1718 = vunpack.c.l.b16 %v534
    %v1719 = vunpack.c.h.b16 %v534
    %v1720 = vunpack.c.l.b16 %v535
    %v1721 = vunpack.c.h.b16 %v535
    %v1722 = vunpack.c.l.b16 %v536
    %v1723 = vunpack.c.h.b16 %v536
    %v1724 = vunpack.c.l.b16 %v537
    %v1725 = vunpack.c.h.b16 %v537
    %v1726 = vunpack.c.l.b16 %v538
    %v1727 = vunpack.c.h.b16 %v538
    %v1728 = vunpack.c.l.b16 %v539
    %v1729 = vunpack.c.h.b16 %v539
    %v1730 = vunpack.c.l.b16 %v540
    %v1731 = vunpack.c.h.b16 %v540
    %v1732 = vunpack.c.l.b16 %v541
    %v1733 = vunpack.c.h.b16 %v541
    %v1734 = vunpack.c.l.b16 %v542
    %v1735 = vunpack.c.h.b16 %v542
    %v1736 = vunpack.c.l.b16 %v543
    %v1737 = vunpack.c.h.b16 %v543
    %v1738 = vpack.c.b16 %v962, %v954
    %v1739 = vpack.c.b16 %v963, %v955
    %v1740 = vpack.c.b16 %v964, %v956
    %v1741 = vpack.c.b16 %v965, %v957
    %v1742 = vpack.c.b16 %v966, %v958
    %v1743 = vpack.c.b16 %v967, %v959
    %v1744 = vpack.c.b16 %v968, %v960
    %v1745 = vpack.c.b16 %v969, %v961
    %v1746 = vpack.c.b16 %v978, %v970
    %v1747 = vpack.c.b16 %v979, %v971
    %v1748 = vpack.c.b16 %v980, %v972
    %v1749 = vpack.c.b16 %v981, %v973
    %v1750 = vpack.c.b16 %v982, %v974
    %v1751 = vpack.c.b16 %v983, %v975
    %v1752 = vpack.c.b16 %v984, %v976
    %v1753 = vpack.c.b16 %v985, %v977
    %v1754 = vpack.c.b16 %v994, %v986
    %v1755 = vpack.c.b16 %v995, %v987
    %v1756 = vpack.c.b16 %v996, %v988
    %v1757 = vpack.c.b16 %v997, %v989
    %v1758 = vpack.c.b16 %v998, %v990
    %v1759 = vpack.c.b16 %v999, %v991
    %v1760 = vpack.c.b16 %v1000, %v992
    %v1761 = vpack.c.b16 %v1001, %v993
    %v1762 = vpack.c.b16 %v1010, %v1002
    %v1763 = vpack.c.b16 %v1011, %v1003
    %v1764 = vpack.c.b16 %v1012, %v1004
    %v1765 = vpack.c.b16 %v1013, %v1005
    %v1766 = vpack.c.b16 %v1014, %v1006
    %v1767 = vpack.c.b16 %v1015, %v1007
    %v1768 = vpack.c.b16 %v1016, %v1008
    %v1769 = vpack.c.b16 %v1017, %v1009
    %v1770 = vpack.c.b16 %v1026, %v1018
    %v1771 = vpack.c.b16 %v1027, %v1019
    %v1772 = vpack.c.b16 %v1028, %v1020
    %v1773 = vpack.c.b16 %v1029, %v1021
    %v1774 = vpack.c.b16 %v1030, %v1022
    %v1775 = vpack.c.b16 %v1031, %v1023
    %v1776 = vpack.c.b16 %v1032, %v1024
    %v1777 = vpack.c.b16 %v1033, %v1025
    %v1778 = vpack.c.b16 %v1042, %v1034
    %v1779 = vpack.c.b16 %v1043, %v1035
    %v1780 = vpack.c.b16 %v1044, %v1036
    %v1781 = vpack.c.b16 %v1045, %v1037
    %v1782 = vpack.c.b16 %v1046, %v1038
    %v1783 = vpack.c.b16 %v1047, %v1039
    %v1784 = vpack.c.b16 %v1048, %v1040
    %v1785 = vpack.c.b16 %v1049, %v1041
    %v1786 = vpack.c.b16 %v1058, %v1050
    %v1787 = vpack.c.b16 %v1059, %v1051
    %v1788 = vpack.c.b16 %v1060, %v1052
    %v1789 = vpack.c.b16 %v1061, %v1053
    %v1790 = vpack.c.b16 %v1062, %v1054
    %v1791 = vpack.c.b16 %v1063, %v1055
    %v1792 = vpack.c.b16 %v1064, %v1056
    %v1793 = vpack.c.b16 %v1065, %v1057
    %v1794 = vpack.c.b16 %v1074, %v1066
    %v1795 = vpack.c.b16 %v1075, %v1067
    %v1796 = vpack.c.b16 %v1076, %v1068
    %v1797 = vpack.c.b16 %v1077, %v1069
    %v1798 = vpack.c.b16 %v1078, %v1070
    %v1799 = vpack.c.b16 %v1079, %v1071
    %v1800 = vpack.c.b16 %v1080, %v1072
    %v1801 = vpack.c.b16 %v1081, %v1073
    %v1802 = vpack.c.b16 %v1090, %v1082
    %v1803 = vpack.c.b16 %v1091, %v1083
    %v1804 = vpack.c.b16 %v1092, %v1084
    %v1805 = vpack.c.b16 %v1093, %v1085
    %v1806 = vpack.c.b16 %v1094, %v1086
    %v1807 = vpack.c.b16 %v1095, %v1087
    %v1808 = vpack.c.b16 %v1096, %v1088
    %v1809 = vpack.c.b16 %v1097, %v1089
    %v1810 = vpack.c.b16 %v1106, %v1098
    %v1811 = vpack.c.b16 %v1107, %v1099
    %v1812 = vpack.c.b16 %v1108, %v1100
    %v1813 = vpack.c.b16 %v1109, %v1101
    %v1814 = vpack.c.b16 %v1110, %v1102
    %v1815 = vpack.c.b16 %v1111, %v1103
    %v1816 = vpack.c.b16 %v1112, %v1104
    %v1817 = vpack.c.b16 %v1113, %v1105
    %v1818 = vpack.c.b16 %v1122, %v1114
    %v1819 = vpack.c.b16 %v1123, %v1115
    %v1820 = vpack.c.b16 %v1124, %v1116
    %v1821 = vpack.c.b16 %v1125, %v1117
    %v1822 = vpack.c.b16 %v1126, %v1118
    %v1823 = vpack.c.b16 %v1127, %v1119
    %v1824 = vpack.c.b16 %v1128, %v1120
    %v1825 = vpack.c.b16 %v1129, %v1121
    %v1826 = vpack.c.b16 %v1138, %v1130
    %v1827 = vpack.c.b16 %v1139, %v1131
    %v1828 = vpack.c.b16 %v1140, %v1132
    %v1829 = vpack.c.b16 %v1141, %v1133
    %v1830 = vpack.c.b16 %v1142, %v1134
    %v1831 = vpack.c.b16 %v1143, %v1135
    %v1832 = vpack.c.b16 %v1144, %v1136
    %v1833 = vpack.c.b16 %v1145, %v1137
    %v1834 = vpack.c.b16 %v1154, %v1146
    %v1835 = vpack.c.b16 %v1155, %v1147
    %v1836 = vpack.c.b16 %v1156, %v1148
    %v1837 = vpack.c.b16 %v1157, %v1149
    %v1838 = vpack.c.b16 %v1158, %v1150
    %v1839 = vpack.c.b16 %v1159, %v1151
    %v1840 = vpack.c.b16 %v1160, %v1152
    %v1841 = vpack.c.b16 %v1161, %v1153
    %v1842 = vpack.c.b16 %v1170, %v1162
    %v1843 = vpack.c.b16 %v1171, %v1163
    %v1844 = vpack.c.b16 %v1172, %v1164
    %v1845 = vpack.c.b16 %v1173, %v1165
    %v1846 = vpack.c.b16 %v1174, %v1166
    %v1847 = vpack.c.b16 %v1175, %v1167
    %v1848 = vpack.c.b16 %v1176, %v1168
    %v1849 = vpack.c.b16 %v1177, %v1169
    %v1850 = vpack.c.b16 %v1186, %v1178
    %v1851 = vpack.c.b16 %v1187, %v1179
    %v1852 = vpack.c.b16 %v1188, %v1180
    %v1853 = vpack.c.b16 %v1189, %v1181
    %v1854 = vpack.c.b16 %v1190, %v1182
    %v1855 = vpack.c.b16 %v1191, %v1183
    %v1856 = vpack.c.b16 %v1192, %v1184
    %v1857 = vpack.c.b16 %v1193, %v1185
    %v1858 = vpack.c.b16 %v1202, %v1194
    %v1859 = vpack.c.b16 %v1203, %v1195
    %v1860 = vpack.c.b16 %v1204, %v1196
    %v1861 = vpack.c.b16 %v1205, %v1197
    %v1862 = vpack.c.b16 %v1206, %v1198
    %v1863 = vpack.c.b16 %v1207, %v1199
    %v1864 = vpack.c.b16 %v1208, %v1200
    %v1865 = vpack.c.b16 %v1209, %v1201
    %v1866 = vpack.c.b16 %v1218, %v1210
    %v1867 = vpack.c.b16 %v1219, %v1211
    %v1868 = vpack.c.b16 %v1220, %v1212
    %v1869 = vpack.c.b16 %v1221, %v1213
    %v1870 = vpack.c.b16 %v1222, %v1214
    %v1871 = vpack.c.b16 %v1223, %v1215
    %v1872 = vpack.c.b16 %v1224, %v1216
    %v1873 = vpack.c.b16 %v1225, %v1217
    %v1874 = vpack.c.b16 %v1234, %v1226
    %v1875 = vpack.c.b16 %v1235, %v1227
    %v1876 = vpack.c.b16 %v1236, %v1228
    %v1877 = vpack.c.b16 %v1237, %v1229
    %v1878 = vpack.c.b16 %v1238, %v1230
    %v1879 = vpack.c.b16 %v1239, %v1231
    %v1880 = vpack.c.b16 %v1240, %v1232
    %v1881 = vpack.c.b16 %v1241, %v1233
    %v1882 = vpack.c.b16 %v1250, %v1242
    %v1883 = vpack.c.b16 %v1251, %v1243
    %v1884 = vpack.c.b16 %v1252, %v1244
    %v1885 = vpack.c.b16 %v1253, %v1245
    %v1886 = vpack.c.b16 %v1254, %v1246
    %v1887 = vpack.c.b16 %v1255, %v1247
    %v1888 = vpack.c.b16 %v1256, %v1248
    %v1889 = vpack.c.b16 %v1257, %v1249
    %v1890 = vpack.c.b16 %v1266, %v1258
    %v1891 = vpack.c.b16 %v1267, %v1259
    %v1892 = vpack.c.b16 %v1268, %v1260
    %v1893 = vpack.c.b16 %v1269, %v1261
    %v1894 = vpack.c.b16 %v1270, %v1262
    %v1895 = vpack.c.b16 %v1271, %v1263
    %v1896 = vpack.c.b16 %v1272, %v1264
    %v1897 = vpack.c.b16 %v1273, %v1265
    %v1898 = vpack.c.b16 %v1282, %v1274
    %v1899 = vpack.c.b16 %v1283, %v1275
    %v1900 = vpack.c.b16 %v1284, %v1276
    %v1901 = vpack.c.b16 %v1285, %v1277
    %v1902 = vpack.c.b16 %v1286, %v1278
    %v1903 = vpack.c.b16 %v1287, %v1279
    %v1904 = vpack.c.b16 %v1288, %v1280
    %v1905 = vpack.c.b16 %v1289, %v1281
    %v1906 = vpack.c.b16 %v1298, %v1290
    %v1907 = vpack.c.b16 %v1299, %v1291
    %v1908 = vpack.c.b16 %v1300, %v1292
    %v1909 = vpack.c.b16 %v1301, %v1293
    %v1910 = vpack.c.b16 %v1302, %v1294
    %v1911 = vpack.c.b16 %v1303, %v1295
    %v1912 = vpack.c.b16 %v1304, %v1296
    %v1913 = vpack.c.b16 %v1305, %v1297
    %v1914 = vpack.c.b16 %v1314, %v1306
    %v1915 = vpack.c.b16 %v1315, %v1307
    %v1916 = vpack.c.b16 %v1316, %v1308
    %v1917 = vpack.c.b16 %v1317, %v1309
    %v1918 = vpack.c.b16 %v1318, %v1310
    %v1919 = vpack.c.b16 %v1319, %v1311
    %v1920 = vpack.c.b16 %v1320, %v1312
    %v1921 = vpack.c.b16 %v1321, %v1313
    %v1922 = vpack.c.b16 %v1330, %v1322
    %v1923 = vpack.c.b16 %v1331, %v1323
    %v1924 = vpack.c.b16 %v1332, %v1324
    %v1925 = vpack.c.b16 %v1333, %v1325
    %v1926 = vpack.c.b16 %v1334, %v1326
    %v1927 = vpack.c.b16 %v1335, %v1327
    %v1928 = vpack.c.b16 %v1336, %v1328
    %v1929 = vpack.c.b16 %v1337, %v1329
    %v1930 = vpack.c.b16 %v1346, %v1338
    %v1931 = vpack.c.b16 %v1347, %v1339
    %v1932 = vpack.c.b16 %v1348, %v1340
    %v1933 = vpack.c.b16 %v1349, %v1341
    %v1934 = vpack.c.b16 %v1350, %v1342
    %v1935 = vpack.c.b16 %v1351, %v1343
    %v1936 = vpack.c.b16 %v1352, %v1344
    %v1937 = vpack.c.b16 %v1353, %v1345
    %v1938 = vpack.c.b16 %v1362, %v1354
    %v1939 = vpack.c.b16 %v1363, %v1355
    %v1940 = vpack.c.b16 %v1364, %v1356
    %v1941 = vpack.c.b16 %v1365, %v1357
    %v1942 = vpack.c.b16 %v1366, %v1358
    %v1943 = vpack.c.b16 %v1367, %v1359
    %v1944 = vpack.c.b16 %v1368, %v1360
    %v1945 = vpack.c.b16 %v1369, %v1361
    %v1946 = vpack.c.b16 %v1378, %v1370
    %v1947 = vpack.c.b16 %v1379, %v1371
    %v1948 = vpack.c.b16 %v1380, %v1372
    %v1949 = vpack.c.b16 %v1381, %v1373
    %v1950 = vpack.c.b16 %v1382, %v1374
    %v1951 = vpack.c.b16 %v1383, %v1375
    %v1952 = vpack.c.b16 %v1384, %v1376
    %v1953 = vpack.c.b16 %v1385, %v1377
    %v1954 = vpack.c.b16 %v1394, %v1386
    %v1955 = vpack.c.b16 %v1395, %v1387
    %v1956 = vpack.c.b16 %v1396, %v1388
    %v1957 = vpack.c.b16 %v1397, %v1389
    %v1958 = vpack.c.b16 %v1398, %v1390
    %v1959 = vpack.c.b16 %v1399, %v1391
    %v1960 = vpack.c.b16 %v1400, %v1392
    %v1961 = vpack.c.b16 %v1401, %v1393
    %v1962 = vpack.c.b16 %v1410, %v1402
    %v1963 = vpack.c.b16 %v1411, %v1403
    %v1964 = vpack.c.b16 %v1412, %v1404
    %v1965 = vpack.c.b16 %v1413, %v1405
    %v1966 = vpack.c.b16 %v1414, %v1406
    %v1967 = vpack.c.b16 %v1415, %v1407
    %v1968 = vpack.c.b16 %v1416, %v1408
    %v1969 = vpack.c.b16 %v1417, %v1409
    %v1970 = vpack.c.b16 %v1426, %v1418
    %v1971 = vpack.c.b16 %v1427, %v1419
    %v1972 = vpack.c.b16 %v1428, %v1420
    %v1973 = vpack.c.b16 %v1429, %v1421
    %v1974 = vpack.c.b16 %v1430, %v1422
    %v1975 = vpack.c.b16 %v1431, %v1423
    %v1976 = vpack.c.b16 %v1432, %v1424
    %v1977 = vpack.c.b16 %v1433, %v1425
    %v1978 = vpack.c.b16 %v1442, %v1434
    %v1979 = vpack.c.b16 %v1443, %v1435
    %v1980 = vpack.c.b16 %v1444, %v1436
    %v1981 = vpack.c.b16 %v1445, %v1437
    %v1982 = vpack.c.b16 %v1446, %v1438
    %v1983 = vpack.c.b16 %v1447, %v1439
    %v1984 = vpack.c.b16 %v1448, %v1440
    %v1985 = vpack.c.b16 %v1449, %v1441
    %v1986 = vpack.c.b16 %v1458, %v1450
    %v1987 = vpack.c.b16 %v1459, %v1451
    %v1988 = vpack.c.b16 %v1460, %v1452
    %v1989 = vpack.c.b16 %v1461, %v1453
    %v1990 = vpack.c.b16 %v1462, %v1454
    %v1991 = vpack.c.b16 %v1463, %v1455
    %v1992 = vpack.c.b16 %v1464, %v1456
    %v1993 = vpack.c.b16 %v1465, %v1457
    %v1994 = vpack.c.b16 %v1474, %v1466
    %v1995 = vpack.c.b16 %v1475, %v1467
    %v1996 = vpack.c.b16 %v1476, %v1468
    %v1997 = vpack.c.b16 %v1477, %v1469
    %v1998 = vpack.c.b16 %v1478, %v1470
    %v1999 = vpack.c.b16 %v1479, %v1471
    %v2000 = vpack.c.b16 %v1480, %v1472
    %v2001 = vpack.c.b16 %v1481, %v1473
    %v2002 = vpack.c.b16 %v1490, %v1482
    %v2003 = vpack.c.b16 %v1491, %v1483
    %v2004 = vpack.c.b16 %v1492, %v1484
    %v2005 = vpack.c.b16 %v1493, %v1485
    %v2006 = vpack.c.b16 %v1494, %v1486
    %v2007 = vpack.c.b16 %v1495, %v1487
    %v2008 = vpack.c.b16 %v1496, %v1488
    %v2009 = vpack.c.b16 %v1497, %v1489
    %v2010 = vpack.c.b16 %v1506, %v1498
    %v2011 = vpack.c.b16 %v1507, %v1499
    %v2012 = vpack.c.b16 %v1508, %v1500
    %v2013 = vpack.c.b16 %v1509, %v1501
    %v2014 = vpack.c.b16 %v1510, %v1502
    %v2015 = vpack.c.b16 %v1511, %v1503
    %v2016 = vpack.c.b16 %v1512, %v1504
    %v2017 = vpack.c.b16 %v1513, %v1505
    %v2018 = vpack.c.b16 %v1522, %v1514
    %v2019 = vpack.c.b16 %v1523, %v1515
    %v2020 = vpack.c.b16 %v1524, %v1516
    %v2021 = vpack.c.b16 %v1525, %v1517
    %v2022 = vpack.c.b16 %v1526, %v1518
    %v2023 = vpack.c.b16 %v1527, %v1519
    %v2024 = vpack.c.b16 %v1528, %v1520
    %v2025 = vpack.c.b16 %v1529, %v1521
    %v2026 = vpack.c.b16 %v1538, %v1530
    %v2027 = vpack.c.b16 %v1539, %v1531
    %v2028 = vpack.c.b16 %v1540, %v1532
    %v2029 = vpack.c.b16 %v1541, %v1533
    %v2030 = vpack.c.b16 %v1542, %v1534
    %v2031 = vpack.c.b16 %v1543, %v1535
    %v2032 = vpack.c.b16 %v1544, %v1536
    %v2033 = vpack.c.b16 %v1545, %v1537
    %v2034 = vpack.c.b16 %v1554, %v1546
    %v2035 = vpack.c.b16 %v1555, %v1547
    %v2036 = vpack.c.b16 %v1556, %v1548
    %v2037 = vpack.c.b16 %v1557, %v1549
    %v2038 = vpack.c.b16 %v1558, %v1550
    %v2039 = vpack.c.b16 %v1559, %v1551
    %v2040 = vpack.c.b16 %v1560, %v1552
    %v2041 = vpack.c.b16 %v1561, %v1553
    %v2042 = vpack.c.b16 %v1570, %v1562
    %v2043 = vpack.c.b16 %v1571, %v1563
    %v2044 = vpack.c.b16 %v1572, %v1564
    %v2045 = vpack.c.b16 %v1573, %v1565
    %v2046 = vpack.c.b16 %v1574, %v1566
    %v2047 = vpack.c.b16 %v1575, %v1567
    %v2048 = vpack.c.b16 %v1576, %v1568
    %v2049 = vpack.c.b16 %v1577, %v1569
    %v2050 = vpack.c.b16 %v1586, %v1578
    %v2051 = vpack.c.b16 %v1587, %v1579
    %v2052 = vpack.c.b16 %v1588, %v1580
    %v2053 = vpack.c.b16 %v1589, %v1581
    %v2054 = vpack.c.b16 %v1590, %v1582
    %v2055 = vpack.c.b16 %v1591, %v1583
    %v2056 = vpack.c.b16 %v1592, %v1584
    %v2057 = vpack.c.b16 %v1593, %v1585
    %v2058 = vpack.c.b16 %v1602, %v1594
    %v2059 = vpack.c.b16 %v1603, %v1595
    %v2060 = vpack.c.b16 %v1604, %v1596
    %v2061 = vpack.c.b16 %v1605, %v1597
    %v2062 = vpack.c.b16 %v1606, %v1598
    %v2063 = vpack.c.b16 %v1607, %v1599
    %v2064 = vpack.c.b16 %v1608, %v1600
    %v2065 = vpack.c.b16 %v1609, %v1601
    %v2066 = vpack.c.b16 %v1618, %v1610
    %v2067 = vpack.c.b16 %v1619, %v1611
    %v2068 = vpack.c.b16 %v1620, %v1612
    %v2069 = vpack.c.b16 %v1621, %v1613
    %v2070 = vpack.c.b16 %v1622, %v1614
    %v2071 = vpack.c.b16 %v1623, %v1615
    %v2072 = vpack.c.b16 %v1624, %v1616
    %v2073 = vpack.c.b16 %v1625, %v1617
    %v2074 = vpack.c.b16 %v1634, %v1626
    %v2075 = vpack.c.b16 %v1635, %v1627
    %v2076 = vpack.c.b16 %v1636, %v1628
    %v2077 = vpack.c.b16 %v1637, %v1629
    %v2078 = vpack.c.b16 %v1638, %v1630
    %v2079 = vpack.c.b16 %v1639, %v1631
    %v2080 = vpack.c.b16 %v1640, %v1632
    %v2081 = vpack.c.b16 %v1641, %v1633
    %v2082 = vpack.c.b16 %v1650, %v1642
    %v2083 = vpack.c.b16 %v1651, %v1643
    %v2084 = vpack.c.b16 %v1652, %v1644
    %v2085 = vpack.c.b16 %v1653, %v1645
    %v2086 = vpack.c.b16 %v1654, %v1646
    %v2087 = vpack.c.b16 %v1655, %v1647
    %v2088 = vpack.c.b16 %v1656, %v1648
    %v2089 = vpack.c.b16 %v1657, %v1649
    %v2090 = vpack.c.b16 %v1666, %v1658
    %v2091 = vpack.c.b16 %v1667, %v1659
    %v2092 = vpack.c.b16 %v1668, %v1660
    %v2093 = vpack.c.b16 %v1669, %v1661
    %v2094 = vpack.c.b16 %v1670, %v1662
    %v2095 = vpack.c.b16 %v1671, %v1663
    %v2096 = vpack.c.b16 %v1672, %v1664
    %v2097 = vpack.c.b16 %v1673, %v1665
    %v2098 = vpack.c.b16 %v1682, %v1674
    %v2099 = vpack.c.b16 %v1683, %v1675
    %v2100 = vpack.c.b16 %v1684, %v1676
    %v2101 = vpack.c.b16 %v1685, %v1677
    %v2102 = vpack.c.b16 %v1686, %v1678
    %v2103 = vpack.c.b16 %v1687, %v1679
    %v2104 = vpack.c.b16 %v1688, %v1680
    %v2105 = vpack.c.b16 %v1689, %v1681
    %v2106 = vpack.c.b16 %v1698, %v1690
    %v2107 = vpack.c.b16 %v1699, %v1691
    %v2108 = vpack.c.b16 %v1700, %v1692
    %v2109 = vpack.c.b16 %v1701, %v1693
    %v2110 = vpack.c.b16 %v1702, %v1694
    %v2111 = vpack.c.b16 %v1703, %v1695
    %v2112 = vpack.c.b16 %v1704, %v1696
    %v2113 = vpack.c.b16 %v1705, %v1697
    %v2114 = vpack.c.b16 %v1714, %v1706
    %v2115 = vpack.c.b16 %v1715, %v1707
    %v2116 = vpack.c.b16 %v1716, %v1708
    %v2117 = vpack.c.b16 %v1717, %v1709
    %v2118 = vpack.c.b16 %v1718, %v1710
    %v2119 = vpack.c.b16 %v1719, %v1711
    %v2120 = vpack.c.b16 %v1720, %v1712
    %v2121 = vpack.c.b16 %v1721, %v1713
    %v2122 = vpack.c.b16 %v1730, %v1722
    %v2123 = vpack.c.b16 %v1731, %v1723
    %v2124 = vpack.c.b16 %v1732, %v1724
    %v2125 = vpack.c.b16 %v1733, %v1725
    %v2126 = vpack.c.b16 %v1734, %v1726
    %v2127 = vpack.c.b16 %v1735, %v1727
    %v2128 = vpack.c.b16 %v1736, %v1728
    %v2129 = vpack.c.b16 %v1737, %v1729
    %vm2522 = vcmask 130048
    %v2524 = vsel %vm2522, %v151, 0
    %2526 = vmatpush.bf16.msra.mxu0 %v1794
    %2527 = vmatpush.bf16.msra.mxu0 %v1786
    %2528 = vmatpush.bf16.msra.mxu0 %v1778
    %2529 = vmatpush.bf16.msra.mxu0 %v1770
    %2530 = vmatpush.bf16.msra.mxu0 %v1762
    %2531 = vmatpush.bf16.msra.mxu0 %v1754
    %2532 = vmatpush.bf16.msra.mxu0 %v1746
    %2533 = vmatpush.bf16.msra.mxu0 %v1738
    %2534 = vmatmul.bf16.gmra.mxu0 %v145
    %v2535 = vpop.f32.mrf.mxu0
    %v2536 = vadd.f32 %v546, %v2535
    %v2537 = vpop.f32.mrf.mxu0
    %v2538 = vadd.f32 %v546, %v2537
    %2539 = vdwg.mxu0
    %2540 = vmatpush.bf16.msra.mxu0 %v1858
    %2541 = vmatpush.bf16.msra.mxu0 %v1850
    %2542 = vmatpush.bf16.msra.mxu0 %v1842
    %2543 = vmatpush.bf16.msra.mxu0 %v1834
    %2544 = vmatpush.bf16.msra.mxu0 %v1826
    %2545 = vmatpush.bf16.msra.mxu0 %v1818
    %2546 = vmatpush.bf16.msra.mxu0 %v1810
    %2547 = vmatpush.bf16.msra.mxu0 %v1802
    %2548 = vmatmul.bf16.gmra.mxu0 %v146
    %v2549 = vpop.f32.mrf.mxu0
    %v2550 = vadd.f32 %v2536, %v2549
    %v2551 = vpop.f32.mrf.mxu0
    %v2552 = vadd.f32 %v2538, %v2551
    %2553 = vdwg.mxu0
    %2554 = vmatpush.bf16.msra.mxu0 %v1922
    %2555 = vmatpush.bf16.msra.mxu0 %v1914
    %2556 = vmatpush.bf16.msra.mxu0 %v1906
    %2557 = vmatpush.bf16.msra.mxu0 %v1898
    %2558 = vmatpush.bf16.msra.mxu0 %v1890
    %2559 = vmatpush.bf16.msra.mxu0 %v1882
    %2560 = vmatpush.bf16.msra.mxu0 %v1874
    %2561 = vmatpush.bf16.msra.mxu0 %v1866
    %2562 = vmatmul.bf16.gmra.mxu0 %v147
    %v2563 = vpop.f32.mrf.mxu0
    %v2564 = vadd.f32 %v2550, %v2563
    %v2565 = vpop.f32.mrf.mxu0
    %v2566 = vadd.f32 %v2552, %v2565
    %2567 = vdwg.mxu0
    %2568 = vmatpush.bf16.msra.mxu0 %v1986
    %2569 = vmatpush.bf16.msra.mxu0 %v1978
    %2570 = vmatpush.bf16.msra.mxu0 %v1970
    %2571 = vmatpush.bf16.msra.mxu0 %v1962
    %2572 = vmatpush.bf16.msra.mxu0 %v1954
    %2573 = vmatpush.bf16.msra.mxu0 %v1946
    %2574 = vmatpush.bf16.msra.mxu0 %v1938
    %2575 = vmatpush.bf16.msra.mxu0 %v1930
    %2576 = vmatmul.bf16.gmra.mxu0 %v148
    %v2577 = vpop.f32.mrf.mxu0
    %v2578 = vadd.f32 %v2564, %v2577
    %v2579 = vpop.f32.mrf.mxu0
    %v2580 = vadd.f32 %v2566, %v2579
    %2581 = vdwg.mxu0
    %2582 = vmatpush.bf16.msra.mxu0 %v2050
    %2583 = vmatpush.bf16.msra.mxu0 %v2042
    %2584 = vmatpush.bf16.msra.mxu0 %v2034
    %2585 = vmatpush.bf16.msra.mxu0 %v2026
    %2586 = vmatpush.bf16.msra.mxu0 %v2018
    %2587 = vmatpush.bf16.msra.mxu0 %v2010
    %2588 = vmatpush.bf16.msra.mxu0 %v2002
    %2589 = vmatpush.bf16.msra.mxu0 %v1994
    %2590 = vmatmul.bf16.gmra.mxu0 %v149
    %v2591 = vpop.f32.mrf.mxu0
    %v2592 = vadd.f32 %v2578, %v2591
    %v2593 = vpop.f32.mrf.mxu0
    %v2594 = vadd.f32 %v2580, %v2593
    %2595 = vdwg.mxu0
    %2596 = vmatpush.bf16.msra.mxu0 %v2114
    %2597 = vmatpush.bf16.msra.mxu0 %v2106
    %2598 = vmatpush.bf16.msra.mxu0 %v2098
    %2599 = vmatpush.bf16.msra.mxu0 %v2090
    %2600 = vmatpush.bf16.msra.mxu0 %v2082
    %2601 = vmatpush.bf16.msra.mxu0 %v2074
    %2602 = vmatpush.bf16.msra.mxu0 %v2066
    %2603 = vmatpush.bf16.msra.mxu0 %v2058
    %2604 = vmatmul.bf16.gmra.mxu0 %v150
    %v2605 = vpop.f32.mrf.mxu0
    %v2606 = vadd.f32 %v2592, %v2605
    %v2607 = vpop.f32.mrf.mxu0
    %v2608 = vadd.f32 %v2594, %v2607
    %2609 = vdwg.mxu0
    %2610 = vmatpush.bf16.msra.mxu0 0
    %2611 = vmatpush.bf16.msra.mxu0 0
    %2612 = vmatpush.bf16.msra.mxu0 0
    %2613 = vmatpush.bf16.msra.mxu0 0
    %2614 = vmatpush.bf16.msra.mxu0 0
    %2615 = vmatpush.bf16.msra.mxu0 0
    %2616 = vmatpush.bf16.msra.mxu0 0
    %2617 = vmatpush.bf16.msra.mxu0 %v2122
    %2618 = vmatmul.bf16.gmra.mxu0 %v2524
    %v2619 = vpop.f32.mrf.mxu0
    %v2620 = vadd.f32 %v2606, %v2619
    %v2621 = vpop.f32.mrf.mxu0
    %v2622 = vadd.f32 %v2608, %v2621
    %2623 = vdwg.mxu0
    %2624 = vmatpush.bf16.msra.mxu0 %v1795
    %2625 = vmatpush.bf16.msra.mxu0 %v1787
    %2626 = vmatpush.bf16.msra.mxu0 %v1779
    %2627 = vmatpush.bf16.msra.mxu0 %v1771
    %2628 = vmatpush.bf16.msra.mxu0 %v1763
    %2629 = vmatpush.bf16.msra.mxu0 %v1755
    %2630 = vmatpush.bf16.msra.mxu0 %v1747
    %2631 = vmatpush.bf16.msra.mxu0 %v1739
    %2632 = vmatmul.bf16.gmra.mxu0 %v145
    %v2633 = vpop.f32.mrf.mxu0
    %v2634 = vadd.f32 %v547, %v2633
    %v2635 = vpop.f32.mrf.mxu0
    %v2636 = vadd.f32 %v547, %v2635
    %2637 = vdwg.mxu0
    %2638 = vmatpush.bf16.msra.mxu0 %v1859
    %2639 = vmatpush.bf16.msra.mxu0 %v1851
    %2640 = vmatpush.bf16.msra.mxu0 %v1843
    %2641 = vmatpush.bf16.msra.mxu0 %v1835
    %2642 = vmatpush.bf16.msra.mxu0 %v1827
    %2643 = vmatpush.bf16.msra.mxu0 %v1819
    %2644 = vmatpush.bf16.msra.mxu0 %v1811
    %2645 = vmatpush.bf16.msra.mxu0 %v1803
    %2646 = vmatmul.bf16.gmra.mxu0 %v146
    %v2647 = vpop.f32.mrf.mxu0
    %v2648 = vadd.f32 %v2634, %v2647
    %v2649 = vpop.f32.mrf.mxu0
    %v2650 = vadd.f32 %v2636, %v2649
    %2651 = vdwg.mxu0
    %2652 = vmatpush.bf16.msra.mxu0 %v1923
    %2653 = vmatpush.bf16.msra.mxu0 %v1915
    %2654 = vmatpush.bf16.msra.mxu0 %v1907
    %2655 = vmatpush.bf16.msra.mxu0 %v1899
    %2656 = vmatpush.bf16.msra.mxu0 %v1891
    %2657 = vmatpush.bf16.msra.mxu0 %v1883
    %2658 = vmatpush.bf16.msra.mxu0 %v1875
    %2659 = vmatpush.bf16.msra.mxu0 %v1867
    %2660 = vmatmul.bf16.gmra.mxu0 %v147
    %v2661 = vpop.f32.mrf.mxu0
    %v2662 = vadd.f32 %v2648, %v2661
    %v2663 = vpop.f32.mrf.mxu0
    %v2664 = vadd.f32 %v2650, %v2663
    %2665 = vdwg.mxu0
    %2666 = vmatpush.bf16.msra.mxu0 %v1987
    %2667 = vmatpush.bf16.msra.mxu0 %v1979
    %2668 = vmatpush.bf16.msra.mxu0 %v1971
    %2669 = vmatpush.bf16.msra.mxu0 %v1963
    %2670 = vmatpush.bf16.msra.mxu0 %v1955
    %2671 = vmatpush.bf16.msra.mxu0 %v1947
    %2672 = vmatpush.bf16.msra.mxu0 %v1939
    %2673 = vmatpush.bf16.msra.mxu0 %v1931
    %2674 = vmatmul.bf16.gmra.mxu0 %v148
    %v2675 = vpop.f32.mrf.mxu0
    %v2676 = vadd.f32 %v2662, %v2675
    %v2677 = vpop.f32.mrf.mxu0
    %v2678 = vadd.f32 %v2664, %v2677
    %2679 = vdwg.mxu0
    %2680 = vmatpush.bf16.msra.mxu0 %v2051
    %2681 = vmatpush.bf16.msra.mxu0 %v2043
    %2682 = vmatpush.bf16.msra.mxu0 %v2035
    %2683 = vmatpush.bf16.msra.mxu0 %v2027
    %2684 = vmatpush.bf16.msra.mxu0 %v2019
    %2685 = vmatpush.bf16.msra.mxu0 %v2011
    %2686 = vmatpush.bf16.msra.mxu0 %v2003
    %2687 = vmatpush.bf16.msra.mxu0 %v1995
    %2688 = vmatmul.bf16.gmra.mxu0 %v149
    %v2689 = vpop.f32.mrf.mxu0
    %v2690 = vadd.f32 %v2676, %v2689
    %v2691 = vpop.f32.mrf.mxu0
    %v2692 = vadd.f32 %v2678, %v2691
    %2693 = vdwg.mxu0
    %2694 = vmatpush.bf16.msra.mxu0 %v2115
    %2695 = vmatpush.bf16.msra.mxu0 %v2107
    %2696 = vmatpush.bf16.msra.mxu0 %v2099
    %2697 = vmatpush.bf16.msra.mxu0 %v2091
    %2698 = vmatpush.bf16.msra.mxu0 %v2083
    %2699 = vmatpush.bf16.msra.mxu0 %v2075
    %2700 = vmatpush.bf16.msra.mxu0 %v2067
    %2701 = vmatpush.bf16.msra.mxu0 %v2059
    %2702 = vmatmul.bf16.gmra.mxu0 %v150
    %v2703 = vpop.f32.mrf.mxu0
    %v2704 = vadd.f32 %v2690, %v2703
    %v2705 = vpop.f32.mrf.mxu0
    %v2706 = vadd.f32 %v2692, %v2705
    %2707 = vdwg.mxu0
    %2708 = vmatpush.bf16.msra.mxu0 0
    %2709 = vmatpush.bf16.msra.mxu0 0
    %2710 = vmatpush.bf16.msra.mxu0 0
    %2711 = vmatpush.bf16.msra.mxu0 0
    %2712 = vmatpush.bf16.msra.mxu0 0
    %2713 = vmatpush.bf16.msra.mxu0 0
    %2714 = vmatpush.bf16.msra.mxu0 0
    %2715 = vmatpush.bf16.msra.mxu0 %v2123
    %2716 = vmatmul.bf16.gmra.mxu0 %v2524
    %v2717 = vpop.f32.mrf.mxu0
    %v2718 = vadd.f32 %v2704, %v2717
    %v2719 = vpop.f32.mrf.mxu0
    %v2720 = vadd.f32 %v2706, %v2719
    %2721 = vdwg.mxu0
    %2722 = vmatpush.bf16.msra.mxu0 %v1796
    %2723 = vmatpush.bf16.msra.mxu0 %v1788
    %2724 = vmatpush.bf16.msra.mxu0 %v1780
    %2725 = vmatpush.bf16.msra.mxu0 %v1772
    %2726 = vmatpush.bf16.msra.mxu0 %v1764
    %2727 = vmatpush.bf16.msra.mxu0 %v1756
    %2728 = vmatpush.bf16.msra.mxu0 %v1748
    %2729 = vmatpush.bf16.msra.mxu0 %v1740
    %2730 = vmatmul.bf16.gmra.mxu0 %v145
    %v2731 = vpop.f32.mrf.mxu0
    %v2732 = vadd.f32 %v548, %v2731
    %v2733 = vpop.f32.mrf.mxu0
    %v2734 = vadd.f32 %v548, %v2733
    %2735 = vdwg.mxu0
    %2736 = vmatpush.bf16.msra.mxu0 %v1860
    %2737 = vmatpush.bf16.msra.mxu0 %v1852
    %2738 = vmatpush.bf16.msra.mxu0 %v1844
    %2739 = vmatpush.bf16.msra.mxu0 %v1836
    %2740 = vmatpush.bf16.msra.mxu0 %v1828
    %2741 = vmatpush.bf16.msra.mxu0 %v1820
    %2742 = vmatpush.bf16.msra.mxu0 %v1812
    %2743 = vmatpush.bf16.msra.mxu0 %v1804
    %2744 = vmatmul.bf16.gmra.mxu0 %v146
    %v2745 = vpop.f32.mrf.mxu0
    %v2746 = vadd.f32 %v2732, %v2745
    %v2747 = vpop.f32.mrf.mxu0
    %v2748 = vadd.f32 %v2734, %v2747
    %2749 = vdwg.mxu0
    %2750 = vmatpush.bf16.msra.mxu0 %v1924
    %2751 = vmatpush.bf16.msra.mxu0 %v1916
    %2752 = vmatpush.bf16.msra.mxu0 %v1908
    %2753 = vmatpush.bf16.msra.mxu0 %v1900
    %2754 = vmatpush.bf16.msra.mxu0 %v1892
    %2755 = vmatpush.bf16.msra.mxu0 %v1884
    %2756 = vmatpush.bf16.msra.mxu0 %v1876
    %2757 = vmatpush.bf16.msra.mxu0 %v1868
    %2758 = vmatmul.bf16.gmra.mxu0 %v147
    %v2759 = vpop.f32.mrf.mxu0
    %v2760 = vadd.f32 %v2746, %v2759
    %v2761 = vpop.f32.mrf.mxu0
    %v2762 = vadd.f32 %v2748, %v2761
    %2763 = vdwg.mxu0
    %2764 = vmatpush.bf16.msra.mxu0 %v1988
    %2765 = vmatpush.bf16.msra.mxu0 %v1980
    %2766 = vmatpush.bf16.msra.mxu0 %v1972
    %2767 = vmatpush.bf16.msra.mxu0 %v1964
    %2768 = vmatpush.bf16.msra.mxu0 %v1956
    %2769 = vmatpush.bf16.msra.mxu0 %v1948
    %2770 = vmatpush.bf16.msra.mxu0 %v1940
    %2771 = vmatpush.bf16.msra.mxu0 %v1932
    %2772 = vmatmul.bf16.gmra.mxu0 %v148
    %v2773 = vpop.f32.mrf.mxu0
    %v2774 = vadd.f32 %v2760, %v2773
    %v2775 = vpop.f32.mrf.mxu0
    %v2776 = vadd.f32 %v2762, %v2775
    %2777 = vdwg.mxu0
    %2778 = vmatpush.bf16.msra.mxu0 %v2052
    %2779 = vmatpush.bf16.msra.mxu0 %v2044
    %2780 = vmatpush.bf16.msra.mxu0 %v2036
    %2781 = vmatpush.bf16.msra.mxu0 %v2028
    %2782 = vmatpush.bf16.msra.mxu0 %v2020
    %2783 = vmatpush.bf16.msra.mxu0 %v2012
    %2784 = vmatpush.bf16.msra.mxu0 %v2004
    %2785 = vmatpush.bf16.msra.mxu0 %v1996
    %2786 = vmatmul.bf16.gmra.mxu0 %v149
    %v2787 = vpop.f32.mrf.mxu0
    %v2788 = vadd.f32 %v2774, %v2787
    %v2789 = vpop.f32.mrf.mxu0
    %v2790 = vadd.f32 %v2776, %v2789
    %2791 = vdwg.mxu0
    %2792 = vmatpush.bf16.msra.mxu0 %v2116
    %2793 = vmatpush.bf16.msra.mxu0 %v2108
    %2794 = vmatpush.bf16.msra.mxu0 %v2100
    %2795 = vmatpush.bf16.msra.mxu0 %v2092
    %2796 = vmatpush.bf16.msra.mxu0 %v2084
    %2797 = vmatpush.bf16.msra.mxu0 %v2076
    %2798 = vmatpush.bf16.msra.mxu0 %v2068
    %2799 = vmatpush.bf16.msra.mxu0 %v2060
    %2800 = vmatmul.bf16.gmra.mxu0 %v150
    %v2801 = vpop.f32.mrf.mxu0
    %v2802 = vadd.f32 %v2788, %v2801
    %v2803 = vpop.f32.mrf.mxu0
    %v2804 = vadd.f32 %v2790, %v2803
    %2805 = vdwg.mxu0
    %2806 = vmatpush.bf16.msra.mxu0 0
    %2807 = vmatpush.bf16.msra.mxu0 0
    %2808 = vmatpush.bf16.msra.mxu0 0
    %2809 = vmatpush.bf16.msra.mxu0 0
    %2810 = vmatpush.bf16.msra.mxu0 0
    %2811 = vmatpush.bf16.msra.mxu0 0
    %2812 = vmatpush.bf16.msra.mxu0 0
    %2813 = vmatpush.bf16.msra.mxu0 %v2124
    %2814 = vmatmul.bf16.gmra.mxu0 %v2524
    %v2815 = vpop.f32.mrf.mxu0
    %v2816 = vadd.f32 %v2802, %v2815
    %v2817 = vpop.f32.mrf.mxu0
    %v2818 = vadd.f32 %v2804, %v2817
    %2819 = vdwg.mxu0
    %2820 = vmatpush.bf16.msra.mxu0 %v1797
    %2821 = vmatpush.bf16.msra.mxu0 %v1789
    %2822 = vmatpush.bf16.msra.mxu0 %v1781
    %2823 = vmatpush.bf16.msra.mxu0 %v1773
    %2824 = vmatpush.bf16.msra.mxu0 %v1765
    %2825 = vmatpush.bf16.msra.mxu0 %v1757
    %2826 = vmatpush.bf16.msra.mxu0 %v1749
    %2827 = vmatpush.bf16.msra.mxu0 %v1741
    %2828 = vmatmul.bf16.gmra.mxu0 %v145
    %v2829 = vpop.f32.mrf.mxu0
    %v2830 = vadd.f32 %v549, %v2829
    %v2831 = vpop.f32.mrf.mxu0
    %v2832 = vadd.f32 %v549, %v2831
    %2833 = vdwg.mxu0
    %2834 = vmatpush.bf16.msra.mxu0 %v1861
    %2835 = vmatpush.bf16.msra.mxu0 %v1853
    %2836 = vmatpush.bf16.msra.mxu0 %v1845
    %2837 = vmatpush.bf16.msra.mxu0 %v1837
    %2838 = vmatpush.bf16.msra.mxu0 %v1829
    %2839 = vmatpush.bf16.msra.mxu0 %v1821
    %2840 = vmatpush.bf16.msra.mxu0 %v1813
    %2841 = vmatpush.bf16.msra.mxu0 %v1805
    %2842 = vmatmul.bf16.gmra.mxu0 %v146
    %v2843 = vpop.f32.mrf.mxu0
    %v2844 = vadd.f32 %v2830, %v2843
    %v2845 = vpop.f32.mrf.mxu0
    %v2846 = vadd.f32 %v2832, %v2845
    %2847 = vdwg.mxu0
    %2848 = vmatpush.bf16.msra.mxu0 %v1925
    %2849 = vmatpush.bf16.msra.mxu0 %v1917
    %2850 = vmatpush.bf16.msra.mxu0 %v1909
    %2851 = vmatpush.bf16.msra.mxu0 %v1901
    %2852 = vmatpush.bf16.msra.mxu0 %v1893
    %2853 = vmatpush.bf16.msra.mxu0 %v1885
    %2854 = vmatpush.bf16.msra.mxu0 %v1877
    %2855 = vmatpush.bf16.msra.mxu0 %v1869
    %2856 = vmatmul.bf16.gmra.mxu0 %v147
    %v2857 = vpop.f32.mrf.mxu0
    %v2858 = vadd.f32 %v2844, %v2857
    %v2859 = vpop.f32.mrf.mxu0
    %v2860 = vadd.f32 %v2846, %v2859
    %2861 = vdwg.mxu0
    %2862 = vmatpush.bf16.msra.mxu0 %v1989
    %2863 = vmatpush.bf16.msra.mxu0 %v1981
    %2864 = vmatpush.bf16.msra.mxu0 %v1973
    %2865 = vmatpush.bf16.msra.mxu0 %v1965
    %2866 = vmatpush.bf16.msra.mxu0 %v1957
    %2867 = vmatpush.bf16.msra.mxu0 %v1949
    %2868 = vmatpush.bf16.msra.mxu0 %v1941
    %2869 = vmatpush.bf16.msra.mxu0 %v1933
    %2870 = vmatmul.bf16.gmra.mxu0 %v148
    %v2871 = vpop.f32.mrf.mxu0
    %v2872 = vadd.f32 %v2858, %v2871
    %v2873 = vpop.f32.mrf.mxu0
    %v2874 = vadd.f32 %v2860, %v2873
    %2875 = vdwg.mxu0
    %2876 = vmatpush.bf16.msra.mxu0 %v2053
    %2877 = vmatpush.bf16.msra.mxu0 %v2045
    %2878 = vmatpush.bf16.msra.mxu0 %v2037
    %2879 = vmatpush.bf16.msra.mxu0 %v2029
    %2880 = vmatpush.bf16.msra.mxu0 %v2021
    %2881 = vmatpush.bf16.msra.mxu0 %v2013
    %2882 = vmatpush.bf16.msra.mxu0 %v2005
    %2883 = vmatpush.bf16.msra.mxu0 %v1997
    %2884 = vmatmul.bf16.gmra.mxu0 %v149
    %v2885 = vpop.f32.mrf.mxu0
    %v2886 = vadd.f32 %v2872, %v2885
    %v2887 = vpop.f32.mrf.mxu0
    %v2888 = vadd.f32 %v2874, %v2887
    %2889 = vdwg.mxu0
    %2890 = vmatpush.bf16.msra.mxu0 %v2117
    %2891 = vmatpush.bf16.msra.mxu0 %v2109
    %2892 = vmatpush.bf16.msra.mxu0 %v2101
    %2893 = vmatpush.bf16.msra.mxu0 %v2093
    %2894 = vmatpush.bf16.msra.mxu0 %v2085
    %2895 = vmatpush.bf16.msra.mxu0 %v2077
    %2896 = vmatpush.bf16.msra.mxu0 %v2069
    %2897 = vmatpush.bf16.msra.mxu0 %v2061
    %2898 = vmatmul.bf16.gmra.mxu0 %v150
    %v2899 = vpop.f32.mrf.mxu0
    %v2900 = vadd.f32 %v2886, %v2899
    %v2901 = vpop.f32.mrf.mxu0
    %v2902 = vadd.f32 %v2888, %v2901
    %2903 = vdwg.mxu0
    %2904 = vmatpush.bf16.msra.mxu0 0
    %2905 = vmatpush.bf16.msra.mxu0 0
    %2906 = vmatpush.bf16.msra.mxu0 0
    %2907 = vmatpush.bf16.msra.mxu0 0
    %2908 = vmatpush.bf16.msra.mxu0 0
    %2909 = vmatpush.bf16.msra.mxu0 0
    %2910 = vmatpush.bf16.msra.mxu0 0
    %2911 = vmatpush.bf16.msra.mxu0 %v2125
    %2912 = vmatmul.bf16.gmra.mxu0 %v2524
    %v2913 = vpop.f32.mrf.mxu0
    %v2914 = vadd.f32 %v2900, %v2913
    %v2915 = vpop.f32.mrf.mxu0
    %v2916 = vadd.f32 %v2902, %v2915
    %2917 = vdwg.mxu0
    %2918 = vmatpush.bf16.msra.mxu0 %v1798
    %2919 = vmatpush.bf16.msra.mxu0 %v1790
    %2920 = vmatpush.bf16.msra.mxu0 %v1782
    %2921 = vmatpush.bf16.msra.mxu0 %v1774
    %2922 = vmatpush.bf16.msra.mxu0 %v1766
    %2923 = vmatpush.bf16.msra.mxu0 %v1758
    %2924 = vmatpush.bf16.msra.mxu0 %v1750
    %2925 = vmatpush.bf16.msra.mxu0 %v1742
    %2926 = vmatmul.bf16.gmra.mxu0 %v145
    %v2927 = vpop.f32.mrf.mxu0
    %v2928 = vadd.f32 %v550, %v2927
    %v2929 = vpop.f32.mrf.mxu0
    %v2930 = vadd.f32 %v550, %v2929
    %2931 = vdwg.mxu0
    %2932 = vmatpush.bf16.msra.mxu0 %v1862
    %2933 = vmatpush.bf16.msra.mxu0 %v1854
    %2934 = vmatpush.bf16.msra.mxu0 %v1846
    %2935 = vmatpush.bf16.msra.mxu0 %v1838
    %2936 = vmatpush.bf16.msra.mxu0 %v1830
    %2937 = vmatpush.bf16.msra.mxu0 %v1822
    %2938 = vmatpush.bf16.msra.mxu0 %v1814
    %2939 = vmatpush.bf16.msra.mxu0 %v1806
    %2940 = vmatmul.bf16.gmra.mxu0 %v146
    %v2941 = vpop.f32.mrf.mxu0
    %v2942 = vadd.f32 %v2928, %v2941
    %v2943 = vpop.f32.mrf.mxu0
    %v2944 = vadd.f32 %v2930, %v2943
    %2945 = vdwg.mxu0
    %2946 = vmatpush.bf16.msra.mxu0 %v1926
    %2947 = vmatpush.bf16.msra.mxu0 %v1918
    %2948 = vmatpush.bf16.msra.mxu0 %v1910
    %2949 = vmatpush.bf16.msra.mxu0 %v1902
    %2950 = vmatpush.bf16.msra.mxu0 %v1894
    %2951 = vmatpush.bf16.msra.mxu0 %v1886
    %2952 = vmatpush.bf16.msra.mxu0 %v1878
    %2953 = vmatpush.bf16.msra.mxu0 %v1870
    %2954 = vmatmul.bf16.gmra.mxu0 %v147
    %v2955 = vpop.f32.mrf.mxu0
    %v2956 = vadd.f32 %v2942, %v2955
    %v2957 = vpop.f32.mrf.mxu0
    %v2958 = vadd.f32 %v2944, %v2957
    %2959 = vdwg.mxu0
    %2960 = vmatpush.bf16.msra.mxu0 %v1990
    %2961 = vmatpush.bf16.msra.mxu0 %v1982
    %2962 = vmatpush.bf16.msra.mxu0 %v1974
    %2963 = vmatpush.bf16.msra.mxu0 %v1966
    %2964 = vmatpush.bf16.msra.mxu0 %v1958
    %2965 = vmatpush.bf16.msra.mxu0 %v1950
    %2966 = vmatpush.bf16.msra.mxu0 %v1942
    %2967 = vmatpush.bf16.msra.mxu0 %v1934
    %2968 = vmatmul.bf16.gmra.mxu0 %v148
    %v2969 = vpop.f32.mrf.mxu0
    %v2970 = vadd.f32 %v2956, %v2969
    %v2971 = vpop.f32.mrf.mxu0
    %v2972 = vadd.f32 %v2958, %v2971
    %2973 = vdwg.mxu0
    %2974 = vmatpush.bf16.msra.mxu0 %v2054
    %2975 = vmatpush.bf16.msra.mxu0 %v2046
    %2976 = vmatpush.bf16.msra.mxu0 %v2038
    %2977 = vmatpush.bf16.msra.mxu0 %v2030
    %2978 = vmatpush.bf16.msra.mxu0 %v2022
    %2979 = vmatpush.bf16.msra.mxu0 %v2014
    %2980 = vmatpush.bf16.msra.mxu0 %v2006
    %2981 = vmatpush.bf16.msra.mxu0 %v1998
    %2982 = vmatmul.bf16.gmra.mxu0 %v149
    %v2983 = vpop.f32.mrf.mxu0
    %v2984 = vadd.f32 %v2970, %v2983
    %v2985 = vpop.f32.mrf.mxu0
    %v2986 = vadd.f32 %v2972, %v2985
    %2987 = vdwg.mxu0
    %2988 = vmatpush.bf16.msra.mxu0 %v2118
    %2989 = vmatpush.bf16.msra.mxu0 %v2110
    %2990 = vmatpush.bf16.msra.mxu0 %v2102
    %2991 = vmatpush.bf16.msra.mxu0 %v2094
    %2992 = vmatpush.bf16.msra.mxu0 %v2086
    %2993 = vmatpush.bf16.msra.mxu0 %v2078
    %2994 = vmatpush.bf16.msra.mxu0 %v2070
    %2995 = vmatpush.bf16.msra.mxu0 %v2062
    %2996 = vmatmul.bf16.gmra.mxu0 %v150
    %v2997 = vpop.f32.mrf.mxu0
    %v2998 = vadd.f32 %v2984, %v2997
    %v2999 = vpop.f32.mrf.mxu0
    %v3000 = vadd.f32 %v2986, %v2999
    %3001 = vdwg.mxu0
    %3002 = vmatpush.bf16.msra.mxu0 0
    %3003 = vmatpush.bf16.msra.mxu0 0
    %3004 = vmatpush.bf16.msra.mxu0 0
    %3005 = vmatpush.bf16.msra.mxu0 0
    %3006 = vmatpush.bf16.msra.mxu0 0
    %3007 = vmatpush.bf16.msra.mxu0 0
    %3008 = vmatpush.bf16.msra.mxu0 0
    %3009 = vmatpush.bf16.msra.mxu0 %v2126
    %3010 = vmatmul.bf16.gmra.mxu0 %v2524
    %v3011 = vpop.f32.mrf.mxu0
    %v3012 = vadd.f32 %v2998, %v3011
    %v3013 = vpop.f32.mrf.mxu0
    %v3014 = vadd.f32 %v3000, %v3013
    %3015 = vdwg.mxu0
    %3016 = vmatpush.bf16.msra.mxu0 %v1799
    %3017 = vmatpush.bf16.msra.mxu0 %v1791
    %3018 = vmatpush.bf16.msra.mxu0 %v1783
    %3019 = vmatpush.bf16.msra.mxu0 %v1775
    %3020 = vmatpush.bf16.msra.mxu0 %v1767
    %3021 = vmatpush.bf16.msra.mxu0 %v1759
    %3022 = vmatpush.bf16.msra.mxu0 %v1751
    %3023 = vmatpush.bf16.msra.mxu0 %v1743
    %3024 = vmatmul.bf16.gmra.mxu0 %v145
    %v3025 = vpop.f32.mrf.mxu0
    %v3026 = vadd.f32 %v551, %v3025
    %v3027 = vpop.f32.mrf.mxu0
    %v3028 = vadd.f32 %v551, %v3027
    %3029 = vdwg.mxu0
    %3030 = vmatpush.bf16.msra.mxu0 %v1863
    %3031 = vmatpush.bf16.msra.mxu0 %v1855
    %3032 = vmatpush.bf16.msra.mxu0 %v1847
    %3033 = vmatpush.bf16.msra.mxu0 %v1839
    %3034 = vmatpush.bf16.msra.mxu0 %v1831
    %3035 = vmatpush.bf16.msra.mxu0 %v1823
    %3036 = vmatpush.bf16.msra.mxu0 %v1815
    %3037 = vmatpush.bf16.msra.mxu0 %v1807
    %3038 = vmatmul.bf16.gmra.mxu0 %v146
    %v3039 = vpop.f32.mrf.mxu0
    %v3040 = vadd.f32 %v3026, %v3039
    %v3041 = vpop.f32.mrf.mxu0
    %v3042 = vadd.f32 %v3028, %v3041
    %3043 = vdwg.mxu0
    %3044 = vmatpush.bf16.msra.mxu0 %v1927
    %3045 = vmatpush.bf16.msra.mxu0 %v1919
    %3046 = vmatpush.bf16.msra.mxu0 %v1911
    %3047 = vmatpush.bf16.msra.mxu0 %v1903
    %3048 = vmatpush.bf16.msra.mxu0 %v1895
    %3049 = vmatpush.bf16.msra.mxu0 %v1887
    %3050 = vmatpush.bf16.msra.mxu0 %v1879
    %3051 = vmatpush.bf16.msra.mxu0 %v1871
    %3052 = vmatmul.bf16.gmra.mxu0 %v147
    %v3053 = vpop.f32.mrf.mxu0
    %v3054 = vadd.f32 %v3040, %v3053
    %v3055 = vpop.f32.mrf.mxu0
    %v3056 = vadd.f32 %v3042, %v3055
    %3057 = vdwg.mxu0
    %3058 = vmatpush.bf16.msra.mxu0 %v1991
    %3059 = vmatpush.bf16.msra.mxu0 %v1983
    %3060 = vmatpush.bf16.msra.mxu0 %v1975
    %3061 = vmatpush.bf16.msra.mxu0 %v1967
    %3062 = vmatpush.bf16.msra.mxu0 %v1959
    %3063 = vmatpush.bf16.msra.mxu0 %v1951
    %3064 = vmatpush.bf16.msra.mxu0 %v1943
    %3065 = vmatpush.bf16.msra.mxu0 %v1935
    %3066 = vmatmul.bf16.gmra.mxu0 %v148
    %v3067 = vpop.f32.mrf.mxu0
    %v3068 = vadd.f32 %v3054, %v3067
    %v3069 = vpop.f32.mrf.mxu0
    %v3070 = vadd.f32 %v3056, %v3069
    %3071 = vdwg.mxu0
    %3072 = vmatpush.bf16.msra.mxu0 %v2055
    %3073 = vmatpush.bf16.msra.mxu0 %v2047
    %3074 = vmatpush.bf16.msra.mxu0 %v2039
    %3075 = vmatpush.bf16.msra.mxu0 %v2031
    %3076 = vmatpush.bf16.msra.mxu0 %v2023
    %3077 = vmatpush.bf16.msra.mxu0 %v2015
    %3078 = vmatpush.bf16.msra.mxu0 %v2007
    %3079 = vmatpush.bf16.msra.mxu0 %v1999
    %3080 = vmatmul.bf16.gmra.mxu0 %v149
    %v3081 = vpop.f32.mrf.mxu0
    %v3082 = vadd.f32 %v3068, %v3081
    %v3083 = vpop.f32.mrf.mxu0
    %v3084 = vadd.f32 %v3070, %v3083
    %3085 = vdwg.mxu0
    %3086 = vmatpush.bf16.msra.mxu0 %v2119
    %3087 = vmatpush.bf16.msra.mxu0 %v2111
    %3088 = vmatpush.bf16.msra.mxu0 %v2103
    %3089 = vmatpush.bf16.msra.mxu0 %v2095
    %3090 = vmatpush.bf16.msra.mxu0 %v2087
    %3091 = vmatpush.bf16.msra.mxu0 %v2079
    %3092 = vmatpush.bf16.msra.mxu0 %v2071
    %3093 = vmatpush.bf16.msra.mxu0 %v2063
    %3094 = vmatmul.bf16.gmra.mxu0 %v150
    %v3095 = vpop.f32.mrf.mxu0
    %v3096 = vadd.f32 %v3082, %v3095
    %v3097 = vpop.f32.mrf.mxu0
    %v3098 = vadd.f32 %v3084, %v3097
    %3099 = vdwg.mxu0
    %3100 = vmatpush.bf16.msra.mxu0 0
    %3101 = vmatpush.bf16.msra.mxu0 0
    %3102 = vmatpush.bf16.msra.mxu0 0
    %3103 = vmatpush.bf16.msra.mxu0 0
    %3104 = vmatpush.bf16.msra.mxu0 0
    %3105 = vmatpush.bf16.msra.mxu0 0
    %3106 = vmatpush.bf16.msra.mxu0 0
    %3107 = vmatpush.bf16.msra.mxu0 %v2127
    %3108 = vmatmul.bf16.gmra.mxu0 %v2524
    %v3109 = vpop.f32.mrf.mxu0
    %v3110 = vadd.f32 %v3096, %v3109
    %v3111 = vpop.f32.mrf.mxu0
    %v3112 = vadd.f32 %v3098, %v3111
    %3113 = vdwg.mxu0
    %3114 = vmatpush.bf16.msra.mxu0 %v1800
    %3115 = vmatpush.bf16.msra.mxu0 %v1792
    %3116 = vmatpush.bf16.msra.mxu0 %v1784
    %3117 = vmatpush.bf16.msra.mxu0 %v1776
    %3118 = vmatpush.bf16.msra.mxu0 %v1768
    %3119 = vmatpush.bf16.msra.mxu0 %v1760
    %3120 = vmatpush.bf16.msra.mxu0 %v1752
    %3121 = vmatpush.bf16.msra.mxu0 %v1744
    %3122 = vmatmul.bf16.gmra.mxu0 %v145
    %v3123 = vpop.f32.mrf.mxu0
    %v3124 = vadd.f32 %v552, %v3123
    %v3125 = vpop.f32.mrf.mxu0
    %v3126 = vadd.f32 %v552, %v3125
    %3127 = vdwg.mxu0
    %3128 = vmatpush.bf16.msra.mxu0 %v1864
    %3129 = vmatpush.bf16.msra.mxu0 %v1856
    %3130 = vmatpush.bf16.msra.mxu0 %v1848
    %3131 = vmatpush.bf16.msra.mxu0 %v1840
    %3132 = vmatpush.bf16.msra.mxu0 %v1832
    %3133 = vmatpush.bf16.msra.mxu0 %v1824
    %3134 = vmatpush.bf16.msra.mxu0 %v1816
    %3135 = vmatpush.bf16.msra.mxu0 %v1808
    %3136 = vmatmul.bf16.gmra.mxu0 %v146
    %v3137 = vpop.f32.mrf.mxu0
    %v3138 = vadd.f32 %v3124, %v3137
    %v3139 = vpop.f32.mrf.mxu0
    %v3140 = vadd.f32 %v3126, %v3139
    %3141 = vdwg.mxu0
    %3142 = vmatpush.bf16.msra.mxu0 %v1928
    %3143 = vmatpush.bf16.msra.mxu0 %v1920
    %3144 = vmatpush.bf16.msra.mxu0 %v1912
    %3145 = vmatpush.bf16.msra.mxu0 %v1904
    %3146 = vmatpush.bf16.msra.mxu0 %v1896
    %3147 = vmatpush.bf16.msra.mxu0 %v1888
    %3148 = vmatpush.bf16.msra.mxu0 %v1880
    %3149 = vmatpush.bf16.msra.mxu0 %v1872
    %3150 = vmatmul.bf16.gmra.mxu0 %v147
    %v3151 = vpop.f32.mrf.mxu0
    %v3152 = vadd.f32 %v3138, %v3151
    %v3153 = vpop.f32.mrf.mxu0
    %v3154 = vadd.f32 %v3140, %v3153
    %3155 = vdwg.mxu0
    %3156 = vmatpush.bf16.msra.mxu0 %v1992
    %3157 = vmatpush.bf16.msra.mxu0 %v1984
    %3158 = vmatpush.bf16.msra.mxu0 %v1976
    %3159 = vmatpush.bf16.msra.mxu0 %v1968
    %3160 = vmatpush.bf16.msra.mxu0 %v1960
    %3161 = vmatpush.bf16.msra.mxu0 %v1952
    %3162 = vmatpush.bf16.msra.mxu0 %v1944
    %3163 = vmatpush.bf16.msra.mxu0 %v1936
    %3164 = vmatmul.bf16.gmra.mxu0 %v148
    %v3165 = vpop.f32.mrf.mxu0
    %v3166 = vadd.f32 %v3152, %v3165
    %v3167 = vpop.f32.mrf.mxu0
    %v3168 = vadd.f32 %v3154, %v3167
    %3169 = vdwg.mxu0
    %3170 = vmatpush.bf16.msra.mxu0 %v2056
    %3171 = vmatpush.bf16.msra.mxu0 %v2048
    %3172 = vmatpush.bf16.msra.mxu0 %v2040
    %3173 = vmatpush.bf16.msra.mxu0 %v2032
    %3174 = vmatpush.bf16.msra.mxu0 %v2024
    %3175 = vmatpush.bf16.msra.mxu0 %v2016
    %3176 = vmatpush.bf16.msra.mxu0 %v2008
    %3177 = vmatpush.bf16.msra.mxu0 %v2000
    %3178 = vmatmul.bf16.gmra.mxu0 %v149
    %v3179 = vpop.f32.mrf.mxu0
    %v3180 = vadd.f32 %v3166, %v3179
    %v3181 = vpop.f32.mrf.mxu0
    %v3182 = vadd.f32 %v3168, %v3181
    %3183 = vdwg.mxu0
    %3184 = vmatpush.bf16.msra.mxu0 %v2120
    %3185 = vmatpush.bf16.msra.mxu0 %v2112
    %3186 = vmatpush.bf16.msra.mxu0 %v2104
    %3187 = vmatpush.bf16.msra.mxu0 %v2096
    %3188 = vmatpush.bf16.msra.mxu0 %v2088
    %3189 = vmatpush.bf16.msra.mxu0 %v2080
    %3190 = vmatpush.bf16.msra.mxu0 %v2072
    %3191 = vmatpush.bf16.msra.mxu0 %v2064
    %3192 = vmatmul.bf16.gmra.mxu0 %v150
    %v3193 = vpop.f32.mrf.mxu0
    %v3194 = vadd.f32 %v3180, %v3193
    %v3195 = vpop.f32.mrf.mxu0
    %v3196 = vadd.f32 %v3182, %v3195
    %3197 = vdwg.mxu0
    %3198 = vmatpush.bf16.msra.mxu0 0
    %3199 = vmatpush.bf16.msra.mxu0 0
    %3200 = vmatpush.bf16.msra.mxu0 0
    %3201 = vmatpush.bf16.msra.mxu0 0
    %3202 = vmatpush.bf16.msra.mxu0 0
    %3203 = vmatpush.bf16.msra.mxu0 0
    %3204 = vmatpush.bf16.msra.mxu0 0
    %3205 = vmatpush.bf16.msra.mxu0 %v2128
    %3206 = vmatmul.bf16.gmra.mxu0 %v2524
    %v3207 = vpop.f32.mrf.mxu0
    %v3208 = vadd.f32 %v3194, %v3207
    %v3209 = vpop.f32.mrf.mxu0
    %v3210 = vadd.f32 %v3196, %v3209
    %3211 = vdwg.mxu0
    %3212 = vmatpush.bf16.msra.mxu0 %v1801
    %3213 = vmatpush.bf16.msra.mxu0 %v1793
    %3214 = vmatpush.bf16.msra.mxu0 %v1785
    %3215 = vmatpush.bf16.msra.mxu0 %v1777
    %3216 = vmatpush.bf16.msra.mxu0 %v1769
    %3217 = vmatpush.bf16.msra.mxu0 %v1761
    %3218 = vmatpush.bf16.msra.mxu0 %v1753
    %3219 = vmatpush.bf16.msra.mxu0 %v1745
    %3220 = vmatmul.bf16.gmra.mxu0 %v145
    %v3221 = vpop.f32.mrf.mxu0
    %v3222 = vadd.f32 %v553, %v3221
    %v3223 = vpop.f32.mrf.mxu0
    %v3224 = vadd.f32 %v553, %v3223
    %3225 = vdwg.mxu0
    %3226 = vmatpush.bf16.msra.mxu0 %v1865
    %3227 = vmatpush.bf16.msra.mxu0 %v1857
    %3228 = vmatpush.bf16.msra.mxu0 %v1849
    %3229 = vmatpush.bf16.msra.mxu0 %v1841
    %3230 = vmatpush.bf16.msra.mxu0 %v1833
    %3231 = vmatpush.bf16.msra.mxu0 %v1825
    %3232 = vmatpush.bf16.msra.mxu0 %v1817
    %3233 = vmatpush.bf16.msra.mxu0 %v1809
    %3234 = vmatmul.bf16.gmra.mxu0 %v146
    %v3235 = vpop.f32.mrf.mxu0
    %v3236 = vadd.f32 %v3222, %v3235
    %v3237 = vpop.f32.mrf.mxu0
    %v3238 = vadd.f32 %v3224, %v3237
    %3239 = vdwg.mxu0
    %3240 = vmatpush.bf16.msra.mxu0 %v1929
    %3241 = vmatpush.bf16.msra.mxu0 %v1921
    %3242 = vmatpush.bf16.msra.mxu0 %v1913
    %3243 = vmatpush.bf16.msra.mxu0 %v1905
    %3244 = vmatpush.bf16.msra.mxu0 %v1897
    %3245 = vmatpush.bf16.msra.mxu0 %v1889
    %3246 = vmatpush.bf16.msra.mxu0 %v1881
    %3247 = vmatpush.bf16.msra.mxu0 %v1873
    %3248 = vmatmul.bf16.gmra.mxu0 %v147
    %v3249 = vpop.f32.mrf.mxu0
    %v3250 = vadd.f32 %v3236, %v3249
    %v3251 = vpop.f32.mrf.mxu0
    %v3252 = vadd.f32 %v3238, %v3251
    %3253 = vdwg.mxu0
    %3254 = vmatpush.bf16.msra.mxu0 %v1993
    %3255 = vmatpush.bf16.msra.mxu0 %v1985
    %3256 = vmatpush.bf16.msra.mxu0 %v1977
    %3257 = vmatpush.bf16.msra.mxu0 %v1969
    %3258 = vmatpush.bf16.msra.mxu0 %v1961
    %3259 = vmatpush.bf16.msra.mxu0 %v1953
    %3260 = vmatpush.bf16.msra.mxu0 %v1945
    %3261 = vmatpush.bf16.msra.mxu0 %v1937
    %3262 = vmatmul.bf16.gmra.mxu0 %v148
    %v3263 = vpop.f32.mrf.mxu0
    %v3264 = vadd.f32 %v3250, %v3263
    %v3265 = vpop.f32.mrf.mxu0
    %v3266 = vadd.f32 %v3252, %v3265
    %3267 = vdwg.mxu0
    %3268 = vmatpush.bf16.msra.mxu0 %v2057
    %3269 = vmatpush.bf16.msra.mxu0 %v2049
    %3270 = vmatpush.bf16.msra.mxu0 %v2041
    %3271 = vmatpush.bf16.msra.mxu0 %v2033
    %3272 = vmatpush.bf16.msra.mxu0 %v2025
    %3273 = vmatpush.bf16.msra.mxu0 %v2017
    %3274 = vmatpush.bf16.msra.mxu0 %v2009
    %3275 = vmatpush.bf16.msra.mxu0 %v2001
    %3276 = vmatmul.bf16.gmra.mxu0 %v149
    %v3277 = vpop.f32.mrf.mxu0
    %v3278 = vadd.f32 %v3264, %v3277
    %v3279 = vpop.f32.mrf.mxu0
    %v3280 = vadd.f32 %v3266, %v3279
    %3281 = vdwg.mxu0
    %3282 = vmatpush.bf16.msra.mxu0 %v2121
    %3283 = vmatpush.bf16.msra.mxu0 %v2113
    %3284 = vmatpush.bf16.msra.mxu0 %v2105
    %3285 = vmatpush.bf16.msra.mxu0 %v2097
    %3286 = vmatpush.bf16.msra.mxu0 %v2089
    %3287 = vmatpush.bf16.msra.mxu0 %v2081
    %3288 = vmatpush.bf16.msra.mxu0 %v2073
    %3289 = vmatpush.bf16.msra.mxu0 %v2065
    %3290 = vmatmul.bf16.gmra.mxu0 %v150
    %v3291 = vpop.f32.mrf.mxu0
    %v3292 = vadd.f32 %v3278, %v3291
    %v3293 = vpop.f32.mrf.mxu0
    %v3294 = vadd.f32 %v3280, %v3293
    %3295 = vdwg.mxu0
    %3296 = vmatpush.bf16.msra.mxu0 0
    %3297 = vmatpush.bf16.msra.mxu0 0
    %3298 = vmatpush.bf16.msra.mxu0 0
    %3299 = vmatpush.bf16.msra.mxu0 0
    %3300 = vmatpush.bf16.msra.mxu0 0
    %3301 = vmatpush.bf16.msra.mxu0 0
    %3302 = vmatpush.bf16.msra.mxu0 0
    %3303 = vmatpush.bf16.msra.mxu0 %v2129
    %3304 = vmatmul.bf16.gmra.mxu0 %v2524
    %v3305 = vpop.f32.mrf.mxu0
    %v3306 = vadd.f32 %v3292, %v3305
    %v3307 = vpop.f32.mrf.mxu0
    %v3308 = vadd.f32 %v3294, %v3307
    %3309 = vdwg.mxu0
    %v3310 = vmax.f32 %v2620, 0.0
    %v3311 = vmax.f32 %v2718, 0.0
    %v3312 = vmax.f32 %v2816, 0.0
    %v3313 = vmax.f32 %v2914, 0.0
    %v3314 = vmax.f32 %v3012, 0.0
    %v3315 = vmax.f32 %v3110, 0.0
    %v3316 = vmax.f32 %v3208, 0.0
    %v3317 = vmax.f32 %v3306, 0.0
    %v3318 = vmax.f32 %v2622, 0.0
    %v3319 = vmax.f32 %v2720, 0.0
    %v3320 = vmax.f32 %v2818, 0.0
    %v3321 = vmax.f32 %v2916, 0.0
    %v3322 = vmax.f32 %v3014, 0.0
    %v3323 = vmax.f32 %v3112, 0.0
    %v3324 = vmax.f32 %v3210, 0.0
    %v3325 = vmax.f32 %v3308, 0.0
    %v3326 = vpack.c.bf16 %v3318, %v3310
    %v3327 = vpack.c.bf16 %v3319, %v3311
    %v3328 = vpack.c.bf16 %v3320, %v3312
    %v3329 = vpack.c.bf16 %v3321, %v3313
    %v3330 = vpack.c.bf16 %v3322, %v3314
    %v3331 = vpack.c.bf16 %v3323, %v3315
    %v3332 = vpack.c.bf16 %v3324, %v3316
    %v3333 = vpack.c.bf16 %v3325, %v3317
    %v3334 = vld [vmem:[#allocation8] sm:$0xff]
    %v3335 = vld [vmem:[#allocation8 + $0x8] sm:$0xff]
    %v3336 = vld [vmem:[#allocation8 + $0x10] sm:$0xff]
    %v3337 = vld [vmem:[#allocation8 + $0x18] sm:$0xff]
    %v3338 = vld [vmem:[#allocation8 + $0x20] sm:$0xff]
    %v3339 = vld [vmem:[#allocation8 + $0x28] sm:$0xff]
    %v3340 = vld [vmem:[#allocation8 + $0x30] sm:$0xff]
    %v3341 = vld [vmem:[#allocation8 + $0x38] sm:$0xff]
    %v3342 = vld [vmem:[#allocation8 + $0x40] sm:$0xff]
    %v3343 = vld [vmem:[#allocation8 + $0x48] sm:$0xff]
    %v3344 = vld [vmem:[#allocation8 + $0x50] sm:$0xff]
    %v3345 = vld [vmem:[#allocation8 + $0x58] sm:$0xff]
    %v3346 = vld [vmem:[#allocation8 + $0x60] sm:$0xff]
    %v3347 = vld [vmem:[#allocation8 + $0x68] sm:$0xff]
    %v3348 = vld [vmem:[#allocation8 + $0x70] sm:$0xff]
    %v3349 = vld [vmem:[#allocation8 + $0x78] sm:$0xff]
    %v3350 = vld [vmem:[#allocation8 + $0x80] sm:$0xff]
    %v3351 = vld [vmem:[#allocation8 + $0x88] sm:$0xff]
    %v3352 = vld [vmem:[#allocation8 + $0x90] sm:$0xff]
    %v3353 = vld [vmem:[#allocation8 + $0x98] sm:$0xff]
    %v3354 = vld [vmem:[#allocation8 + $0xa0] sm:$0xff]
    %v3355 = vld [vmem:[#allocation8 + $0xa8] sm:$0xff]
    %v3356 = vld [vmem:[#allocation8 + $0xb0] sm:$0xff]
    %v3357 = vld [vmem:[#allocation8 + $0xb8] sm:$0xff]
    %v3358 = vld [vmem:[#allocation8 + $0xc0] sm:$0xff]
    %v3359 = vld [vmem:[#allocation8 + $0xc8] sm:$0xff]
    %v3360 = vld [vmem:[#allocation8 + $0xd0] sm:$0xff]
    %v3361 = vld [vmem:[#allocation8 + $0xd8] sm:$0xff]
    %v3362 = vld [vmem:[#allocation8 + $0xe0] sm:$0xff]
    %v3363 = vld [vmem:[#allocation8 + $0xe8] sm:$0xff]
    %v3364 = vld [vmem:[#allocation8 + $0xf0] sm:$0xff]
    %v3365 = vld [vmem:[#allocation8 + $0xf8] sm:$0xff]
    %v3366 = vld [vmem:[#allocation8 + $0x100] sm:$0xff]
    %v3367 = vld [vmem:[#allocation8 + $0x108] sm:$0xff]
    %v3368 = vld [vmem:[#allocation8 + $0x110] sm:$0xff]
    %v3369 = vld [vmem:[#allocation8 + $0x118] sm:$0xff]
    %v3370 = vld [vmem:[#allocation8 + $0x120] sm:$0xff]
    %v3371 = vld [vmem:[#allocation8 + $0x128] sm:$0xff]
    %v3372 = vld [vmem:[#allocation8 + $0x130] sm:$0xff]
    %v3373 = vld [vmem:[#allocation8 + $0x138] sm:$0xff]
    %v3374 = vld [vmem:[#allocation8 + $0x140] sm:$0xff]
    %v3375 = vld [vmem:[#allocation8 + $0x148] sm:$0xff]
    %v3376 = vld [vmem:[#allocation8 + $0x150] sm:$0xff]
    %v3377 = vld [vmem:[#allocation8 + $0x158] sm:$0xff]
    %v3378 = vld [vmem:[#allocation8 + $0x160] sm:$0xff]
    %v3379 = vld [vmem:[#allocation8 + $0x168] sm:$0xff]
    %v3380 = vld [vmem:[#allocation8 + $0x170] sm:$0xff]
    %v3381 = vld [vmem:[#allocation8 + $0x178] sm:$0xff]
    %v3382 = vld [vmem:[#allocation8 + $0x180] sm:$0xff]
    %v3383 = vld [vmem:[#allocation8 + $0x188] sm:$0xff]
    %v3384 = vld [vmem:[#allocation8 + $0x190] sm:$0xff]
    %v3385 = vld [vmem:[#allocation8 + $0x198] sm:$0xff]
    %v3386 = vld [vmem:[#allocation8 + $0x1a0] sm:$0xff]
    %v3387 = vld [vmem:[#allocation8 + $0x1a8] sm:$0xff]
    %v3388 = vld [vmem:[#allocation8 + $0x1b0] sm:$0xff]
    %v3389 = vld [vmem:[#allocation8 + $0x1b8] sm:$0xff]
    %v3390 = vld [vmem:[#allocation8 + $0x1c0] sm:$0xff]
    %v3391 = vld [vmem:[#allocation8 + $0x1c8] sm:$0xff]
    %v3392 = vld [vmem:[#allocation8 + $0x1d0] sm:$0xff]
    %v3393 = vld [vmem:[#allocation8 + $0x1d8] sm:$0xff]
    %v3394 = vld [vmem:[#allocation8 + $0x1e0] sm:$0xff]
    %v3395 = vld [vmem:[#allocation8 + $0x1e8] sm:$0xff]
    %v3396 = vld [vmem:[#allocation8 + $0x1f0] sm:$0xff]
    %v3397 = vld [vmem:[#allocation8 + $0x1f8] sm:$0xff]
    %v3398 = vld [vmem:[#allocation8 + $0x200] sm:$0xff]
    %v3399 = vld [vmem:[#allocation8 + $0x208] sm:$0xff]
    %v3400 = vld [vmem:[#allocation8 + $0x210] sm:$0xff]
    %v3401 = vld [vmem:[#allocation8 + $0x218] sm:$0xff]
    %v3402 = vld [vmem:[#allocation8 + $0x220] sm:$0xff]
    %v3403 = vld [vmem:[#allocation8 + $0x228] sm:$0xff]
    %v3404 = vld [vmem:[#allocation8 + $0x230] sm:$0xff]
    %v3405 = vld [vmem:[#allocation8 + $0x238] sm:$0xff]
    %v3406 = vld [vmem:[#allocation8 + $0x240] sm:$0xff]
    %v3407 = vld [vmem:[#allocation8 + $0x248] sm:$0xff]
    %v3408 = vld [vmem:[#allocation8 + $0x250] sm:$0xff]
    %v3409 = vld [vmem:[#allocation8 + $0x258] sm:$0xff]
    %v3410 = vld [vmem:[#allocation8 + $0x260] sm:$0xff]
    %v3411 = vld [vmem:[#allocation8 + $0x268] sm:$0xff]
    %v3412 = vld [vmem:[#allocation8 + $0x270] sm:$0xff]
    %v3413 = vld [vmem:[#allocation8 + $0x278] sm:$0xff]
    %v3414 = vld [vmem:[#allocation8 + $0x280] sm:$0xff]
    %v3415 = vld [vmem:[#allocation8 + $0x288] sm:$0xff]
    %v3416 = vld [vmem:[#allocation8 + $0x290] sm:$0xff]
    %v3417 = vld [vmem:[#allocation8 + $0x298] sm:$0xff]
    %v3418 = vld [vmem:[#allocation8 + $0x2a0] sm:$0xff]
    %v3419 = vld [vmem:[#allocation8 + $0x2a8] sm:$0xff]
    %v3420 = vld [vmem:[#allocation8 + $0x2b0] sm:$0xff]
    %v3421 = vld [vmem:[#allocation8 + $0x2b8] sm:$0xff]
    %v3422 = vld [vmem:[#allocation8 + $0x2c0] sm:$0xff]
    %v3423 = vld [vmem:[#allocation8 + $0x2c8] sm:$0xff]
    %v3424 = vld [vmem:[#allocation8 + $0x2d0] sm:$0xff]
    %v3425 = vld [vmem:[#allocation8 + $0x2d8] sm:$0xff]
    %v3426 = vld [vmem:[#allocation8 + $0x2e0] sm:$0xff]
    %v3427 = vld [vmem:[#allocation8 + $0x2e8] sm:$0xff]
    %v3428 = vld [vmem:[#allocation8 + $0x2f0] sm:$0xff]
    %v3429 = vld [vmem:[#allocation8 + $0x2f8] sm:$0xff]
    %v3430 = vld [vmem:[#allocation8 + $0x300] sm:$0xff]
    %v3431 = vld [vmem:[#allocation8 + $0x308] sm:$0xff]
    %v3432 = vld [vmem:[#allocation8 + $0x310] sm:$0xff]
    %v3433 = vld [vmem:[#allocation8 + $0x318] sm:$0xff]
    %v3434 = vld [vmem:[#allocation8 + $0x320] sm:$0xff]
    %v3435 = vld [vmem:[#allocation8 + $0x328] sm:$0xff]
    %v3436 = vld [vmem:[#allocation8 + $0x330] sm:$0xff]
    %v3437 = vld [vmem:[#allocation8 + $0x338] sm:$0xff]
    %v3438 = vld [vmem:[#allocation8 + $0x340] sm:$0xff]
    %v3439 = vld [vmem:[#allocation8 + $0x348] sm:$0xff]
    %v3440 = vld [vmem:[#allocation8 + $0x350] sm:$0xff]
    %v3441 = vld [vmem:[#allocation8 + $0x358] sm:$0xff]
    %v3442 = vld [vmem:[#allocation8 + $0x360] sm:$0xff]
    %v3443 = vld [vmem:[#allocation8 + $0x368] sm:$0xff]
    %v3444 = vld [vmem:[#allocation8 + $0x370] sm:$0xff]
    %v3445 = vld [vmem:[#allocation8 + $0x378] sm:$0xff]
    %v3446 = vld [vmem:[#allocation8 + $0x380] sm:$0xff]
    %v3447 = vld [vmem:[#allocation8 + $0x388] sm:$0xff]
    %v3448 = vld [vmem:[#allocation8 + $0x390] sm:$0xff]
    %v3449 = vld [vmem:[#allocation8 + $0x398] sm:$0xff]
    %v3450 = vld [vmem:[#allocation8 + $0x3a0] sm:$0xff]
    %v3451 = vld [vmem:[#allocation8 + $0x3a8] sm:$0xff]
    %v3452 = vld [vmem:[#allocation8 + $0x3b0] sm:$0xff]
    %v3453 = vld [vmem:[#allocation8 + $0x3b8] sm:$0xff]
    %v3454 = vld [vmem:[#allocation8 + $0x3c0] sm:$0xff]
    %v3455 = vld [vmem:[#allocation8 + $0x3c8] sm:$0xff]
    %v3456 = vld [vmem:[#allocation8 + $0x3d0] sm:$0xff]
    %v3457 = vld [vmem:[#allocation8 + $0x3d8] sm:$0xff]
    %v3458 = vld [vmem:[#allocation8 + $0x3e0] sm:$0xff]
    %v3459 = vld [vmem:[#allocation8 + $0x3e8] sm:$0xff]
    %v3460 = vld [vmem:[#allocation8 + $0x3f0] sm:$0xff]
    %v3461 = vld [vmem:[#allocation8 + $0x3f8] sm:$0xff]
    %v3462 = vld [vmem:[#allocation8 + $0x400] sm:$0xff]
    %v3463 = vld [vmem:[#allocation8 + $0x408] sm:$0xff]
    %v3464 = vld [vmem:[#allocation8 + $0x410] sm:$0xff]
    %v3465 = vld [vmem:[#allocation8 + $0x418] sm:$0xff]
    %v3466 = vld [vmem:[#allocation8 + $0x420] sm:$0xff]
    %v3467 = vld [vmem:[#allocation8 + $0x428] sm:$0xff]
    %v3468 = vld [vmem:[#allocation8 + $0x430] sm:$0xff]
    %v3469 = vld [vmem:[#allocation8 + $0x438] sm:$0xff]
    %v3470 = vld [vmem:[#allocation8 + $0x440] sm:$0xff]
    %v3471 = vld [vmem:[#allocation8 + $0x448] sm:$0xff]
    %v3472 = vld [vmem:[#allocation8 + $0x450] sm:$0xff]
    %v3473 = vld [vmem:[#allocation8 + $0x458] sm:$0xff]
    %v3474 = vld [vmem:[#allocation8 + $0x460] sm:$0xff]
    %v3475 = vld [vmem:[#allocation8 + $0x468] sm:$0xff]
    %v3476 = vld [vmem:[#allocation8 + $0x470] sm:$0xff]
    %v3477 = vld [vmem:[#allocation8 + $0x478] sm:$0xff]
    %v3478 = vld [vmem:[#allocation8 + $0x480] sm:$0xff]
    %v3479 = vld [vmem:[#allocation8 + $0x488] sm:$0xff]
    %v3480 = vld [vmem:[#allocation8 + $0x490] sm:$0xff]
    %v3481 = vld [vmem:[#allocation8 + $0x498] sm:$0xff]
    %v3482 = vld [vmem:[#allocation8 + $0x4a0] sm:$0xff]
    %v3483 = vld [vmem:[#allocation8 + $0x4a8] sm:$0xff]
    %v3484 = vld [vmem:[#allocation8 + $0x4b0] sm:$0xff]
    %v3485 = vld [vmem:[#allocation8 + $0x4b8] sm:$0xff]
    %v3486 = vld [vmem:[#allocation8 + $0x4c0] sm:$0xff]
    %v3487 = vld [vmem:[#allocation8 + $0x4c8] sm:$0xff]
    %v3488 = vld [vmem:[#allocation8 + $0x4d0] sm:$0xff]
    %v3489 = vld [vmem:[#allocation8 + $0x4d8] sm:$0xff]
    %v3490 = vld [vmem:[#allocation8 + $0x4e0] sm:$0xff]
    %v3491 = vld [vmem:[#allocation8 + $0x4e8] sm:$0xff]
    %v3492 = vld [vmem:[#allocation8 + $0x4f0] sm:$0xff]
    %v3493 = vld [vmem:[#allocation8 + $0x4f8] sm:$0xff]
    %v3494 = vld [vmem:[#allocation8 + $0x500] sm:$0xff]
    %v3495 = vld [vmem:[#allocation8 + $0x508] sm:$0xff]
    %v3496 = vld [vmem:[#allocation8 + $0x510] sm:$0xff]
    %v3497 = vld [vmem:[#allocation8 + $0x518] sm:$0xff]
    %v3498 = vld [vmem:[#allocation8 + $0x520] sm:$0xff]
    %v3499 = vld [vmem:[#allocation8 + $0x528] sm:$0xff]
    %v3500 = vld [vmem:[#allocation8 + $0x530] sm:$0xff]
    %v3501 = vld [vmem:[#allocation8 + $0x538] sm:$0xff]
    %v3502 = vld [vmem:[#allocation8 + $0x540] sm:$0xff]
    %v3503 = vld [vmem:[#allocation8 + $0x548] sm:$0xff]
    %v3504 = vld [vmem:[#allocation8 + $0x550] sm:$0xff]
    %v3505 = vld [vmem:[#allocation8 + $0x558] sm:$0xff]
    %v3506 = vld [vmem:[#allocation8 + $0x560] sm:$0xff]
    %v3507 = vld [vmem:[#allocation8 + $0x568] sm:$0xff]
    %v3508 = vld [vmem:[#allocation8 + $0x570] sm:$0xff]
    %v3509 = vld [vmem:[#allocation8 + $0x578] sm:$0xff]
    %v3510 = vld [vmem:[#allocation8 + $0x580] sm:$0xff]
    %v3511 = vld [vmem:[#allocation8 + $0x588] sm:$0xff]
    %v3512 = vld [vmem:[#allocation8 + $0x590] sm:$0xff]
    %v3513 = vld [vmem:[#allocation8 + $0x598] sm:$0xff]
    %v3514 = vld [vmem:[#allocation8 + $0x5a0] sm:$0xff]
    %v3515 = vld [vmem:[#allocation8 + $0x5a8] sm:$0xff]
    %v3516 = vld [vmem:[#allocation8 + $0x5b0] sm:$0xff]
    %v3517 = vld [vmem:[#allocation8 + $0x5b8] sm:$0xff]
    %v3518 = vld [vmem:[#allocation8 + $0x5c0] sm:$0xff]
    %v3519 = vld [vmem:[#allocation8 + $0x5c8] sm:$0xff]
    %v3520 = vld [vmem:[#allocation8 + $0x5d0] sm:$0xff]
    %v3521 = vld [vmem:[#allocation8 + $0x5d8] sm:$0xff]
    %v3522 = vld [vmem:[#allocation8 + $0x5e0] sm:$0xff]
    %v3523 = vld [vmem:[#allocation8 + $0x5e8] sm:$0xff]
    %v3524 = vld [vmem:[#allocation8 + $0x5f0] sm:$0xff]
    %v3525 = vld [vmem:[#allocation8 + $0x5f8] sm:$0xff]
    %v3526 = vld [vmem:[#allocation8 + $0x600] sm:$0xff]
    %v3527 = vld [vmem:[#allocation8 + $0x608] sm:$0xff]
    %v3528 = vld [vmem:[#allocation8 + $0x610] sm:$0xff]
    %v3529 = vld [vmem:[#allocation8 + $0x618] sm:$0xff]
    %v3530 = vld [vmem:[#allocation8 + $0x620] sm:$0xff]
    %v3531 = vld [vmem:[#allocation8 + $0x628] sm:$0xff]
    %v3532 = vld [vmem:[#allocation8 + $0x630] sm:$0xff]
    %v3533 = vld [vmem:[#allocation8 + $0x638] sm:$0xff]
    %v3534 = vld [vmem:[#allocation8 + $0x640] sm:$0xff]
    %v3535 = vld [vmem:[#allocation8 + $0x648] sm:$0xff]
    %v3536 = vld [vmem:[#allocation8 + $0x650] sm:$0xff]
    %v3537 = vld [vmem:[#allocation8 + $0x658] sm:$0xff]
    %v3538 = vld [vmem:[#allocation8 + $0x660] sm:$0xff]
    %v3539 = vld [vmem:[#allocation8 + $0x668] sm:$0xff]
    %v3540 = vld [vmem:[#allocation8 + $0x670] sm:$0xff]
    %v3541 = vld [vmem:[#allocation8 + $0x678] sm:$0xff]
    %v3542 = vld [vmem:[#allocation8 + $0x680] sm:$0xff]
    %v3543 = vld [vmem:[#allocation8 + $0x688] sm:$0xff]
    %v3544 = vld [vmem:[#allocation8 + $0x690] sm:$0xff]
    %v3545 = vld [vmem:[#allocation8 + $0x698] sm:$0xff]
    %v3546 = vld [vmem:[#allocation8 + $0x6a0] sm:$0xff]
    %v3547 = vld [vmem:[#allocation8 + $0x6a8] sm:$0xff]
    %v3548 = vld [vmem:[#allocation8 + $0x6b0] sm:$0xff]
    %v3549 = vld [vmem:[#allocation8 + $0x6b8] sm:$0xff]
    %v3550 = vld [vmem:[#allocation8 + $0x6c0] sm:$0xff]
    %v3551 = vld [vmem:[#allocation8 + $0x6c8] sm:$0xff]
    %v3552 = vld [vmem:[#allocation8 + $0x6d0] sm:$0xff]
    %v3553 = vld [vmem:[#allocation8 + $0x6d8] sm:$0xff]
    %v3554 = vld [vmem:[#allocation8 + $0x6e0] sm:$0xff]
    %v3555 = vld [vmem:[#allocation8 + $0x6e8] sm:$0xff]
    %v3556 = vld [vmem:[#allocation8 + $0x6f0] sm:$0xff]
    %v3557 = vld [vmem:[#allocation8 + $0x6f8] sm:$0xff]
    %v3558 = vld [vmem:[#allocation8 + $0x700] sm:$0xff]
    %v3559 = vld [vmem:[#allocation8 + $0x708] sm:$0xff]
    %v3560 = vld [vmem:[#allocation8 + $0x710] sm:$0xff]
    %v3561 = vld [vmem:[#allocation8 + $0x718] sm:$0xff]
    %v3562 = vld [vmem:[#allocation8 + $0x720] sm:$0xff]
    %v3563 = vld [vmem:[#allocation8 + $0x728] sm:$0xff]
    %v3564 = vld [vmem:[#allocation8 + $0x730] sm:$0xff]
    %v3565 = vld [vmem:[#allocation8 + $0x738] sm:$0xff]
    %v3566 = vld [vmem:[#allocation8 + $0x740] sm:$0xff]
    %v3567 = vld [vmem:[#allocation8 + $0x748] sm:$0xff]
    %v3568 = vld [vmem:[#allocation8 + $0x750] sm:$0xff]
    %v3569 = vld [vmem:[#allocation8 + $0x758] sm:$0xff]
    %v3570 = vld [vmem:[#allocation8 + $0x760] sm:$0xff]
    %v3571 = vld [vmem:[#allocation8 + $0x768] sm:$0xff]
    %v3572 = vld [vmem:[#allocation8 + $0x770] sm:$0xff]
    %v3573 = vld [vmem:[#allocation8 + $0x778] sm:$0xff]
    %v3574 = vld [vmem:[#allocation8 + $0x780] sm:$0xff]
    %v3575 = vld [vmem:[#allocation8 + $0x788] sm:$0xff]
    %v3576 = vld [vmem:[#allocation8 + $0x790] sm:$0xff]
    %v3577 = vld [vmem:[#allocation8 + $0x798] sm:$0xff]
    %v3578 = vld [vmem:[#allocation8 + $0x7a0] sm:$0xff]
    %v3579 = vld [vmem:[#allocation8 + $0x7a8] sm:$0xff]
    %v3580 = vld [vmem:[#allocation8 + $0x7b0] sm:$0xff]
    %v3581 = vld [vmem:[#allocation8 + $0x7b8] sm:$0xff]
    %v3582 = vld [vmem:[#allocation8 + $0x7c0] sm:$0xff]
    %v3583 = vld [vmem:[#allocation8 + $0x7c8] sm:$0xff]
    %v3584 = vld [vmem:[#allocation8 + $0x7d0] sm:$0xff]
    %v3585 = vld [vmem:[#allocation8 + $0x7d8] sm:$0xff]
    %v3586 = vld [vmem:[#allocation8 + $0x7e0] sm:$0xff]
    %v3587 = vld [vmem:[#allocation8 + $0x7e8] sm:$0xff]
    %v3588 = vld [vmem:[#allocation8 + $0x7f0] sm:$0xff]
    %v3589 = vld [vmem:[#allocation8 + $0x7f8] sm:$0xff]
    %v3590 = vld [vmem:[#allocation8 + $0x800] sm:$0xff]
    %v3591 = vld [vmem:[#allocation8 + $0x808] sm:$0xff]
    %v3592 = vld [vmem:[#allocation8 + $0x810] sm:$0xff]
    %v3593 = vld [vmem:[#allocation8 + $0x818] sm:$0xff]
    %v3594 = vld [vmem:[#allocation8 + $0x820] sm:$0xff]
    %v3595 = vld [vmem:[#allocation8 + $0x828] sm:$0xff]
    %v3596 = vld [vmem:[#allocation8 + $0x830] sm:$0xff]
    %v3597 = vld [vmem:[#allocation8 + $0x838] sm:$0xff]
    %v3598 = vld [vmem:[#allocation8 + $0x840] sm:$0xff]
    %v3599 = vld [vmem:[#allocation8 + $0x848] sm:$0xff]
    %v3600 = vld [vmem:[#allocation8 + $0x850] sm:$0xff]
    %v3601 = vld [vmem:[#allocation8 + $0x858] sm:$0xff]
    %v3602 = vld [vmem:[#allocation8 + $0x860] sm:$0xff]
    %v3603 = vld [vmem:[#allocation8 + $0x868] sm:$0xff]
    %v3604 = vld [vmem:[#allocation8 + $0x870] sm:$0xff]
    %v3605 = vld [vmem:[#allocation8 + $0x878] sm:$0xff]
    %v3606 = vld [vmem:[#allocation8 + $0x880] sm:$0xff]
    %v3607 = vld [vmem:[#allocation8 + $0x888] sm:$0xff]
    %v3608 = vld [vmem:[#allocation8 + $0x890] sm:$0xff]
    %v3609 = vld [vmem:[#allocation8 + $0x898] sm:$0xff]
    %v3610 = vld [vmem:[#allocation8 + $0x8a0] sm:$0xff]
    %v3611 = vld [vmem:[#allocation8 + $0x8a8] sm:$0xff]
    %v3612 = vld [vmem:[#allocation8 + $0x8b0] sm:$0xff]
    %v3613 = vld [vmem:[#allocation8 + $0x8b8] sm:$0xff]
    %v3614 = vld [vmem:[#allocation8 + $0x8c0] sm:$0xff]
    %v3615 = vld [vmem:[#allocation8 + $0x8c8] sm:$0xff]
    %v3616 = vld [vmem:[#allocation8 + $0x8d0] sm:$0xff]
    %v3617 = vld [vmem:[#allocation8 + $0x8d8] sm:$0xff]
    %v3618 = vld [vmem:[#allocation8 + $0x8e0] sm:$0xff]
    %v3619 = vld [vmem:[#allocation8 + $0x8e8] sm:$0xff]
    %v3620 = vld [vmem:[#allocation8 + $0x8f0] sm:$0xff]
    %v3621 = vld [vmem:[#allocation8 + $0x8f8] sm:$0xff]
    %v3622 = vld [vmem:[#allocation8 + $0x900] sm:$0xff]
    %v3623 = vld [vmem:[#allocation8 + $0x908] sm:$0xff]
    %v3624 = vld [vmem:[#allocation8 + $0x910] sm:$0xff]
    %v3625 = vld [vmem:[#allocation8 + $0x918] sm:$0xff]
    %v3626 = vld [vmem:[#allocation8 + $0x920] sm:$0xff]
    %v3627 = vld [vmem:[#allocation8 + $0x928] sm:$0xff]
    %v3628 = vld [vmem:[#allocation8 + $0x930] sm:$0xff]
    %v3629 = vld [vmem:[#allocation8 + $0x938] sm:$0xff]
    %v3630 = vld [vmem:[#allocation8 + $0x940] sm:$0xff]
    %v3631 = vld [vmem:[#allocation8 + $0x948] sm:$0xff]
    %v3632 = vld [vmem:[#allocation8 + $0x950] sm:$0xff]
    %v3633 = vld [vmem:[#allocation8 + $0x958] sm:$0xff]
    %v3634 = vld [vmem:[#allocation8 + $0x960] sm:$0xff]
    %v3635 = vld [vmem:[#allocation8 + $0x968] sm:$0xff]
    %v3636 = vld [vmem:[#allocation8 + $0x970] sm:$0xff]
    %v3637 = vld [vmem:[#allocation8 + $0x978] sm:$0xff]
    %v3638 = vld [vmem:[#allocation8 + $0x980] sm:$0xff]
    %v3639 = vld [vmem:[#allocation8 + $0x988] sm:$0xff]
    %v3640 = vld [vmem:[#allocation8 + $0x990] sm:$0xff]
    %v3641 = vld [vmem:[#allocation8 + $0x998] sm:$0xff]
    %v3642 = vld [vmem:[#allocation8 + $0x9a0] sm:$0xff]
    %v3643 = vld [vmem:[#allocation8 + $0x9a8] sm:$0xff]
    %v3644 = vld [vmem:[#allocation8 + $0x9b0] sm:$0xff]
    %v3645 = vld [vmem:[#allocation8 + $0x9b8] sm:$0xff]
    %v3646 = vld [vmem:[#allocation8 + $0x9c0] sm:$0xff]
    %v3647 = vld [vmem:[#allocation8 + $0x9c8] sm:$0xff]
    %v3648 = vld [vmem:[#allocation8 + $0x9d0] sm:$0xff]
    %v3649 = vld [vmem:[#allocation8 + $0x9d8] sm:$0xff]
    %v3650 = vld [vmem:[#allocation8 + $0x9e0] sm:$0xff]
    %v3651 = vld [vmem:[#allocation8 + $0x9e8] sm:$0xff]
    %v3652 = vld [vmem:[#allocation8 + $0x9f0] sm:$0xff]
    %v3653 = vld [vmem:[#allocation8 + $0x9f8] sm:$0xff]
    %v3654 = vld [vmem:[#allocation8 + $0xa00] sm:$0xff]
    %v3655 = vld [vmem:[#allocation8 + $0xa08] sm:$0xff]
    %v3656 = vld [vmem:[#allocation8 + $0xa10] sm:$0xff]
    %v3657 = vld [vmem:[#allocation8 + $0xa18] sm:$0xff]
    %v3658 = vld [vmem:[#allocation8 + $0xa20] sm:$0xff]
    %v3659 = vld [vmem:[#allocation8 + $0xa28] sm:$0xff]
    %v3660 = vld [vmem:[#allocation8 + $0xa30] sm:$0xff]
    %v3661 = vld [vmem:[#allocation8 + $0xa38] sm:$0xff]
    %v3662 = vld [vmem:[#allocation8 + $0xa40] sm:$0xff]
    %v3663 = vld [vmem:[#allocation8 + $0xa48] sm:$0xff]
    %v3664 = vld [vmem:[#allocation8 + $0xa50] sm:$0xff]
    %v3665 = vld [vmem:[#allocation8 + $0xa58] sm:$0xff]
    %v3666 = vld [vmem:[#allocation8 + $0xa60] sm:$0xff]
    %v3667 = vld [vmem:[#allocation8 + $0xa68] sm:$0xff]
    %v3668 = vld [vmem:[#allocation8 + $0xa70] sm:$0xff]
    %v3669 = vld [vmem:[#allocation8 + $0xa78] sm:$0xff]
    %v3670 = vld [vmem:[#allocation8 + $0xa80] sm:$0xff]
    %v3671 = vld [vmem:[#allocation8 + $0xa88] sm:$0xff]
    %v3672 = vld [vmem:[#allocation8 + $0xa90] sm:$0xff]
    %v3673 = vld [vmem:[#allocation8 + $0xa98] sm:$0xff]
    %v3674 = vld [vmem:[#allocation8 + $0xaa0] sm:$0xff]
    %v3675 = vld [vmem:[#allocation8 + $0xaa8] sm:$0xff]
    %v3676 = vld [vmem:[#allocation8 + $0xab0] sm:$0xff]
    %v3677 = vld [vmem:[#allocation8 + $0xab8] sm:$0xff]
    %v3678 = vld [vmem:[#allocation8 + $0xac0] sm:$0xff]
    %v3679 = vld [vmem:[#allocation8 + $0xac8] sm:$0xff]
    %v3680 = vld [vmem:[#allocation8 + $0xad0] sm:$0xff]
    %v3681 = vld [vmem:[#allocation8 + $0xad8] sm:$0xff]
    %v3682 = vld [vmem:[#allocation8 + $0xae0] sm:$0xff]
    %v3683 = vld [vmem:[#allocation8 + $0xae8] sm:$0xff]
    %v3684 = vld [vmem:[#allocation8 + $0xaf0] sm:$0xff]
    %v3685 = vld [vmem:[#allocation8 + $0xaf8] sm:$0xff]
    %v3686 = vld [vmem:[#allocation8 + $0xb00] sm:$0xff]
    %v3687 = vld [vmem:[#allocation8 + $0xb08] sm:$0xff]
    %v3688 = vld [vmem:[#allocation8 + $0xb10] sm:$0xff]
    %v3689 = vld [vmem:[#allocation8 + $0xb18] sm:$0xff]
    %v3690 = vld [vmem:[#allocation8 + $0xb20] sm:$0xff]
    %v3691 = vld [vmem:[#allocation8 + $0xb28] sm:$0xff]
    %v3692 = vld [vmem:[#allocation8 + $0xb30] sm:$0xff]
    %v3693 = vld [vmem:[#allocation8 + $0xb38] sm:$0xff]
    %v3694 = vld [vmem:[#allocation8 + $0xb40] sm:$0xff]
    %v3695 = vld [vmem:[#allocation8 + $0xb48] sm:$0xff]
    %v3696 = vld [vmem:[#allocation8 + $0xb50] sm:$0xff]
    %v3697 = vld [vmem:[#allocation8 + $0xb58] sm:$0xff]
    %v3698 = vld [vmem:[#allocation8 + $0xb60] sm:$0xff]
    %v3699 = vld [vmem:[#allocation8 + $0xb68] sm:$0xff]
    %v3700 = vld [vmem:[#allocation8 + $0xb70] sm:$0xff]
    %v3701 = vld [vmem:[#allocation8 + $0xb78] sm:$0xff]
    %v3702 = vld [vmem:[#allocation8 + $0xb80] sm:$0xff]
    %v3703 = vld [vmem:[#allocation8 + $0xb88] sm:$0xff]
    %v3704 = vld [vmem:[#allocation8 + $0xb90] sm:$0xff]
    %v3705 = vld [vmem:[#allocation8 + $0xb98] sm:$0xff]
    %v3706 = vld [vmem:[#allocation8 + $0xba0] sm:$0xff]
    %v3707 = vld [vmem:[#allocation8 + $0xba8] sm:$0xff]
    %v3708 = vld [vmem:[#allocation8 + $0xbb0] sm:$0xff]
    %v3709 = vld [vmem:[#allocation8 + $0xbb8] sm:$0xff]
    %v3710 = vld [vmem:[#allocation8 + $0xbc0] sm:$0xff]
    %v3711 = vld [vmem:[#allocation8 + $0xbc8] sm:$0xff]
    %v3712 = vld [vmem:[#allocation8 + $0xbd0] sm:$0xff]
    %v3713 = vld [vmem:[#allocation8 + $0xbd8] sm:$0xff]
    %v3714 = vld [vmem:[#allocation8 + $0xbe0] sm:$0xff]
    %v3715 = vld [vmem:[#allocation8 + $0xbe8] sm:$0xff]
    %v3716 = vld [vmem:[#allocation8 + $0xbf0] sm:$0xff]
    %v3717 = vld [vmem:[#allocation8 + $0xbf8] sm:$0xff]
    %v3718 = vld [vmem:[#allocation8 + $0xc00] sm:$0xff]
    %v3719 = vld [vmem:[#allocation8 + $0xc08] sm:$0xff]
    %v3720 = vld [vmem:[#allocation8 + $0xc10] sm:$0xff]
    %v3721 = vld [vmem:[#allocation8 + $0xc18] sm:$0xff]
    %v3722 = vld [vmem:[#allocation8 + $0xc20] sm:$0xff]
    %v3723 = vld [vmem:[#allocation8 + $0xc28] sm:$0xff]
    %v3724 = vld [vmem:[#allocation8 + $0xc30] sm:$0xff]
    %v3725 = vld [vmem:[#allocation8 + $0xc38] sm:$0xff]
    %v3726 = vld [vmem:[#allocation8 + $0xc40] sm:$0xff]
    %v3727 = vld [vmem:[#allocation8 + $0xc48] sm:$0xff]
    %v3728 = vld [vmem:[#allocation8 + $0xc50] sm:$0xff]
    %v3729 = vld [vmem:[#allocation8 + $0xc58] sm:$0xff]
    %v3730 = vld [vmem:[#allocation8 + $0xc60] sm:$0xff]
    %v3731 = vld [vmem:[#allocation8 + $0xc68] sm:$0xff]
    %v3732 = vld [vmem:[#allocation8 + $0xc70] sm:$0xff]
    %v3733 = vld [vmem:[#allocation8 + $0xc78] sm:$0xff]
    %v3734 = vld [vmem:[#allocation8 + $0xc80] sm:$0xff]
    %v3735 = vld [vmem:[#allocation8 + $0xc88] sm:$0xff]
    %v3736 = vld [vmem:[#allocation8 + $0xc90] sm:$0xff]
    %v3737 = vld [vmem:[#allocation8 + $0xc98] sm:$0xff]
    %v3738 = vld [vmem:[#allocation8 + $0xca0] sm:$0xff]
    %v3739 = vld [vmem:[#allocation8 + $0xca8] sm:$0xff]
    %v3740 = vld [vmem:[#allocation8 + $0xcb0] sm:$0xff]
    %v3741 = vld [vmem:[#allocation8 + $0xcb8] sm:$0xff]
    %v3742 = vld [vmem:[#allocation8 + $0xcc0] sm:$0xff]
    %v3743 = vld [vmem:[#allocation8 + $0xcc8] sm:$0xff]
    %v3744 = vld [vmem:[#allocation8 + $0xcd0] sm:$0xff]
    %v3745 = vld [vmem:[#allocation8 + $0xcd8] sm:$0xff]
    %v3746 = vld [vmem:[#allocation8 + $0xce0] sm:$0xff]
    %v3747 = vld [vmem:[#allocation8 + $0xce8] sm:$0xff]
    %v3748 = vld [vmem:[#allocation8 + $0xcf0] sm:$0xff]
    %v3749 = vld [vmem:[#allocation8 + $0xcf8] sm:$0xff]
    %v3750 = vld [vmem:[#allocation8 + $0xd00] sm:$0xff]
    %v3751 = vld [vmem:[#allocation8 + $0xd08] sm:$0xff]
    %v3752 = vld [vmem:[#allocation8 + $0xd10] sm:$0xff]
    %v3753 = vld [vmem:[#allocation8 + $0xd18] sm:$0xff]
    %v3754 = vld [vmem:[#allocation8 + $0xd20] sm:$0xff]
    %v3755 = vld [vmem:[#allocation8 + $0xd28] sm:$0xff]
    %v3756 = vld [vmem:[#allocation8 + $0xd30] sm:$0xff]
    %v3757 = vld [vmem:[#allocation8 + $0xd38] sm:$0xff]
    %v3758 = vld [vmem:[#allocation8 + $0xd40] sm:$0xff]
    %v3759 = vld [vmem:[#allocation8 + $0xd48] sm:$0xff]
    %v3760 = vld [vmem:[#allocation8 + $0xd50] sm:$0xff]
    %v3761 = vld [vmem:[#allocation8 + $0xd58] sm:$0xff]
    %v3762 = vld [vmem:[#allocation8 + $0xd60] sm:$0xff]
    %v3763 = vld [vmem:[#allocation8 + $0xd68] sm:$0xff]
    %v3764 = vld [vmem:[#allocation8 + $0xd70] sm:$0xff]
    %v3765 = vld [vmem:[#allocation8 + $0xd78] sm:$0xff]
    %v3766 = vld [vmem:[#allocation8 + $0xd80] sm:$0xff]
    %v3767 = vld [vmem:[#allocation8 + $0xd88] sm:$0xff]
    %v3768 = vld [vmem:[#allocation8 + $0xd90] sm:$0xff]
    %v3769 = vld [vmem:[#allocation8 + $0xd98] sm:$0xff]
    %v3770 = vld [vmem:[#allocation8 + $0xda0] sm:$0xff]
    %v3771 = vld [vmem:[#allocation8 + $0xda8] sm:$0xff]
    %v3772 = vld [vmem:[#allocation8 + $0xdb0] sm:$0xff]
    %v3773 = vld [vmem:[#allocation8 + $0xdb8] sm:$0xff]
    %v3774 = vld [vmem:[#allocation8 + $0xdc0] sm:$0xff]
    %v3775 = vld [vmem:[#allocation8 + $0xdc8] sm:$0xff]
    %v3776 = vld [vmem:[#allocation8 + $0xdd0] sm:$0xff]
    %v3777 = vld [vmem:[#allocation8 + $0xdd8] sm:$0xff]
    %v3778 = vld [vmem:[#allocation8 + $0xde0] sm:$0xff]
    %v3779 = vld [vmem:[#allocation8 + $0xde8] sm:$0xff]
    %v3780 = vld [vmem:[#allocation8 + $0xdf0] sm:$0xff]
    %v3781 = vld [vmem:[#allocation8 + $0xdf8] sm:$0xff]
    %v3782 = vld [vmem:[#allocation8 + $0xe00] sm:$0xff]
    %v3783 = vld [vmem:[#allocation8 + $0xe08] sm:$0xff]
    %v3784 = vld [vmem:[#allocation8 + $0xe10] sm:$0xff]
    %v3785 = vld [vmem:[#allocation8 + $0xe18] sm:$0xff]
    %v3786 = vld [vmem:[#allocation8 + $0xe20] sm:$0xff]
    %v3787 = vld [vmem:[#allocation8 + $0xe28] sm:$0xff]
    %v3788 = vld [vmem:[#allocation8 + $0xe30] sm:$0xff]
    %v3789 = vld [vmem:[#allocation8 + $0xe38] sm:$0xff]
    %v3790 = vld [vmem:[#allocation8 + $0xe40] sm:$0xff]
    %v3791 = vld [vmem:[#allocation8 + $0xe48] sm:$0xff]
    %v3792 = vld [vmem:[#allocation8 + $0xe50] sm:$0xff]
    %v3793 = vld [vmem:[#allocation8 + $0xe58] sm:$0xff]
    %v3794 = vld [vmem:[#allocation8 + $0xe60] sm:$0xff]
    %v3795 = vld [vmem:[#allocation8 + $0xe68] sm:$0xff]
    %v3796 = vld [vmem:[#allocation8 + $0xe70] sm:$0xff]
    %v3797 = vld [vmem:[#allocation8 + $0xe78] sm:$0xff]
    %v3798 = vld [vmem:[#allocation8 + $0xe80] sm:$0xff]
    %v3799 = vld [vmem:[#allocation8 + $0xe88] sm:$0xff]
    %v3800 = vld [vmem:[#allocation8 + $0xe90] sm:$0xff]
    %v3801 = vld [vmem:[#allocation8 + $0xe98] sm:$0xff]
    %v3802 = vld [vmem:[#allocation8 + $0xea0] sm:$0xff]
    %v3803 = vld [vmem:[#allocation8 + $0xea8] sm:$0xff]
    %v3804 = vld [vmem:[#allocation8 + $0xeb0] sm:$0xff]
    %v3805 = vld [vmem:[#allocation8 + $0xeb8] sm:$0xff]
    %v3806 = vld [vmem:[#allocation8 + $0xec0] sm:$0xff]
    %v3807 = vld [vmem:[#allocation8 + $0xec8] sm:$0xff]
    %v3808 = vld [vmem:[#allocation8 + $0xed0] sm:$0xff]
    %v3809 = vld [vmem:[#allocation8 + $0xed8] sm:$0xff]
    %v3810 = vld [vmem:[#allocation8 + $0xee0] sm:$0xff]
    %v3811 = vld [vmem:[#allocation8 + $0xee8] sm:$0xff]
    %v3812 = vld [vmem:[#allocation8 + $0xef0] sm:$0xff]
    %v3813 = vld [vmem:[#allocation8 + $0xef8] sm:$0xff]
    %v3814 = vld [vmem:[#allocation8 + $0xf00] sm:$0xff]
    %v3815 = vld [vmem:[#allocation8 + $0xf08] sm:$0xff]
    %v3816 = vld [vmem:[#allocation8 + $0xf10] sm:$0xff]
    %v3817 = vld [vmem:[#allocation8 + $0xf18] sm:$0xff]
    %v3818 = vld [vmem:[#allocation8 + $0xf20] sm:$0xff]
    %v3819 = vld [vmem:[#allocation8 + $0xf28] sm:$0xff]
    %v3820 = vld [vmem:[#allocation8 + $0xf30] sm:$0xff]
    %v3821 = vld [vmem:[#allocation8 + $0xf38] sm:$0xff]
    %v3822 = vld [vmem:[#allocation8 + $0xf40] sm:$0xff]
    %v3823 = vld [vmem:[#allocation8 + $0xf48] sm:$0xff]
    %v3824 = vld [vmem:[#allocation8 + $0xf50] sm:$0xff]
    %v3825 = vld [vmem:[#allocation8 + $0xf58] sm:$0xff]
    %v3826 = vld [vmem:[#allocation8 + $0xf60] sm:$0xff]
    %v3827 = vld [vmem:[#allocation8 + $0xf68] sm:$0xff]
    %v3828 = vld [vmem:[#allocation8 + $0xf70] sm:$0xff]
    %v3829 = vld [vmem:[#allocation8 + $0xf78] sm:$0xff]
    %v3830 = vld [vmem:[#allocation8 + $0xf80] sm:$0xff]
    %v3831 = vld [vmem:[#allocation8 + $0xf88] sm:$0xff]
    %v3832 = vld [vmem:[#allocation8 + $0xf90] sm:$0xff]
    %v3833 = vld [vmem:[#allocation8 + $0xf98] sm:$0xff]
    %v3834 = vld [vmem:[#allocation8 + $0xfa0] sm:$0xff]
    %v3835 = vld [vmem:[#allocation8 + $0xfa8] sm:$0xff]
    %v3836 = vld [vmem:[#allocation8 + $0xfb0] sm:$0xff]
    %v3837 = vld [vmem:[#allocation8 + $0xfb8] sm:$0xff]
    %v3838 = vld [vmem:[#allocation8 + $0xfc0] sm:$0xff]
    %v3839 = vld [vmem:[#allocation8 + $0xfc8] sm:$0xff]
    %v3840 = vld [vmem:[#allocation8 + $0xfd0] sm:$0xff]
    %v3841 = vld [vmem:[#allocation8 + $0xfd8] sm:$0xff]
    %v3842 = vld [vmem:[#allocation8 + $0xfe0] sm:$0xff]
    %v3843 = vld [vmem:[#allocation8 + $0xfe8] sm:$0xff]
    %v3844 = vld [vmem:[#allocation8 + $0xff0] sm:$0xff]
    %v3845 = vld [vmem:[#allocation8 + $0xff8] sm:$0xff]
    %v3846 = vld [vmem:[#allocation10] sm:$0xff]
    %v3848 = vperm.slane %v3846, 0
    %v3849 = vperm.slane %v3846, 1
    %v3850 = vperm.slane %v3846, 2
    %v3851 = vperm.slane %v3846, 3
    %v3852 = vperm.slane %v3846, 4
    %v3853 = vperm.slane %v3846, 5
    %v3854 = vperm.slane %v3846, 6
    %v3855 = vperm.slane %v3846, 7
    %v4376 = vunpack.c.l.b16 %v3334
    %v4377 = vunpack.c.h.b16 %v3334
    %v4378 = vunpack.c.l.b16 %v3335
    %v4379 = vunpack.c.h.b16 %v3335
    %v4380 = vunpack.c.l.b16 %v3336
    %v4381 = vunpack.c.h.b16 %v3336
    %v4382 = vunpack.c.l.b16 %v3337
    %v4383 = vunpack.c.h.b16 %v3337
    %v4384 = vunpack.c.l.b16 %v3338
    %v4385 = vunpack.c.h.b16 %v3338
    %v4386 = vunpack.c.l.b16 %v3339
    %v4387 = vunpack.c.h.b16 %v3339
    %v4388 = vunpack.c.l.b16 %v3340
    %v4389 = vunpack.c.h.b16 %v3340
    %v4390 = vunpack.c.l.b16 %v3341
    %v4391 = vunpack.c.h.b16 %v3341
    %v4392 = vunpack.c.l.b16 %v3342
    %v4393 = vunpack.c.h.b16 %v3342
    %v4394 = vunpack.c.l.b16 %v3343
    %v4395 = vunpack.c.h.b16 %v3343
    %v4396 = vunpack.c.l.b16 %v3344
    %v4397 = vunpack.c.h.b16 %v3344
    %v4398 = vunpack.c.l.b16 %v3345
    %v4399 = vunpack.c.h.b16 %v3345
    %v4400 = vunpack.c.l.b16 %v3346
    %v4401 = vunpack.c.h.b16 %v3346
    %v4402 = vunpack.c.l.b16 %v3347
    %v4403 = vunpack.c.h.b16 %v3347
    %v4404 = vunpack.c.l.b16 %v3348
    %v4405 = vunpack.c.h.b16 %v3348
    %v4406 = vunpack.c.l.b16 %v3349
    %v4407 = vunpack.c.h.b16 %v3349
    %v4408 = vunpack.c.l.b16 %v3350
    %v4409 = vunpack.c.h.b16 %v3350
    %v4410 = vunpack.c.l.b16 %v3351
    %v4411 = vunpack.c.h.b16 %v3351
    %v4412 = vunpack.c.l.b16 %v3352
    %v4413 = vunpack.c.h.b16 %v3352
    %v4414 = vunpack.c.l.b16 %v3353
    %v4415 = vunpack.c.h.b16 %v3353
    %v4416 = vunpack.c.l.b16 %v3354
    %v4417 = vunpack.c.h.b16 %v3354
    %v4418 = vunpack.c.l.b16 %v3355
    %v4419 = vunpack.c.h.b16 %v3355
    %v4420 = vunpack.c.l.b16 %v3356
    %v4421 = vunpack.c.h.b16 %v3356
    %v4422 = vunpack.c.l.b16 %v3357
    %v4423 = vunpack.c.h.b16 %v3357
    %v4424 = vunpack.c.l.b16 %v3358
    %v4425 = vunpack.c.h.b16 %v3358
    %v4426 = vunpack.c.l.b16 %v3359
    %v4427 = vunpack.c.h.b16 %v3359
    %v4428 = vunpack.c.l.b16 %v3360
    %v4429 = vunpack.c.h.b16 %v3360
    %v4430 = vunpack.c.l.b16 %v3361
    %v4431 = vunpack.c.h.b16 %v3361
    %v4432 = vunpack.c.l.b16 %v3362
    %v4433 = vunpack.c.h.b16 %v3362
    %v4434 = vunpack.c.l.b16 %v3363
    %v4435 = vunpack.c.h.b16 %v3363
    %v4436 = vunpack.c.l.b16 %v3364
    %v4437 = vunpack.c.h.b16 %v3364
    %v4438 = vunpack.c.l.b16 %v3365
    %v4439 = vunpack.c.h.b16 %v3365
    %v4440 = vunpack.c.l.b16 %v3366
    %v4441 = vunpack.c.h.b16 %v3366
    %v4442 = vunpack.c.l.b16 %v3367
    %v4443 = vunpack.c.h.b16 %v3367
    %v4444 = vunpack.c.l.b16 %v3368
    %v4445 = vunpack.c.h.b16 %v3368
    %v4446 = vunpack.c.l.b16 %v3369
    %v4447 = vunpack.c.h.b16 %v3369
    %v4448 = vunpack.c.l.b16 %v3370
    %v4449 = vunpack.c.h.b16 %v3370
    %v4450 = vunpack.c.l.b16 %v3371
    %v4451 = vunpack.c.h.b16 %v3371
    %v4452 = vunpack.c.l.b16 %v3372
    %v4453 = vunpack.c.h.b16 %v3372
    %v4454 = vunpack.c.l.b16 %v3373
    %v4455 = vunpack.c.h.b16 %v3373
    %v4456 = vunpack.c.l.b16 %v3374
    %v4457 = vunpack.c.h.b16 %v3374
    %v4458 = vunpack.c.l.b16 %v3375
    %v4459 = vunpack.c.h.b16 %v3375
    %v4460 = vunpack.c.l.b16 %v3376
    %v4461 = vunpack.c.h.b16 %v3376
    %v4462 = vunpack.c.l.b16 %v3377
    %v4463 = vunpack.c.h.b16 %v3377
    %v4464 = vunpack.c.l.b16 %v3378
    %v4465 = vunpack.c.h.b16 %v3378
    %v4466 = vunpack.c.l.b16 %v3379
    %v4467 = vunpack.c.h.b16 %v3379
    %v4468 = vunpack.c.l.b16 %v3380
    %v4469 = vunpack.c.h.b16 %v3380
    %v4470 = vunpack.c.l.b16 %v3381
    %v4471 = vunpack.c.h.b16 %v3381
    %v4472 = vunpack.c.l.b16 %v3382
    %v4473 = vunpack.c.h.b16 %v3382
    %v4474 = vunpack.c.l.b16 %v3383
    %v4475 = vunpack.c.h.b16 %v3383
    %v4476 = vunpack.c.l.b16 %v3384
    %v4477 = vunpack.c.h.b16 %v3384
    %v4478 = vunpack.c.l.b16 %v3385
    %v4479 = vunpack.c.h.b16 %v3385
    %v4480 = vunpack.c.l.b16 %v3386
    %v4481 = vunpack.c.h.b16 %v3386
    %v4482 = vunpack.c.l.b16 %v3387
    %v4483 = vunpack.c.h.b16 %v3387
    %v4484 = vunpack.c.l.b16 %v3388
    %v4485 = vunpack.c.h.b16 %v3388
    %v4486 = vunpack.c.l.b16 %v3389
    %v4487 = vunpack.c.h.b16 %v3389
    %v4488 = vunpack.c.l.b16 %v3390
    %v4489 = vunpack.c.h.b16 %v3390
    %v4490 = vunpack.c.l.b16 %v3391
    %v4491 = vunpack.c.h.b16 %v3391
    %v4492 = vunpack.c.l.b16 %v3392
    %v4493 = vunpack.c.h.b16 %v3392
    %v4494 = vunpack.c.l.b16 %v3393
    %v4495 = vunpack.c.h.b16 %v3393
    %v4496 = vunpack.c.l.b16 %v3394
    %v4497 = vunpack.c.h.b16 %v3394
    %v4498 = vunpack.c.l.b16 %v3395
    %v4499 = vunpack.c.h.b16 %v3395
    %v4500 = vunpack.c.l.b16 %v3396
    %v4501 = vunpack.c.h.b16 %v3396
    %v4502 = vunpack.c.l.b16 %v3397
    %v4503 = vunpack.c.h.b16 %v3397
    %v4504 = vunpack.c.l.b16 %v3398
    %v4505 = vunpack.c.h.b16 %v3398
    %v4506 = vunpack.c.l.b16 %v3399
    %v4507 = vunpack.c.h.b16 %v3399
    %v4508 = vunpack.c.l.b16 %v3400
    %v4509 = vunpack.c.h.b16 %v3400
    %v4510 = vunpack.c.l.b16 %v3401
    %v4511 = vunpack.c.h.b16 %v3401
    %v4512 = vunpack.c.l.b16 %v3402
    %v4513 = vunpack.c.h.b16 %v3402
    %v4514 = vunpack.c.l.b16 %v3403
    %v4515 = vunpack.c.h.b16 %v3403
    %v4516 = vunpack.c.l.b16 %v3404
    %v4517 = vunpack.c.h.b16 %v3404
    %v4518 = vunpack.c.l.b16 %v3405
    %v4519 = vunpack.c.h.b16 %v3405
    %v4520 = vunpack.c.l.b16 %v3406
    %v4521 = vunpack.c.h.b16 %v3406
    %v4522 = vunpack.c.l.b16 %v3407
    %v4523 = vunpack.c.h.b16 %v3407
    %v4524 = vunpack.c.l.b16 %v3408
    %v4525 = vunpack.c.h.b16 %v3408
    %v4526 = vunpack.c.l.b16 %v3409
    %v4527 = vunpack.c.h.b16 %v3409
    %v4528 = vunpack.c.l.b16 %v3410
    %v4529 = vunpack.c.h.b16 %v3410
    %v4530 = vunpack.c.l.b16 %v3411
    %v4531 = vunpack.c.h.b16 %v3411
    %v4532 = vunpack.c.l.b16 %v3412
    %v4533 = vunpack.c.h.b16 %v3412
    %v4534 = vunpack.c.l.b16 %v3413
    %v4535 = vunpack.c.h.b16 %v3413
    %v4536 = vunpack.c.l.b16 %v3414
    %v4537 = vunpack.c.h.b16 %v3414
    %v4538 = vunpack.c.l.b16 %v3415
    %v4539 = vunpack.c.h.b16 %v3415
    %v4540 = vunpack.c.l.b16 %v3416
    %v4541 = vunpack.c.h.b16 %v3416
    %v4542 = vunpack.c.l.b16 %v3417
    %v4543 = vunpack.c.h.b16 %v3417
    %v4544 = vunpack.c.l.b16 %v3418
    %v4545 = vunpack.c.h.b16 %v3418
    %v4546 = vunpack.c.l.b16 %v3419
    %v4547 = vunpack.c.h.b16 %v3419
    %v4548 = vunpack.c.l.b16 %v3420
    %v4549 = vunpack.c.h.b16 %v3420
    %v4550 = vunpack.c.l.b16 %v3421
    %v4551 = vunpack.c.h.b16 %v3421
    %v4552 = vunpack.c.l.b16 %v3422
    %v4553 = vunpack.c.h.b16 %v3422
    %v4554 = vunpack.c.l.b16 %v3423
    %v4555 = vunpack.c.h.b16 %v3423
    %v4556 = vunpack.c.l.b16 %v3424
    %v4557 = vunpack.c.h.b16 %v3424
    %v4558 = vunpack.c.l.b16 %v3425
    %v4559 = vunpack.c.h.b16 %v3425
    %v4560 = vunpack.c.l.b16 %v3426
    %v4561 = vunpack.c.h.b16 %v3426
    %v4562 = vunpack.c.l.b16 %v3427
    %v4563 = vunpack.c.h.b16 %v3427
    %v4564 = vunpack.c.l.b16 %v3428
    %v4565 = vunpack.c.h.b16 %v3428
    %v4566 = vunpack.c.l.b16 %v3429
    %v4567 = vunpack.c.h.b16 %v3429
    %v4568 = vunpack.c.l.b16 %v3430
    %v4569 = vunpack.c.h.b16 %v3430
    %v4570 = vunpack.c.l.b16 %v3431
    %v4571 = vunpack.c.h.b16 %v3431
    %v4572 = vunpack.c.l.b16 %v3432
    %v4573 = vunpack.c.h.b16 %v3432
    %v4574 = vunpack.c.l.b16 %v3433
    %v4575 = vunpack.c.h.b16 %v3433
    %v4576 = vunpack.c.l.b16 %v3434
    %v4577 = vunpack.c.h.b16 %v3434
    %v4578 = vunpack.c.l.b16 %v3435
    %v4579 = vunpack.c.h.b16 %v3435
    %v4580 = vunpack.c.l.b16 %v3436
    %v4581 = vunpack.c.h.b16 %v3436
    %v4582 = vunpack.c.l.b16 %v3437
    %v4583 = vunpack.c.h.b16 %v3437
    %v4584 = vunpack.c.l.b16 %v3438
    %v4585 = vunpack.c.h.b16 %v3438
    %v4586 = vunpack.c.l.b16 %v3439
    %v4587 = vunpack.c.h.b16 %v3439
    %v4588 = vunpack.c.l.b16 %v3440
    %v4589 = vunpack.c.h.b16 %v3440
    %v4590 = vunpack.c.l.b16 %v3441
    %v4591 = vunpack.c.h.b16 %v3441
    %v4592 = vunpack.c.l.b16 %v3442
    %v4593 = vunpack.c.h.b16 %v3442
    %v4594 = vunpack.c.l.b16 %v3443
    %v4595 = vunpack.c.h.b16 %v3443
    %v4596 = vunpack.c.l.b16 %v3444
    %v4597 = vunpack.c.h.b16 %v3444
    %v4598 = vunpack.c.l.b16 %v3445
    %v4599 = vunpack.c.h.b16 %v3445
    %v4600 = vunpack.c.l.b16 %v3446
    %v4601 = vunpack.c.h.b16 %v3446
    %v4602 = vunpack.c.l.b16 %v3447
    %v4603 = vunpack.c.h.b16 %v3447
    %v4604 = vunpack.c.l.b16 %v3448
    %v4605 = vunpack.c.h.b16 %v3448
    %v4606 = vunpack.c.l.b16 %v3449
    %v4607 = vunpack.c.h.b16 %v3449
    %v4608 = vunpack.c.l.b16 %v3450
    %v4609 = vunpack.c.h.b16 %v3450
    %v4610 = vunpack.c.l.b16 %v3451
    %v4611 = vunpack.c.h.b16 %v3451
    %v4612 = vunpack.c.l.b16 %v3452
    %v4613 = vunpack.c.h.b16 %v3452
    %v4614 = vunpack.c.l.b16 %v3453
    %v4615 = vunpack.c.h.b16 %v3453
    %v4616 = vunpack.c.l.b16 %v3454
    %v4617 = vunpack.c.h.b16 %v3454
    %v4618 = vunpack.c.l.b16 %v3455
    %v4619 = vunpack.c.h.b16 %v3455
    %v4620 = vunpack.c.l.b16 %v3456
    %v4621 = vunpack.c.h.b16 %v3456
    %v4622 = vunpack.c.l.b16 %v3457
    %v4623 = vunpack.c.h.b16 %v3457
    %v4624 = vunpack.c.l.b16 %v3458
    %v4625 = vunpack.c.h.b16 %v3458
    %v4626 = vunpack.c.l.b16 %v3459
    %v4627 = vunpack.c.h.b16 %v3459
    %v4628 = vunpack.c.l.b16 %v3460
    %v4629 = vunpack.c.h.b16 %v3460
    %v4630 = vunpack.c.l.b16 %v3461
    %v4631 = vunpack.c.h.b16 %v3461
    %v4632 = vunpack.c.l.b16 %v3462
    %v4633 = vunpack.c.h.b16 %v3462
    %v4634 = vunpack.c.l.b16 %v3463
    %v4635 = vunpack.c.h.b16 %v3463
    %v4636 = vunpack.c.l.b16 %v3464
    %v4637 = vunpack.c.h.b16 %v3464
    %v4638 = vunpack.c.l.b16 %v3465
    %v4639 = vunpack.c.h.b16 %v3465
    %v4640 = vunpack.c.l.b16 %v3466
    %v4641 = vunpack.c.h.b16 %v3466
    %v4642 = vunpack.c.l.b16 %v3467
    %v4643 = vunpack.c.h.b16 %v3467
    %v4644 = vunpack.c.l.b16 %v3468
    %v4645 = vunpack.c.h.b16 %v3468
    %v4646 = vunpack.c.l.b16 %v3469
    %v4647 = vunpack.c.h.b16 %v3469
    %v4648 = vunpack.c.l.b16 %v3470
    %v4649 = vunpack.c.h.b16 %v3470
    %v4650 = vunpack.c.l.b16 %v3471
    %v4651 = vunpack.c.h.b16 %v3471
    %v4652 = vunpack.c.l.b16 %v3472
    %v4653 = vunpack.c.h.b16 %v3472
    %v4654 = vunpack.c.l.b16 %v3473
    %v4655 = vunpack.c.h.b16 %v3473
    %v4656 = vunpack.c.l.b16 %v3474
    %v4657 = vunpack.c.h.b16 %v3474
    %v4658 = vunpack.c.l.b16 %v3475
    %v4659 = vunpack.c.h.b16 %v3475
    %v4660 = vunpack.c.l.b16 %v3476
    %v4661 = vunpack.c.h.b16 %v3476
    %v4662 = vunpack.c.l.b16 %v3477
    %v4663 = vunpack.c.h.b16 %v3477
    %v4664 = vunpack.c.l.b16 %v3478
    %v4665 = vunpack.c.h.b16 %v3478
    %v4666 = vunpack.c.l.b16 %v3479
    %v4667 = vunpack.c.h.b16 %v3479
    %v4668 = vunpack.c.l.b16 %v3480
    %v4669 = vunpack.c.h.b16 %v3480
    %v4670 = vunpack.c.l.b16 %v3481
    %v4671 = vunpack.c.h.b16 %v3481
    %v4672 = vunpack.c.l.b16 %v3482
    %v4673 = vunpack.c.h.b16 %v3482
    %v4674 = vunpack.c.l.b16 %v3483
    %v4675 = vunpack.c.h.b16 %v3483
    %v4676 = vunpack.c.l.b16 %v3484
    %v4677 = vunpack.c.h.b16 %v3484
    %v4678 = vunpack.c.l.b16 %v3485
    %v4679 = vunpack.c.h.b16 %v3485
    %v4680 = vunpack.c.l.b16 %v3486
    %v4681 = vunpack.c.h.b16 %v3486
    %v4682 = vunpack.c.l.b16 %v3487
    %v4683 = vunpack.c.h.b16 %v3487
    %v4684 = vunpack.c.l.b16 %v3488
    %v4685 = vunpack.c.h.b16 %v3488
    %v4686 = vunpack.c.l.b16 %v3489
    %v4687 = vunpack.c.h.b16 %v3489
    %v4688 = vunpack.c.l.b16 %v3490
    %v4689 = vunpack.c.h.b16 %v3490
    %v4690 = vunpack.c.l.b16 %v3491
    %v4691 = vunpack.c.h.b16 %v3491
    %v4692 = vunpack.c.l.b16 %v3492
    %v4693 = vunpack.c.h.b16 %v3492
    %v4694 = vunpack.c.l.b16 %v3493
    %v4695 = vunpack.c.h.b16 %v3493
    %v4696 = vunpack.c.l.b16 %v3494
    %v4697 = vunpack.c.h.b16 %v3494
    %v4698 = vunpack.c.l.b16 %v3495
    %v4699 = vunpack.c.h.b16 %v3495
    %v4700 = vunpack.c.l.b16 %v3496
    %v4701 = vunpack.c.h.b16 %v3496
    %v4702 = vunpack.c.l.b16 %v3497
    %v4703 = vunpack.c.h.b16 %v3497
    %v4704 = vunpack.c.l.b16 %v3498
    %v4705 = vunpack.c.h.b16 %v3498
    %v4706 = vunpack.c.l.b16 %v3499
    %v4707 = vunpack.c.h.b16 %v3499
    %v4708 = vunpack.c.l.b16 %v3500
    %v4709 = vunpack.c.h.b16 %v3500
    %v4710 = vunpack.c.l.b16 %v3501
    %v4711 = vunpack.c.h.b16 %v3501
    %v4712 = vunpack.c.l.b16 %v3502
    %v4713 = vunpack.c.h.b16 %v3502
    %v4714 = vunpack.c.l.b16 %v3503
    %v4715 = vunpack.c.h.b16 %v3503
    %v4716 = vunpack.c.l.b16 %v3504
    %v4717 = vunpack.c.h.b16 %v3504
    %v4718 = vunpack.c.l.b16 %v3505
    %v4719 = vunpack.c.h.b16 %v3505
    %v4720 = vunpack.c.l.b16 %v3506
    %v4721 = vunpack.c.h.b16 %v3506
    %v4722 = vunpack.c.l.b16 %v3507
    %v4723 = vunpack.c.h.b16 %v3507
    %v4724 = vunpack.c.l.b16 %v3508
    %v4725 = vunpack.c.h.b16 %v3508
    %v4726 = vunpack.c.l.b16 %v3509
    %v4727 = vunpack.c.h.b16 %v3509
    %v4728 = vunpack.c.l.b16 %v3510
    %v4729 = vunpack.c.h.b16 %v3510
    %v4730 = vunpack.c.l.b16 %v3511
    %v4731 = vunpack.c.h.b16 %v3511
    %v4732 = vunpack.c.l.b16 %v3512
    %v4733 = vunpack.c.h.b16 %v3512
    %v4734 = vunpack.c.l.b16 %v3513
    %v4735 = vunpack.c.h.b16 %v3513
    %v4736 = vunpack.c.l.b16 %v3514
    %v4737 = vunpack.c.h.b16 %v3514
    %v4738 = vunpack.c.l.b16 %v3515
    %v4739 = vunpack.c.h.b16 %v3515
    %v4740 = vunpack.c.l.b16 %v3516
    %v4741 = vunpack.c.h.b16 %v3516
    %v4742 = vunpack.c.l.b16 %v3517
    %v4743 = vunpack.c.h.b16 %v3517
    %v4744 = vunpack.c.l.b16 %v3518
    %v4745 = vunpack.c.h.b16 %v3518
    %v4746 = vunpack.c.l.b16 %v3519
    %v4747 = vunpack.c.h.b16 %v3519
    %v4748 = vunpack.c.l.b16 %v3520
    %v4749 = vunpack.c.h.b16 %v3520
    %v4750 = vunpack.c.l.b16 %v3521
    %v4751 = vunpack.c.h.b16 %v3521
    %v4752 = vunpack.c.l.b16 %v3522
    %v4753 = vunpack.c.h.b16 %v3522
    %v4754 = vunpack.c.l.b16 %v3523
    %v4755 = vunpack.c.h.b16 %v3523
    %v4756 = vunpack.c.l.b16 %v3524
    %v4757 = vunpack.c.h.b16 %v3524
    %v4758 = vunpack.c.l.b16 %v3525
    %v4759 = vunpack.c.h.b16 %v3525
    %v4760 = vunpack.c.l.b16 %v3526
    %v4761 = vunpack.c.h.b16 %v3526
    %v4762 = vunpack.c.l.b16 %v3527
    %v4763 = vunpack.c.h.b16 %v3527
    %v4764 = vunpack.c.l.b16 %v3528
    %v4765 = vunpack.c.h.b16 %v3528
    %v4766 = vunpack.c.l.b16 %v3529
    %v4767 = vunpack.c.h.b16 %v3529
    %v4768 = vunpack.c.l.b16 %v3530
    %v4769 = vunpack.c.h.b16 %v3530
    %v4770 = vunpack.c.l.b16 %v3531
    %v4771 = vunpack.c.h.b16 %v3531
    %v4772 = vunpack.c.l.b16 %v3532
    %v4773 = vunpack.c.h.b16 %v3532
    %v4774 = vunpack.c.l.b16 %v3533
    %v4775 = vunpack.c.h.b16 %v3533
    %v4776 = vunpack.c.l.b16 %v3534
    %v4777 = vunpack.c.h.b16 %v3534
    %v4778 = vunpack.c.l.b16 %v3535
    %v4779 = vunpack.c.h.b16 %v3535
    %v4780 = vunpack.c.l.b16 %v3536
    %v4781 = vunpack.c.h.b16 %v3536
    %v4782 = vunpack.c.l.b16 %v3537
    %v4783 = vunpack.c.h.b16 %v3537
    %v4784 = vunpack.c.l.b16 %v3538
    %v4785 = vunpack.c.h.b16 %v3538
    %v4786 = vunpack.c.l.b16 %v3539
    %v4787 = vunpack.c.h.b16 %v3539
    %v4788 = vunpack.c.l.b16 %v3540
    %v4789 = vunpack.c.h.b16 %v3540
    %v4790 = vunpack.c.l.b16 %v3541
    %v4791 = vunpack.c.h.b16 %v3541
    %v4792 = vunpack.c.l.b16 %v3542
    %v4793 = vunpack.c.h.b16 %v3542
    %v4794 = vunpack.c.l.b16 %v3543
    %v4795 = vunpack.c.h.b16 %v3543
    %v4796 = vunpack.c.l.b16 %v3544
    %v4797 = vunpack.c.h.b16 %v3544
    %v4798 = vunpack.c.l.b16 %v3545
    %v4799 = vunpack.c.h.b16 %v3545
    %v4800 = vunpack.c.l.b16 %v3546
    %v4801 = vunpack.c.h.b16 %v3546
    %v4802 = vunpack.c.l.b16 %v3547
    %v4803 = vunpack.c.h.b16 %v3547
    %v4804 = vunpack.c.l.b16 %v3548
    %v4805 = vunpack.c.h.b16 %v3548
    %v4806 = vunpack.c.l.b16 %v3549
    %v4807 = vunpack.c.h.b16 %v3549
    %v4808 = vunpack.c.l.b16 %v3550
    %v4809 = vunpack.c.h.b16 %v3550
    %v4810 = vunpack.c.l.b16 %v3551
    %v4811 = vunpack.c.h.b16 %v3551
    %v4812 = vunpack.c.l.b16 %v3552
    %v4813 = vunpack.c.h.b16 %v3552
    %v4814 = vunpack.c.l.b16 %v3553
    %v4815 = vunpack.c.h.b16 %v3553
    %v4816 = vunpack.c.l.b16 %v3554
    %v4817 = vunpack.c.h.b16 %v3554
    %v4818 = vunpack.c.l.b16 %v3555
    %v4819 = vunpack.c.h.b16 %v3555
    %v4820 = vunpack.c.l.b16 %v3556
    %v4821 = vunpack.c.h.b16 %v3556
    %v4822 = vunpack.c.l.b16 %v3557
    %v4823 = vunpack.c.h.b16 %v3557
    %v4824 = vunpack.c.l.b16 %v3558
    %v4825 = vunpack.c.h.b16 %v3558
    %v4826 = vunpack.c.l.b16 %v3559
    %v4827 = vunpack.c.h.b16 %v3559
    %v4828 = vunpack.c.l.b16 %v3560
    %v4829 = vunpack.c.h.b16 %v3560
    %v4830 = vunpack.c.l.b16 %v3561
    %v4831 = vunpack.c.h.b16 %v3561
    %v4832 = vunpack.c.l.b16 %v3562
    %v4833 = vunpack.c.h.b16 %v3562
    %v4834 = vunpack.c.l.b16 %v3563
    %v4835 = vunpack.c.h.b16 %v3563
    %v4836 = vunpack.c.l.b16 %v3564
    %v4837 = vunpack.c.h.b16 %v3564
    %v4838 = vunpack.c.l.b16 %v3565
    %v4839 = vunpack.c.h.b16 %v3565
    %v4840 = vunpack.c.l.b16 %v3566
    %v4841 = vunpack.c.h.b16 %v3566
    %v4842 = vunpack.c.l.b16 %v3567
    %v4843 = vunpack.c.h.b16 %v3567
    %v4844 = vunpack.c.l.b16 %v3568
    %v4845 = vunpack.c.h.b16 %v3568
    %v4846 = vunpack.c.l.b16 %v3569
    %v4847 = vunpack.c.h.b16 %v3569
    %v4848 = vunpack.c.l.b16 %v3570
    %v4849 = vunpack.c.h.b16 %v3570
    %v4850 = vunpack.c.l.b16 %v3571
    %v4851 = vunpack.c.h.b16 %v3571
    %v4852 = vunpack.c.l.b16 %v3572
    %v4853 = vunpack.c.h.b16 %v3572
    %v4854 = vunpack.c.l.b16 %v3573
    %v4855 = vunpack.c.h.b16 %v3573
    %v4856 = vunpack.c.l.b16 %v3574
    %v4857 = vunpack.c.h.b16 %v3574
    %v4858 = vunpack.c.l.b16 %v3575
    %v4859 = vunpack.c.h.b16 %v3575
    %v4860 = vunpack.c.l.b16 %v3576
    %v4861 = vunpack.c.h.b16 %v3576
    %v4862 = vunpack.c.l.b16 %v3577
    %v4863 = vunpack.c.h.b16 %v3577
    %v4864 = vunpack.c.l.b16 %v3578
    %v4865 = vunpack.c.h.b16 %v3578
    %v4866 = vunpack.c.l.b16 %v3579
    %v4867 = vunpack.c.h.b16 %v3579
    %v4868 = vunpack.c.l.b16 %v3580
    %v4869 = vunpack.c.h.b16 %v3580
    %v4870 = vunpack.c.l.b16 %v3581
    %v4871 = vunpack.c.h.b16 %v3581
    %v4872 = vunpack.c.l.b16 %v3582
    %v4873 = vunpack.c.h.b16 %v3582
    %v4874 = vunpack.c.l.b16 %v3583
    %v4875 = vunpack.c.h.b16 %v3583
    %v4876 = vunpack.c.l.b16 %v3584
    %v4877 = vunpack.c.h.b16 %v3584
    %v4878 = vunpack.c.l.b16 %v3585
    %v4879 = vunpack.c.h.b16 %v3585
    %v4880 = vunpack.c.l.b16 %v3586
    %v4881 = vunpack.c.h.b16 %v3586
    %v4882 = vunpack.c.l.b16 %v3587
    %v4883 = vunpack.c.h.b16 %v3587
    %v4884 = vunpack.c.l.b16 %v3588
    %v4885 = vunpack.c.h.b16 %v3588
    %v4886 = vunpack.c.l.b16 %v3589
    %v4887 = vunpack.c.h.b16 %v3589
    %v4888 = vunpack.c.l.b16 %v3590
    %v4889 = vunpack.c.h.b16 %v3590
    %v4890 = vunpack.c.l.b16 %v3591
    %v4891 = vunpack.c.h.b16 %v3591
    %v4892 = vunpack.c.l.b16 %v3592
    %v4893 = vunpack.c.h.b16 %v3592
    %v4894 = vunpack.c.l.b16 %v3593
    %v4895 = vunpack.c.h.b16 %v3593
    %v4896 = vunpack.c.l.b16 %v3594
    %v4897 = vunpack.c.h.b16 %v3594
    %v4898 = vunpack.c.l.b16 %v3595
    %v4899 = vunpack.c.h.b16 %v3595
    %v4900 = vunpack.c.l.b16 %v3596
    %v4901 = vunpack.c.h.b16 %v3596
    %v4902 = vunpack.c.l.b16 %v3597
    %v4903 = vunpack.c.h.b16 %v3597
    %v4904 = vunpack.c.l.b16 %v3598
    %v4905 = vunpack.c.h.b16 %v3598
    %v4906 = vunpack.c.l.b16 %v3599
    %v4907 = vunpack.c.h.b16 %v3599
    %v4908 = vunpack.c.l.b16 %v3600
    %v4909 = vunpack.c.h.b16 %v3600
    %v4910 = vunpack.c.l.b16 %v3601
    %v4911 = vunpack.c.h.b16 %v3601
    %v4912 = vunpack.c.l.b16 %v3602
    %v4913 = vunpack.c.h.b16 %v3602
    %v4914 = vunpack.c.l.b16 %v3603
    %v4915 = vunpack.c.h.b16 %v3603
    %v4916 = vunpack.c.l.b16 %v3604
    %v4917 = vunpack.c.h.b16 %v3604
    %v4918 = vunpack.c.l.b16 %v3605
    %v4919 = vunpack.c.h.b16 %v3605
    %v4920 = vunpack.c.l.b16 %v3606
    %v4921 = vunpack.c.h.b16 %v3606
    %v4922 = vunpack.c.l.b16 %v3607
    %v4923 = vunpack.c.h.b16 %v3607
    %v4924 = vunpack.c.l.b16 %v3608
    %v4925 = vunpack.c.h.b16 %v3608
    %v4926 = vunpack.c.l.b16 %v3609
    %v4927 = vunpack.c.h.b16 %v3609
    %v4928 = vunpack.c.l.b16 %v3610
    %v4929 = vunpack.c.h.b16 %v3610
    %v4930 = vunpack.c.l.b16 %v3611
    %v4931 = vunpack.c.h.b16 %v3611
    %v4932 = vunpack.c.l.b16 %v3612
    %v4933 = vunpack.c.h.b16 %v3612
    %v4934 = vunpack.c.l.b16 %v3613
    %v4935 = vunpack.c.h.b16 %v3613
    %v4936 = vunpack.c.l.b16 %v3614
    %v4937 = vunpack.c.h.b16 %v3614
    %v4938 = vunpack.c.l.b16 %v3615
    %v4939 = vunpack.c.h.b16 %v3615
    %v4940 = vunpack.c.l.b16 %v3616
    %v4941 = vunpack.c.h.b16 %v3616
    %v4942 = vunpack.c.l.b16 %v3617
    %v4943 = vunpack.c.h.b16 %v3617
    %v4944 = vunpack.c.l.b16 %v3618
    %v4945 = vunpack.c.h.b16 %v3618
    %v4946 = vunpack.c.l.b16 %v3619
    %v4947 = vunpack.c.h.b16 %v3619
    %v4948 = vunpack.c.l.b16 %v3620
    %v4949 = vunpack.c.h.b16 %v3620
    %v4950 = vunpack.c.l.b16 %v3621
    %v4951 = vunpack.c.h.b16 %v3621
    %v4952 = vunpack.c.l.b16 %v3622
    %v4953 = vunpack.c.h.b16 %v3622
    %v4954 = vunpack.c.l.b16 %v3623
    %v4955 = vunpack.c.h.b16 %v3623
    %v4956 = vunpack.c.l.b16 %v3624
    %v4957 = vunpack.c.h.b16 %v3624
    %v4958 = vunpack.c.l.b16 %v3625
    %v4959 = vunpack.c.h.b16 %v3625
    %v4960 = vunpack.c.l.b16 %v3626
    %v4961 = vunpack.c.h.b16 %v3626
    %v4962 = vunpack.c.l.b16 %v3627
    %v4963 = vunpack.c.h.b16 %v3627
    %v4964 = vunpack.c.l.b16 %v3628
    %v4965 = vunpack.c.h.b16 %v3628
    %v4966 = vunpack.c.l.b16 %v3629
    %v4967 = vunpack.c.h.b16 %v3629
    %v4968 = vunpack.c.l.b16 %v3630
    %v4969 = vunpack.c.h.b16 %v3630
    %v4970 = vunpack.c.l.b16 %v3631
    %v4971 = vunpack.c.h.b16 %v3631
    %v4972 = vunpack.c.l.b16 %v3632
    %v4973 = vunpack.c.h.b16 %v3632
    %v4974 = vunpack.c.l.b16 %v3633
    %v4975 = vunpack.c.h.b16 %v3633
    %v4976 = vunpack.c.l.b16 %v3634
    %v4977 = vunpack.c.h.b16 %v3634
    %v4978 = vunpack.c.l.b16 %v3635
    %v4979 = vunpack.c.h.b16 %v3635
    %v4980 = vunpack.c.l.b16 %v3636
    %v4981 = vunpack.c.h.b16 %v3636
    %v4982 = vunpack.c.l.b16 %v3637
    %v4983 = vunpack.c.h.b16 %v3637
    %v4984 = vunpack.c.l.b16 %v3638
    %v4985 = vunpack.c.h.b16 %v3638
    %v4986 = vunpack.c.l.b16 %v3639
    %v4987 = vunpack.c.h.b16 %v3639
    %v4988 = vunpack.c.l.b16 %v3640
    %v4989 = vunpack.c.h.b16 %v3640
    %v4990 = vunpack.c.l.b16 %v3641
    %v4991 = vunpack.c.h.b16 %v3641
    %v4992 = vunpack.c.l.b16 %v3642
    %v4993 = vunpack.c.h.b16 %v3642
    %v4994 = vunpack.c.l.b16 %v3643
    %v4995 = vunpack.c.h.b16 %v3643
    %v4996 = vunpack.c.l.b16 %v3644
    %v4997 = vunpack.c.h.b16 %v3644
    %v4998 = vunpack.c.l.b16 %v3645
    %v4999 = vunpack.c.h.b16 %v3645
    %v5000 = vunpack.c.l.b16 %v3646
    %v5001 = vunpack.c.h.b16 %v3646
    %v5002 = vunpack.c.l.b16 %v3647
    %v5003 = vunpack.c.h.b16 %v3647
    %v5004 = vunpack.c.l.b16 %v3648
    %v5005 = vunpack.c.h.b16 %v3648
    %v5006 = vunpack.c.l.b16 %v3649
    %v5007 = vunpack.c.h.b16 %v3649
    %v5008 = vunpack.c.l.b16 %v3650
    %v5009 = vunpack.c.h.b16 %v3650
    %v5010 = vunpack.c.l.b16 %v3651
    %v5011 = vunpack.c.h.b16 %v3651
    %v5012 = vunpack.c.l.b16 %v3652
    %v5013 = vunpack.c.h.b16 %v3652
    %v5014 = vunpack.c.l.b16 %v3653
    %v5015 = vunpack.c.h.b16 %v3653
    %v5016 = vunpack.c.l.b16 %v3654
    %v5017 = vunpack.c.h.b16 %v3654
    %v5018 = vunpack.c.l.b16 %v3655
    %v5019 = vunpack.c.h.b16 %v3655
    %v5020 = vunpack.c.l.b16 %v3656
    %v5021 = vunpack.c.h.b16 %v3656
    %v5022 = vunpack.c.l.b16 %v3657
    %v5023 = vunpack.c.h.b16 %v3657
    %v5024 = vunpack.c.l.b16 %v3658
    %v5025 = vunpack.c.h.b16 %v3658
    %v5026 = vunpack.c.l.b16 %v3659
    %v5027 = vunpack.c.h.b16 %v3659
    %v5028 = vunpack.c.l.b16 %v3660
    %v5029 = vunpack.c.h.b16 %v3660
    %v5030 = vunpack.c.l.b16 %v3661
    %v5031 = vunpack.c.h.b16 %v3661
    %v5032 = vunpack.c.l.b16 %v3662
    %v5033 = vunpack.c.h.b16 %v3662
    %v5034 = vunpack.c.l.b16 %v3663
    %v5035 = vunpack.c.h.b16 %v3663
    %v5036 = vunpack.c.l.b16 %v3664
    %v5037 = vunpack.c.h.b16 %v3664
    %v5038 = vunpack.c.l.b16 %v3665
    %v5039 = vunpack.c.h.b16 %v3665
    %v5040 = vunpack.c.l.b16 %v3666
    %v5041 = vunpack.c.h.b16 %v3666
    %v5042 = vunpack.c.l.b16 %v3667
    %v5043 = vunpack.c.h.b16 %v3667
    %v5044 = vunpack.c.l.b16 %v3668
    %v5045 = vunpack.c.h.b16 %v3668
    %v5046 = vunpack.c.l.b16 %v3669
    %v5047 = vunpack.c.h.b16 %v3669
    %v5048 = vunpack.c.l.b16 %v3670
    %v5049 = vunpack.c.h.b16 %v3670
    %v5050 = vunpack.c.l.b16 %v3671
    %v5051 = vunpack.c.h.b16 %v3671
    %v5052 = vunpack.c.l.b16 %v3672
    %v5053 = vunpack.c.h.b16 %v3672
    %v5054 = vunpack.c.l.b16 %v3673
    %v5055 = vunpack.c.h.b16 %v3673
    %v5056 = vunpack.c.l.b16 %v3674
    %v5057 = vunpack.c.h.b16 %v3674
    %v5058 = vunpack.c.l.b16 %v3675
    %v5059 = vunpack.c.h.b16 %v3675
    %v5060 = vunpack.c.l.b16 %v3676
    %v5061 = vunpack.c.h.b16 %v3676
    %v5062 = vunpack.c.l.b16 %v3677
    %v5063 = vunpack.c.h.b16 %v3677
    %v5064 = vunpack.c.l.b16 %v3678
    %v5065 = vunpack.c.h.b16 %v3678
    %v5066 = vunpack.c.l.b16 %v3679
    %v5067 = vunpack.c.h.b16 %v3679
    %v5068 = vunpack.c.l.b16 %v3680
    %v5069 = vunpack.c.h.b16 %v3680
    %v5070 = vunpack.c.l.b16 %v3681
    %v5071 = vunpack.c.h.b16 %v3681
    %v5072 = vunpack.c.l.b16 %v3682
    %v5073 = vunpack.c.h.b16 %v3682
    %v5074 = vunpack.c.l.b16 %v3683
    %v5075 = vunpack.c.h.b16 %v3683
    %v5076 = vunpack.c.l.b16 %v3684
    %v5077 = vunpack.c.h.b16 %v3684
    %v5078 = vunpack.c.l.b16 %v3685
    %v5079 = vunpack.c.h.b16 %v3685
    %v5080 = vunpack.c.l.b16 %v3686
    %v5081 = vunpack.c.h.b16 %v3686
    %v5082 = vunpack.c.l.b16 %v3687
    %v5083 = vunpack.c.h.b16 %v3687
    %v5084 = vunpack.c.l.b16 %v3688
    %v5085 = vunpack.c.h.b16 %v3688
    %v5086 = vunpack.c.l.b16 %v3689
    %v5087 = vunpack.c.h.b16 %v3689
    %v5088 = vunpack.c.l.b16 %v3690
    %v5089 = vunpack.c.h.b16 %v3690
    %v5090 = vunpack.c.l.b16 %v3691
    %v5091 = vunpack.c.h.b16 %v3691
    %v5092 = vunpack.c.l.b16 %v3692
    %v5093 = vunpack.c.h.b16 %v3692
    %v5094 = vunpack.c.l.b16 %v3693
    %v5095 = vunpack.c.h.b16 %v3693
    %v5096 = vunpack.c.l.b16 %v3694
    %v5097 = vunpack.c.h.b16 %v3694
    %v5098 = vunpack.c.l.b16 %v3695
    %v5099 = vunpack.c.h.b16 %v3695
    %v5100 = vunpack.c.l.b16 %v3696
    %v5101 = vunpack.c.h.b16 %v3696
    %v5102 = vunpack.c.l.b16 %v3697
    %v5103 = vunpack.c.h.b16 %v3697
    %v5104 = vunpack.c.l.b16 %v3698
    %v5105 = vunpack.c.h.b16 %v3698
    %v5106 = vunpack.c.l.b16 %v3699
    %v5107 = vunpack.c.h.b16 %v3699
    %v5108 = vunpack.c.l.b16 %v3700
    %v5109 = vunpack.c.h.b16 %v3700
    %v5110 = vunpack.c.l.b16 %v3701
    %v5111 = vunpack.c.h.b16 %v3701
    %v5112 = vunpack.c.l.b16 %v3702
    %v5113 = vunpack.c.h.b16 %v3702
    %v5114 = vunpack.c.l.b16 %v3703
    %v5115 = vunpack.c.h.b16 %v3703
    %v5116 = vunpack.c.l.b16 %v3704
    %v5117 = vunpack.c.h.b16 %v3704
    %v5118 = vunpack.c.l.b16 %v3705
    %v5119 = vunpack.c.h.b16 %v3705
    %v5120 = vunpack.c.l.b16 %v3706
    %v5121 = vunpack.c.h.b16 %v3706
    %v5122 = vunpack.c.l.b16 %v3707
    %v5123 = vunpack.c.h.b16 %v3707
    %v5124 = vunpack.c.l.b16 %v3708
    %v5125 = vunpack.c.h.b16 %v3708
    %v5126 = vunpack.c.l.b16 %v3709
    %v5127 = vunpack.c.h.b16 %v3709
    %v5128 = vunpack.c.l.b16 %v3710
    %v5129 = vunpack.c.h.b16 %v3710
    %v5130 = vunpack.c.l.b16 %v3711
    %v5131 = vunpack.c.h.b16 %v3711
    %v5132 = vunpack.c.l.b16 %v3712
    %v5133 = vunpack.c.h.b16 %v3712
    %v5134 = vunpack.c.l.b16 %v3713
    %v5135 = vunpack.c.h.b16 %v3713
    %v5136 = vunpack.c.l.b16 %v3714
    %v5137 = vunpack.c.h.b16 %v3714
    %v5138 = vunpack.c.l.b16 %v3715
    %v5139 = vunpack.c.h.b16 %v3715
    %v5140 = vunpack.c.l.b16 %v3716
    %v5141 = vunpack.c.h.b16 %v3716
    %v5142 = vunpack.c.l.b16 %v3717
    %v5143 = vunpack.c.h.b16 %v3717
    %v5144 = vunpack.c.l.b16 %v3718
    %v5145 = vunpack.c.h.b16 %v3718
    %v5146 = vunpack.c.l.b16 %v3719
    %v5147 = vunpack.c.h.b16 %v3719
    %v5148 = vunpack.c.l.b16 %v3720
    %v5149 = vunpack.c.h.b16 %v3720
    %v5150 = vunpack.c.l.b16 %v3721
    %v5151 = vunpack.c.h.b16 %v3721
    %v5152 = vunpack.c.l.b16 %v3722
    %v5153 = vunpack.c.h.b16 %v3722
    %v5154 = vunpack.c.l.b16 %v3723
    %v5155 = vunpack.c.h.b16 %v3723
    %v5156 = vunpack.c.l.b16 %v3724
    %v5157 = vunpack.c.h.b16 %v3724
    %v5158 = vunpack.c.l.b16 %v3725
    %v5159 = vunpack.c.h.b16 %v3725
    %v5160 = vunpack.c.l.b16 %v3726
    %v5161 = vunpack.c.h.b16 %v3726
    %v5162 = vunpack.c.l.b16 %v3727
    %v5163 = vunpack.c.h.b16 %v3727
    %v5164 = vunpack.c.l.b16 %v3728
    %v5165 = vunpack.c.h.b16 %v3728
    %v5166 = vunpack.c.l.b16 %v3729
    %v5167 = vunpack.c.h.b16 %v3729
    %v5168 = vunpack.c.l.b16 %v3730
    %v5169 = vunpack.c.h.b16 %v3730
    %v5170 = vunpack.c.l.b16 %v3731
    %v5171 = vunpack.c.h.b16 %v3731
    %v5172 = vunpack.c.l.b16 %v3732
    %v5173 = vunpack.c.h.b16 %v3732
    %v5174 = vunpack.c.l.b16 %v3733
    %v5175 = vunpack.c.h.b16 %v3733
    %v5176 = vunpack.c.l.b16 %v3734
    %v5177 = vunpack.c.h.b16 %v3734
    %v5178 = vunpack.c.l.b16 %v3735
    %v5179 = vunpack.c.h.b16 %v3735
    %v5180 = vunpack.c.l.b16 %v3736
    %v5181 = vunpack.c.h.b16 %v3736
    %v5182 = vunpack.c.l.b16 %v3737
    %v5183 = vunpack.c.h.b16 %v3737
    %v5184 = vunpack.c.l.b16 %v3738
    %v5185 = vunpack.c.h.b16 %v3738
    %v5186 = vunpack.c.l.b16 %v3739
    %v5187 = vunpack.c.h.b16 %v3739
    %v5188 = vunpack.c.l.b16 %v3740
    %v5189 = vunpack.c.h.b16 %v3740
    %v5190 = vunpack.c.l.b16 %v3741
    %v5191 = vunpack.c.h.b16 %v3741
    %v5192 = vunpack.c.l.b16 %v3742
    %v5193 = vunpack.c.h.b16 %v3742
    %v5194 = vunpack.c.l.b16 %v3743
    %v5195 = vunpack.c.h.b16 %v3743
    %v5196 = vunpack.c.l.b16 %v3744
    %v5197 = vunpack.c.h.b16 %v3744
    %v5198 = vunpack.c.l.b16 %v3745
    %v5199 = vunpack.c.h.b16 %v3745
    %v5200 = vunpack.c.l.b16 %v3746
    %v5201 = vunpack.c.h.b16 %v3746
    %v5202 = vunpack.c.l.b16 %v3747
    %v5203 = vunpack.c.h.b16 %v3747
    %v5204 = vunpack.c.l.b16 %v3748
    %v5205 = vunpack.c.h.b16 %v3748
    %v5206 = vunpack.c.l.b16 %v3749
    %v5207 = vunpack.c.h.b16 %v3749
    %v5208 = vunpack.c.l.b16 %v3750
    %v5209 = vunpack.c.h.b16 %v3750
    %v5210 = vunpack.c.l.b16 %v3751
    %v5211 = vunpack.c.h.b16 %v3751
    %v5212 = vunpack.c.l.b16 %v3752
    %v5213 = vunpack.c.h.b16 %v3752
    %v5214 = vunpack.c.l.b16 %v3753
    %v5215 = vunpack.c.h.b16 %v3753
    %v5216 = vunpack.c.l.b16 %v3754
    %v5217 = vunpack.c.h.b16 %v3754
    %v5218 = vunpack.c.l.b16 %v3755
    %v5219 = vunpack.c.h.b16 %v3755
    %v5220 = vunpack.c.l.b16 %v3756
    %v5221 = vunpack.c.h.b16 %v3756
    %v5222 = vunpack.c.l.b16 %v3757
    %v5223 = vunpack.c.h.b16 %v3757
    %v5224 = vunpack.c.l.b16 %v3758
    %v5225 = vunpack.c.h.b16 %v3758
    %v5226 = vunpack.c.l.b16 %v3759
    %v5227 = vunpack.c.h.b16 %v3759
    %v5228 = vunpack.c.l.b16 %v3760
    %v5229 = vunpack.c.h.b16 %v3760
    %v5230 = vunpack.c.l.b16 %v3761
    %v5231 = vunpack.c.h.b16 %v3761
    %v5232 = vunpack.c.l.b16 %v3762
    %v5233 = vunpack.c.h.b16 %v3762
    %v5234 = vunpack.c.l.b16 %v3763
    %v5235 = vunpack.c.h.b16 %v3763
    %v5236 = vunpack.c.l.b16 %v3764
    %v5237 = vunpack.c.h.b16 %v3764
    %v5238 = vunpack.c.l.b16 %v3765
    %v5239 = vunpack.c.h.b16 %v3765
    %v5240 = vunpack.c.l.b16 %v3766
    %v5241 = vunpack.c.h.b16 %v3766
    %v5242 = vunpack.c.l.b16 %v3767
    %v5243 = vunpack.c.h.b16 %v3767
    %v5244 = vunpack.c.l.b16 %v3768
    %v5245 = vunpack.c.h.b16 %v3768
    %v5246 = vunpack.c.l.b16 %v3769
    %v5247 = vunpack.c.h.b16 %v3769
    %v5248 = vunpack.c.l.b16 %v3770
    %v5249 = vunpack.c.h.b16 %v3770
    %v5250 = vunpack.c.l.b16 %v3771
    %v5251 = vunpack.c.h.b16 %v3771
    %v5252 = vunpack.c.l.b16 %v3772
    %v5253 = vunpack.c.h.b16 %v3772
    %v5254 = vunpack.c.l.b16 %v3773
    %v5255 = vunpack.c.h.b16 %v3773
    %v5256 = vunpack.c.l.b16 %v3774
    %v5257 = vunpack.c.h.b16 %v3774
    %v5258 = vunpack.c.l.b16 %v3775
    %v5259 = vunpack.c.h.b16 %v3775
    %v5260 = vunpack.c.l.b16 %v3776
    %v5261 = vunpack.c.h.b16 %v3776
    %v5262 = vunpack.c.l.b16 %v3777
    %v5263 = vunpack.c.h.b16 %v3777
    %v5264 = vunpack.c.l.b16 %v3778
    %v5265 = vunpack.c.h.b16 %v3778
    %v5266 = vunpack.c.l.b16 %v3779
    %v5267 = vunpack.c.h.b16 %v3779
    %v5268 = vunpack.c.l.b16 %v3780
    %v5269 = vunpack.c.h.b16 %v3780
    %v5270 = vunpack.c.l.b16 %v3781
    %v5271 = vunpack.c.h.b16 %v3781
    %v5272 = vunpack.c.l.b16 %v3782
    %v5273 = vunpack.c.h.b16 %v3782
    %v5274 = vunpack.c.l.b16 %v3783
    %v5275 = vunpack.c.h.b16 %v3783
    %v5276 = vunpack.c.l.b16 %v3784
    %v5277 = vunpack.c.h.b16 %v3784
    %v5278 = vunpack.c.l.b16 %v3785
    %v5279 = vunpack.c.h.b16 %v3785
    %v5280 = vunpack.c.l.b16 %v3786
    %v5281 = vunpack.c.h.b16 %v3786
    %v5282 = vunpack.c.l.b16 %v3787
    %v5283 = vunpack.c.h.b16 %v3787
    %v5284 = vunpack.c.l.b16 %v3788
    %v5285 = vunpack.c.h.b16 %v3788
    %v5286 = vunpack.c.l.b16 %v3789
    %v5287 = vunpack.c.h.b16 %v3789
    %v5288 = vunpack.c.l.b16 %v3790
    %v5289 = vunpack.c.h.b16 %v3790
    %v5290 = vunpack.c.l.b16 %v3791
    %v5291 = vunpack.c.h.b16 %v3791
    %v5292 = vunpack.c.l.b16 %v3792
    %v5293 = vunpack.c.h.b16 %v3792
    %v5294 = vunpack.c.l.b16 %v3793
    %v5295 = vunpack.c.h.b16 %v3793
    %v5296 = vunpack.c.l.b16 %v3794
    %v5297 = vunpack.c.h.b16 %v3794
    %v5298 = vunpack.c.l.b16 %v3795
    %v5299 = vunpack.c.h.b16 %v3795
    %v5300 = vunpack.c.l.b16 %v3796
    %v5301 = vunpack.c.h.b16 %v3796
    %v5302 = vunpack.c.l.b16 %v3797
    %v5303 = vunpack.c.h.b16 %v3797
    %v5304 = vunpack.c.l.b16 %v3798
    %v5305 = vunpack.c.h.b16 %v3798
    %v5306 = vunpack.c.l.b16 %v3799
    %v5307 = vunpack.c.h.b16 %v3799
    %v5308 = vunpack.c.l.b16 %v3800
    %v5309 = vunpack.c.h.b16 %v3800
    %v5310 = vunpack.c.l.b16 %v3801
    %v5311 = vunpack.c.h.b16 %v3801
    %v5312 = vunpack.c.l.b16 %v3802
    %v5313 = vunpack.c.h.b16 %v3802
    %v5314 = vunpack.c.l.b16 %v3803
    %v5315 = vunpack.c.h.b16 %v3803
    %v5316 = vunpack.c.l.b16 %v3804
    %v5317 = vunpack.c.h.b16 %v3804
    %v5318 = vunpack.c.l.b16 %v3805
    %v5319 = vunpack.c.h.b16 %v3805
    %v5320 = vunpack.c.l.b16 %v3806
    %v5321 = vunpack.c.h.b16 %v3806
    %v5322 = vunpack.c.l.b16 %v3807
    %v5323 = vunpack.c.h.b16 %v3807
    %v5324 = vunpack.c.l.b16 %v3808
    %v5325 = vunpack.c.h.b16 %v3808
    %v5326 = vunpack.c.l.b16 %v3809
    %v5327 = vunpack.c.h.b16 %v3809
    %v5328 = vunpack.c.l.b16 %v3810
    %v5329 = vunpack.c.h.b16 %v3810
    %v5330 = vunpack.c.l.b16 %v3811
    %v5331 = vunpack.c.h.b16 %v3811
    %v5332 = vunpack.c.l.b16 %v3812
    %v5333 = vunpack.c.h.b16 %v3812
    %v5334 = vunpack.c.l.b16 %v3813
    %v5335 = vunpack.c.h.b16 %v3813
    %v5336 = vunpack.c.l.b16 %v3814
    %v5337 = vunpack.c.h.b16 %v3814
    %v5338 = vunpack.c.l.b16 %v3815
    %v5339 = vunpack.c.h.b16 %v3815
    %v5340 = vunpack.c.l.b16 %v3816
    %v5341 = vunpack.c.h.b16 %v3816
    %v5342 = vunpack.c.l.b16 %v3817
    %v5343 = vunpack.c.h.b16 %v3817
    %v5344 = vunpack.c.l.b16 %v3818
    %v5345 = vunpack.c.h.b16 %v3818
    %v5346 = vunpack.c.l.b16 %v3819
    %v5347 = vunpack.c.h.b16 %v3819
    %v5348 = vunpack.c.l.b16 %v3820
    %v5349 = vunpack.c.h.b16 %v3820
    %v5350 = vunpack.c.l.b16 %v3821
    %v5351 = vunpack.c.h.b16 %v3821
    %v5352 = vunpack.c.l.b16 %v3822
    %v5353 = vunpack.c.h.b16 %v3822
    %v5354 = vunpack.c.l.b16 %v3823
    %v5355 = vunpack.c.h.b16 %v3823
    %v5356 = vunpack.c.l.b16 %v3824
    %v5357 = vunpack.c.h.b16 %v3824
    %v5358 = vunpack.c.l.b16 %v3825
    %v5359 = vunpack.c.h.b16 %v3825
    %v5360 = vunpack.c.l.b16 %v3826
    %v5361 = vunpack.c.h.b16 %v3826
    %v5362 = vunpack.c.l.b16 %v3827
    %v5363 = vunpack.c.h.b16 %v3827
    %v5364 = vunpack.c.l.b16 %v3828
    %v5365 = vunpack.c.h.b16 %v3828
    %v5366 = vunpack.c.l.b16 %v3829
    %v5367 = vunpack.c.h.b16 %v3829
    %v5368 = vunpack.c.l.b16 %v3830
    %v5369 = vunpack.c.h.b16 %v3830
    %v5370 = vunpack.c.l.b16 %v3831
    %v5371 = vunpack.c.h.b16 %v3831
    %v5372 = vunpack.c.l.b16 %v3832
    %v5373 = vunpack.c.h.b16 %v3832
    %v5374 = vunpack.c.l.b16 %v3833
    %v5375 = vunpack.c.h.b16 %v3833
    %v5376 = vunpack.c.l.b16 %v3834
    %v5377 = vunpack.c.h.b16 %v3834
    %v5378 = vunpack.c.l.b16 %v3835
    %v5379 = vunpack.c.h.b16 %v3835
    %v5380 = vunpack.c.l.b16 %v3836
    %v5381 = vunpack.c.h.b16 %v3836
    %v5382 = vunpack.c.l.b16 %v3837
    %v5383 = vunpack.c.h.b16 %v3837
    %v5384 = vunpack.c.l.b16 %v3838
    %v5385 = vunpack.c.h.b16 %v3838
    %v5386 = vunpack.c.l.b16 %v3839
    %v5387 = vunpack.c.h.b16 %v3839
    %v5388 = vunpack.c.l.b16 %v3840
    %v5389 = vunpack.c.h.b16 %v3840
    %v5390 = vunpack.c.l.b16 %v3841
    %v5391 = vunpack.c.h.b16 %v3841
    %v5392 = vunpack.c.l.b16 %v3842
    %v5393 = vunpack.c.h.b16 %v3842
    %v5394 = vunpack.c.l.b16 %v3843
    %v5395 = vunpack.c.h.b16 %v3843
    %v5396 = vunpack.c.l.b16 %v3844
    %v5397 = vunpack.c.h.b16 %v3844
    %v5398 = vunpack.c.l.b16 %v3845
    %v5399 = vunpack.c.h.b16 %v3845
    %v5400 = vpack.c.b16 %v4384, %v4376
    %v5401 = vpack.c.b16 %v4385, %v4377
    %v5402 = vpack.c.b16 %v4386, %v4378
    %v5403 = vpack.c.b16 %v4387, %v4379
    %v5404 = vpack.c.b16 %v4388, %v4380
    %v5405 = vpack.c.b16 %v4389, %v4381
    %v5406 = vpack.c.b16 %v4390, %v4382
    %v5407 = vpack.c.b16 %v4391, %v4383
    %v5408 = vpack.c.b16 %v4400, %v4392
    %v5409 = vpack.c.b16 %v4401, %v4393
    %v5410 = vpack.c.b16 %v4402, %v4394
    %v5411 = vpack.c.b16 %v4403, %v4395
    %v5412 = vpack.c.b16 %v4404, %v4396
    %v5413 = vpack.c.b16 %v4405, %v4397
    %v5414 = vpack.c.b16 %v4406, %v4398
    %v5415 = vpack.c.b16 %v4407, %v4399
    %v5416 = vpack.c.b16 %v4416, %v4408
    %v5417 = vpack.c.b16 %v4417, %v4409
    %v5418 = vpack.c.b16 %v4418, %v4410
    %v5419 = vpack.c.b16 %v4419, %v4411
    %v5420 = vpack.c.b16 %v4420, %v4412
    %v5421 = vpack.c.b16 %v4421, %v4413
    %v5422 = vpack.c.b16 %v4422, %v4414
    %v5423 = vpack.c.b16 %v4423, %v4415
    %v5424 = vpack.c.b16 %v4432, %v4424
    %v5425 = vpack.c.b16 %v4433, %v4425
    %v5426 = vpack.c.b16 %v4434, %v4426
    %v5427 = vpack.c.b16 %v4435, %v4427
    %v5428 = vpack.c.b16 %v4436, %v4428
    %v5429 = vpack.c.b16 %v4437, %v4429
    %v5430 = vpack.c.b16 %v4438, %v4430
    %v5431 = vpack.c.b16 %v4439, %v4431
    %v5432 = vpack.c.b16 %v4448, %v4440
    %v5433 = vpack.c.b16 %v4449, %v4441
    %v5434 = vpack.c.b16 %v4450, %v4442
    %v5435 = vpack.c.b16 %v4451, %v4443
    %v5436 = vpack.c.b16 %v4452, %v4444
    %v5437 = vpack.c.b16 %v4453, %v4445
    %v5438 = vpack.c.b16 %v4454, %v4446
    %v5439 = vpack.c.b16 %v4455, %v4447
    %v5440 = vpack.c.b16 %v4464, %v4456
    %v5441 = vpack.c.b16 %v4465, %v4457
    %v5442 = vpack.c.b16 %v4466, %v4458
    %v5443 = vpack.c.b16 %v4467, %v4459
    %v5444 = vpack.c.b16 %v4468, %v4460
    %v5445 = vpack.c.b16 %v4469, %v4461
    %v5446 = vpack.c.b16 %v4470, %v4462
    %v5447 = vpack.c.b16 %v4471, %v4463
    %v5448 = vpack.c.b16 %v4480, %v4472
    %v5449 = vpack.c.b16 %v4481, %v4473
    %v5450 = vpack.c.b16 %v4482, %v4474
    %v5451 = vpack.c.b16 %v4483, %v4475
    %v5452 = vpack.c.b16 %v4484, %v4476
    %v5453 = vpack.c.b16 %v4485, %v4477
    %v5454 = vpack.c.b16 %v4486, %v4478
    %v5455 = vpack.c.b16 %v4487, %v4479
    %v5456 = vpack.c.b16 %v4496, %v4488
    %v5457 = vpack.c.b16 %v4497, %v4489
    %v5458 = vpack.c.b16 %v4498, %v4490
    %v5459 = vpack.c.b16 %v4499, %v4491
    %v5460 = vpack.c.b16 %v4500, %v4492
    %v5461 = vpack.c.b16 %v4501, %v4493
    %v5462 = vpack.c.b16 %v4502, %v4494
    %v5463 = vpack.c.b16 %v4503, %v4495
    %v5464 = vpack.c.b16 %v4512, %v4504
    %v5465 = vpack.c.b16 %v4513, %v4505
    %v5466 = vpack.c.b16 %v4514, %v4506
    %v5467 = vpack.c.b16 %v4515, %v4507
    %v5468 = vpack.c.b16 %v4516, %v4508
    %v5469 = vpack.c.b16 %v4517, %v4509
    %v5470 = vpack.c.b16 %v4518, %v4510
    %v5471 = vpack.c.b16 %v4519, %v4511
    %v5472 = vpack.c.b16 %v4528, %v4520
    %v5473 = vpack.c.b16 %v4529, %v4521
    %v5474 = vpack.c.b16 %v4530, %v4522
    %v5475 = vpack.c.b16 %v4531, %v4523
    %v5476 = vpack.c.b16 %v4532, %v4524
    %v5477 = vpack.c.b16 %v4533, %v4525
    %v5478 = vpack.c.b16 %v4534, %v4526
    %v5479 = vpack.c.b16 %v4535, %v4527
    %v5480 = vpack.c.b16 %v4544, %v4536
    %v5481 = vpack.c.b16 %v4545, %v4537
    %v5482 = vpack.c.b16 %v4546, %v4538
    %v5483 = vpack.c.b16 %v4547, %v4539
    %v5484 = vpack.c.b16 %v4548, %v4540
    %v5485 = vpack.c.b16 %v4549, %v4541
    %v5486 = vpack.c.b16 %v4550, %v4542
    %v5487 = vpack.c.b16 %v4551, %v4543
    %v5488 = vpack.c.b16 %v4560, %v4552
    %v5489 = vpack.c.b16 %v4561, %v4553
    %v5490 = vpack.c.b16 %v4562, %v4554
    %v5491 = vpack.c.b16 %v4563, %v4555
    %v5492 = vpack.c.b16 %v4564, %v4556
    %v5493 = vpack.c.b16 %v4565, %v4557
    %v5494 = vpack.c.b16 %v4566, %v4558
    %v5495 = vpack.c.b16 %v4567, %v4559
    %v5496 = vpack.c.b16 %v4576, %v4568
    %v5497 = vpack.c.b16 %v4577, %v4569
    %v5498 = vpack.c.b16 %v4578, %v4570
    %v5499 = vpack.c.b16 %v4579, %v4571
    %v5500 = vpack.c.b16 %v4580, %v4572
    %v5501 = vpack.c.b16 %v4581, %v4573
    %v5502 = vpack.c.b16 %v4582, %v4574
    %v5503 = vpack.c.b16 %v4583, %v4575
    %v5504 = vpack.c.b16 %v4592, %v4584
    %v5505 = vpack.c.b16 %v4593, %v4585
    %v5506 = vpack.c.b16 %v4594, %v4586
    %v5507 = vpack.c.b16 %v4595, %v4587
    %v5508 = vpack.c.b16 %v4596, %v4588
    %v5509 = vpack.c.b16 %v4597, %v4589
    %v5510 = vpack.c.b16 %v4598, %v4590
    %v5511 = vpack.c.b16 %v4599, %v4591
    %v5512 = vpack.c.b16 %v4608, %v4600
    %v5513 = vpack.c.b16 %v4609, %v4601
    %v5514 = vpack.c.b16 %v4610, %v4602
    %v5515 = vpack.c.b16 %v4611, %v4603
    %v5516 = vpack.c.b16 %v4612, %v4604
    %v5517 = vpack.c.b16 %v4613, %v4605
    %v5518 = vpack.c.b16 %v4614, %v4606
    %v5519 = vpack.c.b16 %v4615, %v4607
    %v5520 = vpack.c.b16 %v4624, %v4616
    %v5521 = vpack.c.b16 %v4625, %v4617
    %v5522 = vpack.c.b16 %v4626, %v4618
    %v5523 = vpack.c.b16 %v4627, %v4619
    %v5524 = vpack.c.b16 %v4628, %v4620
    %v5525 = vpack.c.b16 %v4629, %v4621
    %v5526 = vpack.c.b16 %v4630, %v4622
    %v5527 = vpack.c.b16 %v4631, %v4623
    %v5528 = vpack.c.b16 %v4640, %v4632
    %v5529 = vpack.c.b16 %v4641, %v4633
    %v5530 = vpack.c.b16 %v4642, %v4634
    %v5531 = vpack.c.b16 %v4643, %v4635
    %v5532 = vpack.c.b16 %v4644, %v4636
    %v5533 = vpack.c.b16 %v4645, %v4637
    %v5534 = vpack.c.b16 %v4646, %v4638
    %v5535 = vpack.c.b16 %v4647, %v4639
    %v5536 = vpack.c.b16 %v4656, %v4648
    %v5537 = vpack.c.b16 %v4657, %v4649
    %v5538 = vpack.c.b16 %v4658, %v4650
    %v5539 = vpack.c.b16 %v4659, %v4651
    %v5540 = vpack.c.b16 %v4660, %v4652
    %v5541 = vpack.c.b16 %v4661, %v4653
    %v5542 = vpack.c.b16 %v4662, %v4654
    %v5543 = vpack.c.b16 %v4663, %v4655
    %v5544 = vpack.c.b16 %v4672, %v4664
    %v5545 = vpack.c.b16 %v4673, %v4665
    %v5546 = vpack.c.b16 %v4674, %v4666
    %v5547 = vpack.c.b16 %v4675, %v4667
    %v5548 = vpack.c.b16 %v4676, %v4668
    %v5549 = vpack.c.b16 %v4677, %v4669
    %v5550 = vpack.c.b16 %v4678, %v4670
    %v5551 = vpack.c.b16 %v4679, %v4671
    %v5552 = vpack.c.b16 %v4688, %v4680
    %v5553 = vpack.c.b16 %v4689, %v4681
    %v5554 = vpack.c.b16 %v4690, %v4682
    %v5555 = vpack.c.b16 %v4691, %v4683
    %v5556 = vpack.c.b16 %v4692, %v4684
    %v5557 = vpack.c.b16 %v4693, %v4685
    %v5558 = vpack.c.b16 %v4694, %v4686
    %v5559 = vpack.c.b16 %v4695, %v4687
    %v5560 = vpack.c.b16 %v4704, %v4696
    %v5561 = vpack.c.b16 %v4705, %v4697
    %v5562 = vpack.c.b16 %v4706, %v4698
    %v5563 = vpack.c.b16 %v4707, %v4699
    %v5564 = vpack.c.b16 %v4708, %v4700
    %v5565 = vpack.c.b16 %v4709, %v4701
    %v5566 = vpack.c.b16 %v4710, %v4702
    %v5567 = vpack.c.b16 %v4711, %v4703
    %v5568 = vpack.c.b16 %v4720, %v4712
    %v5569 = vpack.c.b16 %v4721, %v4713
    %v5570 = vpack.c.b16 %v4722, %v4714
    %v5571 = vpack.c.b16 %v4723, %v4715
    %v5572 = vpack.c.b16 %v4724, %v4716
    %v5573 = vpack.c.b16 %v4725, %v4717
    %v5574 = vpack.c.b16 %v4726, %v4718
    %v5575 = vpack.c.b16 %v4727, %v4719
    %v5576 = vpack.c.b16 %v4736, %v4728
    %v5577 = vpack.c.b16 %v4737, %v4729
    %v5578 = vpack.c.b16 %v4738, %v4730
    %v5579 = vpack.c.b16 %v4739, %v4731
    %v5580 = vpack.c.b16 %v4740, %v4732
    %v5581 = vpack.c.b16 %v4741, %v4733
    %v5582 = vpack.c.b16 %v4742, %v4734
    %v5583 = vpack.c.b16 %v4743, %v4735
    %v5584 = vpack.c.b16 %v4752, %v4744
    %v5585 = vpack.c.b16 %v4753, %v4745
    %v5586 = vpack.c.b16 %v4754, %v4746
    %v5587 = vpack.c.b16 %v4755, %v4747
    %v5588 = vpack.c.b16 %v4756, %v4748
    %v5589 = vpack.c.b16 %v4757, %v4749
    %v5590 = vpack.c.b16 %v4758, %v4750
    %v5591 = vpack.c.b16 %v4759, %v4751
    %v5592 = vpack.c.b16 %v4768, %v4760
    %v5593 = vpack.c.b16 %v4769, %v4761
    %v5594 = vpack.c.b16 %v4770, %v4762
    %v5595 = vpack.c.b16 %v4771, %v4763
    %v5596 = vpack.c.b16 %v4772, %v4764
    %v5597 = vpack.c.b16 %v4773, %v4765
    %v5598 = vpack.c.b16 %v4774, %v4766
    %v5599 = vpack.c.b16 %v4775, %v4767
    %v5600 = vpack.c.b16 %v4784, %v4776
    %v5601 = vpack.c.b16 %v4785, %v4777
    %v5602 = vpack.c.b16 %v4786, %v4778
    %v5603 = vpack.c.b16 %v4787, %v4779
    %v5604 = vpack.c.b16 %v4788, %v4780
    %v5605 = vpack.c.b16 %v4789, %v4781
    %v5606 = vpack.c.b16 %v4790, %v4782
    %v5607 = vpack.c.b16 %v4791, %v4783
    %v5608 = vpack.c.b16 %v4800, %v4792
    %v5609 = vpack.c.b16 %v4801, %v4793
    %v5610 = vpack.c.b16 %v4802, %v4794
    %v5611 = vpack.c.b16 %v4803, %v4795
    %v5612 = vpack.c.b16 %v4804, %v4796
    %v5613 = vpack.c.b16 %v4805, %v4797
    %v5614 = vpack.c.b16 %v4806, %v4798
    %v5615 = vpack.c.b16 %v4807, %v4799
    %v5616 = vpack.c.b16 %v4816, %v4808
    %v5617 = vpack.c.b16 %v4817, %v4809
    %v5618 = vpack.c.b16 %v4818, %v4810
    %v5619 = vpack.c.b16 %v4819, %v4811
    %v5620 = vpack.c.b16 %v4820, %v4812
    %v5621 = vpack.c.b16 %v4821, %v4813
    %v5622 = vpack.c.b16 %v4822, %v4814
    %v5623 = vpack.c.b16 %v4823, %v4815
    %v5624 = vpack.c.b16 %v4832, %v4824
    %v5625 = vpack.c.b16 %v4833, %v4825
    %v5626 = vpack.c.b16 %v4834, %v4826
    %v5627 = vpack.c.b16 %v4835, %v4827
    %v5628 = vpack.c.b16 %v4836, %v4828
    %v5629 = vpack.c.b16 %v4837, %v4829
    %v5630 = vpack.c.b16 %v4838, %v4830
    %v5631 = vpack.c.b16 %v4839, %v4831
    %v5632 = vpack.c.b16 %v4848, %v4840
    %v5633 = vpack.c.b16 %v4849, %v4841
    %v5634 = vpack.c.b16 %v4850, %v4842
    %v5635 = vpack.c.b16 %v4851, %v4843
    %v5636 = vpack.c.b16 %v4852, %v4844
    %v5637 = vpack.c.b16 %v4853, %v4845
    %v5638 = vpack.c.b16 %v4854, %v4846
    %v5639 = vpack.c.b16 %v4855, %v4847
    %v5640 = vpack.c.b16 %v4864, %v4856
    %v5641 = vpack.c.b16 %v4865, %v4857
    %v5642 = vpack.c.b16 %v4866, %v4858
    %v5643 = vpack.c.b16 %v4867, %v4859
    %v5644 = vpack.c.b16 %v4868, %v4860
    %v5645 = vpack.c.b16 %v4869, %v4861
    %v5646 = vpack.c.b16 %v4870, %v4862
    %v5647 = vpack.c.b16 %v4871, %v4863
    %v5648 = vpack.c.b16 %v4880, %v4872
    %v5649 = vpack.c.b16 %v4881, %v4873
    %v5650 = vpack.c.b16 %v4882, %v4874
    %v5651 = vpack.c.b16 %v4883, %v4875
    %v5652 = vpack.c.b16 %v4884, %v4876
    %v5653 = vpack.c.b16 %v4885, %v4877
    %v5654 = vpack.c.b16 %v4886, %v4878
    %v5655 = vpack.c.b16 %v4887, %v4879
    %v5656 = vpack.c.b16 %v4896, %v4888
    %v5657 = vpack.c.b16 %v4897, %v4889
    %v5658 = vpack.c.b16 %v4898, %v4890
    %v5659 = vpack.c.b16 %v4899, %v4891
    %v5660 = vpack.c.b16 %v4900, %v4892
    %v5661 = vpack.c.b16 %v4901, %v4893
    %v5662 = vpack.c.b16 %v4902, %v4894
    %v5663 = vpack.c.b16 %v4903, %v4895
    %v5664 = vpack.c.b16 %v4912, %v4904
    %v5665 = vpack.c.b16 %v4913, %v4905
    %v5666 = vpack.c.b16 %v4914, %v4906
    %v5667 = vpack.c.b16 %v4915, %v4907
    %v5668 = vpack.c.b16 %v4916, %v4908
    %v5669 = vpack.c.b16 %v4917, %v4909
    %v5670 = vpack.c.b16 %v4918, %v4910
    %v5671 = vpack.c.b16 %v4919, %v4911
    %v5672 = vpack.c.b16 %v4928, %v4920
    %v5673 = vpack.c.b16 %v4929, %v4921
    %v5674 = vpack.c.b16 %v4930, %v4922
    %v5675 = vpack.c.b16 %v4931, %v4923
    %v5676 = vpack.c.b16 %v4932, %v4924
    %v5677 = vpack.c.b16 %v4933, %v4925
    %v5678 = vpack.c.b16 %v4934, %v4926
    %v5679 = vpack.c.b16 %v4935, %v4927
    %v5680 = vpack.c.b16 %v4944, %v4936
    %v5681 = vpack.c.b16 %v4945, %v4937
    %v5682 = vpack.c.b16 %v4946, %v4938
    %v5683 = vpack.c.b16 %v4947, %v4939
    %v5684 = vpack.c.b16 %v4948, %v4940
    %v5685 = vpack.c.b16 %v4949, %v4941
    %v5686 = vpack.c.b16 %v4950, %v4942
    %v5687 = vpack.c.b16 %v4951, %v4943
    %v5688 = vpack.c.b16 %v4960, %v4952
    %v5689 = vpack.c.b16 %v4961, %v4953
    %v5690 = vpack.c.b16 %v4962, %v4954
    %v5691 = vpack.c.b16 %v4963, %v4955
    %v5692 = vpack.c.b16 %v4964, %v4956
    %v5693 = vpack.c.b16 %v4965, %v4957
    %v5694 = vpack.c.b16 %v4966, %v4958
    %v5695 = vpack.c.b16 %v4967, %v4959
    %v5696 = vpack.c.b16 %v4976, %v4968
    %v5697 = vpack.c.b16 %v4977, %v4969
    %v5698 = vpack.c.b16 %v4978, %v4970
    %v5699 = vpack.c.b16 %v4979, %v4971
    %v5700 = vpack.c.b16 %v4980, %v4972
    %v5701 = vpack.c.b16 %v4981, %v4973
    %v5702 = vpack.c.b16 %v4982, %v4974
    %v5703 = vpack.c.b16 %v4983, %v4975
    %v5704 = vpack.c.b16 %v4992, %v4984
    %v5705 = vpack.c.b16 %v4993, %v4985
    %v5706 = vpack.c.b16 %v4994, %v4986
    %v5707 = vpack.c.b16 %v4995, %v4987
    %v5708 = vpack.c.b16 %v4996, %v4988
    %v5709 = vpack.c.b16 %v4997, %v4989
    %v5710 = vpack.c.b16 %v4998, %v4990
    %v5711 = vpack.c.b16 %v4999, %v4991
    %v5712 = vpack.c.b16 %v5008, %v5000
    %v5713 = vpack.c.b16 %v5009, %v5001
    %v5714 = vpack.c.b16 %v5010, %v5002
    %v5715 = vpack.c.b16 %v5011, %v5003
    %v5716 = vpack.c.b16 %v5012, %v5004
    %v5717 = vpack.c.b16 %v5013, %v5005
    %v5718 = vpack.c.b16 %v5014, %v5006
    %v5719 = vpack.c.b16 %v5015, %v5007
    %v5720 = vpack.c.b16 %v5024, %v5016
    %v5721 = vpack.c.b16 %v5025, %v5017
    %v5722 = vpack.c.b16 %v5026, %v5018
    %v5723 = vpack.c.b16 %v5027, %v5019
    %v5724 = vpack.c.b16 %v5028, %v5020
    %v5725 = vpack.c.b16 %v5029, %v5021
    %v5726 = vpack.c.b16 %v5030, %v5022
    %v5727 = vpack.c.b16 %v5031, %v5023
    %v5728 = vpack.c.b16 %v5040, %v5032
    %v5729 = vpack.c.b16 %v5041, %v5033
    %v5730 = vpack.c.b16 %v5042, %v5034
    %v5731 = vpack.c.b16 %v5043, %v5035
    %v5732 = vpack.c.b16 %v5044, %v5036
    %v5733 = vpack.c.b16 %v5045, %v5037
    %v5734 = vpack.c.b16 %v5046, %v5038
    %v5735 = vpack.c.b16 %v5047, %v5039
    %v5736 = vpack.c.b16 %v5056, %v5048
    %v5737 = vpack.c.b16 %v5057, %v5049
    %v5738 = vpack.c.b16 %v5058, %v5050
    %v5739 = vpack.c.b16 %v5059, %v5051
    %v5740 = vpack.c.b16 %v5060, %v5052
    %v5741 = vpack.c.b16 %v5061, %v5053
    %v5742 = vpack.c.b16 %v5062, %v5054
    %v5743 = vpack.c.b16 %v5063, %v5055
    %v5744 = vpack.c.b16 %v5072, %v5064
    %v5745 = vpack.c.b16 %v5073, %v5065
    %v5746 = vpack.c.b16 %v5074, %v5066
    %v5747 = vpack.c.b16 %v5075, %v5067
    %v5748 = vpack.c.b16 %v5076, %v5068
    %v5749 = vpack.c.b16 %v5077, %v5069
    %v5750 = vpack.c.b16 %v5078, %v5070
    %v5751 = vpack.c.b16 %v5079, %v5071
    %v5752 = vpack.c.b16 %v5088, %v5080
    %v5753 = vpack.c.b16 %v5089, %v5081
    %v5754 = vpack.c.b16 %v5090, %v5082
    %v5755 = vpack.c.b16 %v5091, %v5083
    %v5756 = vpack.c.b16 %v5092, %v5084
    %v5757 = vpack.c.b16 %v5093, %v5085
    %v5758 = vpack.c.b16 %v5094, %v5086
    %v5759 = vpack.c.b16 %v5095, %v5087
    %v5760 = vpack.c.b16 %v5104, %v5096
    %v5761 = vpack.c.b16 %v5105, %v5097
    %v5762 = vpack.c.b16 %v5106, %v5098
    %v5763 = vpack.c.b16 %v5107, %v5099
    %v5764 = vpack.c.b16 %v5108, %v5100
    %v5765 = vpack.c.b16 %v5109, %v5101
    %v5766 = vpack.c.b16 %v5110, %v5102
    %v5767 = vpack.c.b16 %v5111, %v5103
    %v5768 = vpack.c.b16 %v5120, %v5112
    %v5769 = vpack.c.b16 %v5121, %v5113
    %v5770 = vpack.c.b16 %v5122, %v5114
    %v5771 = vpack.c.b16 %v5123, %v5115
    %v5772 = vpack.c.b16 %v5124, %v5116
    %v5773 = vpack.c.b16 %v5125, %v5117
    %v5774 = vpack.c.b16 %v5126, %v5118
    %v5775 = vpack.c.b16 %v5127, %v5119
    %v5776 = vpack.c.b16 %v5136, %v5128
    %v5777 = vpack.c.b16 %v5137, %v5129
    %v5778 = vpack.c.b16 %v5138, %v5130
    %v5779 = vpack.c.b16 %v5139, %v5131
    %v5780 = vpack.c.b16 %v5140, %v5132
    %v5781 = vpack.c.b16 %v5141, %v5133
    %v5782 = vpack.c.b16 %v5142, %v5134
    %v5783 = vpack.c.b16 %v5143, %v5135
    %v5784 = vpack.c.b16 %v5152, %v5144
    %v5785 = vpack.c.b16 %v5153, %v5145
    %v5786 = vpack.c.b16 %v5154, %v5146
    %v5787 = vpack.c.b16 %v5155, %v5147
    %v5788 = vpack.c.b16 %v5156, %v5148
    %v5789 = vpack.c.b16 %v5157, %v5149
    %v5790 = vpack.c.b16 %v5158, %v5150
    %v5791 = vpack.c.b16 %v5159, %v5151
    %v5792 = vpack.c.b16 %v5168, %v5160
    %v5793 = vpack.c.b16 %v5169, %v5161
    %v5794 = vpack.c.b16 %v5170, %v5162
    %v5795 = vpack.c.b16 %v5171, %v5163
    %v5796 = vpack.c.b16 %v5172, %v5164
    %v5797 = vpack.c.b16 %v5173, %v5165
    %v5798 = vpack.c.b16 %v5174, %v5166
    %v5799 = vpack.c.b16 %v5175, %v5167
    %v5800 = vpack.c.b16 %v5184, %v5176
    %v5801 = vpack.c.b16 %v5185, %v5177
    %v5802 = vpack.c.b16 %v5186, %v5178
    %v5803 = vpack.c.b16 %v5187, %v5179
    %v5804 = vpack.c.b16 %v5188, %v5180
    %v5805 = vpack.c.b16 %v5189, %v5181
    %v5806 = vpack.c.b16 %v5190, %v5182
    %v5807 = vpack.c.b16 %v5191, %v5183
    %v5808 = vpack.c.b16 %v5200, %v5192
    %v5809 = vpack.c.b16 %v5201, %v5193
    %v5810 = vpack.c.b16 %v5202, %v5194
    %v5811 = vpack.c.b16 %v5203, %v5195
    %v5812 = vpack.c.b16 %v5204, %v5196
    %v5813 = vpack.c.b16 %v5205, %v5197
    %v5814 = vpack.c.b16 %v5206, %v5198
    %v5815 = vpack.c.b16 %v5207, %v5199
    %v5816 = vpack.c.b16 %v5216, %v5208
    %v5817 = vpack.c.b16 %v5217, %v5209
    %v5818 = vpack.c.b16 %v5218, %v5210
    %v5819 = vpack.c.b16 %v5219, %v5211
    %v5820 = vpack.c.b16 %v5220, %v5212
    %v5821 = vpack.c.b16 %v5221, %v5213
    %v5822 = vpack.c.b16 %v5222, %v5214
    %v5823 = vpack.c.b16 %v5223, %v5215
    %v5824 = vpack.c.b16 %v5232, %v5224
    %v5825 = vpack.c.b16 %v5233, %v5225
    %v5826 = vpack.c.b16 %v5234, %v5226
    %v5827 = vpack.c.b16 %v5235, %v5227
    %v5828 = vpack.c.b16 %v5236, %v5228
    %v5829 = vpack.c.b16 %v5237, %v5229
    %v5830 = vpack.c.b16 %v5238, %v5230
    %v5831 = vpack.c.b16 %v5239, %v5231
    %v5832 = vpack.c.b16 %v5248, %v5240
    %v5833 = vpack.c.b16 %v5249, %v5241
    %v5834 = vpack.c.b16 %v5250, %v5242
    %v5835 = vpack.c.b16 %v5251, %v5243
    %v5836 = vpack.c.b16 %v5252, %v5244
    %v5837 = vpack.c.b16 %v5253, %v5245
    %v5838 = vpack.c.b16 %v5254, %v5246
    %v5839 = vpack.c.b16 %v5255, %v5247
    %v5840 = vpack.c.b16 %v5264, %v5256
    %v5841 = vpack.c.b16 %v5265, %v5257
    %v5842 = vpack.c.b16 %v5266, %v5258
    %v5843 = vpack.c.b16 %v5267, %v5259
    %v5844 = vpack.c.b16 %v5268, %v5260
    %v5845 = vpack.c.b16 %v5269, %v5261
    %v5846 = vpack.c.b16 %v5270, %v5262
    %v5847 = vpack.c.b16 %v5271, %v5263
    %v5848 = vpack.c.b16 %v5280, %v5272
    %v5849 = vpack.c.b16 %v5281, %v5273
    %v5850 = vpack.c.b16 %v5282, %v5274
    %v5851 = vpack.c.b16 %v5283, %v5275
    %v5852 = vpack.c.b16 %v5284, %v5276
    %v5853 = vpack.c.b16 %v5285, %v5277
    %v5854 = vpack.c.b16 %v5286, %v5278
    %v5855 = vpack.c.b16 %v5287, %v5279
    %v5856 = vpack.c.b16 %v5296, %v5288
    %v5857 = vpack.c.b16 %v5297, %v5289
    %v5858 = vpack.c.b16 %v5298, %v5290
    %v5859 = vpack.c.b16 %v5299, %v5291
    %v5860 = vpack.c.b16 %v5300, %v5292
    %v5861 = vpack.c.b16 %v5301, %v5293
    %v5862 = vpack.c.b16 %v5302, %v5294
    %v5863 = vpack.c.b16 %v5303, %v5295
    %v5864 = vpack.c.b16 %v5312, %v5304
    %v5865 = vpack.c.b16 %v5313, %v5305
    %v5866 = vpack.c.b16 %v5314, %v5306
    %v5867 = vpack.c.b16 %v5315, %v5307
    %v5868 = vpack.c.b16 %v5316, %v5308
    %v5869 = vpack.c.b16 %v5317, %v5309
    %v5870 = vpack.c.b16 %v5318, %v5310
    %v5871 = vpack.c.b16 %v5319, %v5311
    %v5872 = vpack.c.b16 %v5328, %v5320
    %v5873 = vpack.c.b16 %v5329, %v5321
    %v5874 = vpack.c.b16 %v5330, %v5322
    %v5875 = vpack.c.b16 %v5331, %v5323
    %v5876 = vpack.c.b16 %v5332, %v5324
    %v5877 = vpack.c.b16 %v5333, %v5325
    %v5878 = vpack.c.b16 %v5334, %v5326
    %v5879 = vpack.c.b16 %v5335, %v5327
    %v5880 = vpack.c.b16 %v5344, %v5336
    %v5881 = vpack.c.b16 %v5345, %v5337
    %v5882 = vpack.c.b16 %v5346, %v5338
    %v5883 = vpack.c.b16 %v5347, %v5339
    %v5884 = vpack.c.b16 %v5348, %v5340
    %v5885 = vpack.c.b16 %v5349, %v5341
    %v5886 = vpack.c.b16 %v5350, %v5342
    %v5887 = vpack.c.b16 %v5351, %v5343
    %v5888 = vpack.c.b16 %v5360, %v5352
    %v5889 = vpack.c.b16 %v5361, %v5353
    %v5890 = vpack.c.b16 %v5362, %v5354
    %v5891 = vpack.c.b16 %v5363, %v5355
    %v5892 = vpack.c.b16 %v5364, %v5356
    %v5893 = vpack.c.b16 %v5365, %v5357
    %v5894 = vpack.c.b16 %v5366, %v5358
    %v5895 = vpack.c.b16 %v5367, %v5359
    %v5896 = vpack.c.b16 %v5376, %v5368
    %v5897 = vpack.c.b16 %v5377, %v5369
    %v5898 = vpack.c.b16 %v5378, %v5370
    %v5899 = vpack.c.b16 %v5379, %v5371
    %v5900 = vpack.c.b16 %v5380, %v5372
    %v5901 = vpack.c.b16 %v5381, %v5373
    %v5902 = vpack.c.b16 %v5382, %v5374
    %v5903 = vpack.c.b16 %v5383, %v5375
    %v5904 = vpack.c.b16 %v5392, %v5384
    %v5905 = vpack.c.b16 %v5393, %v5385
    %v5906 = vpack.c.b16 %v5394, %v5386
    %v5907 = vpack.c.b16 %v5395, %v5387
    %v5908 = vpack.c.b16 %v5396, %v5388
    %v5909 = vpack.c.b16 %v5397, %v5389
    %v5910 = vpack.c.b16 %v5398, %v5390
    %v5911 = vpack.c.b16 %v5399, %v5391
    %6424 = vmatpush.bf16.msra.mxu0 %v5456
    %6425 = vmatpush.bf16.msra.mxu0 %v5448
    %6426 = vmatpush.bf16.msra.mxu0 %v5440
    %6427 = vmatpush.bf16.msra.mxu0 %v5432
    %6428 = vmatpush.bf16.msra.mxu0 %v5424
    %6429 = vmatpush.bf16.msra.mxu0 %v5416
    %6430 = vmatpush.bf16.msra.mxu0 %v5408
    %6431 = vmatpush.bf16.msra.mxu0 %v5400
    %6432 = vmatmul.bf16.gmra.mxu0 %v3326
    %v6433 = vpop.f32.mrf.mxu0
    %v6434 = vadd.f32 %v3848, %v6433
    %v6435 = vpop.f32.mrf.mxu0
    %v6436 = vadd.f32 %v3848, %v6435
    %6437 = vdwg.mxu0
    %6438 = vmatpush.bf16.msra.mxu0 %v5520
    %6439 = vmatpush.bf16.msra.mxu0 %v5512
    %6440 = vmatpush.bf16.msra.mxu0 %v5504
    %6441 = vmatpush.bf16.msra.mxu0 %v5496
    %6442 = vmatpush.bf16.msra.mxu0 %v5488
    %6443 = vmatpush.bf16.msra.mxu0 %v5480
    %6444 = vmatpush.bf16.msra.mxu0 %v5472
    %6445 = vmatpush.bf16.msra.mxu0 %v5464
    %6446 = vmatmul.bf16.gmra.mxu0 %v3327
    %v6447 = vpop.f32.mrf.mxu0
    %v6448 = vadd.f32 %v6434, %v6447
    %v6449 = vpop.f32.mrf.mxu0
    %v6450 = vadd.f32 %v6436, %v6449
    %6451 = vdwg.mxu0
    %6452 = vmatpush.bf16.msra.mxu0 %v5584
    %6453 = vmatpush.bf16.msra.mxu0 %v5576
    %6454 = vmatpush.bf16.msra.mxu0 %v5568
    %6455 = vmatpush.bf16.msra.mxu0 %v5560
    %6456 = vmatpush.bf16.msra.mxu0 %v5552
    %6457 = vmatpush.bf16.msra.mxu0 %v5544
    %6458 = vmatpush.bf16.msra.mxu0 %v5536
    %6459 = vmatpush.bf16.msra.mxu0 %v5528
    %6460 = vmatmul.bf16.gmra.mxu0 %v3328
    %v6461 = vpop.f32.mrf.mxu0
    %v6462 = vadd.f32 %v6448, %v6461
    %v6463 = vpop.f32.mrf.mxu0
    %v6464 = vadd.f32 %v6450, %v6463
    %6465 = vdwg.mxu0
    %6466 = vmatpush.bf16.msra.mxu0 %v5648
    %6467 = vmatpush.bf16.msra.mxu0 %v5640
    %6468 = vmatpush.bf16.msra.mxu0 %v5632
    %6469 = vmatpush.bf16.msra.mxu0 %v5624
    %6470 = vmatpush.bf16.msra.mxu0 %v5616
    %6471 = vmatpush.bf16.msra.mxu0 %v5608
    %6472 = vmatpush.bf16.msra.mxu0 %v5600
    %6473 = vmatpush.bf16.msra.mxu0 %v5592
    %6474 = vmatmul.bf16.gmra.mxu0 %v3329
    %v6475 = vpop.f32.mrf.mxu0
    %v6476 = vadd.f32 %v6462, %v6475
    %v6477 = vpop.f32.mrf.mxu0
    %v6478 = vadd.f32 %v6464, %v6477
    %6479 = vdwg.mxu0
    %6480 = vmatpush.bf16.msra.mxu0 %v5712
    %6481 = vmatpush.bf16.msra.mxu0 %v5704
    %6482 = vmatpush.bf16.msra.mxu0 %v5696
    %6483 = vmatpush.bf16.msra.mxu0 %v5688
    %6484 = vmatpush.bf16.msra.mxu0 %v5680
    %6485 = vmatpush.bf16.msra.mxu0 %v5672
    %6486 = vmatpush.bf16.msra.mxu0 %v5664
    %6487 = vmatpush.bf16.msra.mxu0 %v5656
    %6488 = vmatmul.bf16.gmra.mxu0 %v3330
    %v6489 = vpop.f32.mrf.mxu0
    %v6490 = vadd.f32 %v6476, %v6489
    %v6491 = vpop.f32.mrf.mxu0
    %v6492 = vadd.f32 %v6478, %v6491
    %6493 = vdwg.mxu0
    %6494 = vmatpush.bf16.msra.mxu0 %v5776
    %6495 = vmatpush.bf16.msra.mxu0 %v5768
    %6496 = vmatpush.bf16.msra.mxu0 %v5760
    %6497 = vmatpush.bf16.msra.mxu0 %v5752
    %6498 = vmatpush.bf16.msra.mxu0 %v5744
    %6499 = vmatpush.bf16.msra.mxu0 %v5736
    %6500 = vmatpush.bf16.msra.mxu0 %v5728
    %6501 = vmatpush.bf16.msra.mxu0 %v5720
    %6502 = vmatmul.bf16.gmra.mxu0 %v3331
    %v6503 = vpop.f32.mrf.mxu0
    %v6504 = vadd.f32 %v6490, %v6503
    %v6505 = vpop.f32.mrf.mxu0
    %v6506 = vadd.f32 %v6492, %v6505
    %6507 = vdwg.mxu0
    %6508 = vmatpush.bf16.msra.mxu0 %v5840
    %6509 = vmatpush.bf16.msra.mxu0 %v5832
    %6510 = vmatpush.bf16.msra.mxu0 %v5824
    %6511 = vmatpush.bf16.msra.mxu0 %v5816
    %6512 = vmatpush.bf16.msra.mxu0 %v5808
    %6513 = vmatpush.bf16.msra.mxu0 %v5800
    %6514 = vmatpush.bf16.msra.mxu0 %v5792
    %6515 = vmatpush.bf16.msra.mxu0 %v5784
    %6516 = vmatmul.bf16.gmra.mxu0 %v3332
    %v6517 = vpop.f32.mrf.mxu0
    %v6518 = vadd.f32 %v6504, %v6517
    %v6519 = vpop.f32.mrf.mxu0
    %v6520 = vadd.f32 %v6506, %v6519
    %6521 = vdwg.mxu0
    %6522 = vmatpush.bf16.msra.mxu0 %v5904
    %6523 = vmatpush.bf16.msra.mxu0 %v5896
    %6524 = vmatpush.bf16.msra.mxu0 %v5888
    %6525 = vmatpush.bf16.msra.mxu0 %v5880
    %6526 = vmatpush.bf16.msra.mxu0 %v5872
    %6527 = vmatpush.bf16.msra.mxu0 %v5864
    %6528 = vmatpush.bf16.msra.mxu0 %v5856
    %6529 = vmatpush.bf16.msra.mxu0 %v5848
    %6530 = vmatmul.bf16.gmra.mxu0 %v3333
    %v6531 = vpop.f32.mrf.mxu0
    %v6532 = vadd.f32 %v6518, %v6531
    %v6533 = vpop.f32.mrf.mxu0
    %v6534 = vadd.f32 %v6520, %v6533
    %6535 = vdwg.mxu0
    %6536 = vmatpush.bf16.msra.mxu0 %v5457
    %6537 = vmatpush.bf16.msra.mxu0 %v5449
    %6538 = vmatpush.bf16.msra.mxu0 %v5441
    %6539 = vmatpush.bf16.msra.mxu0 %v5433
    %6540 = vmatpush.bf16.msra.mxu0 %v5425
    %6541 = vmatpush.bf16.msra.mxu0 %v5417
    %6542 = vmatpush.bf16.msra.mxu0 %v5409
    %6543 = vmatpush.bf16.msra.mxu0 %v5401
    %6544 = vmatmul.bf16.gmra.mxu0 %v3326
    %v6545 = vpop.f32.mrf.mxu0
    %v6546 = vadd.f32 %v3849, %v6545
    %v6547 = vpop.f32.mrf.mxu0
    %v6548 = vadd.f32 %v3849, %v6547
    %6549 = vdwg.mxu0
    %6550 = vmatpush.bf16.msra.mxu0 %v5521
    %6551 = vmatpush.bf16.msra.mxu0 %v5513
    %6552 = vmatpush.bf16.msra.mxu0 %v5505
    %6553 = vmatpush.bf16.msra.mxu0 %v5497
    %6554 = vmatpush.bf16.msra.mxu0 %v5489
    %6555 = vmatpush.bf16.msra.mxu0 %v5481
    %6556 = vmatpush.bf16.msra.mxu0 %v5473
    %6557 = vmatpush.bf16.msra.mxu0 %v5465
    %6558 = vmatmul.bf16.gmra.mxu0 %v3327
    %v6559 = vpop.f32.mrf.mxu0
    %v6560 = vadd.f32 %v6546, %v6559
    %v6561 = vpop.f32.mrf.mxu0
    %v6562 = vadd.f32 %v6548, %v6561
    %6563 = vdwg.mxu0
    %6564 = vmatpush.bf16.msra.mxu0 %v5585
    %6565 = vmatpush.bf16.msra.mxu0 %v5577
    %6566 = vmatpush.bf16.msra.mxu0 %v5569
    %6567 = vmatpush.bf16.msra.mxu0 %v5561
    %6568 = vmatpush.bf16.msra.mxu0 %v5553
    %6569 = vmatpush.bf16.msra.mxu0 %v5545
    %6570 = vmatpush.bf16.msra.mxu0 %v5537
    %6571 = vmatpush.bf16.msra.mxu0 %v5529
    %6572 = vmatmul.bf16.gmra.mxu0 %v3328
    %v6573 = vpop.f32.mrf.mxu0
    %v6574 = vadd.f32 %v6560, %v6573
    %v6575 = vpop.f32.mrf.mxu0
    %v6576 = vadd.f32 %v6562, %v6575
    %6577 = vdwg.mxu0
    %6578 = vmatpush.bf16.msra.mxu0 %v5649
    %6579 = vmatpush.bf16.msra.mxu0 %v5641
    %6580 = vmatpush.bf16.msra.mxu0 %v5633
    %6581 = vmatpush.bf16.msra.mxu0 %v5625
    %6582 = vmatpush.bf16.msra.mxu0 %v5617
    %6583 = vmatpush.bf16.msra.mxu0 %v5609
    %6584 = vmatpush.bf16.msra.mxu0 %v5601
    %6585 = vmatpush.bf16.msra.mxu0 %v5593
    %6586 = vmatmul.bf16.gmra.mxu0 %v3329
    %v6587 = vpop.f32.mrf.mxu0
    %v6588 = vadd.f32 %v6574, %v6587
    %v6589 = vpop.f32.mrf.mxu0
    %v6590 = vadd.f32 %v6576, %v6589
    %6591 = vdwg.mxu0
    %6592 = vmatpush.bf16.msra.mxu0 %v5713
    %6593 = vmatpush.bf16.msra.mxu0 %v5705
    %6594 = vmatpush.bf16.msra.mxu0 %v5697
    %6595 = vmatpush.bf16.msra.mxu0 %v5689
    %6596 = vmatpush.bf16.msra.mxu0 %v5681
    %6597 = vmatpush.bf16.msra.mxu0 %v5673
    %6598 = vmatpush.bf16.msra.mxu0 %v5665
    %6599 = vmatpush.bf16.msra.mxu0 %v5657
    %6600 = vmatmul.bf16.gmra.mxu0 %v3330
    %v6601 = vpop.f32.mrf.mxu0
    %v6602 = vadd.f32 %v6588, %v6601
    %v6603 = vpop.f32.mrf.mxu0
    %v6604 = vadd.f32 %v6590, %v6603
    %6605 = vdwg.mxu0
    %6606 = vmatpush.bf16.msra.mxu0 %v5777
    %6607 = vmatpush.bf16.msra.mxu0 %v5769
    %6608 = vmatpush.bf16.msra.mxu0 %v5761
    %6609 = vmatpush.bf16.msra.mxu0 %v5753
    %6610 = vmatpush.bf16.msra.mxu0 %v5745
    %6611 = vmatpush.bf16.msra.mxu0 %v5737
    %6612 = vmatpush.bf16.msra.mxu0 %v5729
    %6613 = vmatpush.bf16.msra.mxu0 %v5721
    %6614 = vmatmul.bf16.gmra.mxu0 %v3331
    %v6615 = vpop.f32.mrf.mxu0
    %v6616 = vadd.f32 %v6602, %v6615
    %v6617 = vpop.f32.mrf.mxu0
    %v6618 = vadd.f32 %v6604, %v6617
    %6619 = vdwg.mxu0
    %6620 = vmatpush.bf16.msra.mxu0 %v5841
    %6621 = vmatpush.bf16.msra.mxu0 %v5833
    %6622 = vmatpush.bf16.msra.mxu0 %v5825
    %6623 = vmatpush.bf16.msra.mxu0 %v5817
    %6624 = vmatpush.bf16.msra.mxu0 %v5809
    %6625 = vmatpush.bf16.msra.mxu0 %v5801
    %6626 = vmatpush.bf16.msra.mxu0 %v5793
    %6627 = vmatpush.bf16.msra.mxu0 %v5785
    %6628 = vmatmul.bf16.gmra.mxu0 %v3332
    %v6629 = vpop.f32.mrf.mxu0
    %v6630 = vadd.f32 %v6616, %v6629
    %v6631 = vpop.f32.mrf.mxu0
    %v6632 = vadd.f32 %v6618, %v6631
    %6633 = vdwg.mxu0
    %6634 = vmatpush.bf16.msra.mxu0 %v5905
    %6635 = vmatpush.bf16.msra.mxu0 %v5897
    %6636 = vmatpush.bf16.msra.mxu0 %v5889
    %6637 = vmatpush.bf16.msra.mxu0 %v5881
    %6638 = vmatpush.bf16.msra.mxu0 %v5873
    %6639 = vmatpush.bf16.msra.mxu0 %v5865
    %6640 = vmatpush.bf16.msra.mxu0 %v5857
    %6641 = vmatpush.bf16.msra.mxu0 %v5849
    %6642 = vmatmul.bf16.gmra.mxu0 %v3333
    %v6643 = vpop.f32.mrf.mxu0
    %v6644 = vadd.f32 %v6630, %v6643
    %v6645 = vpop.f32.mrf.mxu0
    %v6646 = vadd.f32 %v6632, %v6645
    %6647 = vdwg.mxu0
    %6648 = vmatpush.bf16.msra.mxu0 %v5458
    %6649 = vmatpush.bf16.msra.mxu0 %v5450
    %6650 = vmatpush.bf16.msra.mxu0 %v5442
    %6651 = vmatpush.bf16.msra.mxu0 %v5434
    %6652 = vmatpush.bf16.msra.mxu0 %v5426
    %6653 = vmatpush.bf16.msra.mxu0 %v5418
    %6654 = vmatpush.bf16.msra.mxu0 %v5410
    %6655 = vmatpush.bf16.msra.mxu0 %v5402
    %6656 = vmatmul.bf16.gmra.mxu0 %v3326
    %v6657 = vpop.f32.mrf.mxu0
    %v6658 = vadd.f32 %v3850, %v6657
    %v6659 = vpop.f32.mrf.mxu0
    %v6660 = vadd.f32 %v3850, %v6659
    %6661 = vdwg.mxu0
    %6662 = vmatpush.bf16.msra.mxu0 %v5522
    %6663 = vmatpush.bf16.msra.mxu0 %v5514
    %6664 = vmatpush.bf16.msra.mxu0 %v5506
    %6665 = vmatpush.bf16.msra.mxu0 %v5498
    %6666 = vmatpush.bf16.msra.mxu0 %v5490
    %6667 = vmatpush.bf16.msra.mxu0 %v5482
    %6668 = vmatpush.bf16.msra.mxu0 %v5474
    %6669 = vmatpush.bf16.msra.mxu0 %v5466
    %6670 = vmatmul.bf16.gmra.mxu0 %v3327
    %v6671 = vpop.f32.mrf.mxu0
    %v6672 = vadd.f32 %v6658, %v6671
    %v6673 = vpop.f32.mrf.mxu0
    %v6674 = vadd.f32 %v6660, %v6673
    %6675 = vdwg.mxu0
    %6676 = vmatpush.bf16.msra.mxu0 %v5586
    %6677 = vmatpush.bf16.msra.mxu0 %v5578
    %6678 = vmatpush.bf16.msra.mxu0 %v5570
    %6679 = vmatpush.bf16.msra.mxu0 %v5562
    %6680 = vmatpush.bf16.msra.mxu0 %v5554
    %6681 = vmatpush.bf16.msra.mxu0 %v5546
    %6682 = vmatpush.bf16.msra.mxu0 %v5538
    %6683 = vmatpush.bf16.msra.mxu0 %v5530
    %6684 = vmatmul.bf16.gmra.mxu0 %v3328
    %v6685 = vpop.f32.mrf.mxu0
    %v6686 = vadd.f32 %v6672, %v6685
    %v6687 = vpop.f32.mrf.mxu0
    %v6688 = vadd.f32 %v6674, %v6687
    %6689 = vdwg.mxu0
    %6690 = vmatpush.bf16.msra.mxu0 %v5650
    %6691 = vmatpush.bf16.msra.mxu0 %v5642
    %6692 = vmatpush.bf16.msra.mxu0 %v5634
    %6693 = vmatpush.bf16.msra.mxu0 %v5626
    %6694 = vmatpush.bf16.msra.mxu0 %v5618
    %6695 = vmatpush.bf16.msra.mxu0 %v5610
    %6696 = vmatpush.bf16.msra.mxu0 %v5602
    %6697 = vmatpush.bf16.msra.mxu0 %v5594
    %6698 = vmatmul.bf16.gmra.mxu0 %v3329
    %v6699 = vpop.f32.mrf.mxu0
    %v6700 = vadd.f32 %v6686, %v6699
    %v6701 = vpop.f32.mrf.mxu0
    %v6702 = vadd.f32 %v6688, %v6701
    %6703 = vdwg.mxu0
    %6704 = vmatpush.bf16.msra.mxu0 %v5714
    %6705 = vmatpush.bf16.msra.mxu0 %v5706
    %6706 = vmatpush.bf16.msra.mxu0 %v5698
    %6707 = vmatpush.bf16.msra.mxu0 %v5690
    %6708 = vmatpush.bf16.msra.mxu0 %v5682
    %6709 = vmatpush.bf16.msra.mxu0 %v5674
    %6710 = vmatpush.bf16.msra.mxu0 %v5666
    %6711 = vmatpush.bf16.msra.mxu0 %v5658
    %6712 = vmatmul.bf16.gmra.mxu0 %v3330
    %v6713 = vpop.f32.mrf.mxu0
    %v6714 = vadd.f32 %v6700, %v6713
    %v6715 = vpop.f32.mrf.mxu0
    %v6716 = vadd.f32 %v6702, %v6715
    %6717 = vdwg.mxu0
    %6718 = vmatpush.bf16.msra.mxu0 %v5778
    %6719 = vmatpush.bf16.msra.mxu0 %v5770
    %6720 = vmatpush.bf16.msra.mxu0 %v5762
    %6721 = vmatpush.bf16.msra.mxu0 %v5754
    %6722 = vmatpush.bf16.msra.mxu0 %v5746
    %6723 = vmatpush.bf16.msra.mxu0 %v5738
    %6724 = vmatpush.bf16.msra.mxu0 %v5730
    %6725 = vmatpush.bf16.msra.mxu0 %v5722
    %6726 = vmatmul.bf16.gmra.mxu0 %v3331
    %v6727 = vpop.f32.mrf.mxu0
    %v6728 = vadd.f32 %v6714, %v6727
    %v6729 = vpop.f32.mrf.mxu0
    %v6730 = vadd.f32 %v6716, %v6729
    %6731 = vdwg.mxu0
    %6732 = vmatpush.bf16.msra.mxu0 %v5842
    %6733 = vmatpush.bf16.msra.mxu0 %v5834
    %6734 = vmatpush.bf16.msra.mxu0 %v5826
    %6735 = vmatpush.bf16.msra.mxu0 %v5818
    %6736 = vmatpush.bf16.msra.mxu0 %v5810
    %6737 = vmatpush.bf16.msra.mxu0 %v5802
    %6738 = vmatpush.bf16.msra.mxu0 %v5794
    %6739 = vmatpush.bf16.msra.mxu0 %v5786
    %6740 = vmatmul.bf16.gmra.mxu0 %v3332
    %v6741 = vpop.f32.mrf.mxu0
    %v6742 = vadd.f32 %v6728, %v6741
    %v6743 = vpop.f32.mrf.mxu0
    %v6744 = vadd.f32 %v6730, %v6743
    %6745 = vdwg.mxu0
    %6746 = vmatpush.bf16.msra.mxu0 %v5906
    %6747 = vmatpush.bf16.msra.mxu0 %v5898
    %6748 = vmatpush.bf16.msra.mxu0 %v5890
    %6749 = vmatpush.bf16.msra.mxu0 %v5882
    %6750 = vmatpush.bf16.msra.mxu0 %v5874
    %6751 = vmatpush.bf16.msra.mxu0 %v5866
    %6752 = vmatpush.bf16.msra.mxu0 %v5858
    %6753 = vmatpush.bf16.msra.mxu0 %v5850
    %6754 = vmatmul.bf16.gmra.mxu0 %v3333
    %v6755 = vpop.f32.mrf.mxu0
    %v6756 = vadd.f32 %v6742, %v6755
    %v6757 = vpop.f32.mrf.mxu0
    %v6758 = vadd.f32 %v6744, %v6757
    %6759 = vdwg.mxu0
    %6760 = vmatpush.bf16.msra.mxu0 %v5459
    %6761 = vmatpush.bf16.msra.mxu0 %v5451
    %6762 = vmatpush.bf16.msra.mxu0 %v5443
    %6763 = vmatpush.bf16.msra.mxu0 %v5435
    %6764 = vmatpush.bf16.msra.mxu0 %v5427
    %6765 = vmatpush.bf16.msra.mxu0 %v5419
    %6766 = vmatpush.bf16.msra.mxu0 %v5411
    %6767 = vmatpush.bf16.msra.mxu0 %v5403
    %6768 = vmatmul.bf16.gmra.mxu0 %v3326
    %v6769 = vpop.f32.mrf.mxu0
    %v6770 = vadd.f32 %v3851, %v6769
    %v6771 = vpop.f32.mrf.mxu0
    %v6772 = vadd.f32 %v3851, %v6771
    %6773 = vdwg.mxu0
    %6774 = vmatpush.bf16.msra.mxu0 %v5523
    %6775 = vmatpush.bf16.msra.mxu0 %v5515
    %6776 = vmatpush.bf16.msra.mxu0 %v5507
    %6777 = vmatpush.bf16.msra.mxu0 %v5499
    %6778 = vmatpush.bf16.msra.mxu0 %v5491
    %6779 = vmatpush.bf16.msra.mxu0 %v5483
    %6780 = vmatpush.bf16.msra.mxu0 %v5475
    %6781 = vmatpush.bf16.msra.mxu0 %v5467
    %6782 = vmatmul.bf16.gmra.mxu0 %v3327
    %v6783 = vpop.f32.mrf.mxu0
    %v6784 = vadd.f32 %v6770, %v6783
    %v6785 = vpop.f32.mrf.mxu0
    %v6786 = vadd.f32 %v6772, %v6785
    %6787 = vdwg.mxu0
    %6788 = vmatpush.bf16.msra.mxu0 %v5587
    %6789 = vmatpush.bf16.msra.mxu0 %v5579
    %6790 = vmatpush.bf16.msra.mxu0 %v5571
    %6791 = vmatpush.bf16.msra.mxu0 %v5563
    %6792 = vmatpush.bf16.msra.mxu0 %v5555
    %6793 = vmatpush.bf16.msra.mxu0 %v5547
    %6794 = vmatpush.bf16.msra.mxu0 %v5539
    %6795 = vmatpush.bf16.msra.mxu0 %v5531
    %6796 = vmatmul.bf16.gmra.mxu0 %v3328
    %v6797 = vpop.f32.mrf.mxu0
    %v6798 = vadd.f32 %v6784, %v6797
    %v6799 = vpop.f32.mrf.mxu0
    %v6800 = vadd.f32 %v6786, %v6799
    %6801 = vdwg.mxu0
    %6802 = vmatpush.bf16.msra.mxu0 %v5651
    %6803 = vmatpush.bf16.msra.mxu0 %v5643
    %6804 = vmatpush.bf16.msra.mxu0 %v5635
    %6805 = vmatpush.bf16.msra.mxu0 %v5627
    %6806 = vmatpush.bf16.msra.mxu0 %v5619
    %6807 = vmatpush.bf16.msra.mxu0 %v5611
    %6808 = vmatpush.bf16.msra.mxu0 %v5603
    %6809 = vmatpush.bf16.msra.mxu0 %v5595
    %6810 = vmatmul.bf16.gmra.mxu0 %v3329
    %v6811 = vpop.f32.mrf.mxu0
    %v6812 = vadd.f32 %v6798, %v6811
    %v6813 = vpop.f32.mrf.mxu0
    %v6814 = vadd.f32 %v6800, %v6813
    %6815 = vdwg.mxu0
    %6816 = vmatpush.bf16.msra.mxu0 %v5715
    %6817 = vmatpush.bf16.msra.mxu0 %v5707
    %6818 = vmatpush.bf16.msra.mxu0 %v5699
    %6819 = vmatpush.bf16.msra.mxu0 %v5691
    %6820 = vmatpush.bf16.msra.mxu0 %v5683
    %6821 = vmatpush.bf16.msra.mxu0 %v5675
    %6822 = vmatpush.bf16.msra.mxu0 %v5667
    %6823 = vmatpush.bf16.msra.mxu0 %v5659
    %6824 = vmatmul.bf16.gmra.mxu0 %v3330
    %v6825 = vpop.f32.mrf.mxu0
    %v6826 = vadd.f32 %v6812, %v6825
    %v6827 = vpop.f32.mrf.mxu0
    %v6828 = vadd.f32 %v6814, %v6827
    %6829 = vdwg.mxu0
    %6830 = vmatpush.bf16.msra.mxu0 %v5779
    %6831 = vmatpush.bf16.msra.mxu0 %v5771
    %6832 = vmatpush.bf16.msra.mxu0 %v5763
    %6833 = vmatpush.bf16.msra.mxu0 %v5755
    %6834 = vmatpush.bf16.msra.mxu0 %v5747
    %6835 = vmatpush.bf16.msra.mxu0 %v5739
    %6836 = vmatpush.bf16.msra.mxu0 %v5731
    %6837 = vmatpush.bf16.msra.mxu0 %v5723
    %6838 = vmatmul.bf16.gmra.mxu0 %v3331
    %v6839 = vpop.f32.mrf.mxu0
    %v6840 = vadd.f32 %v6826, %v6839
    %v6841 = vpop.f32.mrf.mxu0
    %v6842 = vadd.f32 %v6828, %v6841
    %6843 = vdwg.mxu0
    %6844 = vmatpush.bf16.msra.mxu0 %v5843
    %6845 = vmatpush.bf16.msra.mxu0 %v5835
    %6846 = vmatpush.bf16.msra.mxu0 %v5827
    %6847 = vmatpush.bf16.msra.mxu0 %v5819
    %6848 = vmatpush.bf16.msra.mxu0 %v5811
    %6849 = vmatpush.bf16.msra.mxu0 %v5803
    %6850 = vmatpush.bf16.msra.mxu0 %v5795
    %6851 = vmatpush.bf16.msra.mxu0 %v5787
    %6852 = vmatmul.bf16.gmra.mxu0 %v3332
    %v6853 = vpop.f32.mrf.mxu0
    %v6854 = vadd.f32 %v6840, %v6853
    %v6855 = vpop.f32.mrf.mxu0
    %v6856 = vadd.f32 %v6842, %v6855
    %6857 = vdwg.mxu0
    %6858 = vmatpush.bf16.msra.mxu0 %v5907
    %6859 = vmatpush.bf16.msra.mxu0 %v5899
    %6860 = vmatpush.bf16.msra.mxu0 %v5891
    %6861 = vmatpush.bf16.msra.mxu0 %v5883
    %6862 = vmatpush.bf16.msra.mxu0 %v5875
    %6863 = vmatpush.bf16.msra.mxu0 %v5867
    %6864 = vmatpush.bf16.msra.mxu0 %v5859
    %6865 = vmatpush.bf16.msra.mxu0 %v5851
    %6866 = vmatmul.bf16.gmra.mxu0 %v3333
    %v6867 = vpop.f32.mrf.mxu0
    %v6868 = vadd.f32 %v6854, %v6867
    %v6869 = vpop.f32.mrf.mxu0
    %v6870 = vadd.f32 %v6856, %v6869
    %6871 = vdwg.mxu0
    %6872 = vmatpush.bf16.msra.mxu0 %v5460
    %6873 = vmatpush.bf16.msra.mxu0 %v5452
    %6874 = vmatpush.bf16.msra.mxu0 %v5444
    %6875 = vmatpush.bf16.msra.mxu0 %v5436
    %6876 = vmatpush.bf16.msra.mxu0 %v5428
    %6877 = vmatpush.bf16.msra.mxu0 %v5420
    %6878 = vmatpush.bf16.msra.mxu0 %v5412
    %6879 = vmatpush.bf16.msra.mxu0 %v5404
    %6880 = vmatmul.bf16.gmra.mxu0 %v3326
    %v6881 = vpop.f32.mrf.mxu0
    %v6882 = vadd.f32 %v3852, %v6881
    %v6883 = vpop.f32.mrf.mxu0
    %v6884 = vadd.f32 %v3852, %v6883
    %6885 = vdwg.mxu0
    %6886 = vmatpush.bf16.msra.mxu0 %v5524
    %6887 = vmatpush.bf16.msra.mxu0 %v5516
    %6888 = vmatpush.bf16.msra.mxu0 %v5508
    %6889 = vmatpush.bf16.msra.mxu0 %v5500
    %6890 = vmatpush.bf16.msra.mxu0 %v5492
    %6891 = vmatpush.bf16.msra.mxu0 %v5484
    %6892 = vmatpush.bf16.msra.mxu0 %v5476
    %6893 = vmatpush.bf16.msra.mxu0 %v5468
    %6894 = vmatmul.bf16.gmra.mxu0 %v3327
    %v6895 = vpop.f32.mrf.mxu0
    %v6896 = vadd.f32 %v6882, %v6895
    %v6897 = vpop.f32.mrf.mxu0
    %v6898 = vadd.f32 %v6884, %v6897
    %6899 = vdwg.mxu0
    %6900 = vmatpush.bf16.msra.mxu0 %v5588
    %6901 = vmatpush.bf16.msra.mxu0 %v5580
    %6902 = vmatpush.bf16.msra.mxu0 %v5572
    %6903 = vmatpush.bf16.msra.mxu0 %v5564
    %6904 = vmatpush.bf16.msra.mxu0 %v5556
    %6905 = vmatpush.bf16.msra.mxu0 %v5548
    %6906 = vmatpush.bf16.msra.mxu0 %v5540
    %6907 = vmatpush.bf16.msra.mxu0 %v5532
    %6908 = vmatmul.bf16.gmra.mxu0 %v3328
    %v6909 = vpop.f32.mrf.mxu0
    %v6910 = vadd.f32 %v6896, %v6909
    %v6911 = vpop.f32.mrf.mxu0
    %v6912 = vadd.f32 %v6898, %v6911
    %6913 = vdwg.mxu0
    %6914 = vmatpush.bf16.msra.mxu0 %v5652
    %6915 = vmatpush.bf16.msra.mxu0 %v5644
    %6916 = vmatpush.bf16.msra.mxu0 %v5636
    %6917 = vmatpush.bf16.msra.mxu0 %v5628
    %6918 = vmatpush.bf16.msra.mxu0 %v5620
    %6919 = vmatpush.bf16.msra.mxu0 %v5612
    %6920 = vmatpush.bf16.msra.mxu0 %v5604
    %6921 = vmatpush.bf16.msra.mxu0 %v5596
    %6922 = vmatmul.bf16.gmra.mxu0 %v3329
    %v6923 = vpop.f32.mrf.mxu0
    %v6924 = vadd.f32 %v6910, %v6923
    %v6925 = vpop.f32.mrf.mxu0
    %v6926 = vadd.f32 %v6912, %v6925
    %6927 = vdwg.mxu0
    %6928 = vmatpush.bf16.msra.mxu0 %v5716
    %6929 = vmatpush.bf16.msra.mxu0 %v5708
    %6930 = vmatpush.bf16.msra.mxu0 %v5700
    %6931 = vmatpush.bf16.msra.mxu0 %v5692
    %6932 = vmatpush.bf16.msra.mxu0 %v5684
    %6933 = vmatpush.bf16.msra.mxu0 %v5676
    %6934 = vmatpush.bf16.msra.mxu0 %v5668
    %6935 = vmatpush.bf16.msra.mxu0 %v5660
    %6936 = vmatmul.bf16.gmra.mxu0 %v3330
    %v6937 = vpop.f32.mrf.mxu0
    %v6938 = vadd.f32 %v6924, %v6937
    %v6939 = vpop.f32.mrf.mxu0
    %v6940 = vadd.f32 %v6926, %v6939
    %6941 = vdwg.mxu0
    %6942 = vmatpush.bf16.msra.mxu0 %v5780
    %6943 = vmatpush.bf16.msra.mxu0 %v5772
    %6944 = vmatpush.bf16.msra.mxu0 %v5764
    %6945 = vmatpush.bf16.msra.mxu0 %v5756
    %6946 = vmatpush.bf16.msra.mxu0 %v5748
    %6947 = vmatpush.bf16.msra.mxu0 %v5740
    %6948 = vmatpush.bf16.msra.mxu0 %v5732
    %6949 = vmatpush.bf16.msra.mxu0 %v5724
    %6950 = vmatmul.bf16.gmra.mxu0 %v3331
    %v6951 = vpop.f32.mrf.mxu0
    %v6952 = vadd.f32 %v6938, %v6951
    %v6953 = vpop.f32.mrf.mxu0
    %v6954 = vadd.f32 %v6940, %v6953
    %6955 = vdwg.mxu0
    %6956 = vmatpush.bf16.msra.mxu0 %v5844
    %6957 = vmatpush.bf16.msra.mxu0 %v5836
    %6958 = vmatpush.bf16.msra.mxu0 %v5828
    %6959 = vmatpush.bf16.msra.mxu0 %v5820
    %6960 = vmatpush.bf16.msra.mxu0 %v5812
    %6961 = vmatpush.bf16.msra.mxu0 %v5804
    %6962 = vmatpush.bf16.msra.mxu0 %v5796
    %6963 = vmatpush.bf16.msra.mxu0 %v5788
    %6964 = vmatmul.bf16.gmra.mxu0 %v3332
    %v6965 = vpop.f32.mrf.mxu0
    %v6966 = vadd.f32 %v6952, %v6965
    %v6967 = vpop.f32.mrf.mxu0
    %v6968 = vadd.f32 %v6954, %v6967
    %6969 = vdwg.mxu0
    %6970 = vmatpush.bf16.msra.mxu0 %v5908
    %6971 = vmatpush.bf16.msra.mxu0 %v5900
    %6972 = vmatpush.bf16.msra.mxu0 %v5892
    %6973 = vmatpush.bf16.msra.mxu0 %v5884
    %6974 = vmatpush.bf16.msra.mxu0 %v5876
    %6975 = vmatpush.bf16.msra.mxu0 %v5868
    %6976 = vmatpush.bf16.msra.mxu0 %v5860
    %6977 = vmatpush.bf16.msra.mxu0 %v5852
    %6978 = vmatmul.bf16.gmra.mxu0 %v3333
    %v6979 = vpop.f32.mrf.mxu0
    %v6980 = vadd.f32 %v6966, %v6979
    %v6981 = vpop.f32.mrf.mxu0
    %v6982 = vadd.f32 %v6968, %v6981
    %6983 = vdwg.mxu0
    %6984 = vmatpush.bf16.msra.mxu0 %v5461
    %6985 = vmatpush.bf16.msra.mxu0 %v5453
    %6986 = vmatpush.bf16.msra.mxu0 %v5445
    %6987 = vmatpush.bf16.msra.mxu0 %v5437
    %6988 = vmatpush.bf16.msra.mxu0 %v5429
    %6989 = vmatpush.bf16.msra.mxu0 %v5421
    %6990 = vmatpush.bf16.msra.mxu0 %v5413
    %6991 = vmatpush.bf16.msra.mxu0 %v5405
    %6992 = vmatmul.bf16.gmra.mxu0 %v3326
    %v6993 = vpop.f32.mrf.mxu0
    %v6994 = vadd.f32 %v3853, %v6993
    %v6995 = vpop.f32.mrf.mxu0
    %v6996 = vadd.f32 %v3853, %v6995
    %6997 = vdwg.mxu0
    %6998 = vmatpush.bf16.msra.mxu0 %v5525
    %6999 = vmatpush.bf16.msra.mxu0 %v5517
    %7000 = vmatpush.bf16.msra.mxu0 %v5509
    %7001 = vmatpush.bf16.msra.mxu0 %v5501
    %7002 = vmatpush.bf16.msra.mxu0 %v5493
    %7003 = vmatpush.bf16.msra.mxu0 %v5485
    %7004 = vmatpush.bf16.msra.mxu0 %v5477
    %7005 = vmatpush.bf16.msra.mxu0 %v5469
    %7006 = vmatmul.bf16.gmra.mxu0 %v3327
    %v7007 = vpop.f32.mrf.mxu0
    %v7008 = vadd.f32 %v6994, %v7007
    %v7009 = vpop.f32.mrf.mxu0
    %v7010 = vadd.f32 %v6996, %v7009
    %7011 = vdwg.mxu0
    %7012 = vmatpush.bf16.msra.mxu0 %v5589
    %7013 = vmatpush.bf16.msra.mxu0 %v5581
    %7014 = vmatpush.bf16.msra.mxu0 %v5573
    %7015 = vmatpush.bf16.msra.mxu0 %v5565
    %7016 = vmatpush.bf16.msra.mxu0 %v5557
    %7017 = vmatpush.bf16.msra.mxu0 %v5549
    %7018 = vmatpush.bf16.msra.mxu0 %v5541
    %7019 = vmatpush.bf16.msra.mxu0 %v5533
    %7020 = vmatmul.bf16.gmra.mxu0 %v3328
    %v7021 = vpop.f32.mrf.mxu0
    %v7022 = vadd.f32 %v7008, %v7021
    %v7023 = vpop.f32.mrf.mxu0
    %v7024 = vadd.f32 %v7010, %v7023
    %7025 = vdwg.mxu0
    %7026 = vmatpush.bf16.msra.mxu0 %v5653
    %7027 = vmatpush.bf16.msra.mxu0 %v5645
    %7028 = vmatpush.bf16.msra.mxu0 %v5637
    %7029 = vmatpush.bf16.msra.mxu0 %v5629
    %7030 = vmatpush.bf16.msra.mxu0 %v5621
    %7031 = vmatpush.bf16.msra.mxu0 %v5613
    %7032 = vmatpush.bf16.msra.mxu0 %v5605
    %7033 = vmatpush.bf16.msra.mxu0 %v5597
    %7034 = vmatmul.bf16.gmra.mxu0 %v3329
    %v7035 = vpop.f32.mrf.mxu0
    %v7036 = vadd.f32 %v7022, %v7035
    %v7037 = vpop.f32.mrf.mxu0
    %v7038 = vadd.f32 %v7024, %v7037
    %7039 = vdwg.mxu0
    %7040 = vmatpush.bf16.msra.mxu0 %v5717
    %7041 = vmatpush.bf16.msra.mxu0 %v5709
    %7042 = vmatpush.bf16.msra.mxu0 %v5701
    %7043 = vmatpush.bf16.msra.mxu0 %v5693
    %7044 = vmatpush.bf16.msra.mxu0 %v5685
    %7045 = vmatpush.bf16.msra.mxu0 %v5677
    %7046 = vmatpush.bf16.msra.mxu0 %v5669
    %7047 = vmatpush.bf16.msra.mxu0 %v5661
    %7048 = vmatmul.bf16.gmra.mxu0 %v3330
    %v7049 = vpop.f32.mrf.mxu0
    %v7050 = vadd.f32 %v7036, %v7049
    %v7051 = vpop.f32.mrf.mxu0
    %v7052 = vadd.f32 %v7038, %v7051
    %7053 = vdwg.mxu0
    %7054 = vmatpush.bf16.msra.mxu0 %v5781
    %7055 = vmatpush.bf16.msra.mxu0 %v5773
    %7056 = vmatpush.bf16.msra.mxu0 %v5765
    %7057 = vmatpush.bf16.msra.mxu0 %v5757
    %7058 = vmatpush.bf16.msra.mxu0 %v5749
    %7059 = vmatpush.bf16.msra.mxu0 %v5741
    %7060 = vmatpush.bf16.msra.mxu0 %v5733
    %7061 = vmatpush.bf16.msra.mxu0 %v5725
    %7062 = vmatmul.bf16.gmra.mxu0 %v3331
    %v7063 = vpop.f32.mrf.mxu0
    %v7064 = vadd.f32 %v7050, %v7063
    %v7065 = vpop.f32.mrf.mxu0
    %v7066 = vadd.f32 %v7052, %v7065
    %7067 = vdwg.mxu0
    %7068 = vmatpush.bf16.msra.mxu0 %v5845
    %7069 = vmatpush.bf16.msra.mxu0 %v5837
    %7070 = vmatpush.bf16.msra.mxu0 %v5829
    %7071 = vmatpush.bf16.msra.mxu0 %v5821
    %7072 = vmatpush.bf16.msra.mxu0 %v5813
    %7073 = vmatpush.bf16.msra.mxu0 %v5805
    %7074 = vmatpush.bf16.msra.mxu0 %v5797
    %7075 = vmatpush.bf16.msra.mxu0 %v5789
    %7076 = vmatmul.bf16.gmra.mxu0 %v3332
    %v7077 = vpop.f32.mrf.mxu0
    %v7078 = vadd.f32 %v7064, %v7077
    %v7079 = vpop.f32.mrf.mxu0
    %v7080 = vadd.f32 %v7066, %v7079
    %7081 = vdwg.mxu0
    %7082 = vmatpush.bf16.msra.mxu0 %v5909
    %7083 = vmatpush.bf16.msra.mxu0 %v5901
    %7084 = vmatpush.bf16.msra.mxu0 %v5893
    %7085 = vmatpush.bf16.msra.mxu0 %v5885
    %7086 = vmatpush.bf16.msra.mxu0 %v5877
    %7087 = vmatpush.bf16.msra.mxu0 %v5869
    %7088 = vmatpush.bf16.msra.mxu0 %v5861
    %7089 = vmatpush.bf16.msra.mxu0 %v5853
    %7090 = vmatmul.bf16.gmra.mxu0 %v3333
    %v7091 = vpop.f32.mrf.mxu0
    %v7092 = vadd.f32 %v7078, %v7091
    %v7093 = vpop.f32.mrf.mxu0
    %v7094 = vadd.f32 %v7080, %v7093
    %7095 = vdwg.mxu0
    %7096 = vmatpush.bf16.msra.mxu0 %v5462
    %7097 = vmatpush.bf16.msra.mxu0 %v5454
    %7098 = vmatpush.bf16.msra.mxu0 %v5446
    %7099 = vmatpush.bf16.msra.mxu0 %v5438
    %7100 = vmatpush.bf16.msra.mxu0 %v5430
    %7101 = vmatpush.bf16.msra.mxu0 %v5422
    %7102 = vmatpush.bf16.msra.mxu0 %v5414
    %7103 = vmatpush.bf16.msra.mxu0 %v5406
    %7104 = vmatmul.bf16.gmra.mxu0 %v3326
    %v7105 = vpop.f32.mrf.mxu0
    %v7106 = vadd.f32 %v3854, %v7105
    %v7107 = vpop.f32.mrf.mxu0
    %v7108 = vadd.f32 %v3854, %v7107
    %7109 = vdwg.mxu0
    %7110 = vmatpush.bf16.msra.mxu0 %v5526
    %7111 = vmatpush.bf16.msra.mxu0 %v5518
    %7112 = vmatpush.bf16.msra.mxu0 %v5510
    %7113 = vmatpush.bf16.msra.mxu0 %v5502
    %7114 = vmatpush.bf16.msra.mxu0 %v5494
    %7115 = vmatpush.bf16.msra.mxu0 %v5486
    %7116 = vmatpush.bf16.msra.mxu0 %v5478
    %7117 = vmatpush.bf16.msra.mxu0 %v5470
    %7118 = vmatmul.bf16.gmra.mxu0 %v3327
    %v7119 = vpop.f32.mrf.mxu0
    %v7120 = vadd.f32 %v7106, %v7119
    %v7121 = vpop.f32.mrf.mxu0
    %v7122 = vadd.f32 %v7108, %v7121
    %7123 = vdwg.mxu0
    %7124 = vmatpush.bf16.msra.mxu0 %v5590
    %7125 = vmatpush.bf16.msra.mxu0 %v5582
    %7126 = vmatpush.bf16.msra.mxu0 %v5574
    %7127 = vmatpush.bf16.msra.mxu0 %v5566
    %7128 = vmatpush.bf16.msra.mxu0 %v5558
    %7129 = vmatpush.bf16.msra.mxu0 %v5550
    %7130 = vmatpush.bf16.msra.mxu0 %v5542
    %7131 = vmatpush.bf16.msra.mxu0 %v5534
    %7132 = vmatmul.bf16.gmra.mxu0 %v3328
    %v7133 = vpop.f32.mrf.mxu0
    %v7134 = vadd.f32 %v7120, %v7133
    %v7135 = vpop.f32.mrf.mxu0
    %v7136 = vadd.f32 %v7122, %v7135
    %7137 = vdwg.mxu0
    %7138 = vmatpush.bf16.msra.mxu0 %v5654
    %7139 = vmatpush.bf16.msra.mxu0 %v5646
    %7140 = vmatpush.bf16.msra.mxu0 %v5638
    %7141 = vmatpush.bf16.msra.mxu0 %v5630
    %7142 = vmatpush.bf16.msra.mxu0 %v5622
    %7143 = vmatpush.bf16.msra.mxu0 %v5614
    %7144 = vmatpush.bf16.msra.mxu0 %v5606
    %7145 = vmatpush.bf16.msra.mxu0 %v5598
    %7146 = vmatmul.bf16.gmra.mxu0 %v3329
    %v7147 = vpop.f32.mrf.mxu0
    %v7148 = vadd.f32 %v7134, %v7147
    %v7149 = vpop.f32.mrf.mxu0
    %v7150 = vadd.f32 %v7136, %v7149
    %7151 = vdwg.mxu0
    %7152 = vmatpush.bf16.msra.mxu0 %v5718
    %7153 = vmatpush.bf16.msra.mxu0 %v5710
    %7154 = vmatpush.bf16.msra.mxu0 %v5702
    %7155 = vmatpush.bf16.msra.mxu0 %v5694
    %7156 = vmatpush.bf16.msra.mxu0 %v5686
    %7157 = vmatpush.bf16.msra.mxu0 %v5678
    %7158 = vmatpush.bf16.msra.mxu0 %v5670
    %7159 = vmatpush.bf16.msra.mxu0 %v5662
    %7160 = vmatmul.bf16.gmra.mxu0 %v3330
    %v7161 = vpop.f32.mrf.mxu0
    %v7162 = vadd.f32 %v7148, %v7161
    %v7163 = vpop.f32.mrf.mxu0
    %v7164 = vadd.f32 %v7150, %v7163
    %7165 = vdwg.mxu0
    %7166 = vmatpush.bf16.msra.mxu0 %v5782
    %7167 = vmatpush.bf16.msra.mxu0 %v5774
    %7168 = vmatpush.bf16.msra.mxu0 %v5766
    %7169 = vmatpush.bf16.msra.mxu0 %v5758
    %7170 = vmatpush.bf16.msra.mxu0 %v5750
    %7171 = vmatpush.bf16.msra.mxu0 %v5742
    %7172 = vmatpush.bf16.msra.mxu0 %v5734
    %7173 = vmatpush.bf16.msra.mxu0 %v5726
    %7174 = vmatmul.bf16.gmra.mxu0 %v3331
    %v7175 = vpop.f32.mrf.mxu0
    %v7176 = vadd.f32 %v7162, %v7175
    %v7177 = vpop.f32.mrf.mxu0
    %v7178 = vadd.f32 %v7164, %v7177
    %7179 = vdwg.mxu0
    %7180 = vmatpush.bf16.msra.mxu0 %v5846
    %7181 = vmatpush.bf16.msra.mxu0 %v5838
    %7182 = vmatpush.bf16.msra.mxu0 %v5830
    %7183 = vmatpush.bf16.msra.mxu0 %v5822
    %7184 = vmatpush.bf16.msra.mxu0 %v5814
    %7185 = vmatpush.bf16.msra.mxu0 %v5806
    %7186 = vmatpush.bf16.msra.mxu0 %v5798
    %7187 = vmatpush.bf16.msra.mxu0 %v5790
    %7188 = vmatmul.bf16.gmra.mxu0 %v3332
    %v7189 = vpop.f32.mrf.mxu0
    %v7190 = vadd.f32 %v7176, %v7189
    %v7191 = vpop.f32.mrf.mxu0
    %v7192 = vadd.f32 %v7178, %v7191
    %7193 = vdwg.mxu0
    %7194 = vmatpush.bf16.msra.mxu0 %v5910
    %7195 = vmatpush.bf16.msra.mxu0 %v5902
    %7196 = vmatpush.bf16.msra.mxu0 %v5894
    %7197 = vmatpush.bf16.msra.mxu0 %v5886
    %7198 = vmatpush.bf16.msra.mxu0 %v5878
    %7199 = vmatpush.bf16.msra.mxu0 %v5870
    %7200 = vmatpush.bf16.msra.mxu0 %v5862
    %7201 = vmatpush.bf16.msra.mxu0 %v5854
    %7202 = vmatmul.bf16.gmra.mxu0 %v3333
    %v7203 = vpop.f32.mrf.mxu0
    %v7204 = vadd.f32 %v7190, %v7203
    %v7205 = vpop.f32.mrf.mxu0
    %v7206 = vadd.f32 %v7192, %v7205
    %7207 = vdwg.mxu0
    %7208 = vmatpush.bf16.msra.mxu0 %v5463
    %7209 = vmatpush.bf16.msra.mxu0 %v5455
    %7210 = vmatpush.bf16.msra.mxu0 %v5447
    %7211 = vmatpush.bf16.msra.mxu0 %v5439
    %7212 = vmatpush.bf16.msra.mxu0 %v5431
    %7213 = vmatpush.bf16.msra.mxu0 %v5423
    %7214 = vmatpush.bf16.msra.mxu0 %v5415
    %7215 = vmatpush.bf16.msra.mxu0 %v5407
    %7216 = vmatmul.bf16.gmra.mxu0 %v3326
    %v7217 = vpop.f32.mrf.mxu0
    %v7218 = vadd.f32 %v3855, %v7217
    %v7219 = vpop.f32.mrf.mxu0
    %v7220 = vadd.f32 %v3855, %v7219
    %7221 = vdwg.mxu0
    %7222 = vmatpush.bf16.msra.mxu0 %v5527
    %7223 = vmatpush.bf16.msra.mxu0 %v5519
    %7224 = vmatpush.bf16.msra.mxu0 %v5511
    %7225 = vmatpush.bf16.msra.mxu0 %v5503
    %7226 = vmatpush.bf16.msra.mxu0 %v5495
    %7227 = vmatpush.bf16.msra.mxu0 %v5487
    %7228 = vmatpush.bf16.msra.mxu0 %v5479
    %7229 = vmatpush.bf16.msra.mxu0 %v5471
    %7230 = vmatmul.bf16.gmra.mxu0 %v3327
    %v7231 = vpop.f32.mrf.mxu0
    %v7232 = vadd.f32 %v7218, %v7231
    %v7233 = vpop.f32.mrf.mxu0
    %v7234 = vadd.f32 %v7220, %v7233
    %7235 = vdwg.mxu0
    %7236 = vmatpush.bf16.msra.mxu0 %v5591
    %7237 = vmatpush.bf16.msra.mxu0 %v5583
    %7238 = vmatpush.bf16.msra.mxu0 %v5575
    %7239 = vmatpush.bf16.msra.mxu0 %v5567
    %7240 = vmatpush.bf16.msra.mxu0 %v5559
    %7241 = vmatpush.bf16.msra.mxu0 %v5551
    %7242 = vmatpush.bf16.msra.mxu0 %v5543
    %7243 = vmatpush.bf16.msra.mxu0 %v5535
    %7244 = vmatmul.bf16.gmra.mxu0 %v3328
    %v7245 = vpop.f32.mrf.mxu0
    %v7246 = vadd.f32 %v7232, %v7245
    %v7247 = vpop.f32.mrf.mxu0
    %v7248 = vadd.f32 %v7234, %v7247
    %7249 = vdwg.mxu0
    %7250 = vmatpush.bf16.msra.mxu0 %v5655
    %7251 = vmatpush.bf16.msra.mxu0 %v5647
    %7252 = vmatpush.bf16.msra.mxu0 %v5639
    %7253 = vmatpush.bf16.msra.mxu0 %v5631
    %7254 = vmatpush.bf16.msra.mxu0 %v5623
    %7255 = vmatpush.bf16.msra.mxu0 %v5615
    %7256 = vmatpush.bf16.msra.mxu0 %v5607
    %7257 = vmatpush.bf16.msra.mxu0 %v5599
    %7258 = vmatmul.bf16.gmra.mxu0 %v3329
    %v7259 = vpop.f32.mrf.mxu0
    %v7260 = vadd.f32 %v7246, %v7259
    %v7261 = vpop.f32.mrf.mxu0
    %v7262 = vadd.f32 %v7248, %v7261
    %7263 = vdwg.mxu0
    %7264 = vmatpush.bf16.msra.mxu0 %v5719
    %7265 = vmatpush.bf16.msra.mxu0 %v5711
    %7266 = vmatpush.bf16.msra.mxu0 %v5703
    %7267 = vmatpush.bf16.msra.mxu0 %v5695
    %7268 = vmatpush.bf16.msra.mxu0 %v5687
    %7269 = vmatpush.bf16.msra.mxu0 %v5679
    %7270 = vmatpush.bf16.msra.mxu0 %v5671
    %7271 = vmatpush.bf16.msra.mxu0 %v5663
    %7272 = vmatmul.bf16.gmra.mxu0 %v3330
    %v7273 = vpop.f32.mrf.mxu0
    %v7274 = vadd.f32 %v7260, %v7273
    %v7275 = vpop.f32.mrf.mxu0
    %v7276 = vadd.f32 %v7262, %v7275
    %7277 = vdwg.mxu0
    %7278 = vmatpush.bf16.msra.mxu0 %v5783
    %7279 = vmatpush.bf16.msra.mxu0 %v5775
    %7280 = vmatpush.bf16.msra.mxu0 %v5767
    %7281 = vmatpush.bf16.msra.mxu0 %v5759
    %7282 = vmatpush.bf16.msra.mxu0 %v5751
    %7283 = vmatpush.bf16.msra.mxu0 %v5743
    %7284 = vmatpush.bf16.msra.mxu0 %v5735
    %7285 = vmatpush.bf16.msra.mxu0 %v5727
    %7286 = vmatmul.bf16.gmra.mxu0 %v3331
    %v7287 = vpop.f32.mrf.mxu0
    %v7288 = vadd.f32 %v7274, %v7287
    %v7289 = vpop.f32.mrf.mxu0
    %v7290 = vadd.f32 %v7276, %v7289
    %7291 = vdwg.mxu0
    %7292 = vmatpush.bf16.msra.mxu0 %v5847
    %7293 = vmatpush.bf16.msra.mxu0 %v5839
    %7294 = vmatpush.bf16.msra.mxu0 %v5831
    %7295 = vmatpush.bf16.msra.mxu0 %v5823
    %7296 = vmatpush.bf16.msra.mxu0 %v5815
    %7297 = vmatpush.bf16.msra.mxu0 %v5807
    %7298 = vmatpush.bf16.msra.mxu0 %v5799
    %7299 = vmatpush.bf16.msra.mxu0 %v5791
    %7300 = vmatmul.bf16.gmra.mxu0 %v3332
    %v7301 = vpop.f32.mrf.mxu0
    %v7302 = vadd.f32 %v7288, %v7301
    %v7303 = vpop.f32.mrf.mxu0
    %v7304 = vadd.f32 %v7290, %v7303
    %7305 = vdwg.mxu0
    %7306 = vmatpush.bf16.msra.mxu0 %v5911
    %7307 = vmatpush.bf16.msra.mxu0 %v5903
    %7308 = vmatpush.bf16.msra.mxu0 %v5895
    %7309 = vmatpush.bf16.msra.mxu0 %v5887
    %7310 = vmatpush.bf16.msra.mxu0 %v5879
    %7311 = vmatpush.bf16.msra.mxu0 %v5871
    %7312 = vmatpush.bf16.msra.mxu0 %v5863
    %7313 = vmatpush.bf16.msra.mxu0 %v5855
    %7314 = vmatmul.bf16.gmra.mxu0 %v3333
    %v7315 = vpop.f32.mrf.mxu0
    %v7316 = vadd.f32 %v7302, %v7315
    %v7317 = vpop.f32.mrf.mxu0
    %v7318 = vadd.f32 %v7304, %v7317
    %7319 = vdwg.mxu0
    %v7320 = vmax.f32 %v6532, 0.0
    %v7321 = vmax.f32 %v6644, 0.0
    %v7322 = vmax.f32 %v6756, 0.0
    %v7323 = vmax.f32 %v6868, 0.0
    %v7324 = vmax.f32 %v6980, 0.0
    %v7325 = vmax.f32 %v7092, 0.0
    %v7326 = vmax.f32 %v7204, 0.0
    %v7327 = vmax.f32 %v7316, 0.0
    %v7328 = vmax.f32 %v6534, 0.0
    %v7329 = vmax.f32 %v6646, 0.0
    %v7330 = vmax.f32 %v6758, 0.0
    %v7331 = vmax.f32 %v6870, 0.0
    %v7332 = vmax.f32 %v6982, 0.0
    %v7333 = vmax.f32 %v7094, 0.0
    %v7334 = vmax.f32 %v7206, 0.0
    %v7335 = vmax.f32 %v7318, 0.0
    %v7336 = vpack.c.bf16 %v7328, %v7320
    %v7337 = vpack.c.bf16 %v7329, %v7321
    %v7338 = vpack.c.bf16 %v7330, %v7322
    %v7339 = vpack.c.bf16 %v7331, %v7323
    %v7340 = vpack.c.bf16 %v7332, %v7324
    %v7341 = vpack.c.bf16 %v7333, %v7325
    %v7342 = vpack.c.bf16 %v7334, %v7326
    %v7343 = vpack.c.bf16 %v7335, %v7327
    %v7344 = vld [vmem:[#allocation11] sm:$0xf]
    %v7345 = vld [vmem:[#allocation11 + $0x4] sm:$0xf]
    %v7346 = vld [vmem:[#allocation11 + $0x8] sm:$0xf]
    %v7347 = vld [vmem:[#allocation11 + $0xc] sm:$0xf]
    %v7348 = vld [vmem:[#allocation11 + $0x10] sm:$0xf]
    %v7349 = vld [vmem:[#allocation11 + $0x14] sm:$0xf]
    %v7350 = vld [vmem:[#allocation11 + $0x18] sm:$0xf]
    %v7351 = vld [vmem:[#allocation11 + $0x1c] sm:$0xf]
    %v7352 = vld [vmem:[#allocation11 + $0x20] sm:$0xf]
    %v7353 = vld [vmem:[#allocation11 + $0x24] sm:$0xf]
    %v7354 = vld [vmem:[#allocation11 + $0x28] sm:$0xf]
    %v7355 = vld [vmem:[#allocation11 + $0x2c] sm:$0xf]
    %v7356 = vld [vmem:[#allocation11 + $0x30] sm:$0xf]
    %v7357 = vld [vmem:[#allocation11 + $0x34] sm:$0xf]
    %v7358 = vld [vmem:[#allocation11 + $0x38] sm:$0xf]
    %v7359 = vld [vmem:[#allocation11 + $0x3c] sm:$0xf]
    %v7360 = vld [vmem:[#allocation11 + $0x40] sm:$0xf]
    %v7361 = vld [vmem:[#allocation11 + $0x44] sm:$0xf]
    %v7362 = vld [vmem:[#allocation11 + $0x48] sm:$0xf]
    %v7363 = vld [vmem:[#allocation11 + $0x4c] sm:$0xf]
    %v7364 = vld [vmem:[#allocation11 + $0x50] sm:$0xf]
    %v7365 = vld [vmem:[#allocation11 + $0x54] sm:$0xf]
    %v7366 = vld [vmem:[#allocation11 + $0x58] sm:$0xf]
    %v7367 = vld [vmem:[#allocation11 + $0x5c] sm:$0xf]
    %v7368 = vld [vmem:[#allocation11 + $0x60] sm:$0xf]
    %v7369 = vld [vmem:[#allocation11 + $0x64] sm:$0xf]
    %v7370 = vld [vmem:[#allocation11 + $0x68] sm:$0xf]
    %v7371 = vld [vmem:[#allocation11 + $0x6c] sm:$0xf]
    %v7372 = vld [vmem:[#allocation11 + $0x70] sm:$0xf]
    %v7373 = vld [vmem:[#allocation11 + $0x74] sm:$0xf]
    %v7374 = vld [vmem:[#allocation11 + $0x78] sm:$0xf]
    %v7375 = vld [vmem:[#allocation11 + $0x7c] sm:$0xf]
    %v7376 = vld [vmem:[#allocation11 + $0x80] sm:$0xf]
    %v7377 = vld [vmem:[#allocation11 + $0x84] sm:$0xf]
    %v7378 = vld [vmem:[#allocation11 + $0x88] sm:$0xf]
    %v7379 = vld [vmem:[#allocation11 + $0x8c] sm:$0xf]
    %v7380 = vld [vmem:[#allocation11 + $0x90] sm:$0xf]
    %v7381 = vld [vmem:[#allocation11 + $0x94] sm:$0xf]
    %v7382 = vld [vmem:[#allocation11 + $0x98] sm:$0xf]
    %v7383 = vld [vmem:[#allocation11 + $0x9c] sm:$0xf]
    %v7384 = vld [vmem:[#allocation11 + $0xa0] sm:$0xf]
    %v7385 = vld [vmem:[#allocation11 + $0xa4] sm:$0xf]
    %v7386 = vld [vmem:[#allocation11 + $0xa8] sm:$0xf]
    %v7387 = vld [vmem:[#allocation11 + $0xac] sm:$0xf]
    %v7388 = vld [vmem:[#allocation11 + $0xb0] sm:$0xf]
    %v7389 = vld [vmem:[#allocation11 + $0xb4] sm:$0xf]
    %v7390 = vld [vmem:[#allocation11 + $0xb8] sm:$0xf]
    %v7391 = vld [vmem:[#allocation11 + $0xbc] sm:$0xf]
    %v7392 = vld [vmem:[#allocation11 + $0xc0] sm:$0xf]
    %v7393 = vld [vmem:[#allocation11 + $0xc4] sm:$0xf]
    %v7394 = vld [vmem:[#allocation11 + $0xc8] sm:$0xf]
    %v7395 = vld [vmem:[#allocation11 + $0xcc] sm:$0xf]
    %v7396 = vld [vmem:[#allocation11 + $0xd0] sm:$0xf]
    %v7397 = vld [vmem:[#allocation11 + $0xd4] sm:$0xf]
    %v7398 = vld [vmem:[#allocation11 + $0xd8] sm:$0xf]
    %v7399 = vld [vmem:[#allocation11 + $0xdc] sm:$0xf]
    %v7400 = vld [vmem:[#allocation11 + $0xe0] sm:$0xf]
    %v7401 = vld [vmem:[#allocation11 + $0xe4] sm:$0xf]
    %v7402 = vld [vmem:[#allocation11 + $0xe8] sm:$0xf]
    %v7403 = vld [vmem:[#allocation11 + $0xec] sm:$0xf]
    %v7404 = vld [vmem:[#allocation11 + $0xf0] sm:$0xf]
    %v7405 = vld [vmem:[#allocation11 + $0xf4] sm:$0xf]
    %v7406 = vld [vmem:[#allocation11 + $0xf8] sm:$0xf]
    %v7407 = vld [vmem:[#allocation11 + $0xfc] sm:$0xf]
    %v7408 = vld [vmem:[#allocation11 + $0x100] sm:$0xf]
    %v7409 = vld [vmem:[#allocation11 + $0x104] sm:$0xf]
    %v7410 = vld [vmem:[#allocation11 + $0x108] sm:$0xf]
    %v7411 = vld [vmem:[#allocation11 + $0x10c] sm:$0xf]
    %v7412 = vld [vmem:[#allocation11 + $0x110] sm:$0xf]
    %v7413 = vld [vmem:[#allocation11 + $0x114] sm:$0xf]
    %v7414 = vld [vmem:[#allocation11 + $0x118] sm:$0xf]
    %v7415 = vld [vmem:[#allocation11 + $0x11c] sm:$0xf]
    %v7416 = vld [vmem:[#allocation11 + $0x120] sm:$0xf]
    %v7417 = vld [vmem:[#allocation11 + $0x124] sm:$0xf]
    %v7418 = vld [vmem:[#allocation11 + $0x128] sm:$0xf]
    %v7419 = vld [vmem:[#allocation11 + $0x12c] sm:$0xf]
    %v7420 = vld [vmem:[#allocation11 + $0x130] sm:$0xf]
    %v7421 = vld [vmem:[#allocation11 + $0x134] sm:$0xf]
    %v7422 = vld [vmem:[#allocation11 + $0x138] sm:$0xf]
    %v7423 = vld [vmem:[#allocation11 + $0x13c] sm:$0xf]
    %v7424 = vld [vmem:[#allocation11 + $0x140] sm:$0xf]
    %v7425 = vld [vmem:[#allocation11 + $0x144] sm:$0xf]
    %v7426 = vld [vmem:[#allocation11 + $0x148] sm:$0xf]
    %v7427 = vld [vmem:[#allocation11 + $0x14c] sm:$0xf]
    %v7428 = vld [vmem:[#allocation11 + $0x150] sm:$0xf]
    %v7429 = vld [vmem:[#allocation11 + $0x154] sm:$0xf]
    %v7430 = vld [vmem:[#allocation11 + $0x158] sm:$0xf]
    %v7431 = vld [vmem:[#allocation11 + $0x15c] sm:$0xf]
    %v7432 = vld [vmem:[#allocation11 + $0x160] sm:$0xf]
    %v7433 = vld [vmem:[#allocation11 + $0x164] sm:$0xf]
    %v7434 = vld [vmem:[#allocation11 + $0x168] sm:$0xf]
    %v7435 = vld [vmem:[#allocation11 + $0x16c] sm:$0xf]
    %v7436 = vld [vmem:[#allocation11 + $0x170] sm:$0xf]
    %v7437 = vld [vmem:[#allocation11 + $0x174] sm:$0xf]
    %v7438 = vld [vmem:[#allocation11 + $0x178] sm:$0xf]
    %v7439 = vld [vmem:[#allocation11 + $0x17c] sm:$0xf]
    %v7440 = vld [vmem:[#allocation11 + $0x180] sm:$0xf]
    %v7441 = vld [vmem:[#allocation11 + $0x184] sm:$0xf]
    %v7442 = vld [vmem:[#allocation11 + $0x188] sm:$0xf]
    %v7443 = vld [vmem:[#allocation11 + $0x18c] sm:$0xf]
    %v7444 = vld [vmem:[#allocation11 + $0x190] sm:$0xf]
    %v7445 = vld [vmem:[#allocation11 + $0x194] sm:$0xf]
    %v7446 = vld [vmem:[#allocation11 + $0x198] sm:$0xf]
    %v7447 = vld [vmem:[#allocation11 + $0x19c] sm:$0xf]
    %v7448 = vld [vmem:[#allocation11 + $0x1a0] sm:$0xf]
    %v7449 = vld [vmem:[#allocation11 + $0x1a4] sm:$0xf]
    %v7450 = vld [vmem:[#allocation11 + $0x1a8] sm:$0xf]
    %v7451 = vld [vmem:[#allocation11 + $0x1ac] sm:$0xf]
    %v7452 = vld [vmem:[#allocation11 + $0x1b0] sm:$0xf]
    %v7453 = vld [vmem:[#allocation11 + $0x1b4] sm:$0xf]
    %v7454 = vld [vmem:[#allocation11 + $0x1b8] sm:$0xf]
    %v7455 = vld [vmem:[#allocation11 + $0x1bc] sm:$0xf]
    %v7456 = vld [vmem:[#allocation11 + $0x1c0] sm:$0xf]
    %v7457 = vld [vmem:[#allocation11 + $0x1c4] sm:$0xf]
    %v7458 = vld [vmem:[#allocation11 + $0x1c8] sm:$0xf]
    %v7459 = vld [vmem:[#allocation11 + $0x1cc] sm:$0xf]
    %v7460 = vld [vmem:[#allocation11 + $0x1d0] sm:$0xf]
    %v7461 = vld [vmem:[#allocation11 + $0x1d4] sm:$0xf]
    %v7462 = vld [vmem:[#allocation11 + $0x1d8] sm:$0xf]
    %v7463 = vld [vmem:[#allocation11 + $0x1dc] sm:$0xf]
    %v7464 = vld [vmem:[#allocation11 + $0x1e0] sm:$0xf]
    %v7465 = vld [vmem:[#allocation11 + $0x1e4] sm:$0xf]
    %v7466 = vld [vmem:[#allocation11 + $0x1e8] sm:$0xf]
    %v7467 = vld [vmem:[#allocation11 + $0x1ec] sm:$0xf]
    %v7468 = vld [vmem:[#allocation11 + $0x1f0] sm:$0xf]
    %v7469 = vld [vmem:[#allocation11 + $0x1f4] sm:$0xf]
    %v7470 = vld [vmem:[#allocation11 + $0x1f8] sm:$0xf]
    %v7471 = vld [vmem:[#allocation11 + $0x1fc] sm:$0xf]
    %v7472 = vld [vmem:[#allocation13] sm:$0x1]
    %v7474 = vperm.slane %v7472, 0
    %v7604 = vunpack.c.l.b16 %v7344
    %v7605 = vunpack.c.l.b16 %v7345
    %v7606 = vunpack.c.l.b16 %v7346
    %v7607 = vunpack.c.l.b16 %v7347
    %v7608 = vunpack.c.l.b16 %v7348
    %v7609 = vunpack.c.l.b16 %v7349
    %v7610 = vunpack.c.l.b16 %v7350
    %v7611 = vunpack.c.l.b16 %v7351
    %v7612 = vunpack.c.l.b16 %v7352
    %v7613 = vunpack.c.l.b16 %v7353
    %v7614 = vunpack.c.l.b16 %v7354
    %v7615 = vunpack.c.l.b16 %v7355
    %v7616 = vunpack.c.l.b16 %v7356
    %v7617 = vunpack.c.l.b16 %v7357
    %v7618 = vunpack.c.l.b16 %v7358
    %v7619 = vunpack.c.l.b16 %v7359
    %v7620 = vunpack.c.l.b16 %v7360
    %v7621 = vunpack.c.l.b16 %v7361
    %v7622 = vunpack.c.l.b16 %v7362
    %v7623 = vunpack.c.l.b16 %v7363
    %v7624 = vunpack.c.l.b16 %v7364
    %v7625 = vunpack.c.l.b16 %v7365
    %v7626 = vunpack.c.l.b16 %v7366
    %v7627 = vunpack.c.l.b16 %v7367
    %v7628 = vunpack.c.l.b16 %v7368
    %v7629 = vunpack.c.l.b16 %v7369
    %v7630 = vunpack.c.l.b16 %v7370
    %v7631 = vunpack.c.l.b16 %v7371
    %v7632 = vunpack.c.l.b16 %v7372
    %v7633 = vunpack.c.l.b16 %v7373
    %v7634 = vunpack.c.l.b16 %v7374
    %v7635 = vunpack.c.l.b16 %v7375
    %v7636 = vunpack.c.l.b16 %v7376
    %v7637 = vunpack.c.l.b16 %v7377
    %v7638 = vunpack.c.l.b16 %v7378
    %v7639 = vunpack.c.l.b16 %v7379
    %v7640 = vunpack.c.l.b16 %v7380
    %v7641 = vunpack.c.l.b16 %v7381
    %v7642 = vunpack.c.l.b16 %v7382
    %v7643 = vunpack.c.l.b16 %v7383
    %v7644 = vunpack.c.l.b16 %v7384
    %v7645 = vunpack.c.l.b16 %v7385
    %v7646 = vunpack.c.l.b16 %v7386
    %v7647 = vunpack.c.l.b16 %v7387
    %v7648 = vunpack.c.l.b16 %v7388
    %v7649 = vunpack.c.l.b16 %v7389
    %v7650 = vunpack.c.l.b16 %v7390
    %v7651 = vunpack.c.l.b16 %v7391
    %v7652 = vunpack.c.l.b16 %v7392
    %v7653 = vunpack.c.l.b16 %v7393
    %v7654 = vunpack.c.l.b16 %v7394
    %v7655 = vunpack.c.l.b16 %v7395
    %v7656 = vunpack.c.l.b16 %v7396
    %v7657 = vunpack.c.l.b16 %v7397
    %v7658 = vunpack.c.l.b16 %v7398
    %v7659 = vunpack.c.l.b16 %v7399
    %v7660 = vunpack.c.l.b16 %v7400
    %v7661 = vunpack.c.l.b16 %v7401
    %v7662 = vunpack.c.l.b16 %v7402
    %v7663 = vunpack.c.l.b16 %v7403
    %v7664 = vunpack.c.l.b16 %v7404
    %v7665 = vunpack.c.l.b16 %v7405
    %v7666 = vunpack.c.l.b16 %v7406
    %v7667 = vunpack.c.l.b16 %v7407
    %v7668 = vunpack.c.l.b16 %v7408
    %v7669 = vunpack.c.l.b16 %v7409
    %v7670 = vunpack.c.l.b16 %v7410
    %v7671 = vunpack.c.l.b16 %v7411
    %v7672 = vunpack.c.l.b16 %v7412
    %v7673 = vunpack.c.l.b16 %v7413
    %v7674 = vunpack.c.l.b16 %v7414
    %v7675 = vunpack.c.l.b16 %v7415
    %v7676 = vunpack.c.l.b16 %v7416
    %v7677 = vunpack.c.l.b16 %v7417
    %v7678 = vunpack.c.l.b16 %v7418
    %v7679 = vunpack.c.l.b16 %v7419
    %v7680 = vunpack.c.l.b16 %v7420
    %v7681 = vunpack.c.l.b16 %v7421
    %v7682 = vunpack.c.l.b16 %v7422
    %v7683 = vunpack.c.l.b16 %v7423
    %v7684 = vunpack.c.l.b16 %v7424
    %v7685 = vunpack.c.l.b16 %v7425
    %v7686 = vunpack.c.l.b16 %v7426
    %v7687 = vunpack.c.l.b16 %v7427
    %v7688 = vunpack.c.l.b16 %v7428
    %v7689 = vunpack.c.l.b16 %v7429
    %v7690 = vunpack.c.l.b16 %v7430
    %v7691 = vunpack.c.l.b16 %v7431
    %v7692 = vunpack.c.l.b16 %v7432
    %v7693 = vunpack.c.l.b16 %v7433
    %v7694 = vunpack.c.l.b16 %v7434
    %v7695 = vunpack.c.l.b16 %v7435
    %v7696 = vunpack.c.l.b16 %v7436
    %v7697 = vunpack.c.l.b16 %v7437
    %v7698 = vunpack.c.l.b16 %v7438
    %v7699 = vunpack.c.l.b16 %v7439
    %v7700 = vunpack.c.l.b16 %v7440
    %v7701 = vunpack.c.l.b16 %v7441
    %v7702 = vunpack.c.l.b16 %v7442
    %v7703 = vunpack.c.l.b16 %v7443
    %v7704 = vunpack.c.l.b16 %v7444
    %v7705 = vunpack.c.l.b16 %v7445
    %v7706 = vunpack.c.l.b16 %v7446
    %v7707 = vunpack.c.l.b16 %v7447
    %v7708 = vunpack.c.l.b16 %v7448
    %v7709 = vunpack.c.l.b16 %v7449
    %v7710 = vunpack.c.l.b16 %v7450
    %v7711 = vunpack.c.l.b16 %v7451
    %v7712 = vunpack.c.l.b16 %v7452
    %v7713 = vunpack.c.l.b16 %v7453
    %v7714 = vunpack.c.l.b16 %v7454
    %v7715 = vunpack.c.l.b16 %v7455
    %v7716 = vunpack.c.l.b16 %v7456
    %v7717 = vunpack.c.l.b16 %v7457
    %v7718 = vunpack.c.l.b16 %v7458
    %v7719 = vunpack.c.l.b16 %v7459
    %v7720 = vunpack.c.l.b16 %v7460
    %v7721 = vunpack.c.l.b16 %v7461
    %v7722 = vunpack.c.l.b16 %v7462
    %v7723 = vunpack.c.l.b16 %v7463
    %v7724 = vunpack.c.l.b16 %v7464
    %v7725 = vunpack.c.l.b16 %v7465
    %v7726 = vunpack.c.l.b16 %v7466
    %v7727 = vunpack.c.l.b16 %v7467
    %v7728 = vunpack.c.l.b16 %v7468
    %v7729 = vunpack.c.l.b16 %v7469
    %v7730 = vunpack.c.l.b16 %v7470
    %v7731 = vunpack.c.l.b16 %v7471
    %v7732 = vpack.c.b16 %v7605, %v7604
    %v7733 = vpack.c.b16 %v7607, %v7606
    %v7734 = vpack.c.b16 %v7609, %v7608
    %v7735 = vpack.c.b16 %v7611, %v7610
    %v7736 = vpack.c.b16 %v7613, %v7612
    %v7737 = vpack.c.b16 %v7615, %v7614
    %v7738 = vpack.c.b16 %v7617, %v7616
    %v7739 = vpack.c.b16 %v7619, %v7618
    %v7740 = vpack.c.b16 %v7621, %v7620
    %v7741 = vpack.c.b16 %v7623, %v7622
    %v7742 = vpack.c.b16 %v7625, %v7624
    %v7743 = vpack.c.b16 %v7627, %v7626
    %v7744 = vpack.c.b16 %v7629, %v7628
    %v7745 = vpack.c.b16 %v7631, %v7630
    %v7746 = vpack.c.b16 %v7633, %v7632
    %v7747 = vpack.c.b16 %v7635, %v7634
    %v7748 = vpack.c.b16 %v7637, %v7636
    %v7749 = vpack.c.b16 %v7639, %v7638
    %v7750 = vpack.c.b16 %v7641, %v7640
    %v7751 = vpack.c.b16 %v7643, %v7642
    %v7752 = vpack.c.b16 %v7645, %v7644
    %v7753 = vpack.c.b16 %v7647, %v7646
    %v7754 = vpack.c.b16 %v7649, %v7648
    %v7755 = vpack.c.b16 %v7651, %v7650
    %v7756 = vpack.c.b16 %v7653, %v7652
    %v7757 = vpack.c.b16 %v7655, %v7654
    %v7758 = vpack.c.b16 %v7657, %v7656
    %v7759 = vpack.c.b16 %v7659, %v7658
    %v7760 = vpack.c.b16 %v7661, %v7660
    %v7761 = vpack.c.b16 %v7663, %v7662
    %v7762 = vpack.c.b16 %v7665, %v7664
    %v7763 = vpack.c.b16 %v7667, %v7666
    %v7764 = vpack.c.b16 %v7669, %v7668
    %v7765 = vpack.c.b16 %v7671, %v7670
    %v7766 = vpack.c.b16 %v7673, %v7672
    %v7767 = vpack.c.b16 %v7675, %v7674
    %v7768 = vpack.c.b16 %v7677, %v7676
    %v7769 = vpack.c.b16 %v7679, %v7678
    %v7770 = vpack.c.b16 %v7681, %v7680
    %v7771 = vpack.c.b16 %v7683, %v7682
    %v7772 = vpack.c.b16 %v7685, %v7684
    %v7773 = vpack.c.b16 %v7687, %v7686
    %v7774 = vpack.c.b16 %v7689, %v7688
    %v7775 = vpack.c.b16 %v7691, %v7690
    %v7776 = vpack.c.b16 %v7693, %v7692
    %v7777 = vpack.c.b16 %v7695, %v7694
    %v7778 = vpack.c.b16 %v7697, %v7696
    %v7779 = vpack.c.b16 %v7699, %v7698
    %v7780 = vpack.c.b16 %v7701, %v7700
    %v7781 = vpack.c.b16 %v7703, %v7702
    %v7782 = vpack.c.b16 %v7705, %v7704
    %v7783 = vpack.c.b16 %v7707, %v7706
    %v7784 = vpack.c.b16 %v7709, %v7708
    %v7785 = vpack.c.b16 %v7711, %v7710
    %v7786 = vpack.c.b16 %v7713, %v7712
    %v7787 = vpack.c.b16 %v7715, %v7714
    %v7788 = vpack.c.b16 %v7717, %v7716
    %v7789 = vpack.c.b16 %v7719, %v7718
    %v7790 = vpack.c.b16 %v7721, %v7720
    %v7791 = vpack.c.b16 %v7723, %v7722
    %v7792 = vpack.c.b16 %v7725, %v7724
    %v7793 = vpack.c.b16 %v7727, %v7726
    %v7794 = vpack.c.b16 %v7729, %v7728
    %v7795 = vpack.c.b16 %v7731, %v7730
    %7860 = vmatpush.bf16.msra.mxu0 %v7739
    %7861 = vmatpush.bf16.msra.mxu0 %v7738
    %7862 = vmatpush.bf16.msra.mxu0 %v7737
    %7863 = vmatpush.bf16.msra.mxu0 %v7736
    %7864 = vmatpush.bf16.msra.mxu0 %v7735
    %7865 = vmatpush.bf16.msra.mxu0 %v7734
    %7866 = vmatpush.bf16.msra.mxu0 %v7733
    %7867 = vmatpush.bf16.msra.mxu0 %v7732
    %7868 = vmatmul.bf16.gmra.mxu0 %v7336
    %v7869 = vpop.f32.mrf.mxu0
    %v7870 = vadd.f32 %v7474, %v7869
    %v7871 = vpop.f32.mrf.mxu0
    %v7872 = vadd.f32 %v7474, %v7871
    %7873 = vdwg.mxu0
    %7874 = vmatpush.bf16.msra.mxu0 %v7747
    %7875 = vmatpush.bf16.msra.mxu0 %v7746
    %7876 = vmatpush.bf16.msra.mxu0 %v7745
    %7877 = vmatpush.bf16.msra.mxu0 %v7744
    %7878 = vmatpush.bf16.msra.mxu0 %v7743
    %7879 = vmatpush.bf16.msra.mxu0 %v7742
    %7880 = vmatpush.bf16.msra.mxu0 %v7741
    %7881 = vmatpush.bf16.msra.mxu0 %v7740
    %7882 = vmatmul.bf16.gmra.mxu0 %v7337
    %v7883 = vpop.f32.mrf.mxu0
    %v7884 = vadd.f32 %v7870, %v7883
    %v7885 = vpop.f32.mrf.mxu0
    %v7886 = vadd.f32 %v7872, %v7885
    %7887 = vdwg.mxu0
    %7888 = vmatpush.bf16.msra.mxu0 %v7755
    %7889 = vmatpush.bf16.msra.mxu0 %v7754
    %7890 = vmatpush.bf16.msra.mxu0 %v7753
    %7891 = vmatpush.bf16.msra.mxu0 %v7752
    %7892 = vmatpush.bf16.msra.mxu0 %v7751
    %7893 = vmatpush.bf16.msra.mxu0 %v7750
    %7894 = vmatpush.bf16.msra.mxu0 %v7749
    %7895 = vmatpush.bf16.msra.mxu0 %v7748
    %7896 = vmatmul.bf16.gmra.mxu0 %v7338
    %v7897 = vpop.f32.mrf.mxu0
    %v7898 = vadd.f32 %v7884, %v7897
    %v7899 = vpop.f32.mrf.mxu0
    %v7900 = vadd.f32 %v7886, %v7899
    %7901 = vdwg.mxu0
    %7902 = vmatpush.bf16.msra.mxu0 %v7763
    %7903 = vmatpush.bf16.msra.mxu0 %v7762
    %7904 = vmatpush.bf16.msra.mxu0 %v7761
    %7905 = vmatpush.bf16.msra.mxu0 %v7760
    %7906 = vmatpush.bf16.msra.mxu0 %v7759
    %7907 = vmatpush.bf16.msra.mxu0 %v7758
    %7908 = vmatpush.bf16.msra.mxu0 %v7757
    %7909 = vmatpush.bf16.msra.mxu0 %v7756
    %7910 = vmatmul.bf16.gmra.mxu0 %v7339
    %v7911 = vpop.f32.mrf.mxu0
    %v7912 = vadd.f32 %v7898, %v7911
    %v7913 = vpop.f32.mrf.mxu0
    %v7914 = vadd.f32 %v7900, %v7913
    %7915 = vdwg.mxu0
    %7916 = vmatpush.bf16.msra.mxu0 %v7771
    %7917 = vmatpush.bf16.msra.mxu0 %v7770
    %7918 = vmatpush.bf16.msra.mxu0 %v7769
    %7919 = vmatpush.bf16.msra.mxu0 %v7768
    %7920 = vmatpush.bf16.msra.mxu0 %v7767
    %7921 = vmatpush.bf16.msra.mxu0 %v7766
    %7922 = vmatpush.bf16.msra.mxu0 %v7765
    %7923 = vmatpush.bf16.msra.mxu0 %v7764
    %7924 = vmatmul.bf16.gmra.mxu0 %v7340
    %v7925 = vpop.f32.mrf.mxu0
    %v7926 = vadd.f32 %v7912, %v7925
    %v7927 = vpop.f32.mrf.mxu0
    %v7928 = vadd.f32 %v7914, %v7927
    %7929 = vdwg.mxu0
    %7930 = vmatpush.bf16.msra.mxu0 %v7779
    %7931 = vmatpush.bf16.msra.mxu0 %v7778
    %7932 = vmatpush.bf16.msra.mxu0 %v7777
    %7933 = vmatpush.bf16.msra.mxu0 %v7776
    %7934 = vmatpush.bf16.msra.mxu0 %v7775
    %7935 = vmatpush.bf16.msra.mxu0 %v7774
    %7936 = vmatpush.bf16.msra.mxu0 %v7773
    %7937 = vmatpush.bf16.msra.mxu0 %v7772
    %7938 = vmatmul.bf16.gmra.mxu0 %v7341
    %v7939 = vpop.f32.mrf.mxu0
    %v7940 = vadd.f32 %v7926, %v7939
    %v7941 = vpop.f32.mrf.mxu0
    %v7942 = vadd.f32 %v7928, %v7941
    %7943 = vdwg.mxu0
    %7944 = vmatpush.bf16.msra.mxu0 %v7787
    %7945 = vmatpush.bf16.msra.mxu0 %v7786
    %7946 = vmatpush.bf16.msra.mxu0 %v7785
    %7947 = vmatpush.bf16.msra.mxu0 %v7784
    %7948 = vmatpush.bf16.msra.mxu0 %v7783
    %7949 = vmatpush.bf16.msra.mxu0 %v7782
    %7950 = vmatpush.bf16.msra.mxu0 %v7781
    %7951 = vmatpush.bf16.msra.mxu0 %v7780
    %7952 = vmatmul.bf16.gmra.mxu0 %v7342
    %v7953 = vpop.f32.mrf.mxu0
    %v7954 = vadd.f32 %v7940, %v7953
    %v7955 = vpop.f32.mrf.mxu0
    %v7956 = vadd.f32 %v7942, %v7955
    %7957 = vdwg.mxu0
    %7958 = vmatpush.bf16.msra.mxu0 %v7795
    %7959 = vmatpush.bf16.msra.mxu0 %v7794
    %7960 = vmatpush.bf16.msra.mxu0 %v7793
    %7961 = vmatpush.bf16.msra.mxu0 %v7792
    %7962 = vmatpush.bf16.msra.mxu0 %v7791
    %7963 = vmatpush.bf16.msra.mxu0 %v7790
    %7964 = vmatpush.bf16.msra.mxu0 %v7789
    %7965 = vmatpush.bf16.msra.mxu0 %v7788
    %7966 = vmatmul.bf16.gmra.mxu0 %v7343
    %v7967 = vpop.f32.mrf.mxu0
    %v7968 = vadd.f32 %v7954, %v7967
    %v7969 = vpop.f32.mrf.mxu0
    %v7970 = vadd.f32 %v7956, %v7969
    %7971 = vdwg.mxu0
    %7972 = vst [vmem:[#allocation14] sm:$0xff] %v7968
    %7973 = vst [vmem:[#allocation14 + $0x8] sm:$0xff] %v7970
    // Predicated region
    $region58: #{tpu_custom_call.1} parent=1 // pred_check
      _
    $region59: #{tpu_custom_call.1} parent=1 // pred_check_branch
      %7975 = sbr.rel (0) target = $region61
    $region60: #{tpu_custom_call.1} parent=1 // pred_region
      %7977 = vsyncadd [#allocation4], 0
      %s7978 = sshll.u32 [#allocation14], 4
      %s7979 = int_to_ptr.vmem [resolvable:$true] %s7978
      %s7980 = sshll.u32 %s7, 4
      %s7981 = int_to_ptr.hbm [resolvable:$true] %s7980
      %7986 = dma.vmem_to_hbm [thread:$0]  %s7979, 256, %s7981, [#allocation4], 128, 128, 8
    $region61: #{tpu_custom_call.1} parent=1 // pred_fallthru
      _
    // Predicated region
    $region62: #{tpu_custom_call.1} parent=1 // pred_check
      _
    $region63: #{tpu_custom_call.1} parent=1 // pred_check_branch
      %7988 = sbr.rel (0) target = $region65
    $region64: #{tpu_custom_call.1} parent=1 // pred_region
      %7990 = dma.done [#allocation4], 256
    $region65: #{tpu_custom_call.1} parent=1 // pred_fallthru
      _
    %7991 = vsyncpa [#allocation3], 1
    %7992 = vsyncpa [#allocation6], 1
    %7993 = vsyncpa [#allocation9], 1
    %7994 = vsyncpa [#allocation12], 1
    %7995 = vsyncpa [#allocation4], 1

</llo_original>
